<compile_context>
chip_gen: v7x
topology: tpu7x:2x2x1
jax: 0.10.0
libtpu: 0.0.40
codegen_flags: <defaults>
</compile_context>

<pallas_src>
import functools

import jax
import jax.numpy as jnp
from jax.experimental import pallas as pl
from jax.experimental.pallas import tpu as pltpu


# ------------------------------ helpers ------------------------------------ #

def _round_up(x, n):
    return (x + n - 1) // n * n


def _tap_groups(cin, mxu_k):
    """Static grouping of the 9 conv taps into MXU dots of depth ~mxu_k."""
    if mxu_k >= 256 or 9 * cin <= mxu_k:
        return ((0, 9),)                      # one wide-K dot (K = 9*Cin)
    per = max(1, mxu_k // cin)                # e.g. 4+4+1 -> K = 128 on v5e
    groups, t = [], 0
    while t < 9:
        nt = min(per, 9 - t)
        groups.append((t, nt))
        t += nt
    return tuple(groups)


# ------------------------------ Pallas kernel ------------------------------ #

def _dncnn_fused_kernel(x_ref, mask_ref, *args, tap_offs, ml, Lb, mxu_k,
                        matmul_dtype):
    """Fused DnCNN forward for one lane-stacked group of images.

    x_ref    : (C_in, Lt)  f32   flattened, ring-padded, lane-padded images
                                 stacked along lanes; Lt = Lb + 2*ml zero-margin
                                 lanes so every 3x3 tap is a static lane slice.
    mask_ref : (1, Lb)     f32   1.0 at interior (non-padding, non-lane-pad)
                                 pixels, else 0.
    args     : w_0, b_0, ..., w_{L-1}, b_{L-1}, o_ref, h_ping, h_pong, op_ref
               w_l    : (Cout_l, 9*Cin_l) matmul_dtype (taps folded into K)
               b_l    : (Cout_l, 1)       f32
               o_ref  : (C_out, Lb)       f32   = x - noise (flattened frame)
               h_ping/h_pong : (F, Lt)    matmul_dtype  activation ping-pong
               op_ref : (9*F, Lb)         matmul_dtype  im2col operand staging
    """
    num_layers = (len(args) - 4) // 2
    w_refs = args[0:2 * num_layers:2]
    b_refs = args[1:2 * num_layers:2]
    o_ref = args[2 * num_layers]
    h_bufs = (args[2 * num_layers + 1], args[2 * num_layers + 2])
    op_ref = args[2 * num_layers + 3]

    mask = mask_ref[...]                                    # (1, Lb) f32

    # Pre-zero the lane margins of both ping-pong buffers.  The interior is
    # fully overwritten every layer; only the margins must stay zero so the
    # tap lane-shifts read zeros outside the batch slab.
    feat = h_bufs[0].shape[0]
    zmargin = jnp.zeros((feat, ml), matmul_dtype)
    for buf in h_bufs:
        buf[:, 0:ml] = zmargin
        buf[:, ml + Lb:ml + Lb + ml] = zmargin

    noise = None
    for l in range(num_layers):
        w_ref, b_ref = w_refs[l], b_refs[l]
        cout = w_ref.shape[0]
        cin = w_ref.shape[1] // 9

        # Accumulator initialised with the broadcast bias (saves a VPU pass).
        acc = jnp.broadcast_to(b_ref[...], (cout, Lb))

        for (t0, nt) in _tap_groups(cin, mxu_k):
            if l == 0:
                # Skinny first layer: tiny operand, build it as a value
                # straight from the once-padded f32 input.
                cols = []
                for j in range(nt):
                    off = ml + tap_offs[t0 + j]
                    cols.append(x_ref[:, off:off + Lb].astype(matmul_dtype))
                operand = jnp.concatenate(cols, axis=0)       # (nt*cin, Lb)
            else:
                # Feature layers: stage the lane-shifted taps in the persistent
                # operand scratch (bounds live ranges under the unrolled loop).
                src = h_bufs[(l - 1) % 2]
                for j in range(nt):
                    off = ml + tap_offs[t0 + j]
                    op_ref[pl.ds(j * cin, cin), :] = src[:, off:off + Lb]
                operand = op_ref[pl.ds(0, nt * cin), :]

            acc = acc + jnp.dot(w_ref[:, t0 * cin:(t0 + nt) * cin], operand,
                                preferred_element_type=jnp.float32)

        if l < num_layers - 1:
            # ReLU, re-zero the padding ring / lane-pad pixels, store into the
            # interior of the next ping-pong buffer (lane-aligned store).
            act = jnp.maximum(acc, 0.0) * mask
            h_bufs[l % 2][:, pl.ds(ml, Lb)] = act.astype(matmul_dtype)
        else:
            noise = acc                                       # final: no ReLU

    # Fused residual: denoised = x - noise (ring / pad lanes stripped on host).
    o_ref[...] = x_ref[:, ml:ml + Lb] - noise


# ------------------------------ JAX wrapper -------------------------------- #

def dncnn_forward(x_nchw, params, *, matmul_dtype=jnp.bfloat16,
                  images_per_step=8):
    """DnCNN forward: noise = model(x); return x - noise.  Input/output NCHW."""
    N, C, H, W = x_nchw.shape
    F = params[0][0].shape[-1]                 # feature width
    c_out = params[-1][0].shape[-1]
    assert c_out == C, "residual x - noise requires out_channels == in_channels"

    Hp, Wp = H + 2, W + 2
    P = Hp * Wp                                # flattened 1-px-padded image
    Pl = _round_up(P, 128)                     # lane-padded slab per image
    m = Wp + 1                                 # max |3x3 tap lane shift|
    ml = _round_up(m, 128)                     # lane-aligned zero margin
    # Fold several images into one grid step, stacked along the lane dim.
    n_blk = max(d for d in range(1, min(N, images_per_step) + 1) if N % d == 0)
    n_grp = N // n_blk
    Lb = n_blk * Pl                            # matmul N-dim per grid step
    Lt = Lb + 2 * ml

    # ---- one-time host prep (cheap pads/reshapes on tiny tensors) ----------
    xp = jnp.pad(x_nchw.astype(jnp.float32), ((0, 0), (0, 0), (1, 1), (1, 1)))
    xf = jnp.pad(xp.reshape(N, C, P), ((0, 0), (0, 0), (0, Pl - P)))
    xg = (xf.reshape(n_grp, n_blk, C, Pl).transpose(0, 2, 1, 3)
            .reshape(n_grp, C, Lb))
    xw = jnp.pad(xg, ((0, 0), (0, 0), (ml, ml)))              # (n_grp, C, Lt)

    # Interior-pixel mask (per image slab, tiled across the lane-stacked batch).
    yy, xx = jnp.meshgrid(jnp.arange(Hp), jnp.arange(Wp), indexing="ij")
    interior = ((yy >= 1) & (yy <= H) & (xx >= 1) & (xx <= W)).reshape(P)
    interior = jnp.pad(interior, (0, Pl - P))
    mask = jnp.tile(interior, n_blk).reshape(1, Lb).astype(jnp.float32)

    # Per-layer weights reshaped to (C_out, 9*C_in): taps folded into wide-K
    # MXU matmuls.  Biases as (C_out, 1) f32 columns.
    flat_params = []
    in_specs = [
        pl.BlockSpec((None, C, Lt), lambda g: (g, 0, 0)),
        pl.BlockSpec((1, Lb), lambda g: (0, 0)),
    ]
    for w, b in params:
        cin, cout = w.shape[2], w.shape[3]
        wm = jnp.transpose(w, (3, 0, 1, 2)).reshape(cout, 9 * cin)
        flat_params.append(wm.astype(matmul_dtype))
        flat_params.append(b.reshape(cout, 1).astype(jnp.float32))
        in_specs.append(pl.BlockSpec((cout, 9 * cin), lambda g: (0, 0)))
        in_specs.append(pl.BlockSpec((cout, 1), lambda g: (0, 0)))

    tap_offs = tuple((dy - 1) * Wp + (dx - 1)
                     for dy in range(3) for dx in range(3))

    # Generation-dependent knobs: MXU contraction depth and VMEM budget.
    try:
        kind = jax.devices()[0].device_kind.lower()
    except Exception:
        kind = ""
    mxu_k = 128 if any(v in kind for v in ("v2", "v3", "v4", "v5")) else 256
    try:
        vmem_cap = pltpu.get_tpu_info().vmem_capacity_bytes
    except Exception:
        vmem_cap = 64 * 1024 * 1024
    vmem_limit = min(int(vmem_cap) * 3 // 4, 112 * 1024 * 1024)

    kern = functools.partial(_dncnn_fused_kernel, tap_offs=tap_offs, ml=ml,
                             Lb=Lb, mxu_k=mxu_k, matmul_dtype=matmul_dtype)
    out_flat = pl.pallas_call(
        kern,
        out_shape=jax.ShapeDtypeStruct((n_grp, c_out, Lb), jnp.float32),
        grid=(n_grp,),
        in_specs=in_specs,
        out_specs=pl.BlockSpec((None, c_out, Lb), lambda g: (g, 0, 0)),
        scratch_shapes=[
            pltpu.VMEM((F, Lt), matmul_dtype),       # activation ping
            pltpu.VMEM((F, Lt), matmul_dtype),       # activation pong
            pltpu.VMEM((9 * F, Lb), matmul_dtype),   # im2col operand staging
        ],
        compiler_params=pltpu.CompilerParams(
            dimension_semantics=("parallel",),
            vmem_limit_bytes=vmem_limit),
    )(xw, mask, *flat_params)

    # Un-stack images, drop the lane padding, un-flatten, strip the 1-px ring.
    out = (out_flat.reshape(n_grp, c_out, n_blk, Pl).transpose(0, 2, 1, 3)
                   .reshape(N, c_out, Pl)[:, :, :P]
                   .reshape(N, c_out, Hp, Wp)[:, :, 1:H + 1, 1:W + 1])
    return out


# --------------------------- parameters & reference ------------------------ #

def init_dncnn_params(key, in_channels=1, out_channels=1, num_layers=5,
                      features=32):
    """Kaiming-normal (fan_out, relu) weights, zero biases — mirrors
    DnCNN._initialize_weights.  Weights stored HWIO: (3, 3, Cin, Cout)."""
    chans = [(in_channels, features)]
    chans += [(features, features)] * (num_layers - 2)
    chans += [(features, out_channels)]
    params = []
    for cin, cout in chans:
        key, sub = jax.random.split(key)
        fan_out = cout * 3 * 3
        std = (2.0 / fan_out) ** 0.5
        w = std * jax.random.normal(sub, (3, 3, cin, cout), jnp.float32)
        b = jnp.zeros((cout,), jnp.float32)
        params.append((w, b))
    return params


def dncnn_reference(x_nchw, params):
    """Pure-JAX reference (full-precision XLA conv) for correctness checking."""
    def conv(h, w, b):
        y = jax.lax.conv_general_dilated(
            h, w, window_strides=(1, 1), padding=((1, 1), (1, 1)),
            dimension_numbers=("NCHW", "HWIO", "NCHW"),
            precision=jax.lax.Precision.HIGHEST)
        return y + b[None, :, None, None]
    h = x_nchw
    for w, b in params[:-1]:
        h = jax.nn.relu(conv(h, w, b))
    w, b = params[-1]
    noise = conv(h, w, b)
    return x_nchw - noise


if __name__ == "__main__":
    key = jax.random.PRNGKey(0)
    kx, kp = jax.random.split(key)

    # Small, module-consistent config: grayscale images, reduced depth/width.
    N, C, H, W = 2, 1, 16, 16
    NUM_LAYERS, FEATURES = 5, 32

    x = jax.random.normal(kx, (N, C, H, W), dtype=jnp.float32)
    params = init_dncnn_params(kp, in_channels=C, out_channels=C,
                               num_layers=NUM_LAYERS, features=FEATURES)
    ref = dncnn_reference(x, params)

    # Tighter regression gate: f32 matmuls / f32 inter-layer activations.
    # (5x tighter than the bf16 gate — catches layout/indexing bugs, which
    # produce O(0.1+) errors, while tolerating reduced-precision MXU passes.)
    fwd_f32 = jax.jit(functools.partial(dncnn_forward,
                                        matmul_dtype=jnp.float32))
    out_f32 = jax.block_until_ready(fwd_f32(x, params))
    assert out_f32.shape == x.shape, (out_f32.shape, x.shape)
    err_f32 = float(jnp.max(jnp.abs(out_f32 - ref)))
    assert jnp.allclose(out_f32, ref, atol=1e-2, rtol=1e-2), err_f32

    # Production dtype: bf16 matmuls + bf16 inter-layer activations; error
    # compounds over depth, hence the looser tolerance.
    fwd_bf16 = jax.jit(dncnn_forward)
    out_bf16 = jax.block_until_ready(fwd_bf16(x, params))
    assert out_bf16.shape == x.shape, (out_bf16.shape, x.shape)
    err_bf16 = float(jnp.max(jnp.abs(out_bf16 - ref)))
    assert jnp.allclose(out_bf16, ref, atol=5e-2, rtol=5e-2), err_bf16

    print("KERNEL_OK")
</pallas_src>

<mosaic_0001>
module attributes {stable_mosaic.version = 11 : i64} {
  func.func @_dncnn_fused_kernel(%arg0: i32, %arg1: memref<1x1x1024xf32, #tpu.memory_space<vmem>>, %arg2: memref<1x768xf32, #tpu.memory_space<vmem>>, %arg3: memref<32x9xf32, #tpu.memory_space<vmem>>, %arg4: memref<32x1xf32, #tpu.memory_space<vmem>>, %arg5: memref<32x288xf32, #tpu.memory_space<vmem>>, %arg6: memref<32x1xf32, #tpu.memory_space<vmem>>, %arg7: memref<32x288xf32, #tpu.memory_space<vmem>>, %arg8: memref<32x1xf32, #tpu.memory_space<vmem>>, %arg9: memref<32x288xf32, #tpu.memory_space<vmem>>, %arg10: memref<32x1xf32, #tpu.memory_space<vmem>>, %arg11: memref<1x288xf32, #tpu.memory_space<vmem>>, %arg12: memref<1x1xf32, #tpu.memory_space<vmem>>, %arg13: memref<1x1x768xf32, #tpu.memory_space<vmem>>, %arg14: memref<32x1024xf32, #tpu.memory_space<vmem>>, %arg15: memref<32x1024xf32, #tpu.memory_space<vmem>>, %arg16: memref<288x768xf32, #tpu.memory_space<vmem>>) attributes {dimension_semantics = [#tpu.dimension_semantics<parallel>], iteration_bounds = array<i64: 1>, scalar_prefetch = 0 : i64, scratch_operands = 3 : i64, tpu.core_type = #tpu.core_type<tc>, window_params = [{transform_indices = @transform_0, window_bounds = array<i64: 1, 1, 1024>}, {pipeline_mode = #tpu.pipeline_mode<synchronous>, transform_indices = @transform_1, window_bounds = array<i64: 1, 768>}, {pipeline_mode = #tpu.pipeline_mode<synchronous>, transform_indices = @transform_2, window_bounds = array<i64: 32, 9>}, {pipeline_mode = #tpu.pipeline_mode<synchronous>, transform_indices = @transform_3, window_bounds = array<i64: 32, 1>}, {pipeline_mode = #tpu.pipeline_mode<synchronous>, transform_indices = @transform_4, window_bounds = array<i64: 32, 288>}, {pipeline_mode = #tpu.pipeline_mode<synchronous>, transform_indices = @transform_5, window_bounds = array<i64: 32, 1>}, {pipeline_mode = #tpu.pipeline_mode<synchronous>, transform_indices = @transform_6, window_bounds = array<i64: 32, 288>}, {pipeline_mode = #tpu.pipeline_mode<synchronous>, transform_indices = @transform_7, window_bounds = array<i64: 32, 1>}, {pipeline_mode = #tpu.pipeline_mode<synchronous>, transform_indices = @transform_8, window_bounds = array<i64: 32, 288>}, {pipeline_mode = #tpu.pipeline_mode<synchronous>, transform_indices = @transform_9, window_bounds = array<i64: 32, 1>}, {pipeline_mode = #tpu.pipeline_mode<synchronous>, transform_indices = @transform_10, window_bounds = array<i64: 1, 288>}, {pipeline_mode = #tpu.pipeline_mode<synchronous>, transform_indices = @transform_11, window_bounds = array<i64: 1, 1>}, {transform_indices = @transform_12, window_bounds = array<i64: 1, 1, 768>}]} {
    %c0 = arith.constant 0 : index
    %c0_0 = arith.constant 0 : index
    %0 = vector.load %arg2[%c0, %c0_0] : memref<1x768xf32, #tpu.memory_space<vmem>>, vector<1x768xf32>
    %cst = arith.constant 0.000000e+00 : f32
    %1 = vector.broadcast %cst : f32 to vector<32x128xf32>
    %c0_1 = arith.constant 0 : index
    %c0_2 = arith.constant 0 : index
    %2 = vector.load %arg14[%c0_1, %c0_2] : memref<32x1024xf32, #tpu.memory_space<vmem>>, vector<32x128xf32>
    tpu.vector_store %arg14[%c0_1, %c0_2], %1 {strides = array<i32>} : memref<32x1024xf32, #tpu.memory_space<vmem>>, vector<32x128xf32>,
    %c0_3 = arith.constant 0 : index
    %c896 = arith.constant 896 : index
    %3 = vector.load %arg14[%c0_3, %c896] : memref<32x1024xf32, #tpu.memory_space<vmem>>, vector<32x128xf32>
    tpu.vector_store %arg14[%c0_3, %c896], %1 {strides = array<i32>} : memref<32x1024xf32, #tpu.memory_space<vmem>>, vector<32x128xf32>,
    %c0_4 = arith.constant 0 : index
    %c0_5 = arith.constant 0 : index
    %4 = vector.load %arg15[%c0_4, %c0_5] : memref<32x1024xf32, #tpu.memory_space<vmem>>, vector<32x128xf32>
    tpu.vector_store %arg15[%c0_4, %c0_5], %1 {strides = array<i32>} : memref<32x1024xf32, #tpu.memory_space<vmem>>, vector<32x128xf32>,
    %c0_6 = arith.constant 0 : index
    %c896_7 = arith.constant 896 : index
    %5 = vector.load %arg15[%c0_6, %c896_7] : memref<32x1024xf32, #tpu.memory_space<vmem>>, vector<32x128xf32>
    tpu.vector_store %arg15[%c0_6, %c896_7], %1 {strides = array<i32>} : memref<32x1024xf32, #tpu.memory_space<vmem>>, vector<32x128xf32>,
    %c0_8 = arith.constant 0 : index
    %c0_9 = arith.constant 0 : index
    %6 = vector.load %arg4[%c0_8, %c0_9] : memref<32x1xf32, #tpu.memory_space<vmem>>, vector<32x1xf32>
    %7 = vector.shape_cast %6 : vector<32x1xf32> to vector<32x1xf32>
    %8 = vector.broadcast %7 : vector<32x1xf32> to vector<32x768xf32>
    %c0_10 = arith.constant 0 : index
    %c0_11 = arith.constant 0 : index
    %c109 = arith.constant 109 : index
    %9 = vector.load %arg1[%c0_10, %c0_11, %c109] : memref<1x1x1024xf32, #tpu.memory_space<vmem>>, vector<1x1x768xf32>
    %10 = vector.shape_cast %9 : vector<1x1x768xf32> to vector<1x768xf32>
    %c0_12 = arith.constant 0 : index
    %c0_13 = arith.constant 0 : index
    %c110 = arith.constant 110 : index
    %11 = vector.load %arg1[%c0_12, %c0_13, %c110] : memref<1x1x1024xf32, #tpu.memory_space<vmem>>, vector<1x1x768xf32>
    %12 = vector.shape_cast %11 : vector<1x1x768xf32> to vector<1x768xf32>
    %c0_14 = arith.constant 0 : index
    %c0_15 = arith.constant 0 : index
    %c111 = arith.constant 111 : index
    %13 = vector.load %arg1[%c0_14, %c0_15, %c111] : memref<1x1x1024xf32, #tpu.memory_space<vmem>>, vector<1x1x768xf32>
    %14 = vector.shape_cast %13 : vector<1x1x768xf32> to vector<1x768xf32>
    %c0_16 = arith.constant 0 : index
    %c0_17 = arith.constant 0 : index
    %c127 = arith.constant 127 : index
    %15 = vector.load %arg1[%c0_16, %c0_17, %c127] : memref<1x1x1024xf32, #tpu.memory_space<vmem>>, vector<1x1x768xf32>
    %16 = vector.shape_cast %15 : vector<1x1x768xf32> to vector<1x768xf32>
    %c0_18 = arith.constant 0 : index
    %c0_19 = arith.constant 0 : index
    %c128 = arith.constant 128 : index
    %17 = vector.load %arg1[%c0_18, %c0_19, %c128] : memref<1x1x1024xf32, #tpu.memory_space<vmem>>, vector<1x1x768xf32>
    %18 = vector.shape_cast %17 : vector<1x1x768xf32> to vector<1x768xf32>
    %c0_20 = arith.constant 0 : index
    %c0_21 = arith.constant 0 : index
    %c129 = arith.constant 129 : index
    %19 = vector.load %arg1[%c0_20, %c0_21, %c129] : memref<1x1x1024xf32, #tpu.memory_space<vmem>>, vector<1x1x768xf32>
    %20 = vector.shape_cast %19 : vector<1x1x768xf32> to vector<1x768xf32>
    %c0_22 = arith.constant 0 : index
    %c0_23 = arith.constant 0 : index
    %c145 = arith.constant 145 : index
    %21 = vector.load %arg1[%c0_22, %c0_23, %c145] : memref<1x1x1024xf32, #tpu.memory_space<vmem>>, vector<1x1x768xf32>
    %22 = vector.shape_cast %21 : vector<1x1x768xf32> to vector<1x768xf32>
    %c0_24 = arith.constant 0 : index
    %c0_25 = arith.constant 0 : index
    %c146 = arith.constant 146 : index
    %23 = vector.load %arg1[%c0_24, %c0_25, %c146] : memref<1x1x1024xf32, #tpu.memory_space<vmem>>, vector<1x1x768xf32>
    %24 = vector.shape_cast %23 : vector<1x1x768xf32> to vector<1x768xf32>
    %c0_26 = arith.constant 0 : index
    %c0_27 = arith.constant 0 : index
    %c147 = arith.constant 147 : index
    %25 = vector.load %arg1[%c0_26, %c0_27, %c147] : memref<1x1x1024xf32, #tpu.memory_space<vmem>>, vector<1x1x768xf32>
    %26 = vector.shape_cast %25 : vector<1x1x768xf32> to vector<1x768xf32>
    %27 = tpu.concatenate %10, %12, %14, %16, %18, %20, %22, %24, %26 in 0 : vector<1x768xf32>, vector<1x768xf32>, vector<1x768xf32>, vector<1x768xf32>, vector<1x768xf32>, vector<1x768xf32>, vector<1x768xf32>, vector<1x768xf32>, vector<1x768xf32> -> vector<9x768xf32>
    %c0_28 = arith.constant 0 : index
    %c0_29 = arith.constant 0 : index
    %28 = vector.load %arg3[%c0_28, %c0_29] : memref<32x9xf32, #tpu.memory_space<vmem>>, vector<32x9xf32>
    %cst_30 = arith.constant dense<0.000000e+00> : vector<32x768xf32>
    %29 = tpu.matmul %28, %27, %cst_30 {dimension_numbers = #tpu.dot_dimension_numbers<[1], [0], [0], [1], [0, 0, 1, 1], [], []>} : vector<32x9xf32>, vector<9x768xf32>, vector<32x768xf32> -> vector<32x768xf32>
    %30 = arith.addf %8, %29 : vector<32x768xf32>
    %cst_31 = arith.constant 0.000000e+00 : f32
    %31 = vector.broadcast %cst_31 : f32 to vector<32x768xf32>
    %32 = arith.maximumf %30, %31 : vector<32x768xf32>
    %33 = vector.broadcast %0 : vector<1x768xf32> to vector<32x768xf32>
    %34 = arith.mulf %32, %33 : vector<32x768xf32>
    %c0_32 = arith.constant 0 : index
    %c128_33 = arith.constant 128 : index
    %35 = vector.load %arg14[%c0_32, %c128_33] : memref<32x1024xf32, #tpu.memory_space<vmem>>, vector<32x768xf32>
    tpu.vector_store %arg14[%c0_32, %c128_33], %34 {strides = array<i32>} : memref<32x1024xf32, #tpu.memory_space<vmem>>, vector<32x768xf32>,
    %c0_34 = arith.constant 0 : index
    %c0_35 = arith.constant 0 : index
    %36 = vector.load %arg6[%c0_34, %c0_35] : memref<32x1xf32, #tpu.memory_space<vmem>>, vector<32x1xf32>
    %37 = vector.shape_cast %36 : vector<32x1xf32> to vector<32x1xf32>
    %38 = vector.broadcast %37 : vector<32x1xf32> to vector<32x768xf32>
    %c0_36 = arith.constant 0 : index
    %c109_37 = arith.constant 109 : index
    %39 = vector.load %arg14[%c0_36, %c109_37] : memref<32x1024xf32, #tpu.memory_space<vmem>>, vector<32x768xf32>
    %c0_38 = arith.constant 0 : index
    %c0_39 = arith.constant 0 : index
    %40 = vector.load %arg16[%c0_38, %c0_39] : memref<288x768xf32, #tpu.memory_space<vmem>>, vector<32x768xf32>
    tpu.vector_store %arg16[%c0_38, %c0_39], %39 {strides = array<i32>} : memref<288x768xf32, #tpu.memory_space<vmem>>, vector<32x768xf32>,
    %c0_40 = arith.constant 0 : index
    %c110_41 = arith.constant 110 : index
    %41 = vector.load %arg14[%c0_40, %c110_41] : memref<32x1024xf32, #tpu.memory_space<vmem>>, vector<32x768xf32>
    %c32 = arith.constant 32 : index
    %c0_42 = arith.constant 0 : index
    %42 = vector.load %arg16[%c32, %c0_42] : memref<288x768xf32, #tpu.memory_space<vmem>>, vector<32x768xf32>
    tpu.vector_store %arg16[%c32, %c0_42], %41 {strides = array<i32>} : memref<288x768xf32, #tpu.memory_space<vmem>>, vector<32x768xf32>,
    %c0_43 = arith.constant 0 : index
    %c111_44 = arith.constant 111 : index
    %43 = vector.load %arg14[%c0_43, %c111_44] : memref<32x1024xf32, #tpu.memory_space<vmem>>, vector<32x768xf32>
    %c64 = arith.constant 64 : index
    %c0_45 = arith.constant 0 : index
    %44 = vector.load %arg16[%c64, %c0_45] : memref<288x768xf32, #tpu.memory_space<vmem>>, vector<32x768xf32>
    tpu.vector_store %arg16[%c64, %c0_45], %43 {strides = array<i32>} : memref<288x768xf32, #tpu.memory_space<vmem>>, vector<32x768xf32>,
    %c0_46 = arith.constant 0 : index
    %c127_47 = arith.constant 127 : index
    %45 = vector.load %arg14[%c0_46, %c127_47] : memref<32x1024xf32, #tpu.memory_space<vmem>>, vector<32x768xf32>
    %c96 = arith.constant 96 : index
    %c0_48 = arith.constant 0 : index
    %46 = vector.load %arg16[%c96, %c0_48] : memref<288x768xf32, #tpu.memory_space<vmem>>, vector<32x768xf32>
    tpu.vector_store %arg16[%c96, %c0_48], %45 {strides = array<i32>} : memref<288x768xf32, #tpu.memory_space<vmem>>, vector<32x768xf32>,
    %c0_49 = arith.constant 0 : index
    %c128_50 = arith.constant 128 : index
    %47 = vector.load %arg14[%c0_49, %c128_50] : memref<32x1024xf32, #tpu.memory_space<vmem>>, vector<32x768xf32>
    %c128_51 = arith.constant 128 : index
    %c0_52 = arith.constant 0 : index
    %48 = vector.load %arg16[%c128_51, %c0_52] : memref<288x768xf32, #tpu.memory_space<vmem>>, vector<32x768xf32>
    tpu.vector_store %arg16[%c128_51, %c0_52], %47 {strides = array<i32>} : memref<288x768xf32, #tpu.memory_space<vmem>>, vector<32x768xf32>,
    %c0_53 = arith.constant 0 : index
    %c129_54 = arith.constant 129 : index
    %49 = vector.load %arg14[%c0_53, %c129_54] : memref<32x1024xf32, #tpu.memory_space<vmem>>, vector<32x768xf32>
    %c160 = arith.constant 160 : index
    %c0_55 = arith.constant 0 : index
    %50 = vector.load %arg16[%c160, %c0_55] : memref<288x768xf32, #tpu.memory_space<vmem>>, vector<32x768xf32>
    tpu.vector_store %arg16[%c160, %c0_55], %49 {strides = array<i32>} : memref<288x768xf32, #tpu.memory_space<vmem>>, vector<32x768xf32>,
    %c0_56 = arith.constant 0 : index
    %c145_57 = arith.constant 145 : index
    %51 = vector.load %arg14[%c0_56, %c145_57] : memref<32x1024xf32, #tpu.memory_space<vmem>>, vector<32x768xf32>
    %c192 = arith.constant 192 : index
    %c0_58 = arith.constant 0 : index
    %52 = vector.load %arg16[%c192, %c0_58] : memref<288x768xf32, #tpu.memory_space<vmem>>, vector<32x768xf32>
    tpu.vector_store %arg16[%c192, %c0_58], %51 {strides = array<i32>} : memref<288x768xf32, #tpu.memory_space<vmem>>, vector<32x768xf32>,
    %c0_59 = arith.constant 0 : index
    %c146_60 = arith.constant 146 : index
    %53 = vector.load %arg14[%c0_59, %c146_60] : memref<32x1024xf32, #tpu.memory_space<vmem>>, vector<32x768xf32>
    %c224 = arith.constant 224 : index
    %c0_61 = arith.constant 0 : index
    %54 = vector.load %arg16[%c224, %c0_61] : memref<288x768xf32, #tpu.memory_space<vmem>>, vector<32x768xf32>
    tpu.vector_store %arg16[%c224, %c0_61], %53 {strides = array<i32>} : memref<288x768xf32, #tpu.memory_space<vmem>>, vector<32x768xf32>,
    %c0_62 = arith.constant 0 : index
    %c147_63 = arith.constant 147 : index
    %55 = vector.load %arg14[%c0_62, %c147_63] : memref<32x1024xf32, #tpu.memory_space<vmem>>, vector<32x768xf32>
    %c256 = arith.constant 256 : index
    %c0_64 = arith.constant 0 : index
    %56 = vector.load %arg16[%c256, %c0_64] : memref<288x768xf32, #tpu.memory_space<vmem>>, vector<32x768xf32>
    tpu.vector_store %arg16[%c256, %c0_64], %55 {strides = array<i32>} : memref<288x768xf32, #tpu.memory_space<vmem>>, vector<32x768xf32>,
    %c0_65 = arith.constant 0 : index
    %c0_66 = arith.constant 0 : index
    %57 = vector.load %arg16[%c0_65, %c0_66] : memref<288x768xf32, #tpu.memory_space<vmem>>, vector<288x768xf32>
    %c0_67 = arith.constant 0 : index
    %c0_68 = arith.constant 0 : index
    %58 = vector.load %arg5[%c0_67, %c0_68] : memref<32x288xf32, #tpu.memory_space<vmem>>, vector<32x288xf32>
    %cst_69 = arith.constant dense<0.000000e+00> : vector<32x768xf32>
    %59 = tpu.matmul %58, %57, %cst_69 {dimension_numbers = #tpu.dot_dimension_numbers<[1], [0], [0], [1], [0, 0, 1, 1], [], []>} : vector<32x288xf32>, vector<288x768xf32>, vector<32x768xf32> -> vector<32x768xf32>
    %60 = arith.addf %38, %59 : vector<32x768xf32>
    %cst_70 = arith.constant 0.000000e+00 : f32
    %61 = vector.broadcast %cst_70 : f32 to vector<32x768xf32>
    %62 = arith.maximumf %60, %61 : vector<32x768xf32>
    %63 = vector.broadcast %0 : vector<1x768xf32> to vector<32x768xf32>
    %64 = arith.mulf %62, %63 : vector<32x768xf32>
    %c0_71 = arith.constant 0 : index
    %c128_72 = arith.constant 128 : index
    %65 = vector.load %arg15[%c0_71, %c128_72] : memref<32x1024xf32, #tpu.memory_space<vmem>>, vector<32x768xf32>
    tpu.vector_store %arg15[%c0_71, %c128_72], %64 {strides = array<i32>} : memref<32x1024xf32, #tpu.memory_space<vmem>>, vector<32x768xf32>,
    %c0_73 = arith.constant 0 : index
    %c0_74 = arith.constant 0 : index
    %66 = vector.load %arg8[%c0_73, %c0_74] : memref<32x1xf32, #tpu.memory_space<vmem>>, vector<32x1xf32>
    %67 = vector.shape_cast %66 : vector<32x1xf32> to vector<32x1xf32>
    %68 = vector.broadcast %67 : vector<32x1xf32> to vector<32x768xf32>
    %c0_75 = arith.constant 0 : index
    %c109_76 = arith.constant 109 : index
    %69 = vector.load %arg15[%c0_75, %c109_76] : memref<32x1024xf32, #tpu.memory_space<vmem>>, vector<32x768xf32>
    %c0_77 = arith.constant 0 : index
    %c0_78 = arith.constant 0 : index
    %70 = vector.load %arg16[%c0_77, %c0_78] : memref<288x768xf32, #tpu.memory_space<vmem>>, vector<32x768xf32>
    tpu.vector_store %arg16[%c0_77, %c0_78], %69 {strides = array<i32>} : memref<288x768xf32, #tpu.memory_space<vmem>>, vector<32x768xf32>,
    %c0_79 = arith.constant 0 : index
    %c110_80 = arith.constant 110 : index
    %71 = vector.load %arg15[%c0_79, %c110_80] : memref<32x1024xf32, #tpu.memory_space<vmem>>, vector<32x768xf32>
    %c32_81 = arith.constant 32 : index
    %c0_82 = arith.constant 0 : index
    %72 = vector.load %arg16[%c32_81, %c0_82] : memref<288x768xf32, #tpu.memory_space<vmem>>, vector<32x768xf32>
    tpu.vector_store %arg16[%c32_81, %c0_82], %71 {strides = array<i32>} : memref<288x768xf32, #tpu.memory_space<vmem>>, vector<32x768xf32>,
    %c0_83 = arith.constant 0 : index
    %c111_84 = arith.constant 111 : index
    %73 = vector.load %arg15[%c0_83, %c111_84] : memref<32x1024xf32, #tpu.memory_space<vmem>>, vector<32x768xf32>
    %c64_85 = arith.constant 64 : index
    %c0_86 = arith.constant 0 : index
    %74 = vector.load %arg16[%c64_85, %c0_86] : memref<288x768xf32, #tpu.memory_space<vmem>>, vector<32x768xf32>
    tpu.vector_store %arg16[%c64_85, %c0_86], %73 {strides = array<i32>} : memref<288x768xf32, #tpu.memory_space<vmem>>, vector<32x768xf32>,
    %c0_87 = arith.constant 0 : index
    %c127_88 = arith.constant 127 : index
    %75 = vector.load %arg15[%c0_87, %c127_88] : memref<32x1024xf32, #tpu.memory_space<vmem>>, vector<32x768xf32>
    %c96_89 = arith.constant 96 : index
    %c0_90 = arith.constant 0 : index
    %76 = vector.load %arg16[%c96_89, %c0_90] : memref<288x768xf32, #tpu.memory_space<vmem>>, vector<32x768xf32>
    tpu.vector_store %arg16[%c96_89, %c0_90], %75 {strides = array<i32>} : memref<288x768xf32, #tpu.memory_space<vmem>>, vector<32x768xf32>,
    %c0_91 = arith.constant 0 : index
    %c128_92 = arith.constant 128 : index
    %77 = vector.load %arg15[%c0_91, %c128_92] : memref<32x1024xf32, #tpu.memory_space<vmem>>, vector<32x768xf32>
    %c128_93 = arith.constant 128 : index
    %c0_94 = arith.constant 0 : index
    %78 = vector.load %arg16[%c128_93, %c0_94] : memref<288x768xf32, #tpu.memory_space<vmem>>, vector<32x768xf32>
    tpu.vector_store %arg16[%c128_93, %c0_94], %77 {strides = array<i32>} : memref<288x768xf32, #tpu.memory_space<vmem>>, vector<32x768xf32>,
    %c0_95 = arith.constant 0 : index
    %c129_96 = arith.constant 129 : index
    %79 = vector.load %arg15[%c0_95, %c129_96] : memref<32x1024xf32, #tpu.memory_space<vmem>>, vector<32x768xf32>
    %c160_97 = arith.constant 160 : index
    %c0_98 = arith.constant 0 : index
    %80 = vector.load %arg16[%c160_97, %c0_98] : memref<288x768xf32, #tpu.memory_space<vmem>>, vector<32x768xf32>
    tpu.vector_store %arg16[%c160_97, %c0_98], %79 {strides = array<i32>} : memref<288x768xf32, #tpu.memory_space<vmem>>, vector<32x768xf32>,
    %c0_99 = arith.constant 0 : index
    %c145_100 = arith.constant 145 : index
    %81 = vector.load %arg15[%c0_99, %c145_100] : memref<32x1024xf32, #tpu.memory_space<vmem>>, vector<32x768xf32>
    %c192_101 = arith.constant 192 : index
    %c0_102 = arith.constant 0 : index
    %82 = vector.load %arg16[%c192_101, %c0_102] : memref<288x768xf32, #tpu.memory_space<vmem>>, vector<32x768xf32>
    tpu.vector_store %arg16[%c192_101, %c0_102], %81 {strides = array<i32>} : memref<288x768xf32, #tpu.memory_space<vmem>>, vector<32x768xf32>,
    %c0_103 = arith.constant 0 : index
    %c146_104 = arith.constant 146 : index
    %83 = vector.load %arg15[%c0_103, %c146_104] : memref<32x1024xf32, #tpu.memory_space<vmem>>, vector<32x768xf32>
    %c224_105 = arith.constant 224 : index
    %c0_106 = arith.constant 0 : index
    %84 = vector.load %arg16[%c224_105, %c0_106] : memref<288x768xf32, #tpu.memory_space<vmem>>, vector<32x768xf32>
    tpu.vector_store %arg16[%c224_105, %c0_106], %83 {strides = array<i32>} : memref<288x768xf32, #tpu.memory_space<vmem>>, vector<32x768xf32>,
    %c0_107 = arith.constant 0 : index
    %c147_108 = arith.constant 147 : index
    %85 = vector.load %arg15[%c0_107, %c147_108] : memref<32x1024xf32, #tpu.memory_space<vmem>>, vector<32x768xf32>
    %c256_109 = arith.constant 256 : index
    %c0_110 = arith.constant 0 : index
    %86 = vector.load %arg16[%c256_109, %c0_110] : memref<288x768xf32, #tpu.memory_space<vmem>>, vector<32x768xf32>
    tpu.vector_store %arg16[%c256_109, %c0_110], %85 {strides = array<i32>} : memref<288x768xf32, #tpu.memory_space<vmem>>, vector<32x768xf32>,
    %c0_111 = arith.constant 0 : index
    %c0_112 = arith.constant 0 : index
    %87 = vector.load %arg16[%c0_111, %c0_112] : memref<288x768xf32, #tpu.memory_space<vmem>>, vector<288x768xf32>
    %c0_113 = arith.constant 0 : index
    %c0_114 = arith.constant 0 : index
    %88 = vector.load %arg7[%c0_113, %c0_114] : memref<32x288xf32, #tpu.memory_space<vmem>>, vector<32x288xf32>
    %cst_115 = arith.constant dense<0.000000e+00> : vector<32x768xf32>
    %89 = tpu.matmul %88, %87, %cst_115 {dimension_numbers = #tpu.dot_dimension_numbers<[1], [0], [0], [1], [0, 0, 1, 1], [], []>} : vector<32x288xf32>, vector<288x768xf32>, vector<32x768xf32> -> vector<32x768xf32>
    %90 = arith.addf %68, %89 : vector<32x768xf32>
    %cst_116 = arith.constant 0.000000e+00 : f32
    %91 = vector.broadcast %cst_116 : f32 to vector<32x768xf32>
    %92 = arith.maximumf %90, %91 : vector<32x768xf32>
    %93 = vector.broadcast %0 : vector<1x768xf32> to vector<32x768xf32>
    %94 = arith.mulf %92, %93 : vector<32x768xf32>
    %c0_117 = arith.constant 0 : index
    %c128_118 = arith.constant 128 : index
    %95 = vector.load %arg14[%c0_117, %c128_118] : memref<32x1024xf32, #tpu.memory_space<vmem>>, vector<32x768xf32>
    tpu.vector_store %arg14[%c0_117, %c128_118], %94 {strides = array<i32>} : memref<32x1024xf32, #tpu.memory_space<vmem>>, vector<32x768xf32>,
    %c0_119 = arith.constant 0 : index
    %c0_120 = arith.constant 0 : index
    %96 = vector.load %arg10[%c0_119, %c0_120] : memref<32x1xf32, #tpu.memory_space<vmem>>, vector<32x1xf32>
    %97 = vector.shape_cast %96 : vector<32x1xf32> to vector<32x1xf32>
    %98 = vector.broadcast %97 : vector<32x1xf32> to vector<32x768xf32>
    %c0_121 = arith.constant 0 : index
    %c109_122 = arith.constant 109 : index
    %99 = vector.load %arg14[%c0_121, %c109_122] : memref<32x1024xf32, #tpu.memory_space<vmem>>, vector<32x768xf32>
    %c0_123 = arith.constant 0 : index
    %c0_124 = arith.constant 0 : index
    %100 = vector.load %arg16[%c0_123, %c0_124] : memref<288x768xf32, #tpu.memory_space<vmem>>, vector<32x768xf32>
    tpu.vector_store %arg16[%c0_123, %c0_124], %99 {strides = array<i32>} : memref<288x768xf32, #tpu.memory_space<vmem>>, vector<32x768xf32>,
    %c0_125 = arith.constant 0 : index
    %c110_126 = arith.constant 110 : index
    %101 = vector.load %arg14[%c0_125, %c110_126] : memref<32x1024xf32, #tpu.memory_space<vmem>>, vector<32x768xf32>
    %c32_127 = arith.constant 32 : index
    %c0_128 = arith.constant 0 : index
    %102 = vector.load %arg16[%c32_127, %c0_128] : memref<288x768xf32, #tpu.memory_space<vmem>>, vector<32x768xf32>
    tpu.vector_store %arg16[%c32_127, %c0_128], %101 {strides = array<i32>} : memref<288x768xf32, #tpu.memory_space<vmem>>, vector<32x768xf32>,
    %c0_129 = arith.constant 0 : index
    %c111_130 = arith.constant 111 : index
    %103 = vector.load %arg14[%c0_129, %c111_130] : memref<32x1024xf32, #tpu.memory_space<vmem>>, vector<32x768xf32>
    %c64_131 = arith.constant 64 : index
    %c0_132 = arith.constant 0 : index
    %104 = vector.load %arg16[%c64_131, %c0_132] : memref<288x768xf32, #tpu.memory_space<vmem>>, vector<32x768xf32>
    tpu.vector_store %arg16[%c64_131, %c0_132], %103 {strides = array<i32>} : memref<288x768xf32, #tpu.memory_space<vmem>>, vector<32x768xf32>,
    %c0_133 = arith.constant 0 : index
    %c127_134 = arith.constant 127 : index
    %105 = vector.load %arg14[%c0_133, %c127_134] : memref<32x1024xf32, #tpu.memory_space<vmem>>, vector<32x768xf32>
    %c96_135 = arith.constant 96 : index
    %c0_136 = arith.constant 0 : index
    %106 = vector.load %arg16[%c96_135, %c0_136] : memref<288x768xf32, #tpu.memory_space<vmem>>, vector<32x768xf32>
    tpu.vector_store %arg16[%c96_135, %c0_136], %105 {strides = array<i32>} : memref<288x768xf32, #tpu.memory_space<vmem>>, vector<32x768xf32>,
    %c0_137 = arith.constant 0 : index
    %c128_138 = arith.constant 128 : index
    %107 = vector.load %arg14[%c0_137, %c128_138] : memref<32x1024xf32, #tpu.memory_space<vmem>>, vector<32x768xf32>
    %c128_139 = arith.constant 128 : index
    %c0_140 = arith.constant 0 : index
    %108 = vector.load %arg16[%c128_139, %c0_140] : memref<288x768xf32, #tpu.memory_space<vmem>>, vector<32x768xf32>
    tpu.vector_store %arg16[%c128_139, %c0_140], %107 {strides = array<i32>} : memref<288x768xf32, #tpu.memory_space<vmem>>, vector<32x768xf32>,
    %c0_141 = arith.constant 0 : index
    %c129_142 = arith.constant 129 : index
    %109 = vector.load %arg14[%c0_141, %c129_142] : memref<32x1024xf32, #tpu.memory_space<vmem>>, vector<32x768xf32>
    %c160_143 = arith.constant 160 : index
    %c0_144 = arith.constant 0 : index
    %110 = vector.load %arg16[%c160_143, %c0_144] : memref<288x768xf32, #tpu.memory_space<vmem>>, vector<32x768xf32>
    tpu.vector_store %arg16[%c160_143, %c0_144], %109 {strides = array<i32>} : memref<288x768xf32, #tpu.memory_space<vmem>>, vector<32x768xf32>,
    %c0_145 = arith.constant 0 : index
    %c145_146 = arith.constant 145 : index
    %111 = vector.load %arg14[%c0_145, %c145_146] : memref<32x1024xf32, #tpu.memory_space<vmem>>, vector<32x768xf32>
    %c192_147 = arith.constant 192 : index
    %c0_148 = arith.constant 0 : index
    %112 = vector.load %arg16[%c192_147, %c0_148] : memref<288x768xf32, #tpu.memory_space<vmem>>, vector<32x768xf32>
    tpu.vector_store %arg16[%c192_147, %c0_148], %111 {strides = array<i32>} : memref<288x768xf32, #tpu.memory_space<vmem>>, vector<32x768xf32>,
    %c0_149 = arith.constant 0 : index
    %c146_150 = arith.constant 146 : index
    %113 = vector.load %arg14[%c0_149, %c146_150] : memref<32x1024xf32, #tpu.memory_space<vmem>>, vector<32x768xf32>
    %c224_151 = arith.constant 224 : index
    %c0_152 = arith.constant 0 : index
    %114 = vector.load %arg16[%c224_151, %c0_152] : memref<288x768xf32, #tpu.memory_space<vmem>>, vector<32x768xf32>
    tpu.vector_store %arg16[%c224_151, %c0_152], %113 {strides = array<i32>} : memref<288x768xf32, #tpu.memory_space<vmem>>, vector<32x768xf32>,
    %c0_153 = arith.constant 0 : index
    %c147_154 = arith.constant 147 : index
    %115 = vector.load %arg14[%c0_153, %c147_154] : memref<32x1024xf32, #tpu.memory_space<vmem>>, vector<32x768xf32>
    %c256_155 = arith.constant 256 : index
    %c0_156 = arith.constant 0 : index
    %116 = vector.load %arg16[%c256_155, %c0_156] : memref<288x768xf32, #tpu.memory_space<vmem>>, vector<32x768xf32>
    tpu.vector_store %arg16[%c256_155, %c0_156], %115 {strides = array<i32>} : memref<288x768xf32, #tpu.memory_space<vmem>>, vector<32x768xf32>,
    %c0_157 = arith.constant 0 : index
    %c0_158 = arith.constant 0 : index
    %117 = vector.load %arg16[%c0_157, %c0_158] : memref<288x768xf32, #tpu.memory_space<vmem>>, vector<288x768xf32>
    %c0_159 = arith.constant 0 : index
    %c0_160 = arith.constant 0 : index
    %118 = vector.load %arg9[%c0_159, %c0_160] : memref<32x288xf32, #tpu.memory_space<vmem>>, vector<32x288xf32>
    %cst_161 = arith.constant dense<0.000000e+00> : vector<32x768xf32>
    %119 = tpu.matmul %118, %117, %cst_161 {dimension_numbers = #tpu.dot_dimension_numbers<[1], [0], [0], [1], [0, 0, 1, 1], [], []>} : vector<32x288xf32>, vector<288x768xf32>, vector<32x768xf32> -> vector<32x768xf32>
    %120 = arith.addf %98, %119 : vector<32x768xf32>
    %cst_162 = arith.constant 0.000000e+00 : f32
    %121 = vector.broadcast %cst_162 : f32 to vector<32x768xf32>
    %122 = arith.maximumf %120, %121 : vector<32x768xf32>
    %123 = vector.broadcast %0 : vector<1x768xf32> to vector<32x768xf32>
    %124 = arith.mulf %122, %123 : vector<32x768xf32>
    %c0_163 = arith.constant 0 : index
    %c128_164 = arith.constant 128 : index
    %125 = vector.load %arg15[%c0_163, %c128_164] : memref<32x1024xf32, #tpu.memory_space<vmem>>, vector<32x768xf32>
    tpu.vector_store %arg15[%c0_163, %c128_164], %124 {strides = array<i32>} : memref<32x1024xf32, #tpu.memory_space<vmem>>, vector<32x768xf32>,
    %c0_165 = arith.constant 0 : index
    %c0_166 = arith.constant 0 : index
    %126 = vector.load %arg12[%c0_165, %c0_166] : memref<1x1xf32, #tpu.memory_space<vmem>>, vector<1x1xf32>
    %127 = vector.shape_cast %126 : vector<1x1xf32> to vector<1x1xf32>
    %128 = vector.broadcast %127 : vector<1x1xf32> to vector<1x768xf32>
    %c0_167 = arith.constant 0 : index
    %c109_168 = arith.constant 109 : index
    %129 = vector.load %arg15[%c0_167, %c109_168] : memref<32x1024xf32, #tpu.memory_space<vmem>>, vector<32x768xf32>
    %c0_169 = arith.constant 0 : index
    %c0_170 = arith.constant 0 : index
    %130 = vector.load %arg16[%c0_169, %c0_170] : memref<288x768xf32, #tpu.memory_space<vmem>>, vector<32x768xf32>
    tpu.vector_store %arg16[%c0_169, %c0_170], %129 {strides = array<i32>} : memref<288x768xf32, #tpu.memory_space<vmem>>, vector<32x768xf32>,
    %c0_171 = arith.constant 0 : index
    %c110_172 = arith.constant 110 : index
    %131 = vector.load %arg15[%c0_171, %c110_172] : memref<32x1024xf32, #tpu.memory_space<vmem>>, vector<32x768xf32>
    %c32_173 = arith.constant 32 : index
    %c0_174 = arith.constant 0 : index
    %132 = vector.load %arg16[%c32_173, %c0_174] : memref<288x768xf32, #tpu.memory_space<vmem>>, vector<32x768xf32>
    tpu.vector_store %arg16[%c32_173, %c0_174], %131 {strides = array<i32>} : memref<288x768xf32, #tpu.memory_space<vmem>>, vector<32x768xf32>,
    %c0_175 = arith.constant 0 : index
    %c111_176 = arith.constant 111 : index
    %133 = vector.load %arg15[%c0_175, %c111_176] : memref<32x1024xf32, #tpu.memory_space<vmem>>, vector<32x768xf32>
    %c64_177 = arith.constant 64 : index
    %c0_178 = arith.constant 0 : index
    %134 = vector.load %arg16[%c64_177, %c0_178] : memref<288x768xf32, #tpu.memory_space<vmem>>, vector<32x768xf32>
    tpu.vector_store %arg16[%c64_177, %c0_178], %133 {strides = array<i32>} : memref<288x768xf32, #tpu.memory_space<vmem>>, vector<32x768xf32>,
    %c0_179 = arith.constant 0 : index
    %c127_180 = arith.constant 127 : index
    %135 = vector.load %arg15[%c0_179, %c127_180] : memref<32x1024xf32, #tpu.memory_space<vmem>>, vector<32x768xf32>
    %c96_181 = arith.constant 96 : index
    %c0_182 = arith.constant 0 : index
    %136 = vector.load %arg16[%c96_181, %c0_182] : memref<288x768xf32, #tpu.memory_space<vmem>>, vector<32x768xf32>
    tpu.vector_store %arg16[%c96_181, %c0_182], %135 {strides = array<i32>} : memref<288x768xf32, #tpu.memory_space<vmem>>, vector<32x768xf32>,
    %c0_183 = arith.constant 0 : index
    %c128_184 = arith.constant 128 : index
    %137 = vector.load %arg15[%c0_183, %c128_184] : memref<32x1024xf32, #tpu.memory_space<vmem>>, vector<32x768xf32>
    %c128_185 = arith.constant 128 : index
    %c0_186 = arith.constant 0 : index
    %138 = vector.load %arg16[%c128_185, %c0_186] : memref<288x768xf32, #tpu.memory_space<vmem>>, vector<32x768xf32>
    tpu.vector_store %arg16[%c128_185, %c0_186], %137 {strides = array<i32>} : memref<288x768xf32, #tpu.memory_space<vmem>>, vector<32x768xf32>,
    %c0_187 = arith.constant 0 : index
    %c129_188 = arith.constant 129 : index
    %139 = vector.load %arg15[%c0_187, %c129_188] : memref<32x1024xf32, #tpu.memory_space<vmem>>, vector<32x768xf32>
    %c160_189 = arith.constant 160 : index
    %c0_190 = arith.constant 0 : index
    %140 = vector.load %arg16[%c160_189, %c0_190] : memref<288x768xf32, #tpu.memory_space<vmem>>, vector<32x768xf32>
    tpu.vector_store %arg16[%c160_189, %c0_190], %139 {strides = array<i32>} : memref<288x768xf32, #tpu.memory_space<vmem>>, vector<32x768xf32>,
    %c0_191 = arith.constant 0 : index
    %c145_192 = arith.constant 145 : index
    %141 = vector.load %arg15[%c0_191, %c145_192] : memref<32x1024xf32, #tpu.memory_space<vmem>>, vector<32x768xf32>
    %c192_193 = arith.constant 192 : index
    %c0_194 = arith.constant 0 : index
    %142 = vector.load %arg16[%c192_193, %c0_194] : memref<288x768xf32, #tpu.memory_space<vmem>>, vector<32x768xf32>
    tpu.vector_store %arg16[%c192_193, %c0_194], %141 {strides = array<i32>} : memref<288x768xf32, #tpu.memory_space<vmem>>, vector<32x768xf32>,
    %c0_195 = arith.constant 0 : index
    %c146_196 = arith.constant 146 : index
    %143 = vector.load %arg15[%c0_195, %c146_196] : memref<32x1024xf32, #tpu.memory_space<vmem>>, vector<32x768xf32>
    %c224_197 = arith.constant 224 : index
    %c0_198 = arith.constant 0 : index
    %144 = vector.load %arg16[%c224_197, %c0_198] : memref<288x768xf32, #tpu.memory_space<vmem>>, vector<32x768xf32>
    tpu.vector_store %arg16[%c224_197, %c0_198], %143 {strides = array<i32>} : memref<288x768xf32, #tpu.memory_space<vmem>>, vector<32x768xf32>,
    %c0_199 = arith.constant 0 : index
    %c147_200 = arith.constant 147 : index
    %145 = vector.load %arg15[%c0_199, %c147_200] : memref<32x1024xf32, #tpu.memory_space<vmem>>, vector<32x768xf32>
    %c256_201 = arith.constant 256 : index
    %c0_202 = arith.constant 0 : index
    %146 = vector.load %arg16[%c256_201, %c0_202] : memref<288x768xf32, #tpu.memory_space<vmem>>, vector<32x768xf32>
    tpu.vector_store %arg16[%c256_201, %c0_202], %145 {strides = array<i32>} : memref<288x768xf32, #tpu.memory_space<vmem>>, vector<32x768xf32>,
    %c0_203 = arith.constant 0 : index
    %c0_204 = arith.constant 0 : index
    %147 = vector.load %arg16[%c0_203, %c0_204] : memref<288x768xf32, #tpu.memory_space<vmem>>, vector<288x768xf32>
    %c0_205 = arith.constant 0 : index
    %c0_206 = arith.constant 0 : index
    %148 = vector.load %arg11[%c0_205, %c0_206] : memref<1x288xf32, #tpu.memory_space<vmem>>, vector<1x288xf32>
    %cst_207 = arith.constant dense<0.000000e+00> : vector<1x768xf32>
    %149 = tpu.matmul %148, %147, %cst_207 {dimension_numbers = #tpu.dot_dimension_numbers<[1], [0], [0], [1], [0, 0, 1, 1], [], []>} : vector<1x288xf32>, vector<288x768xf32>, vector<1x768xf32> -> vector<1x768xf32>
    %150 = arith.addf %128, %149 : vector<1x768xf32>
    %c0_208 = arith.constant 0 : index
    %c0_209 = arith.constant 0 : index
    %c128_210 = arith.constant 128 : index
    %151 = vector.load %arg1[%c0_208, %c0_209, %c128_210] : memref<1x1x1024xf32, #tpu.memory_space<vmem>>, vector<1x1x768xf32>
    %152 = vector.shape_cast %151 : vector<1x1x768xf32> to vector<1x768xf32>
    %153 = arith.subf %152, %150 : vector<1x768xf32>
    %c0_211 = arith.constant 0 : index
    %c0_212 = arith.constant 0 : index
    %c0_213 = arith.constant 0 : index
    %154 = vector.load %arg13[%c0_211, %c0_212, %c0_213] : memref<1x1x768xf32, #tpu.memory_space<vmem>>, vector<1x1x768xf32>
    %155 = vector.shape_cast %154 : vector<1x1x768xf32> to vector<1x768xf32>
    %156 = vector.shape_cast %153 : vector<1x768xf32> to vector<1x1x768xf32>
    tpu.vector_store %arg13[%c0_211, %c0_212, %c0_213], %156 {strides = array<i32>} : memref<1x1x768xf32, #tpu.memory_space<vmem>>, vector<1x1x768xf32>,
    return
  }
  func.func @transform_0(%arg0: i32) -> (i32, i32, i32) {
    %c0_i32 = arith.constant 0 : i32
    %c0_i32_0 = arith.constant 0 : i32
    %c0_i32_1 = arith.constant 0 : i32
    return %arg0, %c0_i32, %c0_i32_0 : i32, i32, i32
  }
  func.func @transform_1(%arg0: i32) -> (i32, i32) {
    %c0_i32 = arith.constant 0 : i32
    %c0_i32_0 = arith.constant 0 : i32
    %c0_i32_1 = arith.constant 0 : i32
    return %c0_i32, %c0_i32_0 : i32, i32
  }
  func.func @transform_2(%arg0: i32) -> (i32, i32) {
    %c0_i32 = arith.constant 0 : i32
    %c0_i32_0 = arith.constant 0 : i32
    %c0_i32_1 = arith.constant 0 : i32
    return %c0_i32, %c0_i32_0 : i32, i32
  }
  func.func @transform_3(%arg0: i32) -> (i32, i32) {
    %c0_i32 = arith.constant 0 : i32
    %c0_i32_0 = arith.constant 0 : i32
    %c0_i32_1 = arith.constant 0 : i32
    return %c0_i32, %c0_i32_0 : i32, i32
  }
  func.func @transform_4(%arg0: i32) -> (i32, i32) {
    %c0_i32 = arith.constant 0 : i32
    %c0_i32_0 = arith.constant 0 : i32
    %c0_i32_1 = arith.constant 0 : i32
    return %c0_i32, %c0_i32_0 : i32, i32
  }
  func.func @transform_5(%arg0: i32) -> (i32, i32) {
    %c0_i32 = arith.constant 0 : i32
    %c0_i32_0 = arith.constant 0 : i32
    %c0_i32_1 = arith.constant 0 : i32
    return %c0_i32, %c0_i32_0 : i32, i32
  }
  func.func @transform_6(%arg0: i32) -> (i32, i32) {
    %c0_i32 = arith.constant 0 : i32
    %c0_i32_0 = arith.constant 0 : i32
    %c0_i32_1 = arith.constant 0 : i32
    return %c0_i32, %c0_i32_0 : i32, i32
  }
  func.func @transform_7(%arg0: i32) -> (i32, i32) {
    %c0_i32 = arith.constant 0 : i32
    %c0_i32_0 = arith.constant 0 : i32
    %c0_i32_1 = arith.constant 0 : i32
    return %c0_i32, %c0_i32_0 : i32, i32
  }
  func.func @transform_8(%arg0: i32) -> (i32, i32) {
    %c0_i32 = arith.constant 0 : i32
    %c0_i32_0 = arith.constant 0 : i32
    %c0_i32_1 = arith.constant 0 : i32
    return %c0_i32, %c0_i32_0 : i32, i32
  }
  func.func @transform_9(%arg0: i32) -> (i32, i32) {
    %c0_i32 = arith.constant 0 : i32
    %c0_i32_0 = arith.constant 0 : i32
    %c0_i32_1 = arith.constant 0 : i32
    return %c0_i32, %c0_i32_0 : i32, i32
  }
  func.func @transform_10(%arg0: i32) -> (i32, i32) {
    %c0_i32 = arith.constant 0 : i32
    %c0_i32_0 = arith.constant 0 : i32
    %c0_i32_1 = arith.constant 0 : i32
    return %c0_i32, %c0_i32_0 : i32, i32
  }
  func.func @transform_11(%arg0: i32) -> (i32, i32) {
    %c0_i32 = arith.constant 0 : i32
    %c0_i32_0 = arith.constant 0 : i32
    %c0_i32_1 = arith.constant 0 : i32
    return %c0_i32, %c0_i32_0 : i32, i32
  }
  func.func @transform_12(%arg0: i32) -> (i32, i32, i32) {
    %c0_i32 = arith.constant 0 : i32
    %c0_i32_0 = arith.constant 0 : i32
    %c0_i32_1 = arith.constant 0 : i32
    return %arg0, %c0_i32, %c0_i32_0 : i32, i32, i32
  }
}

</mosaic_0001>

<llo_original>
// kernel: dncnn_forward.1
$region0: #{dncnn_forward.1}
  #allocation0 [shape = 'u32[]', space=smem, size = 0x4, offset = 0x4, fixed_abs, tag = 'smem constant byte address 0x4 - core index']
  #allocation1 [shape = 'u32[144,128]{1,0:T(1,128)}', space=vmem, size = 0x12000, scoped, tag = 'internal scratch']
  #allocation2 [shape = 'f32[32,1024]{1,0:T(8,128)}', space=vmem, size = 0x20000, scoped, tag = 'scratch operand']
  #allocation3 [shape = 'f32[32,1024]{1,0:T(8,128)}', space=vmem, size = 0x20000, scoped, tag = 'scratch operand']
  #allocation4 [shape = 'f32[288,768]{1,0:T(8,128)}', space=vmem, size = 0xd8000, scoped, tag = 'scratch operand']
  #allocation5 [shape = 'f32[1,1]{1,0:T(1,128)S(1)}', space=vmem, size = 0x200, scoped, tag = 'scoped memory for dncnn_forward.1']
  %s0 = inlined_call_operand.vmem [shape: f32[1,1,1024], index: 0, kind: input, shape index: {}]
  %s1 = inlined_call_operand.vmem [shape: f32[1,768], index: 1, kind: input, shape index: {}]
  %s2 = inlined_call_operand.vmem [shape: f32[32,9], index: 2, kind: input, shape index: {}]
  %s3 = inlined_call_operand.vmem [shape: f32[32,1], index: 3, kind: input, shape index: {}]
  %s4 = inlined_call_operand.vmem [shape: f32[32,288], index: 4, kind: input, shape index: {}]
  %s5 = inlined_call_operand.vmem [shape: f32[32,1], index: 5, kind: input, shape index: {}]
  %s6 = inlined_call_operand.vmem [shape: f32[32,288], index: 6, kind: input, shape index: {}]
  %s7 = inlined_call_operand.vmem [shape: f32[32,1], index: 7, kind: input, shape index: {}]
  %s8 = inlined_call_operand.vmem [shape: f32[32,288], index: 8, kind: input, shape index: {}]
  %s9 = inlined_call_operand.vmem [shape: f32[32,1], index: 9, kind: input, shape index: {}]
  %s10 = inlined_call_operand.vmem [shape: f32[1,288], index: 10, kind: input, shape index: {}]
  %s11 = inlined_call_operand.<no memory space> [shape: f32[1,1], index: 11, kind: input, shape index: {}]
  %s12 = inlined_call_operand.vmem [shape: f32[1,1,768], index: 12, kind: output, shape index: {}]
  %s13 = sld [smem:[#allocation0]]
  $region58: #{dncnn_forward.1} parent=0
    _
  %s15 = ssub.s32 1, %s13
  %s16 = scalar_select 0, %s15, %s13
  %v17 = vstv %s11
  %18 = vst [vmem:[#allocation5] sm:$0x1] %v17
  // Predicated region
  $region2: #{dncnn_forward.1} parent=0 // pred_check
    _
  $region3: #{dncnn_forward.1} parent=0 // pred_check_branch
    %20 = sbr.rel (0) target = $region5
  $region4: #{dncnn_forward.1} parent=0 // pred_region
    _
  $region5: #{dncnn_forward.1} parent=0 // pred_fallthru
    _
  // Predicated region
  $region6: #{dncnn_forward.1} parent=0 // pred_check
    _
  $region7: #{dncnn_forward.1} parent=0 // pred_check_branch
    %22 = sbr.rel (0) target = $region9
  $region8: #{dncnn_forward.1} parent=0 // pred_region
    _
  $region9: #{dncnn_forward.1} parent=0 // pred_fallthru
    _
  // Predicated region
  $region10: #{dncnn_forward.1} parent=0 // pred_check
    _
  $region11: #{dncnn_forward.1} parent=0 // pred_check_branch
    %24 = sbr.rel (0) target = $region13
  $region12: #{dncnn_forward.1} parent=0 // pred_region
    _
  $region13: #{dncnn_forward.1} parent=0 // pred_fallthru
    _
  // Predicated region
  $region14: #{dncnn_forward.1} parent=0 // pred_check
    _
  $region15: #{dncnn_forward.1} parent=0 // pred_check_branch
    %26 = sbr.rel (0) target = $region17
  $region16: #{dncnn_forward.1} parent=0 // pred_region
    _
  $region17: #{dncnn_forward.1} parent=0 // pred_fallthru
    _
  // Predicated region
  $region18: #{dncnn_forward.1} parent=0 // pred_check
    _
  $region19: #{dncnn_forward.1} parent=0 // pred_check_branch
    %28 = sbr.rel (0) target = $region21
  $region20: #{dncnn_forward.1} parent=0 // pred_region
    _
  $region21: #{dncnn_forward.1} parent=0 // pred_fallthru
    _
  // Predicated region
  $region22: #{dncnn_forward.1} parent=0 // pred_check
    _
  $region23: #{dncnn_forward.1} parent=0 // pred_check_branch
    %30 = sbr.rel (0) target = $region25
  $region24: #{dncnn_forward.1} parent=0 // pred_region
    _
  $region25: #{dncnn_forward.1} parent=0 // pred_fallthru
    _
  // Predicated region
  $region26: #{dncnn_forward.1} parent=0 // pred_check
    _
  $region27: #{dncnn_forward.1} parent=0 // pred_check_branch
    %32 = sbr.rel (0) target = $region29
  $region28: #{dncnn_forward.1} parent=0 // pred_region
    _
  $region29: #{dncnn_forward.1} parent=0 // pred_fallthru
    _
  // Predicated region
  $region30: #{dncnn_forward.1} parent=0 // pred_check
    _
  $region31: #{dncnn_forward.1} parent=0 // pred_check_branch
    %34 = sbr.rel (0) target = $region33
  $region32: #{dncnn_forward.1} parent=0 // pred_region
    _
  $region33: #{dncnn_forward.1} parent=0 // pred_fallthru
    _
  // Predicated region
  $region34: #{dncnn_forward.1} parent=0 // pred_check
    _
  $region35: #{dncnn_forward.1} parent=0 // pred_check_branch
    %36 = sbr.rel (0) target = $region37
  $region36: #{dncnn_forward.1} parent=0 // pred_region
    _
  $region37: #{dncnn_forward.1} parent=0 // pred_fallthru
    _
  // Predicated region
  $region38: #{dncnn_forward.1} parent=0 // pred_check
    _
  $region39: #{dncnn_forward.1} parent=0 // pred_check_branch
    %38 = sbr.rel (0) target = $region41
  $region40: #{dncnn_forward.1} parent=0 // pred_region
    _
  $region41: #{dncnn_forward.1} parent=0 // pred_fallthru
    _
  // Predicated region
  $region42: #{dncnn_forward.1} parent=0 // pred_check
    _
  $region43: #{dncnn_forward.1} parent=0 // pred_check_branch
    %40 = sbr.rel (0) target = $region45
  $region44: #{dncnn_forward.1} parent=0 // pred_region
    _
  $region45: #{dncnn_forward.1} parent=0 // pred_fallthru
    _
  // Predicated region
  $region46: #{dncnn_forward.1} parent=0 // pred_check
    _
  $region47: #{dncnn_forward.1} parent=0 // pred_check_branch
    %42 = sbr.rel (0) target = $region49
  $region48: #{dncnn_forward.1} parent=0 // pred_region
    _
  $region49: #{dncnn_forward.1} parent=0 // pred_fallthru
    _
  %v43 = vld [vmem:[%s1] sm:$0x3f]
  %44 = vst [vmem:[#allocation2] sm:$0xff] 0.0
  %45 = vst [vmem:[#allocation2 + $0x40] sm:$0xff] 0.0
  %46 = vst [vmem:[#allocation2 + $0x80] sm:$0xff] 0.0
  %47 = vst [vmem:[#allocation2 + $0xc0] sm:$0xff] 0.0
  %48 = vst [vmem:[#allocation2 + $0x38] sm:$0xff] 0.0
  %49 = vst [vmem:[#allocation2 + $0x78] sm:$0xff] 0.0
  %50 = vst [vmem:[#allocation2 + $0xb8] sm:$0xff] 0.0
  %51 = vst [vmem:[#allocation2 + $0xf8] sm:$0xff] 0.0
  %52 = vst [vmem:[#allocation3] sm:$0xff] 0.0
  %53 = vst [vmem:[#allocation3 + $0x40] sm:$0xff] 0.0
  %54 = vst [vmem:[#allocation3 + $0x80] sm:$0xff] 0.0
  %55 = vst [vmem:[#allocation3 + $0xc0] sm:$0xff] 0.0
  %56 = vst [vmem:[#allocation3 + $0x38] sm:$0xff] 0.0
  %57 = vst [vmem:[#allocation3 + $0x78] sm:$0xff] 0.0
  %58 = vst [vmem:[#allocation3 + $0xb8] sm:$0xff] 0.0
  %59 = vst [vmem:[#allocation3 + $0xf8] sm:$0xff] 0.0
  %v60 = vld [vmem:[%s3] sm:$0xff]
  %v61 = vld [vmem:[%s3 + $0x8] sm:$0xff]
  %v62 = vld [vmem:[%s3 + $0x10] sm:$0xff]
  %v63 = vld [vmem:[%s3 + $0x18] sm:$0xff]
  %65 = vset.pattern.permute.xlu0 0
  %66 = vperm.xlu0 %65, %v60
  %v67 = vpop.permute.xlu0 %66
  %70 = vset.pattern.permute.xlu0 0
  %71 = vperm.xlu0 %70, %v61
  %v72 = vpop.permute.xlu0 %71
  %75 = vset.pattern.permute.xlu0 0
  %76 = vperm.xlu0 %75, %v62
  %v77 = vpop.permute.xlu0 %76
  %80 = vset.pattern.permute.xlu0 0
  %81 = vperm.xlu0 %80, %v63
  %v82 = vpop.permute.xlu0 %81
  %v84 = vld [vmem:[%s0] sm:$0x7f]
  %v85 = vld [vmem:[%s0 + $0x1] sm:$0x3f]
  %v86 = vld [vmem:[%s0 + $0x1] sm:$0x7f]
  %v88 = vlaneseq
  %v89 = vshrl.u32 %v88, 7
  %v90 = vsub.s32 0, %v89
  %v91 = vrot.slane %v84, %v90
  %v92 = vlaneseq
  %v93 = vshrl.u32 %v92, 7
  %v94 = vsub.s32 1, %v93
  %v95 = vrot.slane %v84, %v94
  %v96 = vlaneseq
  %v97 = vshrl.u32 %v96, 7
  %v98 = vsub.s32 2, %v97
  %v99 = vrot.slane %v84, %v98
  %v100 = vlaneseq
  %v101 = vshrl.u32 %v100, 7
  %v102 = vsub.s32 3, %v101
  %v103 = vrot.slane %v84, %v102
  %v104 = vlaneseq
  %v105 = vshrl.u32 %v104, 7
  %v106 = vsub.s32 4, %v105
  %v107 = vrot.slane %v84, %v106
  %v108 = vlaneseq
  %v109 = vshrl.u32 %v108, 7
  %v110 = vsub.s32 5, %v109
  %v111 = vrot.slane %v84, %v110
  %v112 = vlaneseq
  %v113 = vshrl.u32 %v112, 7
  %v114 = vsub.s32 6, %v113
  %v115 = vrot.slane %v84, %v114
  %123 = vrot.lane.b32.xlu0 %v91, 127
  %v124 = vpop.permute.xlu0 %123
  %125 = vrot.lane.b32.xlu0 %v95, 127
  %v126 = vpop.permute.xlu0 %125
  %127 = vrot.lane.b32.xlu0 %v99, 127
  %v128 = vpop.permute.xlu0 %127
  %129 = vrot.lane.b32.xlu0 %v103, 127
  %v130 = vpop.permute.xlu0 %129
  %131 = vrot.lane.b32.xlu0 %v107, 127
  %v132 = vpop.permute.xlu0 %131
  %133 = vrot.lane.b32.xlu0 %v111, 127
  %v134 = vpop.permute.xlu0 %133
  %135 = vrot.lane.b32.xlu0 %v115, 127
  %v136 = vpop.permute.xlu0 %135
  %vm137 = vcmask 1039360
  %v138 = vsel %vm137, %v124, %v126
  %v139 = vsel %vm137, %v126, %v128
  %v140 = vsel %vm137, %v128, %v130
  %v141 = vsel %vm137, %v130, %v132
  %v142 = vsel %vm137, %v132, %v134
  %v143 = vsel %vm137, %v134, %v136
  %151 = vrot.lane.b32.xlu0 %v91, 126
  %v152 = vpop.permute.xlu0 %151
  %153 = vrot.lane.b32.xlu0 %v95, 126
  %v154 = vpop.permute.xlu0 %153
  %155 = vrot.lane.b32.xlu0 %v99, 126
  %v156 = vpop.permute.xlu0 %155
  %157 = vrot.lane.b32.xlu0 %v103, 126
  %v158 = vpop.permute.xlu0 %157
  %159 = vrot.lane.b32.xlu0 %v107, 126
  %v160 = vpop.permute.xlu0 %159
  %161 = vrot.lane.b32.xlu0 %v111, 126
  %v162 = vpop.permute.xlu0 %161
  %163 = vrot.lane.b32.xlu0 %v115, 126
  %v164 = vpop.permute.xlu0 %163
  %vm165 = vcmask 1031168
  %v166 = vsel %vm165, %v152, %v154
  %v167 = vsel %vm165, %v154, %v156
  %v168 = vsel %vm165, %v156, %v158
  %v169 = vsel %vm165, %v158, %v160
  %v170 = vsel %vm165, %v160, %v162
  %v171 = vsel %vm165, %v162, %v164
  %179 = vrot.lane.b32.xlu0 %v91, 110
  %v180 = vpop.permute.xlu0 %179
  %181 = vrot.lane.b32.xlu0 %v95, 110
  %v182 = vpop.permute.xlu0 %181
  %183 = vrot.lane.b32.xlu0 %v99, 110
  %v184 = vpop.permute.xlu0 %183
  %185 = vrot.lane.b32.xlu0 %v103, 110
  %v186 = vpop.permute.xlu0 %185
  %187 = vrot.lane.b32.xlu0 %v107, 110
  %v188 = vpop.permute.xlu0 %187
  %189 = vrot.lane.b32.xlu0 %v111, 110
  %v190 = vpop.permute.xlu0 %189
  %191 = vrot.lane.b32.xlu0 %v115, 110
  %v192 = vpop.permute.xlu0 %191
  %vm193 = vcmask 900096
  %v194 = vsel %vm193, %v180, %v182
  %v195 = vsel %vm193, %v182, %v184
  %v196 = vsel %vm193, %v184, %v186
  %v197 = vsel %vm193, %v186, %v188
  %v198 = vsel %vm193, %v188, %v190
  %v199 = vsel %vm193, %v190, %v192
  %v208 = vlaneseq
  %v209 = vshrl.u32 %v208, 7
  %v210 = vsub.s32 0, %v209
  %v211 = vrot.slane %v85, %v210
  %v212 = vlaneseq
  %v213 = vshrl.u32 %v212, 7
  %v214 = vsub.s32 1, %v213
  %v215 = vrot.slane %v85, %v214
  %v216 = vlaneseq
  %v217 = vshrl.u32 %v216, 7
  %v218 = vsub.s32 2, %v217
  %v219 = vrot.slane %v85, %v218
  %v220 = vlaneseq
  %v221 = vshrl.u32 %v220, 7
  %v222 = vsub.s32 3, %v221
  %v223 = vrot.slane %v85, %v222
  %v224 = vlaneseq
  %v225 = vshrl.u32 %v224, 7
  %v226 = vsub.s32 4, %v225
  %v227 = vrot.slane %v85, %v226
  %v228 = vlaneseq
  %v229 = vshrl.u32 %v228, 7
  %v230 = vsub.s32 5, %v229
  %v231 = vrot.slane %v85, %v230
  %232 = vrot.lane.b32.xlu0 %v211, 109
  %v233 = vpop.permute.xlu0 %232
  %234 = vrot.lane.b32.xlu0 %v215, 109
  %v235 = vpop.permute.xlu0 %234
  %236 = vrot.lane.b32.xlu0 %v219, 109
  %v237 = vpop.permute.xlu0 %236
  %238 = vrot.lane.b32.xlu0 %v223, 109
  %v239 = vpop.permute.xlu0 %238
  %240 = vrot.lane.b32.xlu0 %v227, 109
  %v241 = vpop.permute.xlu0 %240
  %242 = vrot.lane.b32.xlu0 %v231, 109
  %v243 = vpop.permute.xlu0 %242
  %vm244 = vcmask 891904
  %v245 = vsel %vm244, %v233, %v235
  %v246 = vsel %vm244, %v235, %v237
  %v247 = vsel %vm244, %v237, %v239
  %v248 = vsel %vm244, %v239, %v241
  %v249 = vsel %vm244, %v241, %v243
  %v258 = vlaneseq
  %v259 = vshrl.u32 %v258, 7
  %v260 = vsub.s32 0, %v259
  %v261 = vrot.slane %v86, %v260
  %v262 = vlaneseq
  %v263 = vshrl.u32 %v262, 7
  %v264 = vsub.s32 1, %v263
  %v265 = vrot.slane %v86, %v264
  %v266 = vlaneseq
  %v267 = vshrl.u32 %v266, 7
  %v268 = vsub.s32 2, %v267
  %v269 = vrot.slane %v86, %v268
  %v270 = vlaneseq
  %v271 = vshrl.u32 %v270, 7
  %v272 = vsub.s32 3, %v271
  %v273 = vrot.slane %v86, %v272
  %v274 = vlaneseq
  %v275 = vshrl.u32 %v274, 7
  %v276 = vsub.s32 4, %v275
  %v277 = vrot.slane %v86, %v276
  %v278 = vlaneseq
  %v279 = vshrl.u32 %v278, 7
  %v280 = vsub.s32 5, %v279
  %v281 = vrot.slane %v86, %v280
  %v282 = vlaneseq
  %v283 = vshrl.u32 %v282, 7
  %v284 = vsub.s32 6, %v283
  %v285 = vrot.slane %v86, %v284
  %286 = vrot.lane.b32.xlu0 %v261, 108
  %v287 = vpop.permute.xlu0 %286
  %288 = vrot.lane.b32.xlu0 %v265, 108
  %v289 = vpop.permute.xlu0 %288
  %290 = vrot.lane.b32.xlu0 %v269, 108
  %v291 = vpop.permute.xlu0 %290
  %292 = vrot.lane.b32.xlu0 %v273, 108
  %v293 = vpop.permute.xlu0 %292
  %294 = vrot.lane.b32.xlu0 %v277, 108
  %v295 = vpop.permute.xlu0 %294
  %296 = vrot.lane.b32.xlu0 %v281, 108
  %v297 = vpop.permute.xlu0 %296
  %298 = vrot.lane.b32.xlu0 %v285, 108
  %v299 = vpop.permute.xlu0 %298
  %vm300 = vcmask 883712
  %v301 = vsel %vm300, %v287, %v289
  %v302 = vsel %vm300, %v289, %v291
  %v303 = vsel %vm300, %v291, %v293
  %v304 = vsel %vm300, %v293, %v295
  %v305 = vsel %vm300, %v295, %v297
  %v306 = vsel %vm300, %v297, %v299
  %314 = vrot.lane.b32.xlu0 %v261, 92
  %v315 = vpop.permute.xlu0 %314
  %316 = vrot.lane.b32.xlu0 %v265, 92
  %v317 = vpop.permute.xlu0 %316
  %318 = vrot.lane.b32.xlu0 %v269, 92
  %v319 = vpop.permute.xlu0 %318
  %320 = vrot.lane.b32.xlu0 %v273, 92
  %v321 = vpop.permute.xlu0 %320
  %322 = vrot.lane.b32.xlu0 %v277, 92
  %v323 = vpop.permute.xlu0 %322
  %324 = vrot.lane.b32.xlu0 %v281, 92
  %v325 = vpop.permute.xlu0 %324
  %326 = vrot.lane.b32.xlu0 %v285, 92
  %v327 = vpop.permute.xlu0 %326
  %vm328 = vcmask 752640
  %v329 = vsel %vm328, %v315, %v317
  %v330 = vsel %vm328, %v317, %v319
  %v331 = vsel %vm328, %v319, %v321
  %v332 = vsel %vm328, %v321, %v323
  %v333 = vsel %vm328, %v323, %v325
  %v334 = vsel %vm328, %v325, %v327
  %342 = vrot.lane.b32.xlu0 %v261, 91
  %v343 = vpop.permute.xlu0 %342
  %344 = vrot.lane.b32.xlu0 %v265, 91
  %v345 = vpop.permute.xlu0 %344
  %346 = vrot.lane.b32.xlu0 %v269, 91
  %v347 = vpop.permute.xlu0 %346
  %348 = vrot.lane.b32.xlu0 %v273, 91
  %v349 = vpop.permute.xlu0 %348
  %350 = vrot.lane.b32.xlu0 %v277, 91
  %v351 = vpop.permute.xlu0 %350
  %352 = vrot.lane.b32.xlu0 %v281, 91
  %v353 = vpop.permute.xlu0 %352
  %354 = vrot.lane.b32.xlu0 %v285, 91
  %v355 = vpop.permute.xlu0 %354
  %vm356 = vcmask 744448
  %v357 = vsel %vm356, %v343, %v345
  %v358 = vsel %vm356, %v345, %v347
  %v359 = vsel %vm356, %v347, %v349
  %v360 = vsel %vm356, %v349, %v351
  %v361 = vsel %vm356, %v351, %v353
  %v362 = vsel %vm356, %v353, %v355
  %370 = vrot.lane.b32.xlu0 %v261, 90
  %v371 = vpop.permute.xlu0 %370
  %372 = vrot.lane.b32.xlu0 %v265, 90
  %v373 = vpop.permute.xlu0 %372
  %374 = vrot.lane.b32.xlu0 %v269, 90
  %v375 = vpop.permute.xlu0 %374
  %376 = vrot.lane.b32.xlu0 %v273, 90
  %v377 = vpop.permute.xlu0 %376
  %378 = vrot.lane.b32.xlu0 %v277, 90
  %v379 = vpop.permute.xlu0 %378
  %380 = vrot.lane.b32.xlu0 %v281, 90
  %v381 = vpop.permute.xlu0 %380
  %382 = vrot.lane.b32.xlu0 %v285, 90
  %v383 = vpop.permute.xlu0 %382
  %vm384 = vcmask 736256
  %v385 = vsel %vm384, %v371, %v373
  %v386 = vsel %vm384, %v373, %v375
  %v387 = vsel %vm384, %v375, %v377
  %v388 = vsel %vm384, %v377, %v379
  %v389 = vsel %vm384, %v379, %v381
  %v390 = vsel %vm384, %v381, %v383
  %vm391 = vcmask 1040384
  %v392 = vsel %vm391, %v91, %v138
  %v393 = vsel %vm391, %v95, %v139
  %v394 = vsel %vm391, %v99, %v140
  %v395 = vsel %vm391, %v103, %v141
  %v396 = vsel %vm391, %v107, %v142
  %v397 = vsel %vm391, %v111, %v143
  %v398 = vsel %vm391, %v115, %v136
  %vm399 = vcmask 1041408
  %v400 = vsel %vm399, %v392, %v166
  %v401 = vsel %vm399, %v393, %v167
  %v402 = vsel %vm399, %v394, %v168
  %v403 = vsel %vm399, %v395, %v169
  %v404 = vsel %vm399, %v396, %v170
  %v405 = vsel %vm399, %v397, %v171
  %v406 = vsel %vm399, %v398, %v164
  %vm407 = vcmask 1042432
  %v408 = vsel %vm407, %v400, %v194
  %v409 = vsel %vm407, %v401, %v195
  %v410 = vsel %vm407, %v402, %v196
  %v411 = vsel %vm407, %v403, %v197
  %v412 = vsel %vm407, %v404, %v198
  %v413 = vsel %vm407, %v405, %v199
  %v414 = vsel %vm407, %v406, %v192
  %vm415 = vcmask 1043456
  %v416 = vsel %vm415, %v408, %v233
  %v417 = vsel %vm415, %v409, %v245
  %v418 = vsel %vm415, %v410, %v246
  %v419 = vsel %vm415, %v411, %v247
  %v420 = vsel %vm415, %v412, %v248
  %v421 = vsel %vm415, %v413, %v249
  %v422 = vsel %vm415, %v414, %v243
  %vm423 = vcmask 1044480
  %v424 = vsel %vm423, %v416, %v287
  %v425 = vsel %vm423, %v417, %v301
  %v426 = vsel %vm423, %v418, %v302
  %v427 = vsel %vm423, %v419, %v303
  %v428 = vsel %vm423, %v420, %v304
  %v429 = vsel %vm423, %v421, %v305
  %v430 = vsel %vm423, %v422, %v306
  %vm431 = vcmask 1045504
  %v432 = vsel %vm431, %v424, %v315
  %v433 = vsel %vm431, %v425, %v329
  %v434 = vsel %vm431, %v426, %v330
  %v435 = vsel %vm431, %v427, %v331
  %v436 = vsel %vm431, %v428, %v332
  %v437 = vsel %vm431, %v429, %v333
  %v438 = vsel %vm431, %v430, %v334
  %vm439 = vcmask 1046528
  %v440 = vsel %vm439, %v432, %v343
  %v441 = vsel %vm439, %v433, %v357
  %v442 = vsel %vm439, %v434, %v358
  %v443 = vsel %vm439, %v435, %v359
  %v444 = vsel %vm439, %v436, %v360
  %v445 = vsel %vm439, %v437, %v361
  %v446 = vsel %vm439, %v438, %v362
  %v447 = vld [vmem:[%s2] sm:$0xff]
  %v448 = vld [vmem:[%s2 + $0x8] sm:$0xff]
  %v449 = vld [vmem:[%s2 + $0x10] sm:$0xff]
  %v450 = vld [vmem:[%s2 + $0x18] sm:$0xff]
  %458 = vrot.lane.b32.xlu0 %v440, 19
  %v459 = vpop.permute.xlu0 %458
  %460 = vrot.lane.b32.xlu0 %v441, 19
  %v461 = vpop.permute.xlu0 %460
  %462 = vrot.lane.b32.xlu0 %v442, 19
  %v463 = vpop.permute.xlu0 %462
  %464 = vrot.lane.b32.xlu0 %v443, 19
  %v465 = vpop.permute.xlu0 %464
  %466 = vrot.lane.b32.xlu0 %v444, 19
  %v467 = vpop.permute.xlu0 %466
  %468 = vrot.lane.b32.xlu0 %v445, 19
  %v469 = vpop.permute.xlu0 %468
  %470 = vrot.lane.b32.xlu0 %v446, 19
  %v471 = vpop.permute.xlu0 %470
  %472 = vrot.lane.b32.xlu0 %v371, 19
  %v473 = vpop.permute.xlu0 %472
  %474 = vrot.lane.b32.xlu0 %v385, 19
  %v475 = vpop.permute.xlu0 %474
  %476 = vrot.lane.b32.xlu0 %v386, 19
  %v477 = vpop.permute.xlu0 %476
  %478 = vrot.lane.b32.xlu0 %v387, 19
  %v479 = vpop.permute.xlu0 %478
  %480 = vrot.lane.b32.xlu0 %v388, 19
  %v481 = vpop.permute.xlu0 %480
  %482 = vrot.lane.b32.xlu0 %v389, 19
  %v483 = vpop.permute.xlu0 %482
  %484 = vrot.lane.b32.xlu0 %v390, 19
  %v485 = vpop.permute.xlu0 %484
  %vm486 = vcmask 154624
  %v487 = vsel %vm486, %v459, %v461
  %v488 = vsel %vm486, %v461, %v463
  %v489 = vsel %vm486, %v463, %v465
  %v490 = vsel %vm486, %v465, %v467
  %v491 = vsel %vm486, %v467, %v469
  %v492 = vsel %vm486, %v469, %v471
  %v493 = vsel %vm486, %v473, %v475
  %v494 = vsel %vm486, %v475, %v477
  %v495 = vsel %vm486, %v477, %v479
  %v496 = vsel %vm486, %v479, %v481
  %v497 = vsel %vm486, %v481, %v483
  %v498 = vsel %vm486, %v483, %v485
  %vm505 = vcmask 72704
  %v507 = vsel %vm505, %v447, 0
  %v510 = vsel %vm505, %v448, 0
  %v513 = vsel %vm505, %v449, 0
  %v516 = vsel %vm505, %v450, 0
  %v518 = vsel %vm391, %v493, 0
  %v520 = vsel %vm391, %v494, 0
  %v522 = vsel %vm391, %v495, 0
  %v524 = vsel %vm391, %v496, 0
  %v526 = vsel %vm391, %v497, 0
  %v528 = vsel %vm391, %v498, 0
  %530 = vmatprep.subr.mxu0 %v488
  %531 = vmatpush1.msra.mxu0 %v487
  %532 = vmatprep.subr.mxu0 %v520
  %533 = vmatpush1.msra.mxu0 %v518
  %534 = vmatprep.subr.mxu0 0.0
  %535 = vmatpush1.msra.mxu0 0.0
  %536 = vmatprep.subr.mxu0 0.0
  %537 = vmatpush1.msra.mxu0 0.0
  %538 = vmatprep.subr.mxu0 0.0
  %539 = vmatpush1.msra.mxu0 0.0
  %540 = vmatprep.subr.mxu0 0.0
  %541 = vmatpush1.msra.mxu0 0.0
  %542 = vmatprep.subr.mxu0 0.0
  %543 = vmatpush1.msra.mxu0 0.0
  %544 = vmatprep.subr.mxu0 0.0
  %545 = vmatpush1.msra.mxu0 0.0
  %546 = vmatprep.subr.mxu0 0.0
  %547 = vmatpush1.msra.mxu0 0.0
  %548 = vmatprep.subr.mxu0 0.0
  %549 = vmatpush1.msra.mxu0 0.0
  %550 = vmatprep.subr.mxu0 0.0
  %551 = vmatpush1.msra.mxu0 0.0
  %552 = vmatprep.subr.mxu0 0.0
  %553 = vmatpush1.msra.mxu0 0.0
  %554 = vmatprep.subr.mxu0 0.0
  %555 = vmatpush1.msra.mxu0 0.0
  %556 = vmatprep.subr.mxu0 0.0
  %557 = vmatpush1.msra.mxu0 0.0
  %558 = vmatprep.subr.mxu0 0.0
  %559 = vmatpush1.msra.mxu0 0.0
  %560 = vmatprep.subr.mxu0 0.0
  %561 = vmatpush1.msra.mxu0 0.0
  %562 = vmatprep.subr.mxu0 0.0
  %563 = vmatpush1.msra.mxu0 0.0
  %564 = vmatprep.subr.mxu0 0.0
  %565 = vmatpush1.msra.mxu0 0.0
  %566 = vmatprep.subr.mxu0 0.0
  %567 = vmatpush1.msra.mxu0 0.0
  %568 = vmatprep.subr.mxu0 0.0
  %569 = vmatpush1.msra.mxu0 0.0
  %570 = vmatprep.subr.mxu0 0.0
  %571 = vmatpush1.msra.mxu0 0.0
  %572 = vmatprep.subr.mxu0 0.0
  %573 = vmatpush1.msra.mxu0 0.0
  %574 = vmatprep.subr.mxu0 0.0
  %575 = vmatpush1.msra.mxu0 0.0
  %576 = vmatprep.subr.mxu0 0.0
  %577 = vmatpush1.msra.mxu0 0.0
  %578 = vmatprep.subr.mxu0 0.0
  %579 = vmatpush1.msra.mxu0 0.0
  %580 = vmatprep.subr.mxu0 0.0
  %581 = vmatpush1.msra.mxu0 0.0
  %582 = vmatprep.subr.mxu0 0.0
  %583 = vmatpush1.msra.mxu0 0.0
  %584 = vmatprep.subr.mxu0 0.0
  %585 = vmatpush1.msra.mxu0 0.0
  %586 = vmatprep.subr.mxu0 0.0
  %587 = vmatpush1.msra.mxu0 0.0
  %588 = vmatprep.subr.mxu0 0.0
  %589 = vmatpush1.msra.mxu0 0.0
  %590 = vmatprep.subr.mxu0 0.0
  %591 = vmatpush1.msra.mxu0 0.0
  %592 = vmatprep.subr.mxu0 0.0
  %593 = vmatpush1.msra.mxu0 0.0
  %594 = vmatprep.mubr.f32.mxu0 0.0
  %595 = vmatmul.mubr.f32.gmra.mrb[0].mxu0 %v507
  %v596 = vpop.f32.mrb[0].mxu0
  %v597 = vadd.f32 0.0, %v596
  %v598 = vpop.f32.mrb[0].mxu0
  %v599 = vadd.f32 0.0, %v598
  %600 = vmatprep.mubr.f32.mxu0 0.0
  %601 = vmatmul.mubr.f32.gmra.mrb[0].mxu0 %v510
  %v602 = vpop.f32.mrb[0].mxu0
  %v603 = vadd.f32 0.0, %v602
  %v604 = vpop.f32.mrb[0].mxu0
  %v605 = vadd.f32 0.0, %v604
  %606 = vmatprep.mubr.f32.mxu0 0.0
  %607 = vmatmul.mubr.f32.gmra.mrb[0].mxu0 %v513
  %v608 = vpop.f32.mrb[0].mxu0
  %v609 = vadd.f32 0.0, %v608
  %v610 = vpop.f32.mrb[0].mxu0
  %v611 = vadd.f32 0.0, %v610
  %612 = vmatprep.mubr.f32.mxu0 0.0
  %613 = vmatmul.mubr.f32.gmra.mrb[0].mxu0 %v516
  %v614 = vpop.f32.mrb[0].mxu0
  %v615 = vadd.f32 0.0, %v614
  %v616 = vpop.f32.mrb[0].mxu0
  %v617 = vadd.f32 0.0, %v616
  %618 = vdwg.mxu0
  %619 = vmatprep.subr.mxu0 %v490
  %620 = vmatpush1.msra.mxu0 %v489
  %621 = vmatprep.subr.mxu0 %v524
  %622 = vmatpush1.msra.mxu0 %v522
  %623 = vmatprep.subr.mxu0 0.0
  %624 = vmatpush1.msra.mxu0 0.0
  %625 = vmatprep.subr.mxu0 0.0
  %626 = vmatpush1.msra.mxu0 0.0
  %627 = vmatprep.subr.mxu0 0.0
  %628 = vmatpush1.msra.mxu0 0.0
  %629 = vmatprep.subr.mxu0 0.0
  %630 = vmatpush1.msra.mxu0 0.0
  %631 = vmatprep.subr.mxu0 0.0
  %632 = vmatpush1.msra.mxu0 0.0
  %633 = vmatprep.subr.mxu0 0.0
  %634 = vmatpush1.msra.mxu0 0.0
  %635 = vmatprep.subr.mxu0 0.0
  %636 = vmatpush1.msra.mxu0 0.0
  %637 = vmatprep.subr.mxu0 0.0
  %638 = vmatpush1.msra.mxu0 0.0
  %639 = vmatprep.subr.mxu0 0.0
  %640 = vmatpush1.msra.mxu0 0.0
  %641 = vmatprep.subr.mxu0 0.0
  %642 = vmatpush1.msra.mxu0 0.0
  %643 = vmatprep.subr.mxu0 0.0
  %644 = vmatpush1.msra.mxu0 0.0
  %645 = vmatprep.subr.mxu0 0.0
  %646 = vmatpush1.msra.mxu0 0.0
  %647 = vmatprep.subr.mxu0 0.0
  %648 = vmatpush1.msra.mxu0 0.0
  %649 = vmatprep.subr.mxu0 0.0
  %650 = vmatpush1.msra.mxu0 0.0
  %651 = vmatprep.subr.mxu0 0.0
  %652 = vmatpush1.msra.mxu0 0.0
  %653 = vmatprep.subr.mxu0 0.0
  %654 = vmatpush1.msra.mxu0 0.0
  %655 = vmatprep.subr.mxu0 0.0
  %656 = vmatpush1.msra.mxu0 0.0
  %657 = vmatprep.subr.mxu0 0.0
  %658 = vmatpush1.msra.mxu0 0.0
  %659 = vmatprep.subr.mxu0 0.0
  %660 = vmatpush1.msra.mxu0 0.0
  %661 = vmatprep.subr.mxu0 0.0
  %662 = vmatpush1.msra.mxu0 0.0
  %663 = vmatprep.subr.mxu0 0.0
  %664 = vmatpush1.msra.mxu0 0.0
  %665 = vmatprep.subr.mxu0 0.0
  %666 = vmatpush1.msra.mxu0 0.0
  %667 = vmatprep.subr.mxu0 0.0
  %668 = vmatpush1.msra.mxu0 0.0
  %669 = vmatprep.subr.mxu0 0.0
  %670 = vmatpush1.msra.mxu0 0.0
  %671 = vmatprep.subr.mxu0 0.0
  %672 = vmatpush1.msra.mxu0 0.0
  %673 = vmatprep.subr.mxu0 0.0
  %674 = vmatpush1.msra.mxu0 0.0
  %675 = vmatprep.subr.mxu0 0.0
  %676 = vmatpush1.msra.mxu0 0.0
  %677 = vmatprep.subr.mxu0 0.0
  %678 = vmatpush1.msra.mxu0 0.0
  %679 = vmatprep.subr.mxu0 0.0
  %680 = vmatpush1.msra.mxu0 0.0
  %681 = vmatprep.subr.mxu0 0.0
  %682 = vmatpush1.msra.mxu0 0.0
  %683 = vmatprep.mubr.f32.mxu0 0.0
  %684 = vmatmul.mubr.f32.gmra.mrb[0].mxu0 %v507
  %v685 = vpop.f32.mrb[0].mxu0
  %v686 = vadd.f32 0.0, %v685
  %v687 = vpop.f32.mrb[0].mxu0
  %v688 = vadd.f32 0.0, %v687
  %689 = vmatprep.mubr.f32.mxu0 0.0
  %690 = vmatmul.mubr.f32.gmra.mrb[0].mxu0 %v510
  %v691 = vpop.f32.mrb[0].mxu0
  %v692 = vadd.f32 0.0, %v691
  %v693 = vpop.f32.mrb[0].mxu0
  %v694 = vadd.f32 0.0, %v693
  %695 = vmatprep.mubr.f32.mxu0 0.0
  %696 = vmatmul.mubr.f32.gmra.mrb[0].mxu0 %v513
  %v697 = vpop.f32.mrb[0].mxu0
  %v698 = vadd.f32 0.0, %v697
  %v699 = vpop.f32.mrb[0].mxu0
  %v700 = vadd.f32 0.0, %v699
  %701 = vmatprep.mubr.f32.mxu0 0.0
  %702 = vmatmul.mubr.f32.gmra.mrb[0].mxu0 %v516
  %v703 = vpop.f32.mrb[0].mxu0
  %v704 = vadd.f32 0.0, %v703
  %v705 = vpop.f32.mrb[0].mxu0
  %v706 = vadd.f32 0.0, %v705
  %707 = vdwg.mxu0
  %708 = vmatprep.subr.mxu0 %v492
  %709 = vmatpush1.msra.mxu0 %v491
  %710 = vmatprep.subr.mxu0 %v528
  %711 = vmatpush1.msra.mxu0 %v526
  %712 = vmatprep.subr.mxu0 0.0
  %713 = vmatpush1.msra.mxu0 0.0
  %714 = vmatprep.subr.mxu0 0.0
  %715 = vmatpush1.msra.mxu0 0.0
  %716 = vmatprep.subr.mxu0 0.0
  %717 = vmatpush1.msra.mxu0 0.0
  %718 = vmatprep.subr.mxu0 0.0
  %719 = vmatpush1.msra.mxu0 0.0
  %720 = vmatprep.subr.mxu0 0.0
  %721 = vmatpush1.msra.mxu0 0.0
  %722 = vmatprep.subr.mxu0 0.0
  %723 = vmatpush1.msra.mxu0 0.0
  %724 = vmatprep.subr.mxu0 0.0
  %725 = vmatpush1.msra.mxu0 0.0
  %726 = vmatprep.subr.mxu0 0.0
  %727 = vmatpush1.msra.mxu0 0.0
  %728 = vmatprep.subr.mxu0 0.0
  %729 = vmatpush1.msra.mxu0 0.0
  %730 = vmatprep.subr.mxu0 0.0
  %731 = vmatpush1.msra.mxu0 0.0
  %732 = vmatprep.subr.mxu0 0.0
  %733 = vmatpush1.msra.mxu0 0.0
  %734 = vmatprep.subr.mxu0 0.0
  %735 = vmatpush1.msra.mxu0 0.0
  %736 = vmatprep.subr.mxu0 0.0
  %737 = vmatpush1.msra.mxu0 0.0
  %738 = vmatprep.subr.mxu0 0.0
  %739 = vmatpush1.msra.mxu0 0.0
  %740 = vmatprep.subr.mxu0 0.0
  %741 = vmatpush1.msra.mxu0 0.0
  %742 = vmatprep.subr.mxu0 0.0
  %743 = vmatpush1.msra.mxu0 0.0
  %744 = vmatprep.subr.mxu0 0.0
  %745 = vmatpush1.msra.mxu0 0.0
  %746 = vmatprep.subr.mxu0 0.0
  %747 = vmatpush1.msra.mxu0 0.0
  %748 = vmatprep.subr.mxu0 0.0
  %749 = vmatpush1.msra.mxu0 0.0
  %750 = vmatprep.subr.mxu0 0.0
  %751 = vmatpush1.msra.mxu0 0.0
  %752 = vmatprep.subr.mxu0 0.0
  %753 = vmatpush1.msra.mxu0 0.0
  %754 = vmatprep.subr.mxu0 0.0
  %755 = vmatpush1.msra.mxu0 0.0
  %756 = vmatprep.subr.mxu0 0.0
  %757 = vmatpush1.msra.mxu0 0.0
  %758 = vmatprep.subr.mxu0 0.0
  %759 = vmatpush1.msra.mxu0 0.0
  %760 = vmatprep.subr.mxu0 0.0
  %761 = vmatpush1.msra.mxu0 0.0
  %762 = vmatprep.subr.mxu0 0.0
  %763 = vmatpush1.msra.mxu0 0.0
  %764 = vmatprep.subr.mxu0 0.0
  %765 = vmatpush1.msra.mxu0 0.0
  %766 = vmatprep.subr.mxu0 0.0
  %767 = vmatpush1.msra.mxu0 0.0
  %768 = vmatprep.subr.mxu0 0.0
  %769 = vmatpush1.msra.mxu0 0.0
  %770 = vmatprep.subr.mxu0 0.0
  %771 = vmatpush1.msra.mxu0 0.0
  %772 = vmatprep.mubr.f32.mxu0 0.0
  %773 = vmatmul.mubr.f32.gmra.mrb[0].mxu0 %v507
  %v774 = vpop.f32.mrb[0].mxu0
  %v775 = vadd.f32 0.0, %v774
  %v776 = vpop.f32.mrb[0].mxu0
  %v777 = vadd.f32 0.0, %v776
  %778 = vmatprep.mubr.f32.mxu0 0.0
  %779 = vmatmul.mubr.f32.gmra.mrb[0].mxu0 %v510
  %v780 = vpop.f32.mrb[0].mxu0
  %v781 = vadd.f32 0.0, %v780
  %v782 = vpop.f32.mrb[0].mxu0
  %v783 = vadd.f32 0.0, %v782
  %784 = vmatprep.mubr.f32.mxu0 0.0
  %785 = vmatmul.mubr.f32.gmra.mrb[0].mxu0 %v513
  %v786 = vpop.f32.mrb[0].mxu0
  %v787 = vadd.f32 0.0, %v786
  %v788 = vpop.f32.mrb[0].mxu0
  %v789 = vadd.f32 0.0, %v788
  %790 = vmatprep.mubr.f32.mxu0 0.0
  %791 = vmatmul.mubr.f32.gmra.mrb[0].mxu0 %v516
  %v792 = vpop.f32.mrb[0].mxu0
  %v793 = vadd.f32 0.0, %v792
  %v794 = vpop.f32.mrb[0].mxu0
  %v795 = vadd.f32 0.0, %v794
  %796 = vdwg.mxu0
  %v797 = vadd.f32 %v67, %v597
  %v798 = vadd.f32 %v67, %v599
  %v799 = vadd.f32 %v67, %v686
  %v800 = vadd.f32 %v67, %v688
  %v801 = vadd.f32 %v67, %v775
  %v802 = vadd.f32 %v67, %v777
  %v803 = vadd.f32 %v72, %v603
  %v804 = vadd.f32 %v72, %v605
  %v805 = vadd.f32 %v72, %v692
  %v806 = vadd.f32 %v72, %v694
  %v807 = vadd.f32 %v72, %v781
  %v808 = vadd.f32 %v72, %v783
  %v809 = vadd.f32 %v77, %v609
  %v810 = vadd.f32 %v77, %v611
  %v811 = vadd.f32 %v77, %v698
  %v812 = vadd.f32 %v77, %v700
  %v813 = vadd.f32 %v77, %v787
  %v814 = vadd.f32 %v77, %v789
  %v815 = vadd.f32 %v82, %v615
  %v816 = vadd.f32 %v82, %v617
  %v817 = vadd.f32 %v82, %v704
  %v818 = vadd.f32 %v82, %v706
  %v819 = vadd.f32 %v82, %v793
  %v820 = vadd.f32 %v82, %v795
  %v821 = vmax.f32 %v797, 0.0
  %v822 = vmax.f32 %v798, 0.0
  %v823 = vmax.f32 %v799, 0.0
  %v824 = vmax.f32 %v800, 0.0
  %v825 = vmax.f32 %v801, 0.0
  %v826 = vmax.f32 %v802, 0.0
  %v827 = vmax.f32 %v803, 0.0
  %v828 = vmax.f32 %v804, 0.0
  %v829 = vmax.f32 %v805, 0.0
  %v830 = vmax.f32 %v806, 0.0
  %v831 = vmax.f32 %v807, 0.0
  %v832 = vmax.f32 %v808, 0.0
  %v833 = vmax.f32 %v809, 0.0
  %v834 = vmax.f32 %v810, 0.0
  %v835 = vmax.f32 %v811, 0.0
  %v836 = vmax.f32 %v812, 0.0
  %v837 = vmax.f32 %v813, 0.0
  %v838 = vmax.f32 %v814, 0.0
  %v839 = vmax.f32 %v815, 0.0
  %v840 = vmax.f32 %v816, 0.0
  %v841 = vmax.f32 %v817, 0.0
  %v842 = vmax.f32 %v818, 0.0
  %v843 = vmax.f32 %v819, 0.0
  %v844 = vmax.f32 %v820, 0.0
  %v846 = vlaneseq
  %v847 = vshrl.u32 %v846, 7
  %v848 = vsub.s32 0, %v847
  %v849 = vrot.slane %v43, %v848
  %v850 = vlaneseq
  %v851 = vshrl.u32 %v850, 7
  %v852 = vsub.s32 1, %v851
  %v853 = vrot.slane %v43, %v852
  %v854 = vlaneseq
  %v855 = vshrl.u32 %v854, 7
  %v856 = vsub.s32 2, %v855
  %v857 = vrot.slane %v43, %v856
  %v858 = vlaneseq
  %v859 = vshrl.u32 %v858, 7
  %v860 = vsub.s32 3, %v859
  %v861 = vrot.slane %v43, %v860
  %v862 = vlaneseq
  %v863 = vshrl.u32 %v862, 7
  %v864 = vsub.s32 4, %v863
  %v865 = vrot.slane %v43, %v864
  %v866 = vlaneseq
  %v867 = vshrl.u32 %v866, 7
  %v868 = vsub.s32 5, %v867
  %v869 = vrot.slane %v43, %v868
  %v876 = vmul.f32 %v821, %v849
  %v877 = vmul.f32 %v822, %v853
  %v878 = vmul.f32 %v823, %v857
  %v879 = vmul.f32 %v824, %v861
  %v880 = vmul.f32 %v825, %v865
  %v881 = vmul.f32 %v826, %v869
  %v882 = vmul.f32 %v827, %v849
  %v883 = vmul.f32 %v828, %v853
  %v884 = vmul.f32 %v829, %v857
  %v885 = vmul.f32 %v830, %v861
  %v886 = vmul.f32 %v831, %v865
  %v887 = vmul.f32 %v832, %v869
  %v888 = vmul.f32 %v833, %v849
  %v889 = vmul.f32 %v834, %v853
  %v890 = vmul.f32 %v835, %v857
  %v891 = vmul.f32 %v836, %v861
  %v892 = vmul.f32 %v837, %v865
  %v893 = vmul.f32 %v838, %v869
  %v894 = vmul.f32 %v839, %v849
  %v895 = vmul.f32 %v840, %v853
  %v896 = vmul.f32 %v841, %v857
  %v897 = vmul.f32 %v842, %v861
  %v898 = vmul.f32 %v843, %v865
  %v899 = vmul.f32 %v844, %v869
  %900 = vst [vmem:[#allocation2 + $0x8] sm:$0xff] %v876
  %901 = vst [vmem:[#allocation2 + $0x10] sm:$0xff] %v877
  %902 = vst [vmem:[#allocation2 + $0x18] sm:$0xff] %v878
  %903 = vst [vmem:[#allocation2 + $0x20] sm:$0xff] %v879
  %904 = vst [vmem:[#allocation2 + $0x28] sm:$0xff] %v880
  %905 = vst [vmem:[#allocation2 + $0x30] sm:$0xff] %v881
  %906 = vst [vmem:[#allocation2 + $0x48] sm:$0xff] %v882
  %907 = vst [vmem:[#allocation2 + $0x50] sm:$0xff] %v883
  %908 = vst [vmem:[#allocation2 + $0x58] sm:$0xff] %v884
  %909 = vst [vmem:[#allocation2 + $0x60] sm:$0xff] %v885
  %910 = vst [vmem:[#allocation2 + $0x68] sm:$0xff] %v886
  %911 = vst [vmem:[#allocation2 + $0x70] sm:$0xff] %v887
  %912 = vst [vmem:[#allocation2 + $0x88] sm:$0xff] %v888
  %913 = vst [vmem:[#allocation2 + $0x90] sm:$0xff] %v889
  %914 = vst [vmem:[#allocation2 + $0x98] sm:$0xff] %v890
  %915 = vst [vmem:[#allocation2 + $0xa0] sm:$0xff] %v891
  %916 = vst [vmem:[#allocation2 + $0xa8] sm:$0xff] %v892
  %917 = vst [vmem:[#allocation2 + $0xb0] sm:$0xff] %v893
  %918 = vst [vmem:[#allocation2 + $0xc8] sm:$0xff] %v894
  %919 = vst [vmem:[#allocation2 + $0xd0] sm:$0xff] %v895
  %920 = vst [vmem:[#allocation2 + $0xd8] sm:$0xff] %v896
  %921 = vst [vmem:[#allocation2 + $0xe0] sm:$0xff] %v897
  %922 = vst [vmem:[#allocation2 + $0xe8] sm:$0xff] %v898
  %923 = vst [vmem:[#allocation2 + $0xf0] sm:$0xff] %v899
  %v924 = vld [vmem:[%s5] sm:$0xff]
  %v925 = vld [vmem:[%s5 + $0x8] sm:$0xff]
  %v926 = vld [vmem:[%s5 + $0x10] sm:$0xff]
  %v927 = vld [vmem:[%s5 + $0x18] sm:$0xff]
  %929 = vset.pattern.permute.xlu0 0
  %930 = vperm.xlu0 %929, %v924
  %v931 = vpop.permute.xlu0 %930
  %934 = vset.pattern.permute.xlu0 0
  %935 = vperm.xlu0 %934, %v925
  %v936 = vpop.permute.xlu0 %935
  %939 = vset.pattern.permute.xlu0 0
  %940 = vperm.xlu0 %939, %v926
  %v941 = vpop.permute.xlu0 %940
  %944 = vset.pattern.permute.xlu0 0
  %945 = vperm.xlu0 %944, %v927
  %v946 = vpop.permute.xlu0 %945
  %v948 = vld [vmem:[#allocation2] sm:$0xff]
  %v949 = vld [vmem:[#allocation2 + $0x8] sm:$0xff]
  %v950 = vld [vmem:[#allocation2 + $0x10] sm:$0xff]
  %v951 = vld [vmem:[#allocation2 + $0x18] sm:$0xff]
  %v952 = vld [vmem:[#allocation2 + $0x20] sm:$0xff]
  %v953 = vld [vmem:[#allocation2 + $0x28] sm:$0xff]
  %v954 = vld [vmem:[#allocation2 + $0x30] sm:$0xff]
  %v955 = vld [vmem:[#allocation2 + $0x40] sm:$0xff]
  %v956 = vld [vmem:[#allocation2 + $0x48] sm:$0xff]
  %v957 = vld [vmem:[#allocation2 + $0x50] sm:$0xff]
  %v958 = vld [vmem:[#allocation2 + $0x58] sm:$0xff]
  %v959 = vld [vmem:[#allocation2 + $0x60] sm:$0xff]
  %v960 = vld [vmem:[#allocation2 + $0x68] sm:$0xff]
  %v961 = vld [vmem:[#allocation2 + $0x70] sm:$0xff]
  %v962 = vld [vmem:[#allocation2 + $0x80] sm:$0xff]
  %v963 = vld [vmem:[#allocation2 + $0x88] sm:$0xff]
  %v964 = vld [vmem:[#allocation2 + $0x90] sm:$0xff]
  %v965 = vld [vmem:[#allocation2 + $0x98] sm:$0xff]
  %v966 = vld [vmem:[#allocation2 + $0xa0] sm:$0xff]
  %v967 = vld [vmem:[#allocation2 + $0xa8] sm:$0xff]
  %v968 = vld [vmem:[#allocation2 + $0xb0] sm:$0xff]
  %v969 = vld [vmem:[#allocation2 + $0xc0] sm:$0xff]
  %v970 = vld [vmem:[#allocation2 + $0xc8] sm:$0xff]
  %v971 = vld [vmem:[#allocation2 + $0xd0] sm:$0xff]
  %v972 = vld [vmem:[#allocation2 + $0xd8] sm:$0xff]
  %v973 = vld [vmem:[#allocation2 + $0xe0] sm:$0xff]
  %v974 = vld [vmem:[#allocation2 + $0xe8] sm:$0xff]
  %v975 = vld [vmem:[#allocation2 + $0xf0] sm:$0xff]
  %1004 = vrot.lane.b32.xlu0 %v948, 19
  %v1005 = vpop.permute.xlu0 %1004
  %1006 = vrot.lane.b32.xlu0 %v949, 19
  %v1007 = vpop.permute.xlu0 %1006
  %1008 = vrot.lane.b32.xlu0 %v950, 19
  %v1009 = vpop.permute.xlu0 %1008
  %1010 = vrot.lane.b32.xlu0 %v951, 19
  %v1011 = vpop.permute.xlu0 %1010
  %1012 = vrot.lane.b32.xlu0 %v952, 19
  %v1013 = vpop.permute.xlu0 %1012
  %1014 = vrot.lane.b32.xlu0 %v953, 19
  %v1015 = vpop.permute.xlu0 %1014
  %1016 = vrot.lane.b32.xlu0 %v954, 19
  %v1017 = vpop.permute.xlu0 %1016
  %1018 = vrot.lane.b32.xlu0 %v955, 19
  %v1019 = vpop.permute.xlu0 %1018
  %1020 = vrot.lane.b32.xlu0 %v956, 19
  %v1021 = vpop.permute.xlu0 %1020
  %1022 = vrot.lane.b32.xlu0 %v957, 19
  %v1023 = vpop.permute.xlu0 %1022
  %1024 = vrot.lane.b32.xlu0 %v958, 19
  %v1025 = vpop.permute.xlu0 %1024
  %1026 = vrot.lane.b32.xlu0 %v959, 19
  %v1027 = vpop.permute.xlu0 %1026
  %1028 = vrot.lane.b32.xlu0 %v960, 19
  %v1029 = vpop.permute.xlu0 %1028
  %1030 = vrot.lane.b32.xlu0 %v961, 19
  %v1031 = vpop.permute.xlu0 %1030
  %1032 = vrot.lane.b32.xlu0 %v962, 19
  %v1033 = vpop.permute.xlu0 %1032
  %1034 = vrot.lane.b32.xlu0 %v963, 19
  %v1035 = vpop.permute.xlu0 %1034
  %1036 = vrot.lane.b32.xlu0 %v964, 19
  %v1037 = vpop.permute.xlu0 %1036
  %1038 = vrot.lane.b32.xlu0 %v965, 19
  %v1039 = vpop.permute.xlu0 %1038
  %1040 = vrot.lane.b32.xlu0 %v966, 19
  %v1041 = vpop.permute.xlu0 %1040
  %1042 = vrot.lane.b32.xlu0 %v967, 19
  %v1043 = vpop.permute.xlu0 %1042
  %1044 = vrot.lane.b32.xlu0 %v968, 19
  %v1045 = vpop.permute.xlu0 %1044
  %1046 = vrot.lane.b32.xlu0 %v969, 19
  %v1047 = vpop.permute.xlu0 %1046
  %1048 = vrot.lane.b32.xlu0 %v970, 19
  %v1049 = vpop.permute.xlu0 %1048
  %1050 = vrot.lane.b32.xlu0 %v971, 19
  %v1051 = vpop.permute.xlu0 %1050
  %1052 = vrot.lane.b32.xlu0 %v972, 19
  %v1053 = vpop.permute.xlu0 %1052
  %1054 = vrot.lane.b32.xlu0 %v973, 19
  %v1055 = vpop.permute.xlu0 %1054
  %1056 = vrot.lane.b32.xlu0 %v974, 19
  %v1057 = vpop.permute.xlu0 %1056
  %1058 = vrot.lane.b32.xlu0 %v975, 19
  %v1059 = vpop.permute.xlu0 %1058
  %v1060 = vsel %vm486, %v1005, %v1007
  %v1061 = vsel %vm486, %v1007, %v1009
  %v1062 = vsel %vm486, %v1009, %v1011
  %v1063 = vsel %vm486, %v1011, %v1013
  %v1064 = vsel %vm486, %v1013, %v1015
  %v1065 = vsel %vm486, %v1015, %v1017
  %v1066 = vsel %vm486, %v1019, %v1021
  %v1067 = vsel %vm486, %v1021, %v1023
  %v1068 = vsel %vm486, %v1023, %v1025
  %v1069 = vsel %vm486, %v1025, %v1027
  %v1070 = vsel %vm486, %v1027, %v1029
  %v1071 = vsel %vm486, %v1029, %v1031
  %v1072 = vsel %vm486, %v1033, %v1035
  %v1073 = vsel %vm486, %v1035, %v1037
  %v1074 = vsel %vm486, %v1037, %v1039
  %v1075 = vsel %vm486, %v1039, %v1041
  %v1076 = vsel %vm486, %v1041, %v1043
  %v1077 = vsel %vm486, %v1043, %v1045
  %v1078 = vsel %vm486, %v1047, %v1049
  %v1079 = vsel %vm486, %v1049, %v1051
  %v1080 = vsel %vm486, %v1051, %v1053
  %v1081 = vsel %vm486, %v1053, %v1055
  %v1082 = vsel %vm486, %v1055, %v1057
  %v1083 = vsel %vm486, %v1057, %v1059
  %1108 = vst [vmem:[#allocation4] sm:$0xff] %v1060
  %1109 = vst [vmem:[#allocation4 + $0x8] sm:$0xff] %v1061
  %1110 = vst [vmem:[#allocation4 + $0x10] sm:$0xff] %v1062
  %1111 = vst [vmem:[#allocation4 + $0x18] sm:$0xff] %v1063
  %1112 = vst [vmem:[#allocation4 + $0x20] sm:$0xff] %v1064
  %1113 = vst [vmem:[#allocation4 + $0x28] sm:$0xff] %v1065
  %1114 = vst [vmem:[#allocation4 + $0x30] sm:$0xff] %v1066
  %1115 = vst [vmem:[#allocation4 + $0x38] sm:$0xff] %v1067
  %1116 = vst [vmem:[#allocation4 + $0x40] sm:$0xff] %v1068
  %1117 = vst [vmem:[#allocation4 + $0x48] sm:$0xff] %v1069
  %1118 = vst [vmem:[#allocation4 + $0x50] sm:$0xff] %v1070
  %1119 = vst [vmem:[#allocation4 + $0x58] sm:$0xff] %v1071
  %1120 = vst [vmem:[#allocation4 + $0x60] sm:$0xff] %v1072
  %1121 = vst [vmem:[#allocation4 + $0x68] sm:$0xff] %v1073
  %1122 = vst [vmem:[#allocation4 + $0x70] sm:$0xff] %v1074
  %1123 = vst [vmem:[#allocation4 + $0x78] sm:$0xff] %v1075
  %1124 = vst [vmem:[#allocation4 + $0x80] sm:$0xff] %v1076
  %1125 = vst [vmem:[#allocation4 + $0x88] sm:$0xff] %v1077
  %1126 = vst [vmem:[#allocation4 + $0x90] sm:$0xff] %v1078
  %1127 = vst [vmem:[#allocation4 + $0x98] sm:$0xff] %v1079
  %1128 = vst [vmem:[#allocation4 + $0xa0] sm:$0xff] %v1080
  %1129 = vst [vmem:[#allocation4 + $0xa8] sm:$0xff] %v1081
  %1130 = vst [vmem:[#allocation4 + $0xb0] sm:$0xff] %v1082
  %1131 = vst [vmem:[#allocation4 + $0xb8] sm:$0xff] %v1083
  %v1132 = vld [vmem:[#allocation2] sm:$0xff]
  %v1133 = vld [vmem:[#allocation2 + $0x8] sm:$0xff]
  %v1134 = vld [vmem:[#allocation2 + $0x10] sm:$0xff]
  %v1135 = vld [vmem:[#allocation2 + $0x18] sm:$0xff]
  %v1136 = vld [vmem:[#allocation2 + $0x20] sm:$0xff]
  %v1137 = vld [vmem:[#allocation2 + $0x28] sm:$0xff]
  %v1138 = vld [vmem:[#allocation2 + $0x30] sm:$0xff]
  %v1139 = vld [vmem:[#allocation2 + $0x40] sm:$0xff]
  %v1140 = vld [vmem:[#allocation2 + $0x48] sm:$0xff]
  %v1141 = vld [vmem:[#allocation2 + $0x50] sm:$0xff]
  %v1142 = vld [vmem:[#allocation2 + $0x58] sm:$0xff]
  %v1143 = vld [vmem:[#allocation2 + $0x60] sm:$0xff]
  %v1144 = vld [vmem:[#allocation2 + $0x68] sm:$0xff]
  %v1145 = vld [vmem:[#allocation2 + $0x70] sm:$0xff]
  %v1146 = vld [vmem:[#allocation2 + $0x80] sm:$0xff]
  %v1147 = vld [vmem:[#allocation2 + $0x88] sm:$0xff]
  %v1148 = vld [vmem:[#allocation2 + $0x90] sm:$0xff]
  %v1149 = vld [vmem:[#allocation2 + $0x98] sm:$0xff]
  %v1150 = vld [vmem:[#allocation2 + $0xa0] sm:$0xff]
  %v1151 = vld [vmem:[#allocation2 + $0xa8] sm:$0xff]
  %v1152 = vld [vmem:[#allocation2 + $0xb0] sm:$0xff]
  %v1153 = vld [vmem:[#allocation2 + $0xc0] sm:$0xff]
  %v1154 = vld [vmem:[#allocation2 + $0xc8] sm:$0xff]
  %v1155 = vld [vmem:[#allocation2 + $0xd0] sm:$0xff]
  %v1156 = vld [vmem:[#allocation2 + $0xd8] sm:$0xff]
  %v1157 = vld [vmem:[#allocation2 + $0xe0] sm:$0xff]
  %v1158 = vld [vmem:[#allocation2 + $0xe8] sm:$0xff]
  %v1159 = vld [vmem:[#allocation2 + $0xf0] sm:$0xff]
  %1188 = vrot.lane.b32.xlu0 %v1132, 18
  %v1189 = vpop.permute.xlu0 %1188
  %1190 = vrot.lane.b32.xlu0 %v1133, 18
  %v1191 = vpop.permute.xlu0 %1190
  %1192 = vrot.lane.b32.xlu0 %v1134, 18
  %v1193 = vpop.permute.xlu0 %1192
  %1194 = vrot.lane.b32.xlu0 %v1135, 18
  %v1195 = vpop.permute.xlu0 %1194
  %1196 = vrot.lane.b32.xlu0 %v1136, 18
  %v1197 = vpop.permute.xlu0 %1196
  %1198 = vrot.lane.b32.xlu0 %v1137, 18
  %v1199 = vpop.permute.xlu0 %1198
  %1200 = vrot.lane.b32.xlu0 %v1138, 18
  %v1201 = vpop.permute.xlu0 %1200
  %1202 = vrot.lane.b32.xlu0 %v1139, 18
  %v1203 = vpop.permute.xlu0 %1202
  %1204 = vrot.lane.b32.xlu0 %v1140, 18
  %v1205 = vpop.permute.xlu0 %1204
  %1206 = vrot.lane.b32.xlu0 %v1141, 18
  %v1207 = vpop.permute.xlu0 %1206
  %1208 = vrot.lane.b32.xlu0 %v1142, 18
  %v1209 = vpop.permute.xlu0 %1208
  %1210 = vrot.lane.b32.xlu0 %v1143, 18
  %v1211 = vpop.permute.xlu0 %1210
  %1212 = vrot.lane.b32.xlu0 %v1144, 18
  %v1213 = vpop.permute.xlu0 %1212
  %1214 = vrot.lane.b32.xlu0 %v1145, 18
  %v1215 = vpop.permute.xlu0 %1214
  %1216 = vrot.lane.b32.xlu0 %v1146, 18
  %v1217 = vpop.permute.xlu0 %1216
  %1218 = vrot.lane.b32.xlu0 %v1147, 18
  %v1219 = vpop.permute.xlu0 %1218
  %1220 = vrot.lane.b32.xlu0 %v1148, 18
  %v1221 = vpop.permute.xlu0 %1220
  %1222 = vrot.lane.b32.xlu0 %v1149, 18
  %v1223 = vpop.permute.xlu0 %1222
  %1224 = vrot.lane.b32.xlu0 %v1150, 18
  %v1225 = vpop.permute.xlu0 %1224
  %1226 = vrot.lane.b32.xlu0 %v1151, 18
  %v1227 = vpop.permute.xlu0 %1226
  %1228 = vrot.lane.b32.xlu0 %v1152, 18
  %v1229 = vpop.permute.xlu0 %1228
  %1230 = vrot.lane.b32.xlu0 %v1153, 18
  %v1231 = vpop.permute.xlu0 %1230
  %1232 = vrot.lane.b32.xlu0 %v1154, 18
  %v1233 = vpop.permute.xlu0 %1232
  %1234 = vrot.lane.b32.xlu0 %v1155, 18
  %v1235 = vpop.permute.xlu0 %1234
  %1236 = vrot.lane.b32.xlu0 %v1156, 18
  %v1237 = vpop.permute.xlu0 %1236
  %1238 = vrot.lane.b32.xlu0 %v1157, 18
  %v1239 = vpop.permute.xlu0 %1238
  %1240 = vrot.lane.b32.xlu0 %v1158, 18
  %v1241 = vpop.permute.xlu0 %1240
  %1242 = vrot.lane.b32.xlu0 %v1159, 18
  %v1243 = vpop.permute.xlu0 %1242
  %vm1244 = vcmask 146432
  %v1245 = vsel %vm1244, %v1189, %v1191
  %v1246 = vsel %vm1244, %v1191, %v1193
  %v1247 = vsel %vm1244, %v1193, %v1195
  %v1248 = vsel %vm1244, %v1195, %v1197
  %v1249 = vsel %vm1244, %v1197, %v1199
  %v1250 = vsel %vm1244, %v1199, %v1201
  %v1251 = vsel %vm1244, %v1203, %v1205
  %v1252 = vsel %vm1244, %v1205, %v1207
  %v1253 = vsel %vm1244, %v1207, %v1209
  %v1254 = vsel %vm1244, %v1209, %v1211
  %v1255 = vsel %vm1244, %v1211, %v1213
  %v1256 = vsel %vm1244, %v1213, %v1215
  %v1257 = vsel %vm1244, %v1217, %v1219
  %v1258 = vsel %vm1244, %v1219, %v1221
  %v1259 = vsel %vm1244, %v1221, %v1223
  %v1260 = vsel %vm1244, %v1223, %v1225
  %v1261 = vsel %vm1244, %v1225, %v1227
  %v1262 = vsel %vm1244, %v1227, %v1229
  %v1263 = vsel %vm1244, %v1231, %v1233
  %v1264 = vsel %vm1244, %v1233, %v1235
  %v1265 = vsel %vm1244, %v1235, %v1237
  %v1266 = vsel %vm1244, %v1237, %v1239
  %v1267 = vsel %vm1244, %v1239, %v1241
  %v1268 = vsel %vm1244, %v1241, %v1243
  %1293 = vst [vmem:[#allocation4 + $0xc0] sm:$0xff] %v1245
  %1294 = vst [vmem:[#allocation4 + $0xc8] sm:$0xff] %v1246
  %1295 = vst [vmem:[#allocation4 + $0xd0] sm:$0xff] %v1247
  %1296 = vst [vmem:[#allocation4 + $0xd8] sm:$0xff] %v1248
  %1297 = vst [vmem:[#allocation4 + $0xe0] sm:$0xff] %v1249
  %1298 = vst [vmem:[#allocation4 + $0xe8] sm:$0xff] %v1250
  %1299 = vst [vmem:[#allocation4 + $0xf0] sm:$0xff] %v1251
  %1300 = vst [vmem:[#allocation4 + $0xf8] sm:$0xff] %v1252
  %1301 = vst [vmem:[#allocation4 + $0x100] sm:$0xff] %v1253
  %1302 = vst [vmem:[#allocation4 + $0x108] sm:$0xff] %v1254
  %1303 = vst [vmem:[#allocation4 + $0x110] sm:$0xff] %v1255
  %1304 = vst [vmem:[#allocation4 + $0x118] sm:$0xff] %v1256
  %1305 = vst [vmem:[#allocation4 + $0x120] sm:$0xff] %v1257
  %1306 = vst [vmem:[#allocation4 + $0x128] sm:$0xff] %v1258
  %1307 = vst [vmem:[#allocation4 + $0x130] sm:$0xff] %v1259
  %1308 = vst [vmem:[#allocation4 + $0x138] sm:$0xff] %v1260
  %1309 = vst [vmem:[#allocation4 + $0x140] sm:$0xff] %v1261
  %1310 = vst [vmem:[#allocation4 + $0x148] sm:$0xff] %v1262
  %1311 = vst [vmem:[#allocation4 + $0x150] sm:$0xff] %v1263
  %1312 = vst [vmem:[#allocation4 + $0x158] sm:$0xff] %v1264
  %1313 = vst [vmem:[#allocation4 + $0x160] sm:$0xff] %v1265
  %1314 = vst [vmem:[#allocation4 + $0x168] sm:$0xff] %v1266
  %1315 = vst [vmem:[#allocation4 + $0x170] sm:$0xff] %v1267
  %1316 = vst [vmem:[#allocation4 + $0x178] sm:$0xff] %v1268
  %v1317 = vld [vmem:[#allocation2] sm:$0xff]
  %v1318 = vld [vmem:[#allocation2 + $0x8] sm:$0xff]
  %v1319 = vld [vmem:[#allocation2 + $0x10] sm:$0xff]
  %v1320 = vld [vmem:[#allocation2 + $0x18] sm:$0xff]
  %v1321 = vld [vmem:[#allocation2 + $0x20] sm:$0xff]
  %v1322 = vld [vmem:[#allocation2 + $0x28] sm:$0xff]
  %v1323 = vld [vmem:[#allocation2 + $0x30] sm:$0xff]
  %v1324 = vld [vmem:[#allocation2 + $0x40] sm:$0xff]
  %v1325 = vld [vmem:[#allocation2 + $0x48] sm:$0xff]
  %v1326 = vld [vmem:[#allocation2 + $0x50] sm:$0xff]
  %v1327 = vld [vmem:[#allocation2 + $0x58] sm:$0xff]
  %v1328 = vld [vmem:[#allocation2 + $0x60] sm:$0xff]
  %v1329 = vld [vmem:[#allocation2 + $0x68] sm:$0xff]
  %v1330 = vld [vmem:[#allocation2 + $0x70] sm:$0xff]
  %v1331 = vld [vmem:[#allocation2 + $0x80] sm:$0xff]
  %v1332 = vld [vmem:[#allocation2 + $0x88] sm:$0xff]
  %v1333 = vld [vmem:[#allocation2 + $0x90] sm:$0xff]
  %v1334 = vld [vmem:[#allocation2 + $0x98] sm:$0xff]
  %v1335 = vld [vmem:[#allocation2 + $0xa0] sm:$0xff]
  %v1336 = vld [vmem:[#allocation2 + $0xa8] sm:$0xff]
  %v1337 = vld [vmem:[#allocation2 + $0xb0] sm:$0xff]
  %v1338 = vld [vmem:[#allocation2 + $0xc0] sm:$0xff]
  %v1339 = vld [vmem:[#allocation2 + $0xc8] sm:$0xff]
  %v1340 = vld [vmem:[#allocation2 + $0xd0] sm:$0xff]
  %v1341 = vld [vmem:[#allocation2 + $0xd8] sm:$0xff]
  %v1342 = vld [vmem:[#allocation2 + $0xe0] sm:$0xff]
  %v1343 = vld [vmem:[#allocation2 + $0xe8] sm:$0xff]
  %v1344 = vld [vmem:[#allocation2 + $0xf0] sm:$0xff]
  %1373 = vrot.lane.b32.xlu0 %v1317, 17
  %v1374 = vpop.permute.xlu0 %1373
  %1375 = vrot.lane.b32.xlu0 %v1318, 17
  %v1376 = vpop.permute.xlu0 %1375
  %1377 = vrot.lane.b32.xlu0 %v1319, 17
  %v1378 = vpop.permute.xlu0 %1377
  %1379 = vrot.lane.b32.xlu0 %v1320, 17
  %v1380 = vpop.permute.xlu0 %1379
  %1381 = vrot.lane.b32.xlu0 %v1321, 17
  %v1382 = vpop.permute.xlu0 %1381
  %1383 = vrot.lane.b32.xlu0 %v1322, 17
  %v1384 = vpop.permute.xlu0 %1383
  %1385 = vrot.lane.b32.xlu0 %v1323, 17
  %v1386 = vpop.permute.xlu0 %1385
  %1387 = vrot.lane.b32.xlu0 %v1324, 17
  %v1388 = vpop.permute.xlu0 %1387
  %1389 = vrot.lane.b32.xlu0 %v1325, 17
  %v1390 = vpop.permute.xlu0 %1389
  %1391 = vrot.lane.b32.xlu0 %v1326, 17
  %v1392 = vpop.permute.xlu0 %1391
  %1393 = vrot.lane.b32.xlu0 %v1327, 17
  %v1394 = vpop.permute.xlu0 %1393
  %1395 = vrot.lane.b32.xlu0 %v1328, 17
  %v1396 = vpop.permute.xlu0 %1395
  %1397 = vrot.lane.b32.xlu0 %v1329, 17
  %v1398 = vpop.permute.xlu0 %1397
  %1399 = vrot.lane.b32.xlu0 %v1330, 17
  %v1400 = vpop.permute.xlu0 %1399
  %1401 = vrot.lane.b32.xlu0 %v1331, 17
  %v1402 = vpop.permute.xlu0 %1401
  %1403 = vrot.lane.b32.xlu0 %v1332, 17
  %v1404 = vpop.permute.xlu0 %1403
  %1405 = vrot.lane.b32.xlu0 %v1333, 17
  %v1406 = vpop.permute.xlu0 %1405
  %1407 = vrot.lane.b32.xlu0 %v1334, 17
  %v1408 = vpop.permute.xlu0 %1407
  %1409 = vrot.lane.b32.xlu0 %v1335, 17
  %v1410 = vpop.permute.xlu0 %1409
  %1411 = vrot.lane.b32.xlu0 %v1336, 17
  %v1412 = vpop.permute.xlu0 %1411
  %1413 = vrot.lane.b32.xlu0 %v1337, 17
  %v1414 = vpop.permute.xlu0 %1413
  %1415 = vrot.lane.b32.xlu0 %v1338, 17
  %v1416 = vpop.permute.xlu0 %1415
  %1417 = vrot.lane.b32.xlu0 %v1339, 17
  %v1418 = vpop.permute.xlu0 %1417
  %1419 = vrot.lane.b32.xlu0 %v1340, 17
  %v1420 = vpop.permute.xlu0 %1419
  %1421 = vrot.lane.b32.xlu0 %v1341, 17
  %v1422 = vpop.permute.xlu0 %1421
  %1423 = vrot.lane.b32.xlu0 %v1342, 17
  %v1424 = vpop.permute.xlu0 %1423
  %1425 = vrot.lane.b32.xlu0 %v1343, 17
  %v1426 = vpop.permute.xlu0 %1425
  %1427 = vrot.lane.b32.xlu0 %v1344, 17
  %v1428 = vpop.permute.xlu0 %1427
  %vm1429 = vcmask 138240
  %v1430 = vsel %vm1429, %v1374, %v1376
  %v1431 = vsel %vm1429, %v1376, %v1378
  %v1432 = vsel %vm1429, %v1378, %v1380
  %v1433 = vsel %vm1429, %v1380, %v1382
  %v1434 = vsel %vm1429, %v1382, %v1384
  %v1435 = vsel %vm1429, %v1384, %v1386
  %v1436 = vsel %vm1429, %v1388, %v1390
  %v1437 = vsel %vm1429, %v1390, %v1392
  %v1438 = vsel %vm1429, %v1392, %v1394
  %v1439 = vsel %vm1429, %v1394, %v1396
  %v1440 = vsel %vm1429, %v1396, %v1398
  %v1441 = vsel %vm1429, %v1398, %v1400
  %v1442 = vsel %vm1429, %v1402, %v1404
  %v1443 = vsel %vm1429, %v1404, %v1406
  %v1444 = vsel %vm1429, %v1406, %v1408
  %v1445 = vsel %vm1429, %v1408, %v1410
  %v1446 = vsel %vm1429, %v1410, %v1412
  %v1447 = vsel %vm1429, %v1412, %v1414
  %v1448 = vsel %vm1429, %v1416, %v1418
  %v1449 = vsel %vm1429, %v1418, %v1420
  %v1450 = vsel %vm1429, %v1420, %v1422
  %v1451 = vsel %vm1429, %v1422, %v1424
  %v1452 = vsel %vm1429, %v1424, %v1426
  %v1453 = vsel %vm1429, %v1426, %v1428
  %1478 = vst [vmem:[#allocation4 + $0x180] sm:$0xff] %v1430
  %1479 = vst [vmem:[#allocation4 + $0x188] sm:$0xff] %v1431
  %1480 = vst [vmem:[#allocation4 + $0x190] sm:$0xff] %v1432
  %1481 = vst [vmem:[#allocation4 + $0x198] sm:$0xff] %v1433
  %1482 = vst [vmem:[#allocation4 + $0x1a0] sm:$0xff] %v1434
  %1483 = vst [vmem:[#allocation4 + $0x1a8] sm:$0xff] %v1435
  %1484 = vst [vmem:[#allocation4 + $0x1b0] sm:$0xff] %v1436
  %1485 = vst [vmem:[#allocation4 + $0x1b8] sm:$0xff] %v1437
  %1486 = vst [vmem:[#allocation4 + $0x1c0] sm:$0xff] %v1438
  %1487 = vst [vmem:[#allocation4 + $0x1c8] sm:$0xff] %v1439
  %1488 = vst [vmem:[#allocation4 + $0x1d0] sm:$0xff] %v1440
  %1489 = vst [vmem:[#allocation4 + $0x1d8] sm:$0xff] %v1441
  %1490 = vst [vmem:[#allocation4 + $0x1e0] sm:$0xff] %v1442
  %1491 = vst [vmem:[#allocation4 + $0x1e8] sm:$0xff] %v1443
  %1492 = vst [vmem:[#allocation4 + $0x1f0] sm:$0xff] %v1444
  %1493 = vst [vmem:[#allocation4 + $0x1f8] sm:$0xff] %v1445
  %1494 = vst [vmem:[#allocation4 + $0x200] sm:$0xff] %v1446
  %1495 = vst [vmem:[#allocation4 + $0x208] sm:$0xff] %v1447
  %1496 = vst [vmem:[#allocation4 + $0x210] sm:$0xff] %v1448
  %1497 = vst [vmem:[#allocation4 + $0x218] sm:$0xff] %v1449
  %1498 = vst [vmem:[#allocation4 + $0x220] sm:$0xff] %v1450
  %1499 = vst [vmem:[#allocation4 + $0x228] sm:$0xff] %v1451
  %1500 = vst [vmem:[#allocation4 + $0x230] sm:$0xff] %v1452
  %1501 = vst [vmem:[#allocation4 + $0x238] sm:$0xff] %v1453
  %v1502 = vld [vmem:[#allocation2] sm:$0xff]
  %v1503 = vld [vmem:[#allocation2 + $0x8] sm:$0xff]
  %v1504 = vld [vmem:[#allocation2 + $0x10] sm:$0xff]
  %v1505 = vld [vmem:[#allocation2 + $0x18] sm:$0xff]
  %v1506 = vld [vmem:[#allocation2 + $0x20] sm:$0xff]
  %v1507 = vld [vmem:[#allocation2 + $0x28] sm:$0xff]
  %v1508 = vld [vmem:[#allocation2 + $0x30] sm:$0xff]
  %v1509 = vld [vmem:[#allocation2 + $0x40] sm:$0xff]
  %v1510 = vld [vmem:[#allocation2 + $0x48] sm:$0xff]
  %v1511 = vld [vmem:[#allocation2 + $0x50] sm:$0xff]
  %v1512 = vld [vmem:[#allocation2 + $0x58] sm:$0xff]
  %v1513 = vld [vmem:[#allocation2 + $0x60] sm:$0xff]
  %v1514 = vld [vmem:[#allocation2 + $0x68] sm:$0xff]
  %v1515 = vld [vmem:[#allocation2 + $0x70] sm:$0xff]
  %v1516 = vld [vmem:[#allocation2 + $0x80] sm:$0xff]
  %v1517 = vld [vmem:[#allocation2 + $0x88] sm:$0xff]
  %v1518 = vld [vmem:[#allocation2 + $0x90] sm:$0xff]
  %v1519 = vld [vmem:[#allocation2 + $0x98] sm:$0xff]
  %v1520 = vld [vmem:[#allocation2 + $0xa0] sm:$0xff]
  %v1521 = vld [vmem:[#allocation2 + $0xa8] sm:$0xff]
  %v1522 = vld [vmem:[#allocation2 + $0xb0] sm:$0xff]
  %v1523 = vld [vmem:[#allocation2 + $0xc0] sm:$0xff]
  %v1524 = vld [vmem:[#allocation2 + $0xc8] sm:$0xff]
  %v1525 = vld [vmem:[#allocation2 + $0xd0] sm:$0xff]
  %v1526 = vld [vmem:[#allocation2 + $0xd8] sm:$0xff]
  %v1527 = vld [vmem:[#allocation2 + $0xe0] sm:$0xff]
  %v1528 = vld [vmem:[#allocation2 + $0xe8] sm:$0xff]
  %v1529 = vld [vmem:[#allocation2 + $0xf0] sm:$0xff]
  %1558 = vrot.lane.b32.xlu0 %v1502, 1
  %v1559 = vpop.permute.xlu0 %1558
  %1560 = vrot.lane.b32.xlu0 %v1503, 1
  %v1561 = vpop.permute.xlu0 %1560
  %1562 = vrot.lane.b32.xlu0 %v1504, 1
  %v1563 = vpop.permute.xlu0 %1562
  %1564 = vrot.lane.b32.xlu0 %v1505, 1
  %v1565 = vpop.permute.xlu0 %1564
  %1566 = vrot.lane.b32.xlu0 %v1506, 1
  %v1567 = vpop.permute.xlu0 %1566
  %1568 = vrot.lane.b32.xlu0 %v1507, 1
  %v1569 = vpop.permute.xlu0 %1568
  %1570 = vrot.lane.b32.xlu0 %v1508, 1
  %v1571 = vpop.permute.xlu0 %1570
  %1572 = vrot.lane.b32.xlu0 %v1509, 1
  %v1573 = vpop.permute.xlu0 %1572
  %1574 = vrot.lane.b32.xlu0 %v1510, 1
  %v1575 = vpop.permute.xlu0 %1574
  %1576 = vrot.lane.b32.xlu0 %v1511, 1
  %v1577 = vpop.permute.xlu0 %1576
  %1578 = vrot.lane.b32.xlu0 %v1512, 1
  %v1579 = vpop.permute.xlu0 %1578
  %1580 = vrot.lane.b32.xlu0 %v1513, 1
  %v1581 = vpop.permute.xlu0 %1580
  %1582 = vrot.lane.b32.xlu0 %v1514, 1
  %v1583 = vpop.permute.xlu0 %1582
  %1584 = vrot.lane.b32.xlu0 %v1515, 1
  %v1585 = vpop.permute.xlu0 %1584
  %1586 = vrot.lane.b32.xlu0 %v1516, 1
  %v1587 = vpop.permute.xlu0 %1586
  %1588 = vrot.lane.b32.xlu0 %v1517, 1
  %v1589 = vpop.permute.xlu0 %1588
  %1590 = vrot.lane.b32.xlu0 %v1518, 1
  %v1591 = vpop.permute.xlu0 %1590
  %1592 = vrot.lane.b32.xlu0 %v1519, 1
  %v1593 = vpop.permute.xlu0 %1592
  %1594 = vrot.lane.b32.xlu0 %v1520, 1
  %v1595 = vpop.permute.xlu0 %1594
  %1596 = vrot.lane.b32.xlu0 %v1521, 1
  %v1597 = vpop.permute.xlu0 %1596
  %1598 = vrot.lane.b32.xlu0 %v1522, 1
  %v1599 = vpop.permute.xlu0 %1598
  %1600 = vrot.lane.b32.xlu0 %v1523, 1
  %v1601 = vpop.permute.xlu0 %1600
  %1602 = vrot.lane.b32.xlu0 %v1524, 1
  %v1603 = vpop.permute.xlu0 %1602
  %1604 = vrot.lane.b32.xlu0 %v1525, 1
  %v1605 = vpop.permute.xlu0 %1604
  %1606 = vrot.lane.b32.xlu0 %v1526, 1
  %v1607 = vpop.permute.xlu0 %1606
  %1608 = vrot.lane.b32.xlu0 %v1527, 1
  %v1609 = vpop.permute.xlu0 %1608
  %1610 = vrot.lane.b32.xlu0 %v1528, 1
  %v1611 = vpop.permute.xlu0 %1610
  %1612 = vrot.lane.b32.xlu0 %v1529, 1
  %v1613 = vpop.permute.xlu0 %1612
  %vm1614 = vcmask 7168
  %v1615 = vsel %vm1614, %v1559, %v1561
  %v1616 = vsel %vm1614, %v1561, %v1563
  %v1617 = vsel %vm1614, %v1563, %v1565
  %v1618 = vsel %vm1614, %v1565, %v1567
  %v1619 = vsel %vm1614, %v1567, %v1569
  %v1620 = vsel %vm1614, %v1569, %v1571
  %v1621 = vsel %vm1614, %v1573, %v1575
  %v1622 = vsel %vm1614, %v1575, %v1577
  %v1623 = vsel %vm1614, %v1577, %v1579
  %v1624 = vsel %vm1614, %v1579, %v1581
  %v1625 = vsel %vm1614, %v1581, %v1583
  %v1626 = vsel %vm1614, %v1583, %v1585
  %v1627 = vsel %vm1614, %v1587, %v1589
  %v1628 = vsel %vm1614, %v1589, %v1591
  %v1629 = vsel %vm1614, %v1591, %v1593
  %v1630 = vsel %vm1614, %v1593, %v1595
  %v1631 = vsel %vm1614, %v1595, %v1597
  %v1632 = vsel %vm1614, %v1597, %v1599
  %v1633 = vsel %vm1614, %v1601, %v1603
  %v1634 = vsel %vm1614, %v1603, %v1605
  %v1635 = vsel %vm1614, %v1605, %v1607
  %v1636 = vsel %vm1614, %v1607, %v1609
  %v1637 = vsel %vm1614, %v1609, %v1611
  %v1638 = vsel %vm1614, %v1611, %v1613
  %1663 = vst [vmem:[#allocation4 + $0x240] sm:$0xff] %v1615
  %1664 = vst [vmem:[#allocation4 + $0x248] sm:$0xff] %v1616
  %1665 = vst [vmem:[#allocation4 + $0x250] sm:$0xff] %v1617
  %1666 = vst [vmem:[#allocation4 + $0x258] sm:$0xff] %v1618
  %1667 = vst [vmem:[#allocation4 + $0x260] sm:$0xff] %v1619
  %1668 = vst [vmem:[#allocation4 + $0x268] sm:$0xff] %v1620
  %1669 = vst [vmem:[#allocation4 + $0x270] sm:$0xff] %v1621
  %1670 = vst [vmem:[#allocation4 + $0x278] sm:$0xff] %v1622
  %1671 = vst [vmem:[#allocation4 + $0x280] sm:$0xff] %v1623
  %1672 = vst [vmem:[#allocation4 + $0x288] sm:$0xff] %v1624
  %1673 = vst [vmem:[#allocation4 + $0x290] sm:$0xff] %v1625
  %1674 = vst [vmem:[#allocation4 + $0x298] sm:$0xff] %v1626
  %1675 = vst [vmem:[#allocation4 + $0x2a0] sm:$0xff] %v1627
  %1676 = vst [vmem:[#allocation4 + $0x2a8] sm:$0xff] %v1628
  %1677 = vst [vmem:[#allocation4 + $0x2b0] sm:$0xff] %v1629
  %1678 = vst [vmem:[#allocation4 + $0x2b8] sm:$0xff] %v1630
  %1679 = vst [vmem:[#allocation4 + $0x2c0] sm:$0xff] %v1631
  %1680 = vst [vmem:[#allocation4 + $0x2c8] sm:$0xff] %v1632
  %1681 = vst [vmem:[#allocation4 + $0x2d0] sm:$0xff] %v1633
  %1682 = vst [vmem:[#allocation4 + $0x2d8] sm:$0xff] %v1634
  %1683 = vst [vmem:[#allocation4 + $0x2e0] sm:$0xff] %v1635
  %1684 = vst [vmem:[#allocation4 + $0x2e8] sm:$0xff] %v1636
  %1685 = vst [vmem:[#allocation4 + $0x2f0] sm:$0xff] %v1637
  %1686 = vst [vmem:[#allocation4 + $0x2f8] sm:$0xff] %v1638
  %v1687 = vld [vmem:[#allocation2 + $0x8] sm:$0xff]
  %v1688 = vld [vmem:[#allocation2 + $0x10] sm:$0xff]
  %v1689 = vld [vmem:[#allocation2 + $0x18] sm:$0xff]
  %v1690 = vld [vmem:[#allocation2 + $0x20] sm:$0xff]
  %v1691 = vld [vmem:[#allocation2 + $0x28] sm:$0xff]
  %v1692 = vld [vmem:[#allocation2 + $0x30] sm:$0xff]
  %v1693 = vld [vmem:[#allocation2 + $0x48] sm:$0xff]
  %v1694 = vld [vmem:[#allocation2 + $0x50] sm:$0xff]
  %v1695 = vld [vmem:[#allocation2 + $0x58] sm:$0xff]
  %v1696 = vld [vmem:[#allocation2 + $0x60] sm:$0xff]
  %v1697 = vld [vmem:[#allocation2 + $0x68] sm:$0xff]
  %v1698 = vld [vmem:[#allocation2 + $0x70] sm:$0xff]
  %v1699 = vld [vmem:[#allocation2 + $0x88] sm:$0xff]
  %v1700 = vld [vmem:[#allocation2 + $0x90] sm:$0xff]
  %v1701 = vld [vmem:[#allocation2 + $0x98] sm:$0xff]
  %v1702 = vld [vmem:[#allocation2 + $0xa0] sm:$0xff]
  %v1703 = vld [vmem:[#allocation2 + $0xa8] sm:$0xff]
  %v1704 = vld [vmem:[#allocation2 + $0xb0] sm:$0xff]
  %v1705 = vld [vmem:[#allocation2 + $0xc8] sm:$0xff]
  %v1706 = vld [vmem:[#allocation2 + $0xd0] sm:$0xff]
  %v1707 = vld [vmem:[#allocation2 + $0xd8] sm:$0xff]
  %v1708 = vld [vmem:[#allocation2 + $0xe0] sm:$0xff]
  %v1709 = vld [vmem:[#allocation2 + $0xe8] sm:$0xff]
  %v1710 = vld [vmem:[#allocation2 + $0xf0] sm:$0xff]
  %1711 = vst [vmem:[#allocation4 + $0x300] sm:$0xff] %v1687
  %1712 = vst [vmem:[#allocation4 + $0x308] sm:$0xff] %v1688
  %1713 = vst [vmem:[#allocation4 + $0x310] sm:$0xff] %v1689
  %1714 = vst [vmem:[#allocation4 + $0x318] sm:$0xff] %v1690
  %1715 = vst [vmem:[#allocation4 + $0x320] sm:$0xff] %v1691
  %1716 = vst [vmem:[#allocation4 + $0x328] sm:$0xff] %v1692
  %1717 = vst [vmem:[#allocation4 + $0x330] sm:$0xff] %v1693
  %1718 = vst [vmem:[#allocation4 + $0x338] sm:$0xff] %v1694
  %1719 = vst [vmem:[#allocation4 + $0x340] sm:$0xff] %v1695
  %1720 = vst [vmem:[#allocation4 + $0x348] sm:$0xff] %v1696
  %1721 = vst [vmem:[#allocation4 + $0x350] sm:$0xff] %v1697
  %1722 = vst [vmem:[#allocation4 + $0x358] sm:$0xff] %v1698
  %1723 = vst [vmem:[#allocation4 + $0x360] sm:$0xff] %v1699
  %1724 = vst [vmem:[#allocation4 + $0x368] sm:$0xff] %v1700
  %1725 = vst [vmem:[#allocation4 + $0x370] sm:$0xff] %v1701
  %1726 = vst [vmem:[#allocation4 + $0x378] sm:$0xff] %v1702
  %1727 = vst [vmem:[#allocation4 + $0x380] sm:$0xff] %v1703
  %1728 = vst [vmem:[#allocation4 + $0x388] sm:$0xff] %v1704
  %1729 = vst [vmem:[#allocation4 + $0x390] sm:$0xff] %v1705
  %1730 = vst [vmem:[#allocation4 + $0x398] sm:$0xff] %v1706
  %1731 = vst [vmem:[#allocation4 + $0x3a0] sm:$0xff] %v1707
  %1732 = vst [vmem:[#allocation4 + $0x3a8] sm:$0xff] %v1708
  %1733 = vst [vmem:[#allocation4 + $0x3b0] sm:$0xff] %v1709
  %1734 = vst [vmem:[#allocation4 + $0x3b8] sm:$0xff] %v1710
  %v1735 = vld [vmem:[#allocation2 + $0x8] sm:$0xff]
  %v1736 = vld [vmem:[#allocation2 + $0x10] sm:$0xff]
  %v1737 = vld [vmem:[#allocation2 + $0x18] sm:$0xff]
  %v1738 = vld [vmem:[#allocation2 + $0x20] sm:$0xff]
  %v1739 = vld [vmem:[#allocation2 + $0x28] sm:$0xff]
  %v1740 = vld [vmem:[#allocation2 + $0x30] sm:$0xff]
  %v1741 = vld [vmem:[#allocation2 + $0x38] sm:$0xff]
  %v1742 = vld [vmem:[#allocation2 + $0x48] sm:$0xff]
  %v1743 = vld [vmem:[#allocation2 + $0x50] sm:$0xff]
  %v1744 = vld [vmem:[#allocation2 + $0x58] sm:$0xff]
  %v1745 = vld [vmem:[#allocation2 + $0x60] sm:$0xff]
  %v1746 = vld [vmem:[#allocation2 + $0x68] sm:$0xff]
  %v1747 = vld [vmem:[#allocation2 + $0x70] sm:$0xff]
  %v1748 = vld [vmem:[#allocation2 + $0x78] sm:$0xff]
  %v1749 = vld [vmem:[#allocation2 + $0x88] sm:$0xff]
  %v1750 = vld [vmem:[#allocation2 + $0x90] sm:$0xff]
  %v1751 = vld [vmem:[#allocation2 + $0x98] sm:$0xff]
  %v1752 = vld [vmem:[#allocation2 + $0xa0] sm:$0xff]
  %v1753 = vld [vmem:[#allocation2 + $0xa8] sm:$0xff]
  %v1754 = vld [vmem:[#allocation2 + $0xb0] sm:$0xff]
  %v1755 = vld [vmem:[#allocation2 + $0xb8] sm:$0xff]
  %v1756 = vld [vmem:[#allocation2 + $0xc8] sm:$0xff]
  %v1757 = vld [vmem:[#allocation2 + $0xd0] sm:$0xff]
  %v1758 = vld [vmem:[#allocation2 + $0xd8] sm:$0xff]
  %v1759 = vld [vmem:[#allocation2 + $0xe0] sm:$0xff]
  %v1760 = vld [vmem:[#allocation2 + $0xe8] sm:$0xff]
  %v1761 = vld [vmem:[#allocation2 + $0xf0] sm:$0xff]
  %v1762 = vld [vmem:[#allocation2 + $0xf8] sm:$0xff]
  %1791 = vrot.lane.b32.xlu0 %v1735, 127
  %v1792 = vpop.permute.xlu0 %1791
  %1793 = vrot.lane.b32.xlu0 %v1736, 127
  %v1794 = vpop.permute.xlu0 %1793
  %1795 = vrot.lane.b32.xlu0 %v1737, 127
  %v1796 = vpop.permute.xlu0 %1795
  %1797 = vrot.lane.b32.xlu0 %v1738, 127
  %v1798 = vpop.permute.xlu0 %1797
  %1799 = vrot.lane.b32.xlu0 %v1739, 127
  %v1800 = vpop.permute.xlu0 %1799
  %1801 = vrot.lane.b32.xlu0 %v1740, 127
  %v1802 = vpop.permute.xlu0 %1801
  %1803 = vrot.lane.b32.xlu0 %v1741, 127
  %v1804 = vpop.permute.xlu0 %1803
  %1805 = vrot.lane.b32.xlu0 %v1742, 127
  %v1806 = vpop.permute.xlu0 %1805
  %1807 = vrot.lane.b32.xlu0 %v1743, 127
  %v1808 = vpop.permute.xlu0 %1807
  %1809 = vrot.lane.b32.xlu0 %v1744, 127
  %v1810 = vpop.permute.xlu0 %1809
  %1811 = vrot.lane.b32.xlu0 %v1745, 127
  %v1812 = vpop.permute.xlu0 %1811
  %1813 = vrot.lane.b32.xlu0 %v1746, 127
  %v1814 = vpop.permute.xlu0 %1813
  %1815 = vrot.lane.b32.xlu0 %v1747, 127
  %v1816 = vpop.permute.xlu0 %1815
  %1817 = vrot.lane.b32.xlu0 %v1748, 127
  %v1818 = vpop.permute.xlu0 %1817
  %1819 = vrot.lane.b32.xlu0 %v1749, 127
  %v1820 = vpop.permute.xlu0 %1819
  %1821 = vrot.lane.b32.xlu0 %v1750, 127
  %v1822 = vpop.permute.xlu0 %1821
  %1823 = vrot.lane.b32.xlu0 %v1751, 127
  %v1824 = vpop.permute.xlu0 %1823
  %1825 = vrot.lane.b32.xlu0 %v1752, 127
  %v1826 = vpop.permute.xlu0 %1825
  %1827 = vrot.lane.b32.xlu0 %v1753, 127
  %v1828 = vpop.permute.xlu0 %1827
  %1829 = vrot.lane.b32.xlu0 %v1754, 127
  %v1830 = vpop.permute.xlu0 %1829
  %1831 = vrot.lane.b32.xlu0 %v1755, 127
  %v1832 = vpop.permute.xlu0 %1831
  %1833 = vrot.lane.b32.xlu0 %v1756, 127
  %v1834 = vpop.permute.xlu0 %1833
  %1835 = vrot.lane.b32.xlu0 %v1757, 127
  %v1836 = vpop.permute.xlu0 %1835
  %1837 = vrot.lane.b32.xlu0 %v1758, 127
  %v1838 = vpop.permute.xlu0 %1837
  %1839 = vrot.lane.b32.xlu0 %v1759, 127
  %v1840 = vpop.permute.xlu0 %1839
  %1841 = vrot.lane.b32.xlu0 %v1760, 127
  %v1842 = vpop.permute.xlu0 %1841
  %1843 = vrot.lane.b32.xlu0 %v1761, 127
  %v1844 = vpop.permute.xlu0 %1843
  %1845 = vrot.lane.b32.xlu0 %v1762, 127
  %v1846 = vpop.permute.xlu0 %1845
  %v1847 = vsel %vm137, %v1792, %v1794
  %v1848 = vsel %vm137, %v1794, %v1796
  %v1849 = vsel %vm137, %v1796, %v1798
  %v1850 = vsel %vm137, %v1798, %v1800
  %v1851 = vsel %vm137, %v1800, %v1802
  %v1852 = vsel %vm137, %v1802, %v1804
  %v1853 = vsel %vm137, %v1806, %v1808
  %v1854 = vsel %vm137, %v1808, %v1810
  %v1855 = vsel %vm137, %v1810, %v1812
  %v1856 = vsel %vm137, %v1812, %v1814
  %v1857 = vsel %vm137, %v1814, %v1816
  %v1858 = vsel %vm137, %v1816, %v1818
  %v1859 = vsel %vm137, %v1820, %v1822
  %v1860 = vsel %vm137, %v1822, %v1824
  %v1861 = vsel %vm137, %v1824, %v1826
  %v1862 = vsel %vm137, %v1826, %v1828
  %v1863 = vsel %vm137, %v1828, %v1830
  %v1864 = vsel %vm137, %v1830, %v1832
  %v1865 = vsel %vm137, %v1834, %v1836
  %v1866 = vsel %vm137, %v1836, %v1838
  %v1867 = vsel %vm137, %v1838, %v1840
  %v1868 = vsel %vm137, %v1840, %v1842
  %v1869 = vsel %vm137, %v1842, %v1844
  %v1870 = vsel %vm137, %v1844, %v1846
  %1895 = vst [vmem:[#allocation4 + $0x3c0] sm:$0xff] %v1847
  %1896 = vst [vmem:[#allocation4 + $0x3c8] sm:$0xff] %v1848
  %1897 = vst [vmem:[#allocation4 + $0x3d0] sm:$0xff] %v1849
  %1898 = vst [vmem:[#allocation4 + $0x3d8] sm:$0xff] %v1850
  %1899 = vst [vmem:[#allocation4 + $0x3e0] sm:$0xff] %v1851
  %1900 = vst [vmem:[#allocation4 + $0x3e8] sm:$0xff] %v1852
  %1901 = vst [vmem:[#allocation4 + $0x3f0] sm:$0xff] %v1853
  %1902 = vst [vmem:[#allocation4 + $0x3f8] sm:$0xff] %v1854
  %1903 = vst [vmem:[#allocation4 + $0x400] sm:$0xff] %v1855
  %1904 = vst [vmem:[#allocation4 + $0x408] sm:$0xff] %v1856
  %1905 = vst [vmem:[#allocation4 + $0x410] sm:$0xff] %v1857
  %1906 = vst [vmem:[#allocation4 + $0x418] sm:$0xff] %v1858
  %1907 = vst [vmem:[#allocation4 + $0x420] sm:$0xff] %v1859
  %1908 = vst [vmem:[#allocation4 + $0x428] sm:$0xff] %v1860
  %1909 = vst [vmem:[#allocation4 + $0x430] sm:$0xff] %v1861
  %1910 = vst [vmem:[#allocation4 + $0x438] sm:$0xff] %v1862
  %1911 = vst [vmem:[#allocation4 + $0x440] sm:$0xff] %v1863
  %1912 = vst [vmem:[#allocation4 + $0x448] sm:$0xff] %v1864
  %1913 = vst [vmem:[#allocation4 + $0x450] sm:$0xff] %v1865
  %1914 = vst [vmem:[#allocation4 + $0x458] sm:$0xff] %v1866
  %1915 = vst [vmem:[#allocation4 + $0x460] sm:$0xff] %v1867
  %1916 = vst [vmem:[#allocation4 + $0x468] sm:$0xff] %v1868
  %1917 = vst [vmem:[#allocation4 + $0x470] sm:$0xff] %v1869
  %1918 = vst [vmem:[#allocation4 + $0x478] sm:$0xff] %v1870
  %v1919 = vld [vmem:[#allocation2 + $0x8] sm:$0xff]
  %v1920 = vld [vmem:[#allocation2 + $0x10] sm:$0xff]
  %v1921 = vld [vmem:[#allocation2 + $0x18] sm:$0xff]
  %v1922 = vld [vmem:[#allocation2 + $0x20] sm:$0xff]
  %v1923 = vld [vmem:[#allocation2 + $0x28] sm:$0xff]
  %v1924 = vld [vmem:[#allocation2 + $0x30] sm:$0xff]
  %v1925 = vld [vmem:[#allocation2 + $0x38] sm:$0xff]
  %v1926 = vld [vmem:[#allocation2 + $0x48] sm:$0xff]
  %v1927 = vld [vmem:[#allocation2 + $0x50] sm:$0xff]
  %v1928 = vld [vmem:[#allocation2 + $0x58] sm:$0xff]
  %v1929 = vld [vmem:[#allocation2 + $0x60] sm:$0xff]
  %v1930 = vld [vmem:[#allocation2 + $0x68] sm:$0xff]
  %v1931 = vld [vmem:[#allocation2 + $0x70] sm:$0xff]
  %v1932 = vld [vmem:[#allocation2 + $0x78] sm:$0xff]
  %v1933 = vld [vmem:[#allocation2 + $0x88] sm:$0xff]
  %v1934 = vld [vmem:[#allocation2 + $0x90] sm:$0xff]
  %v1935 = vld [vmem:[#allocation2 + $0x98] sm:$0xff]
  %v1936 = vld [vmem:[#allocation2 + $0xa0] sm:$0xff]
  %v1937 = vld [vmem:[#allocation2 + $0xa8] sm:$0xff]
  %v1938 = vld [vmem:[#allocation2 + $0xb0] sm:$0xff]
  %v1939 = vld [vmem:[#allocation2 + $0xb8] sm:$0xff]
  %v1940 = vld [vmem:[#allocation2 + $0xc8] sm:$0xff]
  %v1941 = vld [vmem:[#allocation2 + $0xd0] sm:$0xff]
  %v1942 = vld [vmem:[#allocation2 + $0xd8] sm:$0xff]
  %v1943 = vld [vmem:[#allocation2 + $0xe0] sm:$0xff]
  %v1944 = vld [vmem:[#allocation2 + $0xe8] sm:$0xff]
  %v1945 = vld [vmem:[#allocation2 + $0xf0] sm:$0xff]
  %v1946 = vld [vmem:[#allocation2 + $0xf8] sm:$0xff]
  %1975 = vrot.lane.b32.xlu0 %v1919, 111
  %v1976 = vpop.permute.xlu0 %1975
  %1977 = vrot.lane.b32.xlu0 %v1920, 111
  %v1978 = vpop.permute.xlu0 %1977
  %1979 = vrot.lane.b32.xlu0 %v1921, 111
  %v1980 = vpop.permute.xlu0 %1979
  %1981 = vrot.lane.b32.xlu0 %v1922, 111
  %v1982 = vpop.permute.xlu0 %1981
  %1983 = vrot.lane.b32.xlu0 %v1923, 111
  %v1984 = vpop.permute.xlu0 %1983
  %1985 = vrot.lane.b32.xlu0 %v1924, 111
  %v1986 = vpop.permute.xlu0 %1985
  %1987 = vrot.lane.b32.xlu0 %v1925, 111
  %v1988 = vpop.permute.xlu0 %1987
  %1989 = vrot.lane.b32.xlu0 %v1926, 111
  %v1990 = vpop.permute.xlu0 %1989
  %1991 = vrot.lane.b32.xlu0 %v1927, 111
  %v1992 = vpop.permute.xlu0 %1991
  %1993 = vrot.lane.b32.xlu0 %v1928, 111
  %v1994 = vpop.permute.xlu0 %1993
  %1995 = vrot.lane.b32.xlu0 %v1929, 111
  %v1996 = vpop.permute.xlu0 %1995
  %1997 = vrot.lane.b32.xlu0 %v1930, 111
  %v1998 = vpop.permute.xlu0 %1997
  %1999 = vrot.lane.b32.xlu0 %v1931, 111
  %v2000 = vpop.permute.xlu0 %1999
  %2001 = vrot.lane.b32.xlu0 %v1932, 111
  %v2002 = vpop.permute.xlu0 %2001
  %2003 = vrot.lane.b32.xlu0 %v1933, 111
  %v2004 = vpop.permute.xlu0 %2003
  %2005 = vrot.lane.b32.xlu0 %v1934, 111
  %v2006 = vpop.permute.xlu0 %2005
  %2007 = vrot.lane.b32.xlu0 %v1935, 111
  %v2008 = vpop.permute.xlu0 %2007
  %2009 = vrot.lane.b32.xlu0 %v1936, 111
  %v2010 = vpop.permute.xlu0 %2009
  %2011 = vrot.lane.b32.xlu0 %v1937, 111
  %v2012 = vpop.permute.xlu0 %2011
  %2013 = vrot.lane.b32.xlu0 %v1938, 111
  %v2014 = vpop.permute.xlu0 %2013
  %2015 = vrot.lane.b32.xlu0 %v1939, 111
  %v2016 = vpop.permute.xlu0 %2015
  %2017 = vrot.lane.b32.xlu0 %v1940, 111
  %v2018 = vpop.permute.xlu0 %2017
  %2019 = vrot.lane.b32.xlu0 %v1941, 111
  %v2020 = vpop.permute.xlu0 %2019
  %2021 = vrot.lane.b32.xlu0 %v1942, 111
  %v2022 = vpop.permute.xlu0 %2021
  %2023 = vrot.lane.b32.xlu0 %v1943, 111
  %v2024 = vpop.permute.xlu0 %2023
  %2025 = vrot.lane.b32.xlu0 %v1944, 111
  %v2026 = vpop.permute.xlu0 %2025
  %2027 = vrot.lane.b32.xlu0 %v1945, 111
  %v2028 = vpop.permute.xlu0 %2027
  %2029 = vrot.lane.b32.xlu0 %v1946, 111
  %v2030 = vpop.permute.xlu0 %2029
  %vm2031 = vcmask 908288
  %v2032 = vsel %vm2031, %v1976, %v1978
  %v2033 = vsel %vm2031, %v1978, %v1980
  %v2034 = vsel %vm2031, %v1980, %v1982
  %v2035 = vsel %vm2031, %v1982, %v1984
  %v2036 = vsel %vm2031, %v1984, %v1986
  %v2037 = vsel %vm2031, %v1986, %v1988
  %v2038 = vsel %vm2031, %v1990, %v1992
  %v2039 = vsel %vm2031, %v1992, %v1994
  %v2040 = vsel %vm2031, %v1994, %v1996
  %v2041 = vsel %vm2031, %v1996, %v1998
  %v2042 = vsel %vm2031, %v1998, %v2000
  %v2043 = vsel %vm2031, %v2000, %v2002
  %v2044 = vsel %vm2031, %v2004, %v2006
  %v2045 = vsel %vm2031, %v2006, %v2008
  %v2046 = vsel %vm2031, %v2008, %v2010
  %v2047 = vsel %vm2031, %v2010, %v2012
  %v2048 = vsel %vm2031, %v2012, %v2014
  %v2049 = vsel %vm2031, %v2014, %v2016
  %v2050 = vsel %vm2031, %v2018, %v2020
  %v2051 = vsel %vm2031, %v2020, %v2022
  %v2052 = vsel %vm2031, %v2022, %v2024
  %v2053 = vsel %vm2031, %v2024, %v2026
  %v2054 = vsel %vm2031, %v2026, %v2028
  %v2055 = vsel %vm2031, %v2028, %v2030
  %2080 = vst [vmem:[#allocation4 + $0x480] sm:$0xff] %v2032
  %2081 = vst [vmem:[#allocation4 + $0x488] sm:$0xff] %v2033
  %2082 = vst [vmem:[#allocation4 + $0x490] sm:$0xff] %v2034
  %2083 = vst [vmem:[#allocation4 + $0x498] sm:$0xff] %v2035
  %2084 = vst [vmem:[#allocation4 + $0x4a0] sm:$0xff] %v2036
  %2085 = vst [vmem:[#allocation4 + $0x4a8] sm:$0xff] %v2037
  %2086 = vst [vmem:[#allocation4 + $0x4b0] sm:$0xff] %v2038
  %2087 = vst [vmem:[#allocation4 + $0x4b8] sm:$0xff] %v2039
  %2088 = vst [vmem:[#allocation4 + $0x4c0] sm:$0xff] %v2040
  %2089 = vst [vmem:[#allocation4 + $0x4c8] sm:$0xff] %v2041
  %2090 = vst [vmem:[#allocation4 + $0x4d0] sm:$0xff] %v2042
  %2091 = vst [vmem:[#allocation4 + $0x4d8] sm:$0xff] %v2043
  %2092 = vst [vmem:[#allocation4 + $0x4e0] sm:$0xff] %v2044
  %2093 = vst [vmem:[#allocation4 + $0x4e8] sm:$0xff] %v2045
  %2094 = vst [vmem:[#allocation4 + $0x4f0] sm:$0xff] %v2046
  %2095 = vst [vmem:[#allocation4 + $0x4f8] sm:$0xff] %v2047
  %2096 = vst [vmem:[#allocation4 + $0x500] sm:$0xff] %v2048
  %2097 = vst [vmem:[#allocation4 + $0x508] sm:$0xff] %v2049
  %2098 = vst [vmem:[#allocation4 + $0x510] sm:$0xff] %v2050
  %2099 = vst [vmem:[#allocation4 + $0x518] sm:$0xff] %v2051
  %2100 = vst [vmem:[#allocation4 + $0x520] sm:$0xff] %v2052
  %2101 = vst [vmem:[#allocation4 + $0x528] sm:$0xff] %v2053
  %2102 = vst [vmem:[#allocation4 + $0x530] sm:$0xff] %v2054
  %2103 = vst [vmem:[#allocation4 + $0x538] sm:$0xff] %v2055
  %v2104 = vld [vmem:[#allocation2 + $0x8] sm:$0xff]
  %v2105 = vld [vmem:[#allocation2 + $0x10] sm:$0xff]
  %v2106 = vld [vmem:[#allocation2 + $0x18] sm:$0xff]
  %v2107 = vld [vmem:[#allocation2 + $0x20] sm:$0xff]
  %v2108 = vld [vmem:[#allocation2 + $0x28] sm:$0xff]
  %v2109 = vld [vmem:[#allocation2 + $0x30] sm:$0xff]
  %v2110 = vld [vmem:[#allocation2 + $0x38] sm:$0xff]
  %v2111 = vld [vmem:[#allocation2 + $0x48] sm:$0xff]
  %v2112 = vld [vmem:[#allocation2 + $0x50] sm:$0xff]
  %v2113 = vld [vmem:[#allocation2 + $0x58] sm:$0xff]
  %v2114 = vld [vmem:[#allocation2 + $0x60] sm:$0xff]
  %v2115 = vld [vmem:[#allocation2 + $0x68] sm:$0xff]
  %v2116 = vld [vmem:[#allocation2 + $0x70] sm:$0xff]
  %v2117 = vld [vmem:[#allocation2 + $0x78] sm:$0xff]
  %v2118 = vld [vmem:[#allocation2 + $0x88] sm:$0xff]
  %v2119 = vld [vmem:[#allocation2 + $0x90] sm:$0xff]
  %v2120 = vld [vmem:[#allocation2 + $0x98] sm:$0xff]
  %v2121 = vld [vmem:[#allocation2 + $0xa0] sm:$0xff]
  %v2122 = vld [vmem:[#allocation2 + $0xa8] sm:$0xff]
  %v2123 = vld [vmem:[#allocation2 + $0xb0] sm:$0xff]
  %v2124 = vld [vmem:[#allocation2 + $0xb8] sm:$0xff]
  %v2125 = vld [vmem:[#allocation2 + $0xc8] sm:$0xff]
  %v2126 = vld [vmem:[#allocation2 + $0xd0] sm:$0xff]
  %v2127 = vld [vmem:[#allocation2 + $0xd8] sm:$0xff]
  %v2128 = vld [vmem:[#allocation2 + $0xe0] sm:$0xff]
  %v2129 = vld [vmem:[#allocation2 + $0xe8] sm:$0xff]
  %v2130 = vld [vmem:[#allocation2 + $0xf0] sm:$0xff]
  %v2131 = vld [vmem:[#allocation2 + $0xf8] sm:$0xff]
  %2160 = vrot.lane.b32.xlu0 %v2104, 110
  %v2161 = vpop.permute.xlu0 %2160
  %2162 = vrot.lane.b32.xlu0 %v2105, 110
  %v2163 = vpop.permute.xlu0 %2162
  %2164 = vrot.lane.b32.xlu0 %v2106, 110
  %v2165 = vpop.permute.xlu0 %2164
  %2166 = vrot.lane.b32.xlu0 %v2107, 110
  %v2167 = vpop.permute.xlu0 %2166
  %2168 = vrot.lane.b32.xlu0 %v2108, 110
  %v2169 = vpop.permute.xlu0 %2168
  %2170 = vrot.lane.b32.xlu0 %v2109, 110
  %v2171 = vpop.permute.xlu0 %2170
  %2172 = vrot.lane.b32.xlu0 %v2110, 110
  %v2173 = vpop.permute.xlu0 %2172
  %2174 = vrot.lane.b32.xlu0 %v2111, 110
  %v2175 = vpop.permute.xlu0 %2174
  %2176 = vrot.lane.b32.xlu0 %v2112, 110
  %v2177 = vpop.permute.xlu0 %2176
  %2178 = vrot.lane.b32.xlu0 %v2113, 110
  %v2179 = vpop.permute.xlu0 %2178
  %2180 = vrot.lane.b32.xlu0 %v2114, 110
  %v2181 = vpop.permute.xlu0 %2180
  %2182 = vrot.lane.b32.xlu0 %v2115, 110
  %v2183 = vpop.permute.xlu0 %2182
  %2184 = vrot.lane.b32.xlu0 %v2116, 110
  %v2185 = vpop.permute.xlu0 %2184
  %2186 = vrot.lane.b32.xlu0 %v2117, 110
  %v2187 = vpop.permute.xlu0 %2186
  %2188 = vrot.lane.b32.xlu0 %v2118, 110
  %v2189 = vpop.permute.xlu0 %2188
  %2190 = vrot.lane.b32.xlu0 %v2119, 110
  %v2191 = vpop.permute.xlu0 %2190
  %2192 = vrot.lane.b32.xlu0 %v2120, 110
  %v2193 = vpop.permute.xlu0 %2192
  %2194 = vrot.lane.b32.xlu0 %v2121, 110
  %v2195 = vpop.permute.xlu0 %2194
  %2196 = vrot.lane.b32.xlu0 %v2122, 110
  %v2197 = vpop.permute.xlu0 %2196
  %2198 = vrot.lane.b32.xlu0 %v2123, 110
  %v2199 = vpop.permute.xlu0 %2198
  %2200 = vrot.lane.b32.xlu0 %v2124, 110
  %v2201 = vpop.permute.xlu0 %2200
  %2202 = vrot.lane.b32.xlu0 %v2125, 110
  %v2203 = vpop.permute.xlu0 %2202
  %2204 = vrot.lane.b32.xlu0 %v2126, 110
  %v2205 = vpop.permute.xlu0 %2204
  %2206 = vrot.lane.b32.xlu0 %v2127, 110
  %v2207 = vpop.permute.xlu0 %2206
  %2208 = vrot.lane.b32.xlu0 %v2128, 110
  %v2209 = vpop.permute.xlu0 %2208
  %2210 = vrot.lane.b32.xlu0 %v2129, 110
  %v2211 = vpop.permute.xlu0 %2210
  %2212 = vrot.lane.b32.xlu0 %v2130, 110
  %v2213 = vpop.permute.xlu0 %2212
  %2214 = vrot.lane.b32.xlu0 %v2131, 110
  %v2215 = vpop.permute.xlu0 %2214
  %v2216 = vsel %vm193, %v2161, %v2163
  %v2217 = vsel %vm193, %v2163, %v2165
  %v2218 = vsel %vm193, %v2165, %v2167
  %v2219 = vsel %vm193, %v2167, %v2169
  %v2220 = vsel %vm193, %v2169, %v2171
  %v2221 = vsel %vm193, %v2171, %v2173
  %v2222 = vsel %vm193, %v2175, %v2177
  %v2223 = vsel %vm193, %v2177, %v2179
  %v2224 = vsel %vm193, %v2179, %v2181
  %v2225 = vsel %vm193, %v2181, %v2183
  %v2226 = vsel %vm193, %v2183, %v2185
  %v2227 = vsel %vm193, %v2185, %v2187
  %v2228 = vsel %vm193, %v2189, %v2191
  %v2229 = vsel %vm193, %v2191, %v2193
  %v2230 = vsel %vm193, %v2193, %v2195
  %v2231 = vsel %vm193, %v2195, %v2197
  %v2232 = vsel %vm193, %v2197, %v2199
  %v2233 = vsel %vm193, %v2199, %v2201
  %v2234 = vsel %vm193, %v2203, %v2205
  %v2235 = vsel %vm193, %v2205, %v2207
  %v2236 = vsel %vm193, %v2207, %v2209
  %v2237 = vsel %vm193, %v2209, %v2211
  %v2238 = vsel %vm193, %v2211, %v2213
  %v2239 = vsel %vm193, %v2213, %v2215
  %2264 = vst [vmem:[#allocation4 + $0x540] sm:$0xff] %v2216
  %2265 = vst [vmem:[#allocation4 + $0x548] sm:$0xff] %v2217
  %2266 = vst [vmem:[#allocation4 + $0x550] sm:$0xff] %v2218
  %2267 = vst [vmem:[#allocation4 + $0x558] sm:$0xff] %v2219
  %2268 = vst [vmem:[#allocation4 + $0x560] sm:$0xff] %v2220
  %2269 = vst [vmem:[#allocation4 + $0x568] sm:$0xff] %v2221
  %2270 = vst [vmem:[#allocation4 + $0x570] sm:$0xff] %v2222
  %2271 = vst [vmem:[#allocation4 + $0x578] sm:$0xff] %v2223
  %2272 = vst [vmem:[#allocation4 + $0x580] sm:$0xff] %v2224
  %2273 = vst [vmem:[#allocation4 + $0x588] sm:$0xff] %v2225
  %2274 = vst [vmem:[#allocation4 + $0x590] sm:$0xff] %v2226
  %2275 = vst [vmem:[#allocation4 + $0x598] sm:$0xff] %v2227
  %2276 = vst [vmem:[#allocation4 + $0x5a0] sm:$0xff] %v2228
  %2277 = vst [vmem:[#allocation4 + $0x5a8] sm:$0xff] %v2229
  %2278 = vst [vmem:[#allocation4 + $0x5b0] sm:$0xff] %v2230
  %2279 = vst [vmem:[#allocation4 + $0x5b8] sm:$0xff] %v2231
  %2280 = vst [vmem:[#allocation4 + $0x5c0] sm:$0xff] %v2232
  %2281 = vst [vmem:[#allocation4 + $0x5c8] sm:$0xff] %v2233
  %2282 = vst [vmem:[#allocation4 + $0x5d0] sm:$0xff] %v2234
  %2283 = vst [vmem:[#allocation4 + $0x5d8] sm:$0xff] %v2235
  %2284 = vst [vmem:[#allocation4 + $0x5e0] sm:$0xff] %v2236
  %2285 = vst [vmem:[#allocation4 + $0x5e8] sm:$0xff] %v2237
  %2286 = vst [vmem:[#allocation4 + $0x5f0] sm:$0xff] %v2238
  %2287 = vst [vmem:[#allocation4 + $0x5f8] sm:$0xff] %v2239
  %v2288 = vld [vmem:[#allocation2 + $0x8] sm:$0xff]
  %v2289 = vld [vmem:[#allocation2 + $0x10] sm:$0xff]
  %v2290 = vld [vmem:[#allocation2 + $0x18] sm:$0xff]
  %v2291 = vld [vmem:[#allocation2 + $0x20] sm:$0xff]
  %v2292 = vld [vmem:[#allocation2 + $0x28] sm:$0xff]
  %v2293 = vld [vmem:[#allocation2 + $0x30] sm:$0xff]
  %v2294 = vld [vmem:[#allocation2 + $0x38] sm:$0xff]
  %v2295 = vld [vmem:[#allocation2 + $0x48] sm:$0xff]
  %v2296 = vld [vmem:[#allocation2 + $0x50] sm:$0xff]
  %v2297 = vld [vmem:[#allocation2 + $0x58] sm:$0xff]
  %v2298 = vld [vmem:[#allocation2 + $0x60] sm:$0xff]
  %v2299 = vld [vmem:[#allocation2 + $0x68] sm:$0xff]
  %v2300 = vld [vmem:[#allocation2 + $0x70] sm:$0xff]
  %v2301 = vld [vmem:[#allocation2 + $0x78] sm:$0xff]
  %v2302 = vld [vmem:[#allocation2 + $0x88] sm:$0xff]
  %v2303 = vld [vmem:[#allocation2 + $0x90] sm:$0xff]
  %v2304 = vld [vmem:[#allocation2 + $0x98] sm:$0xff]
  %v2305 = vld [vmem:[#allocation2 + $0xa0] sm:$0xff]
  %v2306 = vld [vmem:[#allocation2 + $0xa8] sm:$0xff]
  %v2307 = vld [vmem:[#allocation2 + $0xb0] sm:$0xff]
  %v2308 = vld [vmem:[#allocation2 + $0xb8] sm:$0xff]
  %v2309 = vld [vmem:[#allocation2 + $0xc8] sm:$0xff]
  %v2310 = vld [vmem:[#allocation2 + $0xd0] sm:$0xff]
  %v2311 = vld [vmem:[#allocation2 + $0xd8] sm:$0xff]
  %v2312 = vld [vmem:[#allocation2 + $0xe0] sm:$0xff]
  %v2313 = vld [vmem:[#allocation2 + $0xe8] sm:$0xff]
  %v2314 = vld [vmem:[#allocation2 + $0xf0] sm:$0xff]
  %v2315 = vld [vmem:[#allocation2 + $0xf8] sm:$0xff]
  %2344 = vrot.lane.b32.xlu0 %v2288, 109
  %v2345 = vpop.permute.xlu0 %2344
  %2346 = vrot.lane.b32.xlu0 %v2289, 109
  %v2347 = vpop.permute.xlu0 %2346
  %2348 = vrot.lane.b32.xlu0 %v2290, 109
  %v2349 = vpop.permute.xlu0 %2348
  %2350 = vrot.lane.b32.xlu0 %v2291, 109
  %v2351 = vpop.permute.xlu0 %2350
  %2352 = vrot.lane.b32.xlu0 %v2292, 109
  %v2353 = vpop.permute.xlu0 %2352
  %2354 = vrot.lane.b32.xlu0 %v2293, 109
  %v2355 = vpop.permute.xlu0 %2354
  %2356 = vrot.lane.b32.xlu0 %v2294, 109
  %v2357 = vpop.permute.xlu0 %2356
  %2358 = vrot.lane.b32.xlu0 %v2295, 109
  %v2359 = vpop.permute.xlu0 %2358
  %2360 = vrot.lane.b32.xlu0 %v2296, 109
  %v2361 = vpop.permute.xlu0 %2360
  %2362 = vrot.lane.b32.xlu0 %v2297, 109
  %v2363 = vpop.permute.xlu0 %2362
  %2364 = vrot.lane.b32.xlu0 %v2298, 109
  %v2365 = vpop.permute.xlu0 %2364
  %2366 = vrot.lane.b32.xlu0 %v2299, 109
  %v2367 = vpop.permute.xlu0 %2366
  %2368 = vrot.lane.b32.xlu0 %v2300, 109
  %v2369 = vpop.permute.xlu0 %2368
  %2370 = vrot.lane.b32.xlu0 %v2301, 109
  %v2371 = vpop.permute.xlu0 %2370
  %2372 = vrot.lane.b32.xlu0 %v2302, 109
  %v2373 = vpop.permute.xlu0 %2372
  %2374 = vrot.lane.b32.xlu0 %v2303, 109
  %v2375 = vpop.permute.xlu0 %2374
  %2376 = vrot.lane.b32.xlu0 %v2304, 109
  %v2377 = vpop.permute.xlu0 %2376
  %2378 = vrot.lane.b32.xlu0 %v2305, 109
  %v2379 = vpop.permute.xlu0 %2378
  %2380 = vrot.lane.b32.xlu0 %v2306, 109
  %v2381 = vpop.permute.xlu0 %2380
  %2382 = vrot.lane.b32.xlu0 %v2307, 109
  %v2383 = vpop.permute.xlu0 %2382
  %2384 = vrot.lane.b32.xlu0 %v2308, 109
  %v2385 = vpop.permute.xlu0 %2384
  %2386 = vrot.lane.b32.xlu0 %v2309, 109
  %v2387 = vpop.permute.xlu0 %2386
  %2388 = vrot.lane.b32.xlu0 %v2310, 109
  %v2389 = vpop.permute.xlu0 %2388
  %2390 = vrot.lane.b32.xlu0 %v2311, 109
  %v2391 = vpop.permute.xlu0 %2390
  %2392 = vrot.lane.b32.xlu0 %v2312, 109
  %v2393 = vpop.permute.xlu0 %2392
  %2394 = vrot.lane.b32.xlu0 %v2313, 109
  %v2395 = vpop.permute.xlu0 %2394
  %2396 = vrot.lane.b32.xlu0 %v2314, 109
  %v2397 = vpop.permute.xlu0 %2396
  %2398 = vrot.lane.b32.xlu0 %v2315, 109
  %v2399 = vpop.permute.xlu0 %2398
  %v2400 = vsel %vm244, %v2345, %v2347
  %v2401 = vsel %vm244, %v2347, %v2349
  %v2402 = vsel %vm244, %v2349, %v2351
  %v2403 = vsel %vm244, %v2351, %v2353
  %v2404 = vsel %vm244, %v2353, %v2355
  %v2405 = vsel %vm244, %v2355, %v2357
  %v2406 = vsel %vm244, %v2359, %v2361
  %v2407 = vsel %vm244, %v2361, %v2363
  %v2408 = vsel %vm244, %v2363, %v2365
  %v2409 = vsel %vm244, %v2365, %v2367
  %v2410 = vsel %vm244, %v2367, %v2369
  %v2411 = vsel %vm244, %v2369, %v2371
  %v2412 = vsel %vm244, %v2373, %v2375
  %v2413 = vsel %vm244, %v2375, %v2377
  %v2414 = vsel %vm244, %v2377, %v2379
  %v2415 = vsel %vm244, %v2379, %v2381
  %v2416 = vsel %vm244, %v2381, %v2383
  %v2417 = vsel %vm244, %v2383, %v2385
  %v2418 = vsel %vm244, %v2387, %v2389
  %v2419 = vsel %vm244, %v2389, %v2391
  %v2420 = vsel %vm244, %v2391, %v2393
  %v2421 = vsel %vm244, %v2393, %v2395
  %v2422 = vsel %vm244, %v2395, %v2397
  %v2423 = vsel %vm244, %v2397, %v2399
  %2448 = vst [vmem:[#allocation4 + $0x600] sm:$0xff] %v2400
  %2449 = vst [vmem:[#allocation4 + $0x608] sm:$0xff] %v2401
  %2450 = vst [vmem:[#allocation4 + $0x610] sm:$0xff] %v2402
  %2451 = vst [vmem:[#allocation4 + $0x618] sm:$0xff] %v2403
  %2452 = vst [vmem:[#allocation4 + $0x620] sm:$0xff] %v2404
  %2453 = vst [vmem:[#allocation4 + $0x628] sm:$0xff] %v2405
  %2454 = vst [vmem:[#allocation4 + $0x630] sm:$0xff] %v2406
  %2455 = vst [vmem:[#allocation4 + $0x638] sm:$0xff] %v2407
  %2456 = vst [vmem:[#allocation4 + $0x640] sm:$0xff] %v2408
  %2457 = vst [vmem:[#allocation4 + $0x648] sm:$0xff] %v2409
  %2458 = vst [vmem:[#allocation4 + $0x650] sm:$0xff] %v2410
  %2459 = vst [vmem:[#allocation4 + $0x658] sm:$0xff] %v2411
  %2460 = vst [vmem:[#allocation4 + $0x660] sm:$0xff] %v2412
  %2461 = vst [vmem:[#allocation4 + $0x668] sm:$0xff] %v2413
  %2462 = vst [vmem:[#allocation4 + $0x670] sm:$0xff] %v2414
  %2463 = vst [vmem:[#allocation4 + $0x678] sm:$0xff] %v2415
  %2464 = vst [vmem:[#allocation4 + $0x680] sm:$0xff] %v2416
  %2465 = vst [vmem:[#allocation4 + $0x688] sm:$0xff] %v2417
  %2466 = vst [vmem:[#allocation4 + $0x690] sm:$0xff] %v2418
  %2467 = vst [vmem:[#allocation4 + $0x698] sm:$0xff] %v2419
  %2468 = vst [vmem:[#allocation4 + $0x6a0] sm:$0xff] %v2420
  %2469 = vst [vmem:[#allocation4 + $0x6a8] sm:$0xff] %v2421
  %2470 = vst [vmem:[#allocation4 + $0x6b0] sm:$0xff] %v2422
  %2471 = vst [vmem:[#allocation4 + $0x6b8] sm:$0xff] %v2423
  %v2472 = vld [vmem:[#allocation4] sm:$0xff]
  %v2473 = vld [vmem:[#allocation4 + $0x8] sm:$0xff]
  %v2474 = vld [vmem:[#allocation4 + $0x10] sm:$0xff]
  %v2475 = vld [vmem:[#allocation4 + $0x18] sm:$0xff]
  %v2476 = vld [vmem:[#allocation4 + $0x20] sm:$0xff]
  %v2477 = vld [vmem:[#allocation4 + $0x28] sm:$0xff]
  %v2478 = vld [vmem:[#allocation4 + $0x30] sm:$0xff]
  %v2479 = vld [vmem:[#allocation4 + $0x38] sm:$0xff]
  %v2480 = vld [vmem:[#allocation4 + $0x40] sm:$0xff]
  %v2481 = vld [vmem:[#allocation4 + $0x48] sm:$0xff]
  %v2482 = vld [vmem:[#allocation4 + $0x50] sm:$0xff]
  %v2483 = vld [vmem:[#allocation4 + $0x58] sm:$0xff]
  %v2484 = vld [vmem:[#allocation4 + $0x60] sm:$0xff]
  %v2485 = vld [vmem:[#allocation4 + $0x68] sm:$0xff]
  %v2486 = vld [vmem:[#allocation4 + $0x70] sm:$0xff]
  %v2487 = vld [vmem:[#allocation4 + $0x78] sm:$0xff]
  %v2488 = vld [vmem:[#allocation4 + $0x80] sm:$0xff]
  %v2489 = vld [vmem:[#allocation4 + $0x88] sm:$0xff]
  %v2490 = vld [vmem:[#allocation4 + $0x90] sm:$0xff]
  %v2491 = vld [vmem:[#allocation4 + $0x98] sm:$0xff]
  %v2492 = vld [vmem:[#allocation4 + $0xa0] sm:$0xff]
  %v2493 = vld [vmem:[#allocation4 + $0xa8] sm:$0xff]
  %v2494 = vld [vmem:[#allocation4 + $0xb0] sm:$0xff]
  %v2495 = vld [vmem:[#allocation4 + $0xb8] sm:$0xff]
  %v2496 = vld [vmem:[#allocation4 + $0xc0] sm:$0xff]
  %v2497 = vld [vmem:[#allocation4 + $0xc8] sm:$0xff]
  %v2498 = vld [vmem:[#allocation4 + $0xd0] sm:$0xff]
  %v2499 = vld [vmem:[#allocation4 + $0xd8] sm:$0xff]
  %v2500 = vld [vmem:[#allocation4 + $0xe0] sm:$0xff]
  %v2501 = vld [vmem:[#allocation4 + $0xe8] sm:$0xff]
  %v2502 = vld [vmem:[#allocation4 + $0xf0] sm:$0xff]
  %v2503 = vld [vmem:[#allocation4 + $0xf8] sm:$0xff]
  %v2504 = vld [vmem:[#allocation4 + $0x100] sm:$0xff]
  %v2505 = vld [vmem:[#allocation4 + $0x108] sm:$0xff]
  %v2506 = vld [vmem:[#allocation4 + $0x110] sm:$0xff]
  %v2507 = vld [vmem:[#allocation4 + $0x118] sm:$0xff]
  %v2508 = vld [vmem:[#allocation4 + $0x120] sm:$0xff]
  %v2509 = vld [vmem:[#allocation4 + $0x128] sm:$0xff]
  %v2510 = vld [vmem:[#allocation4 + $0x130] sm:$0xff]
  %v2511 = vld [vmem:[#allocation4 + $0x138] sm:$0xff]
  %v2512 = vld [vmem:[#allocation4 + $0x140] sm:$0xff]
  %v2513 = vld [vmem:[#allocation4 + $0x148] sm:$0xff]
  %v2514 = vld [vmem:[#allocation4 + $0x150] sm:$0xff]
  %v2515 = vld [vmem:[#allocation4 + $0x158] sm:$0xff]
  %v2516 = vld [vmem:[#allocation4 + $0x160] sm:$0xff]
  %v2517 = vld [vmem:[#allocation4 + $0x168] sm:$0xff]
  %v2518 = vld [vmem:[#allocation4 + $0x170] sm:$0xff]
  %v2519 = vld [vmem:[#allocation4 + $0x178] sm:$0xff]
  %v2520 = vld [vmem:[#allocation4 + $0x180] sm:$0xff]
  %v2521 = vld [vmem:[#allocation4 + $0x188] sm:$0xff]
  %v2522 = vld [vmem:[#allocation4 + $0x190] sm:$0xff]
  %v2523 = vld [vmem:[#allocation4 + $0x198] sm:$0xff]
  %v2524 = vld [vmem:[#allocation4 + $0x1a0] sm:$0xff]
  %v2525 = vld [vmem:[#allocation4 + $0x1a8] sm:$0xff]
  %v2526 = vld [vmem:[#allocation4 + $0x1b0] sm:$0xff]
  %v2527 = vld [vmem:[#allocation4 + $0x1b8] sm:$0xff]
  %v2528 = vld [vmem:[#allocation4 + $0x1c0] sm:$0xff]
  %v2529 = vld [vmem:[#allocation4 + $0x1c8] sm:$0xff]
  %v2530 = vld [vmem:[#allocation4 + $0x1d0] sm:$0xff]
  %v2531 = vld [vmem:[#allocation4 + $0x1d8] sm:$0xff]
  %v2532 = vld [vmem:[#allocation4 + $0x1e0] sm:$0xff]
  %v2533 = vld [vmem:[#allocation4 + $0x1e8] sm:$0xff]
  %v2534 = vld [vmem:[#allocation4 + $0x1f0] sm:$0xff]
  %v2535 = vld [vmem:[#allocation4 + $0x1f8] sm:$0xff]
  %v2536 = vld [vmem:[#allocation4 + $0x200] sm:$0xff]
  %v2537 = vld [vmem:[#allocation4 + $0x208] sm:$0xff]
  %v2538 = vld [vmem:[#allocation4 + $0x210] sm:$0xff]
  %v2539 = vld [vmem:[#allocation4 + $0x218] sm:$0xff]
  %v2540 = vld [vmem:[#allocation4 + $0x220] sm:$0xff]
  %v2541 = vld [vmem:[#allocation4 + $0x228] sm:$0xff]
  %v2542 = vld [vmem:[#allocation4 + $0x230] sm:$0xff]
  %v2543 = vld [vmem:[#allocation4 + $0x238] sm:$0xff]
  %v2544 = vld [vmem:[#allocation4 + $0x240] sm:$0xff]
  %v2545 = vld [vmem:[#allocation4 + $0x248] sm:$0xff]
  %v2546 = vld [vmem:[#allocation4 + $0x250] sm:$0xff]
  %v2547 = vld [vmem:[#allocation4 + $0x258] sm:$0xff]
  %v2548 = vld [vmem:[#allocation4 + $0x260] sm:$0xff]
  %v2549 = vld [vmem:[#allocation4 + $0x268] sm:$0xff]
  %v2550 = vld [vmem:[#allocation4 + $0x270] sm:$0xff]
  %v2551 = vld [vmem:[#allocation4 + $0x278] sm:$0xff]
  %v2552 = vld [vmem:[#allocation4 + $0x280] sm:$0xff]
  %v2553 = vld [vmem:[#allocation4 + $0x288] sm:$0xff]
  %v2554 = vld [vmem:[#allocation4 + $0x290] sm:$0xff]
  %v2555 = vld [vmem:[#allocation4 + $0x298] sm:$0xff]
  %v2556 = vld [vmem:[#allocation4 + $0x2a0] sm:$0xff]
  %v2557 = vld [vmem:[#allocation4 + $0x2a8] sm:$0xff]
  %v2558 = vld [vmem:[#allocation4 + $0x2b0] sm:$0xff]
  %v2559 = vld [vmem:[#allocation4 + $0x2b8] sm:$0xff]
  %v2560 = vld [vmem:[#allocation4 + $0x2c0] sm:$0xff]
  %v2561 = vld [vmem:[#allocation4 + $0x2c8] sm:$0xff]
  %v2562 = vld [vmem:[#allocation4 + $0x2d0] sm:$0xff]
  %v2563 = vld [vmem:[#allocation4 + $0x2d8] sm:$0xff]
  %v2564 = vld [vmem:[#allocation4 + $0x2e0] sm:$0xff]
  %v2565 = vld [vmem:[#allocation4 + $0x2e8] sm:$0xff]
  %v2566 = vld [vmem:[#allocation4 + $0x2f0] sm:$0xff]
  %v2567 = vld [vmem:[#allocation4 + $0x2f8] sm:$0xff]
  %v2568 = vld [vmem:[#allocation4 + $0x300] sm:$0xff]
  %v2569 = vld [vmem:[#allocation4 + $0x308] sm:$0xff]
  %v2570 = vld [vmem:[#allocation4 + $0x310] sm:$0xff]
  %v2571 = vld [vmem:[#allocation4 + $0x318] sm:$0xff]
  %v2572 = vld [vmem:[#allocation4 + $0x320] sm:$0xff]
  %v2573 = vld [vmem:[#allocation4 + $0x328] sm:$0xff]
  %v2574 = vld [vmem:[#allocation4 + $0x330] sm:$0xff]
  %v2575 = vld [vmem:[#allocation4 + $0x338] sm:$0xff]
  %v2576 = vld [vmem:[#allocation4 + $0x340] sm:$0xff]
  %v2577 = vld [vmem:[#allocation4 + $0x348] sm:$0xff]
  %v2578 = vld [vmem:[#allocation4 + $0x350] sm:$0xff]
  %v2579 = vld [vmem:[#allocation4 + $0x358] sm:$0xff]
  %v2580 = vld [vmem:[#allocation4 + $0x360] sm:$0xff]
  %v2581 = vld [vmem:[#allocation4 + $0x368] sm:$0xff]
  %v2582 = vld [vmem:[#allocation4 + $0x370] sm:$0xff]
  %v2583 = vld [vmem:[#allocation4 + $0x378] sm:$0xff]
  %v2584 = vld [vmem:[#allocation4 + $0x380] sm:$0xff]
  %v2585 = vld [vmem:[#allocation4 + $0x388] sm:$0xff]
  %v2586 = vld [vmem:[#allocation4 + $0x390] sm:$0xff]
  %v2587 = vld [vmem:[#allocation4 + $0x398] sm:$0xff]
  %v2588 = vld [vmem:[#allocation4 + $0x3a0] sm:$0xff]
  %v2589 = vld [vmem:[#allocation4 + $0x3a8] sm:$0xff]
  %v2590 = vld [vmem:[#allocation4 + $0x3b0] sm:$0xff]
  %v2591 = vld [vmem:[#allocation4 + $0x3b8] sm:$0xff]
  %v2592 = vld [vmem:[#allocation4 + $0x3c0] sm:$0xff]
  %v2593 = vld [vmem:[#allocation4 + $0x3c8] sm:$0xff]
  %v2594 = vld [vmem:[#allocation4 + $0x3d0] sm:$0xff]
  %v2595 = vld [vmem:[#allocation4 + $0x3d8] sm:$0xff]
  %v2596 = vld [vmem:[#allocation4 + $0x3e0] sm:$0xff]
  %v2597 = vld [vmem:[#allocation4 + $0x3e8] sm:$0xff]
  %v2598 = vld [vmem:[#allocation4 + $0x3f0] sm:$0xff]
  %v2599 = vld [vmem:[#allocation4 + $0x3f8] sm:$0xff]
  %v2600 = vld [vmem:[#allocation4 + $0x400] sm:$0xff]
  %v2601 = vld [vmem:[#allocation4 + $0x408] sm:$0xff]
  %v2602 = vld [vmem:[#allocation4 + $0x410] sm:$0xff]
  %v2603 = vld [vmem:[#allocation4 + $0x418] sm:$0xff]
  %v2604 = vld [vmem:[#allocation4 + $0x420] sm:$0xff]
  %v2605 = vld [vmem:[#allocation4 + $0x428] sm:$0xff]
  %v2606 = vld [vmem:[#allocation4 + $0x430] sm:$0xff]
  %v2607 = vld [vmem:[#allocation4 + $0x438] sm:$0xff]
  %v2608 = vld [vmem:[#allocation4 + $0x440] sm:$0xff]
  %v2609 = vld [vmem:[#allocation4 + $0x448] sm:$0xff]
  %v2610 = vld [vmem:[#allocation4 + $0x450] sm:$0xff]
  %v2611 = vld [vmem:[#allocation4 + $0x458] sm:$0xff]
  %v2612 = vld [vmem:[#allocation4 + $0x460] sm:$0xff]
  %v2613 = vld [vmem:[#allocation4 + $0x468] sm:$0xff]
  %v2614 = vld [vmem:[#allocation4 + $0x470] sm:$0xff]
  %v2615 = vld [vmem:[#allocation4 + $0x478] sm:$0xff]
  %v2616 = vld [vmem:[#allocation4 + $0x480] sm:$0xff]
  %v2617 = vld [vmem:[#allocation4 + $0x488] sm:$0xff]
  %v2618 = vld [vmem:[#allocation4 + $0x490] sm:$0xff]
  %v2619 = vld [vmem:[#allocation4 + $0x498] sm:$0xff]
  %v2620 = vld [vmem:[#allocation4 + $0x4a0] sm:$0xff]
  %v2621 = vld [vmem:[#allocation4 + $0x4a8] sm:$0xff]
  %v2622 = vld [vmem:[#allocation4 + $0x4b0] sm:$0xff]
  %v2623 = vld [vmem:[#allocation4 + $0x4b8] sm:$0xff]
  %v2624 = vld [vmem:[#allocation4 + $0x4c0] sm:$0xff]
  %v2625 = vld [vmem:[#allocation4 + $0x4c8] sm:$0xff]
  %v2626 = vld [vmem:[#allocation4 + $0x4d0] sm:$0xff]
  %v2627 = vld [vmem:[#allocation4 + $0x4d8] sm:$0xff]
  %v2628 = vld [vmem:[#allocation4 + $0x4e0] sm:$0xff]
  %v2629 = vld [vmem:[#allocation4 + $0x4e8] sm:$0xff]
  %v2630 = vld [vmem:[#allocation4 + $0x4f0] sm:$0xff]
  %v2631 = vld [vmem:[#allocation4 + $0x4f8] sm:$0xff]
  %v2632 = vld [vmem:[#allocation4 + $0x500] sm:$0xff]
  %v2633 = vld [vmem:[#allocation4 + $0x508] sm:$0xff]
  %v2634 = vld [vmem:[#allocation4 + $0x510] sm:$0xff]
  %v2635 = vld [vmem:[#allocation4 + $0x518] sm:$0xff]
  %v2636 = vld [vmem:[#allocation4 + $0x520] sm:$0xff]
  %v2637 = vld [vmem:[#allocation4 + $0x528] sm:$0xff]
  %v2638 = vld [vmem:[#allocation4 + $0x530] sm:$0xff]
  %v2639 = vld [vmem:[#allocation4 + $0x538] sm:$0xff]
  %v2640 = vld [vmem:[#allocation4 + $0x540] sm:$0xff]
  %v2641 = vld [vmem:[#allocation4 + $0x548] sm:$0xff]
  %v2642 = vld [vmem:[#allocation4 + $0x550] sm:$0xff]
  %v2643 = vld [vmem:[#allocation4 + $0x558] sm:$0xff]
  %v2644 = vld [vmem:[#allocation4 + $0x560] sm:$0xff]
  %v2645 = vld [vmem:[#allocation4 + $0x568] sm:$0xff]
  %v2646 = vld [vmem:[#allocation4 + $0x570] sm:$0xff]
  %v2647 = vld [vmem:[#allocation4 + $0x578] sm:$0xff]
  %v2648 = vld [vmem:[#allocation4 + $0x580] sm:$0xff]
  %v2649 = vld [vmem:[#allocation4 + $0x588] sm:$0xff]
  %v2650 = vld [vmem:[#allocation4 + $0x590] sm:$0xff]
  %v2651 = vld [vmem:[#allocation4 + $0x598] sm:$0xff]
  %v2652 = vld [vmem:[#allocation4 + $0x5a0] sm:$0xff]
  %v2653 = vld [vmem:[#allocation4 + $0x5a8] sm:$0xff]
  %v2654 = vld [vmem:[#allocation4 + $0x5b0] sm:$0xff]
  %v2655 = vld [vmem:[#allocation4 + $0x5b8] sm:$0xff]
  %v2656 = vld [vmem:[#allocation4 + $0x5c0] sm:$0xff]
  %v2657 = vld [vmem:[#allocation4 + $0x5c8] sm:$0xff]
  %v2658 = vld [vmem:[#allocation4 + $0x5d0] sm:$0xff]
  %v2659 = vld [vmem:[#allocation4 + $0x5d8] sm:$0xff]
  %v2660 = vld [vmem:[#allocation4 + $0x5e0] sm:$0xff]
  %v2661 = vld [vmem:[#allocation4 + $0x5e8] sm:$0xff]
  %v2662 = vld [vmem:[#allocation4 + $0x5f0] sm:$0xff]
  %v2663 = vld [vmem:[#allocation4 + $0x5f8] sm:$0xff]
  %v2664 = vld [vmem:[#allocation4 + $0x600] sm:$0xff]
  %v2665 = vld [vmem:[#allocation4 + $0x608] sm:$0xff]
  %v2666 = vld [vmem:[#allocation4 + $0x610] sm:$0xff]
  %v2667 = vld [vmem:[#allocation4 + $0x618] sm:$0xff]
  %v2668 = vld [vmem:[#allocation4 + $0x620] sm:$0xff]
  %v2669 = vld [vmem:[#allocation4 + $0x628] sm:$0xff]
  %v2670 = vld [vmem:[#allocation4 + $0x630] sm:$0xff]
  %v2671 = vld [vmem:[#allocation4 + $0x638] sm:$0xff]
  %v2672 = vld [vmem:[#allocation4 + $0x640] sm:$0xff]
  %v2673 = vld [vmem:[#allocation4 + $0x648] sm:$0xff]
  %v2674 = vld [vmem:[#allocation4 + $0x650] sm:$0xff]
  %v2675 = vld [vmem:[#allocation4 + $0x658] sm:$0xff]
  %v2676 = vld [vmem:[#allocation4 + $0x660] sm:$0xff]
  %v2677 = vld [vmem:[#allocation4 + $0x668] sm:$0xff]
  %v2678 = vld [vmem:[#allocation4 + $0x670] sm:$0xff]
  %v2679 = vld [vmem:[#allocation4 + $0x678] sm:$0xff]
  %v2680 = vld [vmem:[#allocation4 + $0x680] sm:$0xff]
  %v2681 = vld [vmem:[#allocation4 + $0x688] sm:$0xff]
  %v2682 = vld [vmem:[#allocation4 + $0x690] sm:$0xff]
  %v2683 = vld [vmem:[#allocation4 + $0x698] sm:$0xff]
  %v2684 = vld [vmem:[#allocation4 + $0x6a0] sm:$0xff]
  %v2685 = vld [vmem:[#allocation4 + $0x6a8] sm:$0xff]
  %v2686 = vld [vmem:[#allocation4 + $0x6b0] sm:$0xff]
  %v2687 = vld [vmem:[#allocation4 + $0x6b8] sm:$0xff]
  %v2688 = vld [vmem:[%s4] sm:$0xff]
  %v2689 = vld [vmem:[%s4 + $0x8] sm:$0xff]
  %v2690 = vld [vmem:[%s4 + $0x10] sm:$0xff]
  %v2691 = vld [vmem:[%s4 + $0x18] sm:$0xff]
  %v2692 = vld [vmem:[%s4 + $0x20] sm:$0xff]
  %v2693 = vld [vmem:[%s4 + $0x28] sm:$0xff]
  %v2694 = vld [vmem:[%s4 + $0x30] sm:$0xff]
  %v2695 = vld [vmem:[%s4 + $0x38] sm:$0xff]
  %v2696 = vld [vmem:[%s4 + $0x40] sm:$0xff]
  %v2697 = vld [vmem:[%s4 + $0x48] sm:$0xff]
  %v2698 = vld [vmem:[%s4 + $0x50] sm:$0xff]
  %v2699 = vld [vmem:[%s4 + $0x58] sm:$0xff]
  %vm2700 = vcmask 261120
  %v2702 = vsel %vm2700, %v2690, 0
  %v2705 = vsel %vm2700, %v2693, 0
  %v2708 = vsel %vm2700, %v2696, 0
  %v2711 = vsel %vm2700, %v2699, 0
  %2713 = vmatprep.subr.mxu0 %v2473
  %2714 = vmatpush1.msra.mxu0 %v2472
  %2715 = vmatprep.subr.mxu0 %v2479
  %2716 = vmatpush1.msra.mxu0 %v2478
  %2717 = vmatprep.subr.mxu0 %v2485
  %2718 = vmatpush1.msra.mxu0 %v2484
  %2719 = vmatprep.subr.mxu0 %v2491
  %2720 = vmatpush1.msra.mxu0 %v2490
  %2721 = vmatprep.subr.mxu0 %v2497
  %2722 = vmatpush1.msra.mxu0 %v2496
  %2723 = vmatprep.subr.mxu0 %v2503
  %2724 = vmatpush1.msra.mxu0 %v2502
  %2725 = vmatprep.subr.mxu0 %v2509
  %2726 = vmatpush1.msra.mxu0 %v2508
  %2727 = vmatprep.subr.mxu0 %v2515
  %2728 = vmatpush1.msra.mxu0 %v2514
  %2729 = vmatprep.subr.mxu0 %v2521
  %2730 = vmatpush1.msra.mxu0 %v2520
  %2731 = vmatprep.subr.mxu0 %v2527
  %2732 = vmatpush1.msra.mxu0 %v2526
  %2733 = vmatprep.subr.mxu0 %v2533
  %2734 = vmatpush1.msra.mxu0 %v2532
  %2735 = vmatprep.subr.mxu0 %v2539
  %2736 = vmatpush1.msra.mxu0 %v2538
  %2737 = vmatprep.subr.mxu0 %v2545
  %2738 = vmatpush1.msra.mxu0 %v2544
  %2739 = vmatprep.subr.mxu0 %v2551
  %2740 = vmatpush1.msra.mxu0 %v2550
  %2741 = vmatprep.subr.mxu0 %v2557
  %2742 = vmatpush1.msra.mxu0 %v2556
  %2743 = vmatprep.subr.mxu0 %v2563
  %2744 = vmatpush1.msra.mxu0 %v2562
  %2745 = vmatprep.subr.mxu0 %v2569
  %2746 = vmatpush1.msra.mxu0 %v2568
  %2747 = vmatprep.subr.mxu0 %v2575
  %2748 = vmatpush1.msra.mxu0 %v2574
  %2749 = vmatprep.subr.mxu0 %v2581
  %2750 = vmatpush1.msra.mxu0 %v2580
  %2751 = vmatprep.subr.mxu0 %v2587
  %2752 = vmatpush1.msra.mxu0 %v2586
  %2753 = vmatprep.subr.mxu0 %v2593
  %2754 = vmatpush1.msra.mxu0 %v2592
  %2755 = vmatprep.subr.mxu0 %v2599
  %2756 = vmatpush1.msra.mxu0 %v2598
  %2757 = vmatprep.subr.mxu0 %v2605
  %2758 = vmatpush1.msra.mxu0 %v2604
  %2759 = vmatprep.subr.mxu0 %v2611
  %2760 = vmatpush1.msra.mxu0 %v2610
  %2761 = vmatprep.subr.mxu0 %v2617
  %2762 = vmatpush1.msra.mxu0 %v2616
  %2763 = vmatprep.subr.mxu0 %v2623
  %2764 = vmatpush1.msra.mxu0 %v2622
  %2765 = vmatprep.subr.mxu0 %v2629
  %2766 = vmatpush1.msra.mxu0 %v2628
  %2767 = vmatprep.subr.mxu0 %v2635
  %2768 = vmatpush1.msra.mxu0 %v2634
  %2769 = vmatprep.subr.mxu0 %v2641
  %2770 = vmatpush1.msra.mxu0 %v2640
  %2771 = vmatprep.subr.mxu0 %v2647
  %2772 = vmatpush1.msra.mxu0 %v2646
  %2773 = vmatprep.subr.mxu0 %v2653
  %2774 = vmatpush1.msra.mxu0 %v2652
  %2775 = vmatprep.subr.mxu0 %v2659
  %2776 = vmatpush1.msra.mxu0 %v2658
  %2777 = vmatprep.mubr.f32.mxu0 %v2689
  %2778 = vmatmul.mubr.f32.gmra.mrb[0].mxu0 %v2688
  %v2779 = vpop.f32.mrb[0].mxu0
  %v2780 = vadd.f32 0.0, %v2779
  %v2781 = vpop.f32.mrb[0].mxu0
  %v2782 = vadd.f32 0.0, %v2781
  %2783 = vmatprep.mubr.f32.mxu0 %v2692
  %2784 = vmatmul.mubr.f32.gmra.mrb[0].mxu0 %v2691
  %v2785 = vpop.f32.mrb[0].mxu0
  %v2786 = vadd.f32 0.0, %v2785
  %v2787 = vpop.f32.mrb[0].mxu0
  %v2788 = vadd.f32 0.0, %v2787
  %2789 = vmatprep.mubr.f32.mxu0 %v2695
  %2790 = vmatmul.mubr.f32.gmra.mrb[0].mxu0 %v2694
  %v2791 = vpop.f32.mrb[0].mxu0
  %v2792 = vadd.f32 0.0, %v2791
  %v2793 = vpop.f32.mrb[0].mxu0
  %v2794 = vadd.f32 0.0, %v2793
  %2795 = vmatprep.mubr.f32.mxu0 %v2698
  %2796 = vmatmul.mubr.f32.gmra.mrb[0].mxu0 %v2697
  %v2797 = vpop.f32.mrb[0].mxu0
  %v2798 = vadd.f32 0.0, %v2797
  %v2799 = vpop.f32.mrb[0].mxu0
  %v2800 = vadd.f32 0.0, %v2799
  %2801 = vdwg.mxu0
  %2802 = vmatprep.subr.mxu0 %v2665
  %2803 = vmatpush1.msra.mxu0 %v2664
  %2804 = vmatprep.subr.mxu0 %v2671
  %2805 = vmatpush1.msra.mxu0 %v2670
  %2806 = vmatprep.subr.mxu0 %v2677
  %2807 = vmatpush1.msra.mxu0 %v2676
  %2808 = vmatprep.subr.mxu0 %v2683
  %2809 = vmatpush1.msra.mxu0 %v2682
  %2810 = vmatprep.subr.mxu0 0.0
  %2811 = vmatpush1.msra.mxu0 0.0
  %2812 = vmatprep.subr.mxu0 0.0
  %2813 = vmatpush1.msra.mxu0 0.0
  %2814 = vmatprep.subr.mxu0 0.0
  %2815 = vmatpush1.msra.mxu0 0.0
  %2816 = vmatprep.subr.mxu0 0.0
  %2817 = vmatpush1.msra.mxu0 0.0
  %2818 = vmatprep.subr.mxu0 0.0
  %2819 = vmatpush1.msra.mxu0 0.0
  %2820 = vmatprep.subr.mxu0 0.0
  %2821 = vmatpush1.msra.mxu0 0.0
  %2822 = vmatprep.subr.mxu0 0.0
  %2823 = vmatpush1.msra.mxu0 0.0
  %2824 = vmatprep.subr.mxu0 0.0
  %2825 = vmatpush1.msra.mxu0 0.0
  %2826 = vmatprep.subr.mxu0 0.0
  %2827 = vmatpush1.msra.mxu0 0.0
  %2828 = vmatprep.subr.mxu0 0.0
  %2829 = vmatpush1.msra.mxu0 0.0
  %2830 = vmatprep.subr.mxu0 0.0
  %2831 = vmatpush1.msra.mxu0 0.0
  %2832 = vmatprep.subr.mxu0 0.0
  %2833 = vmatpush1.msra.mxu0 0.0
  %2834 = vmatprep.subr.mxu0 0.0
  %2835 = vmatpush1.msra.mxu0 0.0
  %2836 = vmatprep.subr.mxu0 0.0
  %2837 = vmatpush1.msra.mxu0 0.0
  %2838 = vmatprep.subr.mxu0 0.0
  %2839 = vmatpush1.msra.mxu0 0.0
  %2840 = vmatprep.subr.mxu0 0.0
  %2841 = vmatpush1.msra.mxu0 0.0
  %2842 = vmatprep.subr.mxu0 0.0
  %2843 = vmatpush1.msra.mxu0 0.0
  %2844 = vmatprep.subr.mxu0 0.0
  %2845 = vmatpush1.msra.mxu0 0.0
  %2846 = vmatprep.subr.mxu0 0.0
  %2847 = vmatpush1.msra.mxu0 0.0
  %2848 = vmatprep.subr.mxu0 0.0
  %2849 = vmatpush1.msra.mxu0 0.0
  %2850 = vmatprep.subr.mxu0 0.0
  %2851 = vmatpush1.msra.mxu0 0.0
  %2852 = vmatprep.subr.mxu0 0.0
  %2853 = vmatpush1.msra.mxu0 0.0
  %2854 = vmatprep.subr.mxu0 0.0
  %2855 = vmatpush1.msra.mxu0 0.0
  %2856 = vmatprep.subr.mxu0 0.0
  %2857 = vmatpush1.msra.mxu0 0.0
  %2858 = vmatprep.subr.mxu0 0.0
  %2859 = vmatpush1.msra.mxu0 0.0
  %2860 = vmatprep.subr.mxu0 0.0
  %2861 = vmatpush1.msra.mxu0 0.0
  %2862 = vmatprep.subr.mxu0 0.0
  %2863 = vmatpush1.msra.mxu0 0.0
  %2864 = vmatprep.subr.mxu0 0.0
  %2865 = vmatpush1.msra.mxu0 0.0
  %2866 = vmatprep.mubr.f32.mxu0 0.0
  %2867 = vmatmul.mubr.f32.gmra.mrb[0].mxu0 %v2702
  %v2868 = vpop.f32.mrb[0].mxu0
  %v2869 = vadd.f32 %v2780, %v2868
  %v2870 = vpop.f32.mrb[0].mxu0
  %v2871 = vadd.f32 %v2782, %v2870
  %2872 = vmatprep.mubr.f32.mxu0 0.0
  %2873 = vmatmul.mubr.f32.gmra.mrb[0].mxu0 %v2705
  %v2874 = vpop.f32.mrb[0].mxu0
  %v2875 = vadd.f32 %v2786, %v2874
  %v2876 = vpop.f32.mrb[0].mxu0
  %v2877 = vadd.f32 %v2788, %v2876
  %2878 = vmatprep.mubr.f32.mxu0 0.0
  %2879 = vmatmul.mubr.f32.gmra.mrb[0].mxu0 %v2708
  %v2880 = vpop.f32.mrb[0].mxu0
  %v2881 = vadd.f32 %v2792, %v2880
  %v2882 = vpop.f32.mrb[0].mxu0
  %v2883 = vadd.f32 %v2794, %v2882
  %2884 = vmatprep.mubr.f32.mxu0 0.0
  %2885 = vmatmul.mubr.f32.gmra.mrb[0].mxu0 %v2711
  %v2886 = vpop.f32.mrb[0].mxu0
  %v2887 = vadd.f32 %v2798, %v2886
  %v2888 = vpop.f32.mrb[0].mxu0
  %v2889 = vadd.f32 %v2800, %v2888
  %2890 = vdwg.mxu0
  %2891 = vmatprep.subr.mxu0 %v2475
  %2892 = vmatpush1.msra.mxu0 %v2474
  %2893 = vmatprep.subr.mxu0 %v2481
  %2894 = vmatpush1.msra.mxu0 %v2480
  %2895 = vmatprep.subr.mxu0 %v2487
  %2896 = vmatpush1.msra.mxu0 %v2486
  %2897 = vmatprep.subr.mxu0 %v2493
  %2898 = vmatpush1.msra.mxu0 %v2492
  %2899 = vmatprep.subr.mxu0 %v2499
  %2900 = vmatpush1.msra.mxu0 %v2498
  %2901 = vmatprep.subr.mxu0 %v2505
  %2902 = vmatpush1.msra.mxu0 %v2504
  %2903 = vmatprep.subr.mxu0 %v2511
  %2904 = vmatpush1.msra.mxu0 %v2510
  %2905 = vmatprep.subr.mxu0 %v2517
  %2906 = vmatpush1.msra.mxu0 %v2516
  %2907 = vmatprep.subr.mxu0 %v2523
  %2908 = vmatpush1.msra.mxu0 %v2522
  %2909 = vmatprep.subr.mxu0 %v2529
  %2910 = vmatpush1.msra.mxu0 %v2528
  %2911 = vmatprep.subr.mxu0 %v2535
  %2912 = vmatpush1.msra.mxu0 %v2534
  %2913 = vmatprep.subr.mxu0 %v2541
  %2914 = vmatpush1.msra.mxu0 %v2540
  %2915 = vmatprep.subr.mxu0 %v2547
  %2916 = vmatpush1.msra.mxu0 %v2546
  %2917 = vmatprep.subr.mxu0 %v2553
  %2918 = vmatpush1.msra.mxu0 %v2552
  %2919 = vmatprep.subr.mxu0 %v2559
  %2920 = vmatpush1.msra.mxu0 %v2558
  %2921 = vmatprep.subr.mxu0 %v2565
  %2922 = vmatpush1.msra.mxu0 %v2564
  %2923 = vmatprep.subr.mxu0 %v2571
  %2924 = vmatpush1.msra.mxu0 %v2570
  %2925 = vmatprep.subr.mxu0 %v2577
  %2926 = vmatpush1.msra.mxu0 %v2576
  %2927 = vmatprep.subr.mxu0 %v2583
  %2928 = vmatpush1.msra.mxu0 %v2582
  %2929 = vmatprep.subr.mxu0 %v2589
  %2930 = vmatpush1.msra.mxu0 %v2588
  %2931 = vmatprep.subr.mxu0 %v2595
  %2932 = vmatpush1.msra.mxu0 %v2594
  %2933 = vmatprep.subr.mxu0 %v2601
  %2934 = vmatpush1.msra.mxu0 %v2600
  %2935 = vmatprep.subr.mxu0 %v2607
  %2936 = vmatpush1.msra.mxu0 %v2606
  %2937 = vmatprep.subr.mxu0 %v2613
  %2938 = vmatpush1.msra.mxu0 %v2612
  %2939 = vmatprep.subr.mxu0 %v2619
  %2940 = vmatpush1.msra.mxu0 %v2618
  %2941 = vmatprep.subr.mxu0 %v2625
  %2942 = vmatpush1.msra.mxu0 %v2624
  %2943 = vmatprep.subr.mxu0 %v2631
  %2944 = vmatpush1.msra.mxu0 %v2630
  %2945 = vmatprep.subr.mxu0 %v2637
  %2946 = vmatpush1.msra.mxu0 %v2636
  %2947 = vmatprep.subr.mxu0 %v2643
  %2948 = vmatpush1.msra.mxu0 %v2642
  %2949 = vmatprep.subr.mxu0 %v2649
  %2950 = vmatpush1.msra.mxu0 %v2648
  %2951 = vmatprep.subr.mxu0 %v2655
  %2952 = vmatpush1.msra.mxu0 %v2654
  %2953 = vmatprep.subr.mxu0 %v2661
  %2954 = vmatpush1.msra.mxu0 %v2660
  %2955 = vmatprep.mubr.f32.mxu0 %v2689
  %2956 = vmatmul.mubr.f32.gmra.mrb[0].mxu0 %v2688
  %v2957 = vpop.f32.mrb[0].mxu0
  %v2958 = vadd.f32 0.0, %v2957
  %v2959 = vpop.f32.mrb[0].mxu0
  %v2960 = vadd.f32 0.0, %v2959
  %2961 = vmatprep.mubr.f32.mxu0 %v2692
  %2962 = vmatmul.mubr.f32.gmra.mrb[0].mxu0 %v2691
  %v2963 = vpop.f32.mrb[0].mxu0
  %v2964 = vadd.f32 0.0, %v2963
  %v2965 = vpop.f32.mrb[0].mxu0
  %v2966 = vadd.f32 0.0, %v2965
  %2967 = vmatprep.mubr.f32.mxu0 %v2695
  %2968 = vmatmul.mubr.f32.gmra.mrb[0].mxu0 %v2694
  %v2969 = vpop.f32.mrb[0].mxu0
  %v2970 = vadd.f32 0.0, %v2969
  %v2971 = vpop.f32.mrb[0].mxu0
  %v2972 = vadd.f32 0.0, %v2971
  %2973 = vmatprep.mubr.f32.mxu0 %v2698
  %2974 = vmatmul.mubr.f32.gmra.mrb[0].mxu0 %v2697
  %v2975 = vpop.f32.mrb[0].mxu0
  %v2976 = vadd.f32 0.0, %v2975
  %v2977 = vpop.f32.mrb[0].mxu0
  %v2978 = vadd.f32 0.0, %v2977
  %2979 = vdwg.mxu0
  %2980 = vmatprep.subr.mxu0 %v2667
  %2981 = vmatpush1.msra.mxu0 %v2666
  %2982 = vmatprep.subr.mxu0 %v2673
  %2983 = vmatpush1.msra.mxu0 %v2672
  %2984 = vmatprep.subr.mxu0 %v2679
  %2985 = vmatpush1.msra.mxu0 %v2678
  %2986 = vmatprep.subr.mxu0 %v2685
  %2987 = vmatpush1.msra.mxu0 %v2684
  %2988 = vmatprep.subr.mxu0 0.0
  %2989 = vmatpush1.msra.mxu0 0.0
  %2990 = vmatprep.subr.mxu0 0.0
  %2991 = vmatpush1.msra.mxu0 0.0
  %2992 = vmatprep.subr.mxu0 0.0
  %2993 = vmatpush1.msra.mxu0 0.0
  %2994 = vmatprep.subr.mxu0 0.0
  %2995 = vmatpush1.msra.mxu0 0.0
  %2996 = vmatprep.subr.mxu0 0.0
  %2997 = vmatpush1.msra.mxu0 0.0
  %2998 = vmatprep.subr.mxu0 0.0
  %2999 = vmatpush1.msra.mxu0 0.0
  %3000 = vmatprep.subr.mxu0 0.0
  %3001 = vmatpush1.msra.mxu0 0.0
  %3002 = vmatprep.subr.mxu0 0.0
  %3003 = vmatpush1.msra.mxu0 0.0
  %3004 = vmatprep.subr.mxu0 0.0
  %3005 = vmatpush1.msra.mxu0 0.0
  %3006 = vmatprep.subr.mxu0 0.0
  %3007 = vmatpush1.msra.mxu0 0.0
  %3008 = vmatprep.subr.mxu0 0.0
  %3009 = vmatpush1.msra.mxu0 0.0
  %3010 = vmatprep.subr.mxu0 0.0
  %3011 = vmatpush1.msra.mxu0 0.0
  %3012 = vmatprep.subr.mxu0 0.0
  %3013 = vmatpush1.msra.mxu0 0.0
  %3014 = vmatprep.subr.mxu0 0.0
  %3015 = vmatpush1.msra.mxu0 0.0
  %3016 = vmatprep.subr.mxu0 0.0
  %3017 = vmatpush1.msra.mxu0 0.0
  %3018 = vmatprep.subr.mxu0 0.0
  %3019 = vmatpush1.msra.mxu0 0.0
  %3020 = vmatprep.subr.mxu0 0.0
  %3021 = vmatpush1.msra.mxu0 0.0
  %3022 = vmatprep.subr.mxu0 0.0
  %3023 = vmatpush1.msra.mxu0 0.0
  %3024 = vmatprep.subr.mxu0 0.0
  %3025 = vmatpush1.msra.mxu0 0.0
  %3026 = vmatprep.subr.mxu0 0.0
  %3027 = vmatpush1.msra.mxu0 0.0
  %3028 = vmatprep.subr.mxu0 0.0
  %3029 = vmatpush1.msra.mxu0 0.0
  %3030 = vmatprep.subr.mxu0 0.0
  %3031 = vmatpush1.msra.mxu0 0.0
  %3032 = vmatprep.subr.mxu0 0.0
  %3033 = vmatpush1.msra.mxu0 0.0
  %3034 = vmatprep.subr.mxu0 0.0
  %3035 = vmatpush1.msra.mxu0 0.0
  %3036 = vmatprep.subr.mxu0 0.0
  %3037 = vmatpush1.msra.mxu0 0.0
  %3038 = vmatprep.subr.mxu0 0.0
  %3039 = vmatpush1.msra.mxu0 0.0
  %3040 = vmatprep.subr.mxu0 0.0
  %3041 = vmatpush1.msra.mxu0 0.0
  %3042 = vmatprep.subr.mxu0 0.0
  %3043 = vmatpush1.msra.mxu0 0.0
  %3044 = vmatprep.mubr.f32.mxu0 0.0
  %3045 = vmatmul.mubr.f32.gmra.mrb[0].mxu0 %v2702
  %v3046 = vpop.f32.mrb[0].mxu0
  %v3047 = vadd.f32 %v2958, %v3046
  %v3048 = vpop.f32.mrb[0].mxu0
  %v3049 = vadd.f32 %v2960, %v3048
  %3050 = vmatprep.mubr.f32.mxu0 0.0
  %3051 = vmatmul.mubr.f32.gmra.mrb[0].mxu0 %v2705
  %v3052 = vpop.f32.mrb[0].mxu0
  %v3053 = vadd.f32 %v2964, %v3052
  %v3054 = vpop.f32.mrb[0].mxu0
  %v3055 = vadd.f32 %v2966, %v3054
  %3056 = vmatprep.mubr.f32.mxu0 0.0
  %3057 = vmatmul.mubr.f32.gmra.mrb[0].mxu0 %v2708
  %v3058 = vpop.f32.mrb[0].mxu0
  %v3059 = vadd.f32 %v2970, %v3058
  %v3060 = vpop.f32.mrb[0].mxu0
  %v3061 = vadd.f32 %v2972, %v3060
  %3062 = vmatprep.mubr.f32.mxu0 0.0
  %3063 = vmatmul.mubr.f32.gmra.mrb[0].mxu0 %v2711
  %v3064 = vpop.f32.mrb[0].mxu0
  %v3065 = vadd.f32 %v2976, %v3064
  %v3066 = vpop.f32.mrb[0].mxu0
  %v3067 = vadd.f32 %v2978, %v3066
  %3068 = vdwg.mxu0
  %3069 = vmatprep.subr.mxu0 %v2477
  %3070 = vmatpush1.msra.mxu0 %v2476
  %3071 = vmatprep.subr.mxu0 %v2483
  %3072 = vmatpush1.msra.mxu0 %v2482
  %3073 = vmatprep.subr.mxu0 %v2489
  %3074 = vmatpush1.msra.mxu0 %v2488
  %3075 = vmatprep.subr.mxu0 %v2495
  %3076 = vmatpush1.msra.mxu0 %v2494
  %3077 = vmatprep.subr.mxu0 %v2501
  %3078 = vmatpush1.msra.mxu0 %v2500
  %3079 = vmatprep.subr.mxu0 %v2507
  %3080 = vmatpush1.msra.mxu0 %v2506
  %3081 = vmatprep.subr.mxu0 %v2513
  %3082 = vmatpush1.msra.mxu0 %v2512
  %3083 = vmatprep.subr.mxu0 %v2519
  %3084 = vmatpush1.msra.mxu0 %v2518
  %3085 = vmatprep.subr.mxu0 %v2525
  %3086 = vmatpush1.msra.mxu0 %v2524
  %3087 = vmatprep.subr.mxu0 %v2531
  %3088 = vmatpush1.msra.mxu0 %v2530
  %3089 = vmatprep.subr.mxu0 %v2537
  %3090 = vmatpush1.msra.mxu0 %v2536
  %3091 = vmatprep.subr.mxu0 %v2543
  %3092 = vmatpush1.msra.mxu0 %v2542
  %3093 = vmatprep.subr.mxu0 %v2549
  %3094 = vmatpush1.msra.mxu0 %v2548
  %3095 = vmatprep.subr.mxu0 %v2555
  %3096 = vmatpush1.msra.mxu0 %v2554
  %3097 = vmatprep.subr.mxu0 %v2561
  %3098 = vmatpush1.msra.mxu0 %v2560
  %3099 = vmatprep.subr.mxu0 %v2567
  %3100 = vmatpush1.msra.mxu0 %v2566
  %3101 = vmatprep.subr.mxu0 %v2573
  %3102 = vmatpush1.msra.mxu0 %v2572
  %3103 = vmatprep.subr.mxu0 %v2579
  %3104 = vmatpush1.msra.mxu0 %v2578
  %3105 = vmatprep.subr.mxu0 %v2585
  %3106 = vmatpush1.msra.mxu0 %v2584
  %3107 = vmatprep.subr.mxu0 %v2591
  %3108 = vmatpush1.msra.mxu0 %v2590
  %3109 = vmatprep.subr.mxu0 %v2597
  %3110 = vmatpush1.msra.mxu0 %v2596
  %3111 = vmatprep.subr.mxu0 %v2603
  %3112 = vmatpush1.msra.mxu0 %v2602
  %3113 = vmatprep.subr.mxu0 %v2609
  %3114 = vmatpush1.msra.mxu0 %v2608
  %3115 = vmatprep.subr.mxu0 %v2615
  %3116 = vmatpush1.msra.mxu0 %v2614
  %3117 = vmatprep.subr.mxu0 %v2621
  %3118 = vmatpush1.msra.mxu0 %v2620
  %3119 = vmatprep.subr.mxu0 %v2627
  %3120 = vmatpush1.msra.mxu0 %v2626
  %3121 = vmatprep.subr.mxu0 %v2633
  %3122 = vmatpush1.msra.mxu0 %v2632
  %3123 = vmatprep.subr.mxu0 %v2639
  %3124 = vmatpush1.msra.mxu0 %v2638
  %3125 = vmatprep.subr.mxu0 %v2645
  %3126 = vmatpush1.msra.mxu0 %v2644
  %3127 = vmatprep.subr.mxu0 %v2651
  %3128 = vmatpush1.msra.mxu0 %v2650
  %3129 = vmatprep.subr.mxu0 %v2657
  %3130 = vmatpush1.msra.mxu0 %v2656
  %3131 = vmatprep.subr.mxu0 %v2663
  %3132 = vmatpush1.msra.mxu0 %v2662
  %3133 = vmatprep.mubr.f32.mxu0 %v2689
  %3134 = vmatmul.mubr.f32.gmra.mrb[0].mxu0 %v2688
  %v3135 = vpop.f32.mrb[0].mxu0
  %v3136 = vadd.f32 0.0, %v3135
  %v3137 = vpop.f32.mrb[0].mxu0
  %v3138 = vadd.f32 0.0, %v3137
  %3139 = vmatprep.mubr.f32.mxu0 %v2692
  %3140 = vmatmul.mubr.f32.gmra.mrb[0].mxu0 %v2691
  %v3141 = vpop.f32.mrb[0].mxu0
  %v3142 = vadd.f32 0.0, %v3141
  %v3143 = vpop.f32.mrb[0].mxu0
  %v3144 = vadd.f32 0.0, %v3143
  %3145 = vmatprep.mubr.f32.mxu0 %v2695
  %3146 = vmatmul.mubr.f32.gmra.mrb[0].mxu0 %v2694
  %v3147 = vpop.f32.mrb[0].mxu0
  %v3148 = vadd.f32 0.0, %v3147
  %v3149 = vpop.f32.mrb[0].mxu0
  %v3150 = vadd.f32 0.0, %v3149
  %3151 = vmatprep.mubr.f32.mxu0 %v2698
  %3152 = vmatmul.mubr.f32.gmra.mrb[0].mxu0 %v2697
  %v3153 = vpop.f32.mrb[0].mxu0
  %v3154 = vadd.f32 0.0, %v3153
  %v3155 = vpop.f32.mrb[0].mxu0
  %v3156 = vadd.f32 0.0, %v3155
  %3157 = vdwg.mxu0
  %3158 = vmatprep.subr.mxu0 %v2669
  %3159 = vmatpush1.msra.mxu0 %v2668
  %3160 = vmatprep.subr.mxu0 %v2675
  %3161 = vmatpush1.msra.mxu0 %v2674
  %3162 = vmatprep.subr.mxu0 %v2681
  %3163 = vmatpush1.msra.mxu0 %v2680
  %3164 = vmatprep.subr.mxu0 %v2687
  %3165 = vmatpush1.msra.mxu0 %v2686
  %3166 = vmatprep.subr.mxu0 0.0
  %3167 = vmatpush1.msra.mxu0 0.0
  %3168 = vmatprep.subr.mxu0 0.0
  %3169 = vmatpush1.msra.mxu0 0.0
  %3170 = vmatprep.subr.mxu0 0.0
  %3171 = vmatpush1.msra.mxu0 0.0
  %3172 = vmatprep.subr.mxu0 0.0
  %3173 = vmatpush1.msra.mxu0 0.0
  %3174 = vmatprep.subr.mxu0 0.0
  %3175 = vmatpush1.msra.mxu0 0.0
  %3176 = vmatprep.subr.mxu0 0.0
  %3177 = vmatpush1.msra.mxu0 0.0
  %3178 = vmatprep.subr.mxu0 0.0
  %3179 = vmatpush1.msra.mxu0 0.0
  %3180 = vmatprep.subr.mxu0 0.0
  %3181 = vmatpush1.msra.mxu0 0.0
  %3182 = vmatprep.subr.mxu0 0.0
  %3183 = vmatpush1.msra.mxu0 0.0
  %3184 = vmatprep.subr.mxu0 0.0
  %3185 = vmatpush1.msra.mxu0 0.0
  %3186 = vmatprep.subr.mxu0 0.0
  %3187 = vmatpush1.msra.mxu0 0.0
  %3188 = vmatprep.subr.mxu0 0.0
  %3189 = vmatpush1.msra.mxu0 0.0
  %3190 = vmatprep.subr.mxu0 0.0
  %3191 = vmatpush1.msra.mxu0 0.0
  %3192 = vmatprep.subr.mxu0 0.0
  %3193 = vmatpush1.msra.mxu0 0.0
  %3194 = vmatprep.subr.mxu0 0.0
  %3195 = vmatpush1.msra.mxu0 0.0
  %3196 = vmatprep.subr.mxu0 0.0
  %3197 = vmatpush1.msra.mxu0 0.0
  %3198 = vmatprep.subr.mxu0 0.0
  %3199 = vmatpush1.msra.mxu0 0.0
  %3200 = vmatprep.subr.mxu0 0.0
  %3201 = vmatpush1.msra.mxu0 0.0
  %3202 = vmatprep.subr.mxu0 0.0
  %3203 = vmatpush1.msra.mxu0 0.0
  %3204 = vmatprep.subr.mxu0 0.0
  %3205 = vmatpush1.msra.mxu0 0.0
  %3206 = vmatprep.subr.mxu0 0.0
  %3207 = vmatpush1.msra.mxu0 0.0
  %3208 = vmatprep.subr.mxu0 0.0
  %3209 = vmatpush1.msra.mxu0 0.0
  %3210 = vmatprep.subr.mxu0 0.0
  %3211 = vmatpush1.msra.mxu0 0.0
  %3212 = vmatprep.subr.mxu0 0.0
  %3213 = vmatpush1.msra.mxu0 0.0
  %3214 = vmatprep.subr.mxu0 0.0
  %3215 = vmatpush1.msra.mxu0 0.0
  %3216 = vmatprep.subr.mxu0 0.0
  %3217 = vmatpush1.msra.mxu0 0.0
  %3218 = vmatprep.subr.mxu0 0.0
  %3219 = vmatpush1.msra.mxu0 0.0
  %3220 = vmatprep.subr.mxu0 0.0
  %3221 = vmatpush1.msra.mxu0 0.0
  %3222 = vmatprep.mubr.f32.mxu0 0.0
  %3223 = vmatmul.mubr.f32.gmra.mrb[0].mxu0 %v2702
  %v3224 = vpop.f32.mrb[0].mxu0
  %v3225 = vadd.f32 %v3136, %v3224
  %v3226 = vpop.f32.mrb[0].mxu0
  %v3227 = vadd.f32 %v3138, %v3226
  %3228 = vmatprep.mubr.f32.mxu0 0.0
  %3229 = vmatmul.mubr.f32.gmra.mrb[0].mxu0 %v2705
  %v3230 = vpop.f32.mrb[0].mxu0
  %v3231 = vadd.f32 %v3142, %v3230
  %v3232 = vpop.f32.mrb[0].mxu0
  %v3233 = vadd.f32 %v3144, %v3232
  %3234 = vmatprep.mubr.f32.mxu0 0.0
  %3235 = vmatmul.mubr.f32.gmra.mrb[0].mxu0 %v2708
  %v3236 = vpop.f32.mrb[0].mxu0
  %v3237 = vadd.f32 %v3148, %v3236
  %v3238 = vpop.f32.mrb[0].mxu0
  %v3239 = vadd.f32 %v3150, %v3238
  %3240 = vmatprep.mubr.f32.mxu0 0.0
  %3241 = vmatmul.mubr.f32.gmra.mrb[0].mxu0 %v2711
  %v3242 = vpop.f32.mrb[0].mxu0
  %v3243 = vadd.f32 %v3154, %v3242
  %v3244 = vpop.f32.mrb[0].mxu0
  %v3245 = vadd.f32 %v3156, %v3244
  %3246 = vdwg.mxu0
  %v3247 = vadd.f32 %v931, %v2869
  %v3248 = vadd.f32 %v931, %v2871
  %v3249 = vadd.f32 %v931, %v3047
  %v3250 = vadd.f32 %v931, %v3049
  %v3251 = vadd.f32 %v931, %v3225
  %v3252 = vadd.f32 %v931, %v3227
  %v3253 = vadd.f32 %v936, %v2875
  %v3254 = vadd.f32 %v936, %v2877
  %v3255 = vadd.f32 %v936, %v3053
  %v3256 = vadd.f32 %v936, %v3055
  %v3257 = vadd.f32 %v936, %v3231
  %v3258 = vadd.f32 %v936, %v3233
  %v3259 = vadd.f32 %v941, %v2881
  %v3260 = vadd.f32 %v941, %v2883
  %v3261 = vadd.f32 %v941, %v3059
  %v3262 = vadd.f32 %v941, %v3061
  %v3263 = vadd.f32 %v941, %v3237
  %v3264 = vadd.f32 %v941, %v3239
  %v3265 = vadd.f32 %v946, %v2887
  %v3266 = vadd.f32 %v946, %v2889
  %v3267 = vadd.f32 %v946, %v3065
  %v3268 = vadd.f32 %v946, %v3067
  %v3269 = vadd.f32 %v946, %v3243
  %v3270 = vadd.f32 %v946, %v3245
  %v3271 = vmax.f32 %v3247, 0.0
  %v3272 = vmax.f32 %v3248, 0.0
  %v3273 = vmax.f32 %v3249, 0.0
  %v3274 = vmax.f32 %v3250, 0.0
  %v3275 = vmax.f32 %v3251, 0.0
  %v3276 = vmax.f32 %v3252, 0.0
  %v3277 = vmax.f32 %v3253, 0.0
  %v3278 = vmax.f32 %v3254, 0.0
  %v3279 = vmax.f32 %v3255, 0.0
  %v3280 = vmax.f32 %v3256, 0.0
  %v3281 = vmax.f32 %v3257, 0.0
  %v3282 = vmax.f32 %v3258, 0.0
  %v3283 = vmax.f32 %v3259, 0.0
  %v3284 = vmax.f32 %v3260, 0.0
  %v3285 = vmax.f32 %v3261, 0.0
  %v3286 = vmax.f32 %v3262, 0.0
  %v3287 = vmax.f32 %v3263, 0.0
  %v3288 = vmax.f32 %v3264, 0.0
  %v3289 = vmax.f32 %v3265, 0.0
  %v3290 = vmax.f32 %v3266, 0.0
  %v3291 = vmax.f32 %v3267, 0.0
  %v3292 = vmax.f32 %v3268, 0.0
  %v3293 = vmax.f32 %v3269, 0.0
  %v3294 = vmax.f32 %v3270, 0.0
  %v3295 = vmul.f32 %v3271, %v849
  %v3296 = vmul.f32 %v3272, %v853
  %v3297 = vmul.f32 %v3273, %v857
  %v3298 = vmul.f32 %v3274, %v861
  %v3299 = vmul.f32 %v3275, %v865
  %v3300 = vmul.f32 %v3276, %v869
  %v3301 = vmul.f32 %v3277, %v849
  %v3302 = vmul.f32 %v3278, %v853
  %v3303 = vmul.f32 %v3279, %v857
  %v3304 = vmul.f32 %v3280, %v861
  %v3305 = vmul.f32 %v3281, %v865
  %v3306 = vmul.f32 %v3282, %v869
  %v3307 = vmul.f32 %v3283, %v849
  %v3308 = vmul.f32 %v3284, %v853
  %v3309 = vmul.f32 %v3285, %v857
  %v3310 = vmul.f32 %v3286, %v861
  %v3311 = vmul.f32 %v3287, %v865
  %v3312 = vmul.f32 %v3288, %v869
  %v3313 = vmul.f32 %v3289, %v849
  %v3314 = vmul.f32 %v3290, %v853
  %v3315 = vmul.f32 %v3291, %v857
  %v3316 = vmul.f32 %v3292, %v861
  %v3317 = vmul.f32 %v3293, %v865
  %v3318 = vmul.f32 %v3294, %v869
  %3319 = vst [vmem:[#allocation3 + $0x8] sm:$0xff] %v3295
  %3320 = vst [vmem:[#allocation3 + $0x10] sm:$0xff] %v3296
  %3321 = vst [vmem:[#allocation3 + $0x18] sm:$0xff] %v3297
  %3322 = vst [vmem:[#allocation3 + $0x20] sm:$0xff] %v3298
  %3323 = vst [vmem:[#allocation3 + $0x28] sm:$0xff] %v3299
  %3324 = vst [vmem:[#allocation3 + $0x30] sm:$0xff] %v3300
  %3325 = vst [vmem:[#allocation3 + $0x48] sm:$0xff] %v3301
  %3326 = vst [vmem:[#allocation3 + $0x50] sm:$0xff] %v3302
  %3327 = vst [vmem:[#allocation3 + $0x58] sm:$0xff] %v3303
  %3328 = vst [vmem:[#allocation3 + $0x60] sm:$0xff] %v3304
  %3329 = vst [vmem:[#allocation3 + $0x68] sm:$0xff] %v3305
  %3330 = vst [vmem:[#allocation3 + $0x70] sm:$0xff] %v3306
  %3331 = vst [vmem:[#allocation3 + $0x88] sm:$0xff] %v3307
  %3332 = vst [vmem:[#allocation3 + $0x90] sm:$0xff] %v3308
  %3333 = vst [vmem:[#allocation3 + $0x98] sm:$0xff] %v3309
  %3334 = vst [vmem:[#allocation3 + $0xa0] sm:$0xff] %v3310
  %3335 = vst [vmem:[#allocation3 + $0xa8] sm:$0xff] %v3311
  %3336 = vst [vmem:[#allocation3 + $0xb0] sm:$0xff] %v3312
  %3337 = vst [vmem:[#allocation3 + $0xc8] sm:$0xff] %v3313
  %3338 = vst [vmem:[#allocation3 + $0xd0] sm:$0xff] %v3314
  %3339 = vst [vmem:[#allocation3 + $0xd8] sm:$0xff] %v3315
  %3340 = vst [vmem:[#allocation3 + $0xe0] sm:$0xff] %v3316
  %3341 = vst [vmem:[#allocation3 + $0xe8] sm:$0xff] %v3317
  %3342 = vst [vmem:[#allocation3 + $0xf0] sm:$0xff] %v3318
  %v3343 = vld [vmem:[%s7] sm:$0xff]
  %v3344 = vld [vmem:[%s7 + $0x8] sm:$0xff]
  %v3345 = vld [vmem:[%s7 + $0x10] sm:$0xff]
  %v3346 = vld [vmem:[%s7 + $0x18] sm:$0xff]
  %3348 = vset.pattern.permute.xlu0 0
  %3349 = vperm.xlu0 %3348, %v3343
  %v3350 = vpop.permute.xlu0 %3349
  %3353 = vset.pattern.permute.xlu0 0
  %3354 = vperm.xlu0 %3353, %v3344
  %v3355 = vpop.permute.xlu0 %3354
  %3358 = vset.pattern.permute.xlu0 0
  %3359 = vperm.xlu0 %3358, %v3345
  %v3360 = vpop.permute.xlu0 %3359
  %3363 = vset.pattern.permute.xlu0 0
  %3364 = vperm.xlu0 %3363, %v3346
  %v3365 = vpop.permute.xlu0 %3364
  %v3367 = vld [vmem:[#allocation3] sm:$0xff]
  %v3368 = vld [vmem:[#allocation3 + $0x8] sm:$0xff]
  %v3369 = vld [vmem:[#allocation3 + $0x10] sm:$0xff]
  %v3370 = vld [vmem:[#allocation3 + $0x18] sm:$0xff]
  %v3371 = vld [vmem:[#allocation3 + $0x20] sm:$0xff]
  %v3372 = vld [vmem:[#allocation3 + $0x28] sm:$0xff]
  %v3373 = vld [vmem:[#allocation3 + $0x30] sm:$0xff]
  %v3374 = vld [vmem:[#allocation3 + $0x40] sm:$0xff]
  %v3375 = vld [vmem:[#allocation3 + $0x48] sm:$0xff]
  %v3376 = vld [vmem:[#allocation3 + $0x50] sm:$0xff]
  %v3377 = vld [vmem:[#allocation3 + $0x58] sm:$0xff]
  %v3378 = vld [vmem:[#allocation3 + $0x60] sm:$0xff]
  %v3379 = vld [vmem:[#allocation3 + $0x68] sm:$0xff]
  %v3380 = vld [vmem:[#allocation3 + $0x70] sm:$0xff]
  %v3381 = vld [vmem:[#allocation3 + $0x80] sm:$0xff]
  %v3382 = vld [vmem:[#allocation3 + $0x88] sm:$0xff]
  %v3383 = vld [vmem:[#allocation3 + $0x90] sm:$0xff]
  %v3384 = vld [vmem:[#allocation3 + $0x98] sm:$0xff]
  %v3385 = vld [vmem:[#allocation3 + $0xa0] sm:$0xff]
  %v3386 = vld [vmem:[#allocation3 + $0xa8] sm:$0xff]
  %v3387 = vld [vmem:[#allocation3 + $0xb0] sm:$0xff]
  %v3388 = vld [vmem:[#allocation3 + $0xc0] sm:$0xff]
  %v3389 = vld [vmem:[#allocation3 + $0xc8] sm:$0xff]
  %v3390 = vld [vmem:[#allocation3 + $0xd0] sm:$0xff]
  %v3391 = vld [vmem:[#allocation3 + $0xd8] sm:$0xff]
  %v3392 = vld [vmem:[#allocation3 + $0xe0] sm:$0xff]
  %v3393 = vld [vmem:[#allocation3 + $0xe8] sm:$0xff]
  %v3394 = vld [vmem:[#allocation3 + $0xf0] sm:$0xff]
  %3423 = vrot.lane.b32.xlu0 %v3367, 19
  %v3424 = vpop.permute.xlu0 %3423
  %3425 = vrot.lane.b32.xlu0 %v3368, 19
  %v3426 = vpop.permute.xlu0 %3425
  %3427 = vrot.lane.b32.xlu0 %v3369, 19
  %v3428 = vpop.permute.xlu0 %3427
  %3429 = vrot.lane.b32.xlu0 %v3370, 19
  %v3430 = vpop.permute.xlu0 %3429
  %3431 = vrot.lane.b32.xlu0 %v3371, 19
  %v3432 = vpop.permute.xlu0 %3431
  %3433 = vrot.lane.b32.xlu0 %v3372, 19
  %v3434 = vpop.permute.xlu0 %3433
  %3435 = vrot.lane.b32.xlu0 %v3373, 19
  %v3436 = vpop.permute.xlu0 %3435
  %3437 = vrot.lane.b32.xlu0 %v3374, 19
  %v3438 = vpop.permute.xlu0 %3437
  %3439 = vrot.lane.b32.xlu0 %v3375, 19
  %v3440 = vpop.permute.xlu0 %3439
  %3441 = vrot.lane.b32.xlu0 %v3376, 19
  %v3442 = vpop.permute.xlu0 %3441
  %3443 = vrot.lane.b32.xlu0 %v3377, 19
  %v3444 = vpop.permute.xlu0 %3443
  %3445 = vrot.lane.b32.xlu0 %v3378, 19
  %v3446 = vpop.permute.xlu0 %3445
  %3447 = vrot.lane.b32.xlu0 %v3379, 19
  %v3448 = vpop.permute.xlu0 %3447
  %3449 = vrot.lane.b32.xlu0 %v3380, 19
  %v3450 = vpop.permute.xlu0 %3449
  %3451 = vrot.lane.b32.xlu0 %v3381, 19
  %v3452 = vpop.permute.xlu0 %3451
  %3453 = vrot.lane.b32.xlu0 %v3382, 19
  %v3454 = vpop.permute.xlu0 %3453
  %3455 = vrot.lane.b32.xlu0 %v3383, 19
  %v3456 = vpop.permute.xlu0 %3455
  %3457 = vrot.lane.b32.xlu0 %v3384, 19
  %v3458 = vpop.permute.xlu0 %3457
  %3459 = vrot.lane.b32.xlu0 %v3385, 19
  %v3460 = vpop.permute.xlu0 %3459
  %3461 = vrot.lane.b32.xlu0 %v3386, 19
  %v3462 = vpop.permute.xlu0 %3461
  %3463 = vrot.lane.b32.xlu0 %v3387, 19
  %v3464 = vpop.permute.xlu0 %3463
  %3465 = vrot.lane.b32.xlu0 %v3388, 19
  %v3466 = vpop.permute.xlu0 %3465
  %3467 = vrot.lane.b32.xlu0 %v3389, 19
  %v3468 = vpop.permute.xlu0 %3467
  %3469 = vrot.lane.b32.xlu0 %v3390, 19
  %v3470 = vpop.permute.xlu0 %3469
  %3471 = vrot.lane.b32.xlu0 %v3391, 19
  %v3472 = vpop.permute.xlu0 %3471
  %3473 = vrot.lane.b32.xlu0 %v3392, 19
  %v3474 = vpop.permute.xlu0 %3473
  %3475 = vrot.lane.b32.xlu0 %v3393, 19
  %v3476 = vpop.permute.xlu0 %3475
  %3477 = vrot.lane.b32.xlu0 %v3394, 19
  %v3478 = vpop.permute.xlu0 %3477
  %v3479 = vsel %vm486, %v3424, %v3426
  %v3480 = vsel %vm486, %v3426, %v3428
  %v3481 = vsel %vm486, %v3428, %v3430
  %v3482 = vsel %vm486, %v3430, %v3432
  %v3483 = vsel %vm486, %v3432, %v3434
  %v3484 = vsel %vm486, %v3434, %v3436
  %v3485 = vsel %vm486, %v3438, %v3440
  %v3486 = vsel %vm486, %v3440, %v3442
  %v3487 = vsel %vm486, %v3442, %v3444
  %v3488 = vsel %vm486, %v3444, %v3446
  %v3489 = vsel %vm486, %v3446, %v3448
  %v3490 = vsel %vm486, %v3448, %v3450
  %v3491 = vsel %vm486, %v3452, %v3454
  %v3492 = vsel %vm486, %v3454, %v3456
  %v3493 = vsel %vm486, %v3456, %v3458
  %v3494 = vsel %vm486, %v3458, %v3460
  %v3495 = vsel %vm486, %v3460, %v3462
  %v3496 = vsel %vm486, %v3462, %v3464
  %v3497 = vsel %vm486, %v3466, %v3468
  %v3498 = vsel %vm486, %v3468, %v3470
  %v3499 = vsel %vm486, %v3470, %v3472
  %v3500 = vsel %vm486, %v3472, %v3474
  %v3501 = vsel %vm486, %v3474, %v3476
  %v3502 = vsel %vm486, %v3476, %v3478
  %3527 = vst [vmem:[#allocation4] sm:$0xff] %v3479
  %3528 = vst [vmem:[#allocation4 + $0x8] sm:$0xff] %v3480
  %3529 = vst [vmem:[#allocation4 + $0x10] sm:$0xff] %v3481
  %3530 = vst [vmem:[#allocation4 + $0x18] sm:$0xff] %v3482
  %3531 = vst [vmem:[#allocation4 + $0x20] sm:$0xff] %v3483
  %3532 = vst [vmem:[#allocation4 + $0x28] sm:$0xff] %v3484
  %3533 = vst [vmem:[#allocation4 + $0x30] sm:$0xff] %v3485
  %3534 = vst [vmem:[#allocation4 + $0x38] sm:$0xff] %v3486
  %3535 = vst [vmem:[#allocation4 + $0x40] sm:$0xff] %v3487
  %3536 = vst [vmem:[#allocation4 + $0x48] sm:$0xff] %v3488
  %3537 = vst [vmem:[#allocation4 + $0x50] sm:$0xff] %v3489
  %3538 = vst [vmem:[#allocation4 + $0x58] sm:$0xff] %v3490
  %3539 = vst [vmem:[#allocation4 + $0x60] sm:$0xff] %v3491
  %3540 = vst [vmem:[#allocation4 + $0x68] sm:$0xff] %v3492
  %3541 = vst [vmem:[#allocation4 + $0x70] sm:$0xff] %v3493
  %3542 = vst [vmem:[#allocation4 + $0x78] sm:$0xff] %v3494
  %3543 = vst [vmem:[#allocation4 + $0x80] sm:$0xff] %v3495
  %3544 = vst [vmem:[#allocation4 + $0x88] sm:$0xff] %v3496
  %3545 = vst [vmem:[#allocation4 + $0x90] sm:$0xff] %v3497
  %3546 = vst [vmem:[#allocation4 + $0x98] sm:$0xff] %v3498
  %3547 = vst [vmem:[#allocation4 + $0xa0] sm:$0xff] %v3499
  %3548 = vst [vmem:[#allocation4 + $0xa8] sm:$0xff] %v3500
  %3549 = vst [vmem:[#allocation4 + $0xb0] sm:$0xff] %v3501
  %3550 = vst [vmem:[#allocation4 + $0xb8] sm:$0xff] %v3502
  %v3551 = vld [vmem:[#allocation3] sm:$0xff]
  %v3552 = vld [vmem:[#allocation3 + $0x8] sm:$0xff]
  %v3553 = vld [vmem:[#allocation3 + $0x10] sm:$0xff]
  %v3554 = vld [vmem:[#allocation3 + $0x18] sm:$0xff]
  %v3555 = vld [vmem:[#allocation3 + $0x20] sm:$0xff]
  %v3556 = vld [vmem:[#allocation3 + $0x28] sm:$0xff]
  %v3557 = vld [vmem:[#allocation3 + $0x30] sm:$0xff]
  %v3558 = vld [vmem:[#allocation3 + $0x40] sm:$0xff]
  %v3559 = vld [vmem:[#allocation3 + $0x48] sm:$0xff]
  %v3560 = vld [vmem:[#allocation3 + $0x50] sm:$0xff]
  %v3561 = vld [vmem:[#allocation3 + $0x58] sm:$0xff]
  %v3562 = vld [vmem:[#allocation3 + $0x60] sm:$0xff]
  %v3563 = vld [vmem:[#allocation3 + $0x68] sm:$0xff]
  %v3564 = vld [vmem:[#allocation3 + $0x70] sm:$0xff]
  %v3565 = vld [vmem:[#allocation3 + $0x80] sm:$0xff]
  %v3566 = vld [vmem:[#allocation3 + $0x88] sm:$0xff]
  %v3567 = vld [vmem:[#allocation3 + $0x90] sm:$0xff]
  %v3568 = vld [vmem:[#allocation3 + $0x98] sm:$0xff]
  %v3569 = vld [vmem:[#allocation3 + $0xa0] sm:$0xff]
  %v3570 = vld [vmem:[#allocation3 + $0xa8] sm:$0xff]
  %v3571 = vld [vmem:[#allocation3 + $0xb0] sm:$0xff]
  %v3572 = vld [vmem:[#allocation3 + $0xc0] sm:$0xff]
  %v3573 = vld [vmem:[#allocation3 + $0xc8] sm:$0xff]
  %v3574 = vld [vmem:[#allocation3 + $0xd0] sm:$0xff]
  %v3575 = vld [vmem:[#allocation3 + $0xd8] sm:$0xff]
  %v3576 = vld [vmem:[#allocation3 + $0xe0] sm:$0xff]
  %v3577 = vld [vmem:[#allocation3 + $0xe8] sm:$0xff]
  %v3578 = vld [vmem:[#allocation3 + $0xf0] sm:$0xff]
  %3607 = vrot.lane.b32.xlu0 %v3551, 18
  %v3608 = vpop.permute.xlu0 %3607
  %3609 = vrot.lane.b32.xlu0 %v3552, 18
  %v3610 = vpop.permute.xlu0 %3609
  %3611 = vrot.lane.b32.xlu0 %v3553, 18
  %v3612 = vpop.permute.xlu0 %3611
  %3613 = vrot.lane.b32.xlu0 %v3554, 18
  %v3614 = vpop.permute.xlu0 %3613
  %3615 = vrot.lane.b32.xlu0 %v3555, 18
  %v3616 = vpop.permute.xlu0 %3615
  %3617 = vrot.lane.b32.xlu0 %v3556, 18
  %v3618 = vpop.permute.xlu0 %3617
  %3619 = vrot.lane.b32.xlu0 %v3557, 18
  %v3620 = vpop.permute.xlu0 %3619
  %3621 = vrot.lane.b32.xlu0 %v3558, 18
  %v3622 = vpop.permute.xlu0 %3621
  %3623 = vrot.lane.b32.xlu0 %v3559, 18
  %v3624 = vpop.permute.xlu0 %3623
  %3625 = vrot.lane.b32.xlu0 %v3560, 18
  %v3626 = vpop.permute.xlu0 %3625
  %3627 = vrot.lane.b32.xlu0 %v3561, 18
  %v3628 = vpop.permute.xlu0 %3627
  %3629 = vrot.lane.b32.xlu0 %v3562, 18
  %v3630 = vpop.permute.xlu0 %3629
  %3631 = vrot.lane.b32.xlu0 %v3563, 18
  %v3632 = vpop.permute.xlu0 %3631
  %3633 = vrot.lane.b32.xlu0 %v3564, 18
  %v3634 = vpop.permute.xlu0 %3633
  %3635 = vrot.lane.b32.xlu0 %v3565, 18
  %v3636 = vpop.permute.xlu0 %3635
  %3637 = vrot.lane.b32.xlu0 %v3566, 18
  %v3638 = vpop.permute.xlu0 %3637
  %3639 = vrot.lane.b32.xlu0 %v3567, 18
  %v3640 = vpop.permute.xlu0 %3639
  %3641 = vrot.lane.b32.xlu0 %v3568, 18
  %v3642 = vpop.permute.xlu0 %3641
  %3643 = vrot.lane.b32.xlu0 %v3569, 18
  %v3644 = vpop.permute.xlu0 %3643
  %3645 = vrot.lane.b32.xlu0 %v3570, 18
  %v3646 = vpop.permute.xlu0 %3645
  %3647 = vrot.lane.b32.xlu0 %v3571, 18
  %v3648 = vpop.permute.xlu0 %3647
  %3649 = vrot.lane.b32.xlu0 %v3572, 18
  %v3650 = vpop.permute.xlu0 %3649
  %3651 = vrot.lane.b32.xlu0 %v3573, 18
  %v3652 = vpop.permute.xlu0 %3651
  %3653 = vrot.lane.b32.xlu0 %v3574, 18
  %v3654 = vpop.permute.xlu0 %3653
  %3655 = vrot.lane.b32.xlu0 %v3575, 18
  %v3656 = vpop.permute.xlu0 %3655
  %3657 = vrot.lane.b32.xlu0 %v3576, 18
  %v3658 = vpop.permute.xlu0 %3657
  %3659 = vrot.lane.b32.xlu0 %v3577, 18
  %v3660 = vpop.permute.xlu0 %3659
  %3661 = vrot.lane.b32.xlu0 %v3578, 18
  %v3662 = vpop.permute.xlu0 %3661
  %v3663 = vsel %vm1244, %v3608, %v3610
  %v3664 = vsel %vm1244, %v3610, %v3612
  %v3665 = vsel %vm1244, %v3612, %v3614
  %v3666 = vsel %vm1244, %v3614, %v3616
  %v3667 = vsel %vm1244, %v3616, %v3618
  %v3668 = vsel %vm1244, %v3618, %v3620
  %v3669 = vsel %vm1244, %v3622, %v3624
  %v3670 = vsel %vm1244, %v3624, %v3626
  %v3671 = vsel %vm1244, %v3626, %v3628
  %v3672 = vsel %vm1244, %v3628, %v3630
  %v3673 = vsel %vm1244, %v3630, %v3632
  %v3674 = vsel %vm1244, %v3632, %v3634
  %v3675 = vsel %vm1244, %v3636, %v3638
  %v3676 = vsel %vm1244, %v3638, %v3640
  %v3677 = vsel %vm1244, %v3640, %v3642
  %v3678 = vsel %vm1244, %v3642, %v3644
  %v3679 = vsel %vm1244, %v3644, %v3646
  %v3680 = vsel %vm1244, %v3646, %v3648
  %v3681 = vsel %vm1244, %v3650, %v3652
  %v3682 = vsel %vm1244, %v3652, %v3654
  %v3683 = vsel %vm1244, %v3654, %v3656
  %v3684 = vsel %vm1244, %v3656, %v3658
  %v3685 = vsel %vm1244, %v3658, %v3660
  %v3686 = vsel %vm1244, %v3660, %v3662
  %3711 = vst [vmem:[#allocation4 + $0xc0] sm:$0xff] %v3663
  %3712 = vst [vmem:[#allocation4 + $0xc8] sm:$0xff] %v3664
  %3713 = vst [vmem:[#allocation4 + $0xd0] sm:$0xff] %v3665
  %3714 = vst [vmem:[#allocation4 + $0xd8] sm:$0xff] %v3666
  %3715 = vst [vmem:[#allocation4 + $0xe0] sm:$0xff] %v3667
  %3716 = vst [vmem:[#allocation4 + $0xe8] sm:$0xff] %v3668
  %3717 = vst [vmem:[#allocation4 + $0xf0] sm:$0xff] %v3669
  %3718 = vst [vmem:[#allocation4 + $0xf8] sm:$0xff] %v3670
  %3719 = vst [vmem:[#allocation4 + $0x100] sm:$0xff] %v3671
  %3720 = vst [vmem:[#allocation4 + $0x108] sm:$0xff] %v3672
  %3721 = vst [vmem:[#allocation4 + $0x110] sm:$0xff] %v3673
  %3722 = vst [vmem:[#allocation4 + $0x118] sm:$0xff] %v3674
  %3723 = vst [vmem:[#allocation4 + $0x120] sm:$0xff] %v3675
  %3724 = vst [vmem:[#allocation4 + $0x128] sm:$0xff] %v3676
  %3725 = vst [vmem:[#allocation4 + $0x130] sm:$0xff] %v3677
  %3726 = vst [vmem:[#allocation4 + $0x138] sm:$0xff] %v3678
  %3727 = vst [vmem:[#allocation4 + $0x140] sm:$0xff] %v3679
  %3728 = vst [vmem:[#allocation4 + $0x148] sm:$0xff] %v3680
  %3729 = vst [vmem:[#allocation4 + $0x150] sm:$0xff] %v3681
  %3730 = vst [vmem:[#allocation4 + $0x158] sm:$0xff] %v3682
  %3731 = vst [vmem:[#allocation4 + $0x160] sm:$0xff] %v3683
  %3732 = vst [vmem:[#allocation4 + $0x168] sm:$0xff] %v3684
  %3733 = vst [vmem:[#allocation4 + $0x170] sm:$0xff] %v3685
  %3734 = vst [vmem:[#allocation4 + $0x178] sm:$0xff] %v3686
  %v3735 = vld [vmem:[#allocation3] sm:$0xff]
  %v3736 = vld [vmem:[#allocation3 + $0x8] sm:$0xff]
  %v3737 = vld [vmem:[#allocation3 + $0x10] sm:$0xff]
  %v3738 = vld [vmem:[#allocation3 + $0x18] sm:$0xff]
  %v3739 = vld [vmem:[#allocation3 + $0x20] sm:$0xff]
  %v3740 = vld [vmem:[#allocation3 + $0x28] sm:$0xff]
  %v3741 = vld [vmem:[#allocation3 + $0x30] sm:$0xff]
  %v3742 = vld [vmem:[#allocation3 + $0x40] sm:$0xff]
  %v3743 = vld [vmem:[#allocation3 + $0x48] sm:$0xff]
  %v3744 = vld [vmem:[#allocation3 + $0x50] sm:$0xff]
  %v3745 = vld [vmem:[#allocation3 + $0x58] sm:$0xff]
  %v3746 = vld [vmem:[#allocation3 + $0x60] sm:$0xff]
  %v3747 = vld [vmem:[#allocation3 + $0x68] sm:$0xff]
  %v3748 = vld [vmem:[#allocation3 + $0x70] sm:$0xff]
  %v3749 = vld [vmem:[#allocation3 + $0x80] sm:$0xff]
  %v3750 = vld [vmem:[#allocation3 + $0x88] sm:$0xff]
  %v3751 = vld [vmem:[#allocation3 + $0x90] sm:$0xff]
  %v3752 = vld [vmem:[#allocation3 + $0x98] sm:$0xff]
  %v3753 = vld [vmem:[#allocation3 + $0xa0] sm:$0xff]
  %v3754 = vld [vmem:[#allocation3 + $0xa8] sm:$0xff]
  %v3755 = vld [vmem:[#allocation3 + $0xb0] sm:$0xff]
  %v3756 = vld [vmem:[#allocation3 + $0xc0] sm:$0xff]
  %v3757 = vld [vmem:[#allocation3 + $0xc8] sm:$0xff]
  %v3758 = vld [vmem:[#allocation3 + $0xd0] sm:$0xff]
  %v3759 = vld [vmem:[#allocation3 + $0xd8] sm:$0xff]
  %v3760 = vld [vmem:[#allocation3 + $0xe0] sm:$0xff]
  %v3761 = vld [vmem:[#allocation3 + $0xe8] sm:$0xff]
  %v3762 = vld [vmem:[#allocation3 + $0xf0] sm:$0xff]
  %3791 = vrot.lane.b32.xlu0 %v3735, 17
  %v3792 = vpop.permute.xlu0 %3791
  %3793 = vrot.lane.b32.xlu0 %v3736, 17
  %v3794 = vpop.permute.xlu0 %3793
  %3795 = vrot.lane.b32.xlu0 %v3737, 17
  %v3796 = vpop.permute.xlu0 %3795
  %3797 = vrot.lane.b32.xlu0 %v3738, 17
  %v3798 = vpop.permute.xlu0 %3797
  %3799 = vrot.lane.b32.xlu0 %v3739, 17
  %v3800 = vpop.permute.xlu0 %3799
  %3801 = vrot.lane.b32.xlu0 %v3740, 17
  %v3802 = vpop.permute.xlu0 %3801
  %3803 = vrot.lane.b32.xlu0 %v3741, 17
  %v3804 = vpop.permute.xlu0 %3803
  %3805 = vrot.lane.b32.xlu0 %v3742, 17
  %v3806 = vpop.permute.xlu0 %3805
  %3807 = vrot.lane.b32.xlu0 %v3743, 17
  %v3808 = vpop.permute.xlu0 %3807
  %3809 = vrot.lane.b32.xlu0 %v3744, 17
  %v3810 = vpop.permute.xlu0 %3809
  %3811 = vrot.lane.b32.xlu0 %v3745, 17
  %v3812 = vpop.permute.xlu0 %3811
  %3813 = vrot.lane.b32.xlu0 %v3746, 17
  %v3814 = vpop.permute.xlu0 %3813
  %3815 = vrot.lane.b32.xlu0 %v3747, 17
  %v3816 = vpop.permute.xlu0 %3815
  %3817 = vrot.lane.b32.xlu0 %v3748, 17
  %v3818 = vpop.permute.xlu0 %3817
  %3819 = vrot.lane.b32.xlu0 %v3749, 17
  %v3820 = vpop.permute.xlu0 %3819
  %3821 = vrot.lane.b32.xlu0 %v3750, 17
  %v3822 = vpop.permute.xlu0 %3821
  %3823 = vrot.lane.b32.xlu0 %v3751, 17
  %v3824 = vpop.permute.xlu0 %3823
  %3825 = vrot.lane.b32.xlu0 %v3752, 17
  %v3826 = vpop.permute.xlu0 %3825
  %3827 = vrot.lane.b32.xlu0 %v3753, 17
  %v3828 = vpop.permute.xlu0 %3827
  %3829 = vrot.lane.b32.xlu0 %v3754, 17
  %v3830 = vpop.permute.xlu0 %3829
  %3831 = vrot.lane.b32.xlu0 %v3755, 17
  %v3832 = vpop.permute.xlu0 %3831
  %3833 = vrot.lane.b32.xlu0 %v3756, 17
  %v3834 = vpop.permute.xlu0 %3833
  %3835 = vrot.lane.b32.xlu0 %v3757, 17
  %v3836 = vpop.permute.xlu0 %3835
  %3837 = vrot.lane.b32.xlu0 %v3758, 17
  %v3838 = vpop.permute.xlu0 %3837
  %3839 = vrot.lane.b32.xlu0 %v3759, 17
  %v3840 = vpop.permute.xlu0 %3839
  %3841 = vrot.lane.b32.xlu0 %v3760, 17
  %v3842 = vpop.permute.xlu0 %3841
  %3843 = vrot.lane.b32.xlu0 %v3761, 17
  %v3844 = vpop.permute.xlu0 %3843
  %3845 = vrot.lane.b32.xlu0 %v3762, 17
  %v3846 = vpop.permute.xlu0 %3845
  %v3847 = vsel %vm1429, %v3792, %v3794
  %v3848 = vsel %vm1429, %v3794, %v3796
  %v3849 = vsel %vm1429, %v3796, %v3798
  %v3850 = vsel %vm1429, %v3798, %v3800
  %v3851 = vsel %vm1429, %v3800, %v3802
  %v3852 = vsel %vm1429, %v3802, %v3804
  %v3853 = vsel %vm1429, %v3806, %v3808
  %v3854 = vsel %vm1429, %v3808, %v3810
  %v3855 = vsel %vm1429, %v3810, %v3812
  %v3856 = vsel %vm1429, %v3812, %v3814
  %v3857 = vsel %vm1429, %v3814, %v3816
  %v3858 = vsel %vm1429, %v3816, %v3818
  %v3859 = vsel %vm1429, %v3820, %v3822
  %v3860 = vsel %vm1429, %v3822, %v3824
  %v3861 = vsel %vm1429, %v3824, %v3826
  %v3862 = vsel %vm1429, %v3826, %v3828
  %v3863 = vsel %vm1429, %v3828, %v3830
  %v3864 = vsel %vm1429, %v3830, %v3832
  %v3865 = vsel %vm1429, %v3834, %v3836
  %v3866 = vsel %vm1429, %v3836, %v3838
  %v3867 = vsel %vm1429, %v3838, %v3840
  %v3868 = vsel %vm1429, %v3840, %v3842
  %v3869 = vsel %vm1429, %v3842, %v3844
  %v3870 = vsel %vm1429, %v3844, %v3846
  %3895 = vst [vmem:[#allocation4 + $0x180] sm:$0xff] %v3847
  %3896 = vst [vmem:[#allocation4 + $0x188] sm:$0xff] %v3848
  %3897 = vst [vmem:[#allocation4 + $0x190] sm:$0xff] %v3849
  %3898 = vst [vmem:[#allocation4 + $0x198] sm:$0xff] %v3850
  %3899 = vst [vmem:[#allocation4 + $0x1a0] sm:$0xff] %v3851
  %3900 = vst [vmem:[#allocation4 + $0x1a8] sm:$0xff] %v3852
  %3901 = vst [vmem:[#allocation4 + $0x1b0] sm:$0xff] %v3853
  %3902 = vst [vmem:[#allocation4 + $0x1b8] sm:$0xff] %v3854
  %3903 = vst [vmem:[#allocation4 + $0x1c0] sm:$0xff] %v3855
  %3904 = vst [vmem:[#allocation4 + $0x1c8] sm:$0xff] %v3856
  %3905 = vst [vmem:[#allocation4 + $0x1d0] sm:$0xff] %v3857
  %3906 = vst [vmem:[#allocation4 + $0x1d8] sm:$0xff] %v3858
  %3907 = vst [vmem:[#allocation4 + $0x1e0] sm:$0xff] %v3859
  %3908 = vst [vmem:[#allocation4 + $0x1e8] sm:$0xff] %v3860
  %3909 = vst [vmem:[#allocation4 + $0x1f0] sm:$0xff] %v3861
  %3910 = vst [vmem:[#allocation4 + $0x1f8] sm:$0xff] %v3862
  %3911 = vst [vmem:[#allocation4 + $0x200] sm:$0xff] %v3863
  %3912 = vst [vmem:[#allocation4 + $0x208] sm:$0xff] %v3864
  %3913 = vst [vmem:[#allocation4 + $0x210] sm:$0xff] %v3865
  %3914 = vst [vmem:[#allocation4 + $0x218] sm:$0xff] %v3866
  %3915 = vst [vmem:[#allocation4 + $0x220] sm:$0xff] %v3867
  %3916 = vst [vmem:[#allocation4 + $0x228] sm:$0xff] %v3868
  %3917 = vst [vmem:[#allocation4 + $0x230] sm:$0xff] %v3869
  %3918 = vst [vmem:[#allocation4 + $0x238] sm:$0xff] %v3870
  %v3919 = vld [vmem:[#allocation3] sm:$0xff]
  %v3920 = vld [vmem:[#allocation3 + $0x8] sm:$0xff]
  %v3921 = vld [vmem:[#allocation3 + $0x10] sm:$0xff]
  %v3922 = vld [vmem:[#allocation3 + $0x18] sm:$0xff]
  %v3923 = vld [vmem:[#allocation3 + $0x20] sm:$0xff]
  %v3924 = vld [vmem:[#allocation3 + $0x28] sm:$0xff]
  %v3925 = vld [vmem:[#allocation3 + $0x30] sm:$0xff]
  %v3926 = vld [vmem:[#allocation3 + $0x40] sm:$0xff]
  %v3927 = vld [vmem:[#allocation3 + $0x48] sm:$0xff]
  %v3928 = vld [vmem:[#allocation3 + $0x50] sm:$0xff]
  %v3929 = vld [vmem:[#allocation3 + $0x58] sm:$0xff]
  %v3930 = vld [vmem:[#allocation3 + $0x60] sm:$0xff]
  %v3931 = vld [vmem:[#allocation3 + $0x68] sm:$0xff]
  %v3932 = vld [vmem:[#allocation3 + $0x70] sm:$0xff]
  %v3933 = vld [vmem:[#allocation3 + $0x80] sm:$0xff]
  %v3934 = vld [vmem:[#allocation3 + $0x88] sm:$0xff]
  %v3935 = vld [vmem:[#allocation3 + $0x90] sm:$0xff]
  %v3936 = vld [vmem:[#allocation3 + $0x98] sm:$0xff]
  %v3937 = vld [vmem:[#allocation3 + $0xa0] sm:$0xff]
  %v3938 = vld [vmem:[#allocation3 + $0xa8] sm:$0xff]
  %v3939 = vld [vmem:[#allocation3 + $0xb0] sm:$0xff]
  %v3940 = vld [vmem:[#allocation3 + $0xc0] sm:$0xff]
  %v3941 = vld [vmem:[#allocation3 + $0xc8] sm:$0xff]
  %v3942 = vld [vmem:[#allocation3 + $0xd0] sm:$0xff]
  %v3943 = vld [vmem:[#allocation3 + $0xd8] sm:$0xff]
  %v3944 = vld [vmem:[#allocation3 + $0xe0] sm:$0xff]
  %v3945 = vld [vmem:[#allocation3 + $0xe8] sm:$0xff]
  %v3946 = vld [vmem:[#allocation3 + $0xf0] sm:$0xff]
  %3975 = vrot.lane.b32.xlu0 %v3919, 1
  %v3976 = vpop.permute.xlu0 %3975
  %3977 = vrot.lane.b32.xlu0 %v3920, 1
  %v3978 = vpop.permute.xlu0 %3977
  %3979 = vrot.lane.b32.xlu0 %v3921, 1
  %v3980 = vpop.permute.xlu0 %3979
  %3981 = vrot.lane.b32.xlu0 %v3922, 1
  %v3982 = vpop.permute.xlu0 %3981
  %3983 = vrot.lane.b32.xlu0 %v3923, 1
  %v3984 = vpop.permute.xlu0 %3983
  %3985 = vrot.lane.b32.xlu0 %v3924, 1
  %v3986 = vpop.permute.xlu0 %3985
  %3987 = vrot.lane.b32.xlu0 %v3925, 1
  %v3988 = vpop.permute.xlu0 %3987
  %3989 = vrot.lane.b32.xlu0 %v3926, 1
  %v3990 = vpop.permute.xlu0 %3989
  %3991 = vrot.lane.b32.xlu0 %v3927, 1
  %v3992 = vpop.permute.xlu0 %3991
  %3993 = vrot.lane.b32.xlu0 %v3928, 1
  %v3994 = vpop.permute.xlu0 %3993
  %3995 = vrot.lane.b32.xlu0 %v3929, 1
  %v3996 = vpop.permute.xlu0 %3995
  %3997 = vrot.lane.b32.xlu0 %v3930, 1
  %v3998 = vpop.permute.xlu0 %3997
  %3999 = vrot.lane.b32.xlu0 %v3931, 1
  %v4000 = vpop.permute.xlu0 %3999
  %4001 = vrot.lane.b32.xlu0 %v3932, 1
  %v4002 = vpop.permute.xlu0 %4001
  %4003 = vrot.lane.b32.xlu0 %v3933, 1
  %v4004 = vpop.permute.xlu0 %4003
  %4005 = vrot.lane.b32.xlu0 %v3934, 1
  %v4006 = vpop.permute.xlu0 %4005
  %4007 = vrot.lane.b32.xlu0 %v3935, 1
  %v4008 = vpop.permute.xlu0 %4007
  %4009 = vrot.lane.b32.xlu0 %v3936, 1
  %v4010 = vpop.permute.xlu0 %4009
  %4011 = vrot.lane.b32.xlu0 %v3937, 1
  %v4012 = vpop.permute.xlu0 %4011
  %4013 = vrot.lane.b32.xlu0 %v3938, 1
  %v4014 = vpop.permute.xlu0 %4013
  %4015 = vrot.lane.b32.xlu0 %v3939, 1
  %v4016 = vpop.permute.xlu0 %4015
  %4017 = vrot.lane.b32.xlu0 %v3940, 1
  %v4018 = vpop.permute.xlu0 %4017
  %4019 = vrot.lane.b32.xlu0 %v3941, 1
  %v4020 = vpop.permute.xlu0 %4019
  %4021 = vrot.lane.b32.xlu0 %v3942, 1
  %v4022 = vpop.permute.xlu0 %4021
  %4023 = vrot.lane.b32.xlu0 %v3943, 1
  %v4024 = vpop.permute.xlu0 %4023
  %4025 = vrot.lane.b32.xlu0 %v3944, 1
  %v4026 = vpop.permute.xlu0 %4025
  %4027 = vrot.lane.b32.xlu0 %v3945, 1
  %v4028 = vpop.permute.xlu0 %4027
  %4029 = vrot.lane.b32.xlu0 %v3946, 1
  %v4030 = vpop.permute.xlu0 %4029
  %v4031 = vsel %vm1614, %v3976, %v3978
  %v4032 = vsel %vm1614, %v3978, %v3980
  %v4033 = vsel %vm1614, %v3980, %v3982
  %v4034 = vsel %vm1614, %v3982, %v3984
  %v4035 = vsel %vm1614, %v3984, %v3986
  %v4036 = vsel %vm1614, %v3986, %v3988
  %v4037 = vsel %vm1614, %v3990, %v3992
  %v4038 = vsel %vm1614, %v3992, %v3994
  %v4039 = vsel %vm1614, %v3994, %v3996
  %v4040 = vsel %vm1614, %v3996, %v3998
  %v4041 = vsel %vm1614, %v3998, %v4000
  %v4042 = vsel %vm1614, %v4000, %v4002
  %v4043 = vsel %vm1614, %v4004, %v4006
  %v4044 = vsel %vm1614, %v4006, %v4008
  %v4045 = vsel %vm1614, %v4008, %v4010
  %v4046 = vsel %vm1614, %v4010, %v4012
  %v4047 = vsel %vm1614, %v4012, %v4014
  %v4048 = vsel %vm1614, %v4014, %v4016
  %v4049 = vsel %vm1614, %v4018, %v4020
  %v4050 = vsel %vm1614, %v4020, %v4022
  %v4051 = vsel %vm1614, %v4022, %v4024
  %v4052 = vsel %vm1614, %v4024, %v4026
  %v4053 = vsel %vm1614, %v4026, %v4028
  %v4054 = vsel %vm1614, %v4028, %v4030
  %4079 = vst [vmem:[#allocation4 + $0x240] sm:$0xff] %v4031
  %4080 = vst [vmem:[#allocation4 + $0x248] sm:$0xff] %v4032
  %4081 = vst [vmem:[#allocation4 + $0x250] sm:$0xff] %v4033
  %4082 = vst [vmem:[#allocation4 + $0x258] sm:$0xff] %v4034
  %4083 = vst [vmem:[#allocation4 + $0x260] sm:$0xff] %v4035
  %4084 = vst [vmem:[#allocation4 + $0x268] sm:$0xff] %v4036
  %4085 = vst [vmem:[#allocation4 + $0x270] sm:$0xff] %v4037
  %4086 = vst [vmem:[#allocation4 + $0x278] sm:$0xff] %v4038
  %4087 = vst [vmem:[#allocation4 + $0x280] sm:$0xff] %v4039
  %4088 = vst [vmem:[#allocation4 + $0x288] sm:$0xff] %v4040
  %4089 = vst [vmem:[#allocation4 + $0x290] sm:$0xff] %v4041
  %4090 = vst [vmem:[#allocation4 + $0x298] sm:$0xff] %v4042
  %4091 = vst [vmem:[#allocation4 + $0x2a0] sm:$0xff] %v4043
  %4092 = vst [vmem:[#allocation4 + $0x2a8] sm:$0xff] %v4044
  %4093 = vst [vmem:[#allocation4 + $0x2b0] sm:$0xff] %v4045
  %4094 = vst [vmem:[#allocation4 + $0x2b8] sm:$0xff] %v4046
  %4095 = vst [vmem:[#allocation4 + $0x2c0] sm:$0xff] %v4047
  %4096 = vst [vmem:[#allocation4 + $0x2c8] sm:$0xff] %v4048
  %4097 = vst [vmem:[#allocation4 + $0x2d0] sm:$0xff] %v4049
  %4098 = vst [vmem:[#allocation4 + $0x2d8] sm:$0xff] %v4050
  %4099 = vst [vmem:[#allocation4 + $0x2e0] sm:$0xff] %v4051
  %4100 = vst [vmem:[#allocation4 + $0x2e8] sm:$0xff] %v4052
  %4101 = vst [vmem:[#allocation4 + $0x2f0] sm:$0xff] %v4053
  %4102 = vst [vmem:[#allocation4 + $0x2f8] sm:$0xff] %v4054
  %v4103 = vld [vmem:[#allocation3 + $0x8] sm:$0xff]
  %v4104 = vld [vmem:[#allocation3 + $0x10] sm:$0xff]
  %v4105 = vld [vmem:[#allocation3 + $0x18] sm:$0xff]
  %v4106 = vld [vmem:[#allocation3 + $0x20] sm:$0xff]
  %v4107 = vld [vmem:[#allocation3 + $0x28] sm:$0xff]
  %v4108 = vld [vmem:[#allocation3 + $0x30] sm:$0xff]
  %v4109 = vld [vmem:[#allocation3 + $0x48] sm:$0xff]
  %v4110 = vld [vmem:[#allocation3 + $0x50] sm:$0xff]
  %v4111 = vld [vmem:[#allocation3 + $0x58] sm:$0xff]
  %v4112 = vld [vmem:[#allocation3 + $0x60] sm:$0xff]
  %v4113 = vld [vmem:[#allocation3 + $0x68] sm:$0xff]
  %v4114 = vld [vmem:[#allocation3 + $0x70] sm:$0xff]
  %v4115 = vld [vmem:[#allocation3 + $0x88] sm:$0xff]
  %v4116 = vld [vmem:[#allocation3 + $0x90] sm:$0xff]
  %v4117 = vld [vmem:[#allocation3 + $0x98] sm:$0xff]
  %v4118 = vld [vmem:[#allocation3 + $0xa0] sm:$0xff]
  %v4119 = vld [vmem:[#allocation3 + $0xa8] sm:$0xff]
  %v4120 = vld [vmem:[#allocation3 + $0xb0] sm:$0xff]
  %v4121 = vld [vmem:[#allocation3 + $0xc8] sm:$0xff]
  %v4122 = vld [vmem:[#allocation3 + $0xd0] sm:$0xff]
  %v4123 = vld [vmem:[#allocation3 + $0xd8] sm:$0xff]
  %v4124 = vld [vmem:[#allocation3 + $0xe0] sm:$0xff]
  %v4125 = vld [vmem:[#allocation3 + $0xe8] sm:$0xff]
  %v4126 = vld [vmem:[#allocation3 + $0xf0] sm:$0xff]
  %4127 = vst [vmem:[#allocation4 + $0x300] sm:$0xff] %v4103
  %4128 = vst [vmem:[#allocation4 + $0x308] sm:$0xff] %v4104
  %4129 = vst [vmem:[#allocation4 + $0x310] sm:$0xff] %v4105
  %4130 = vst [vmem:[#allocation4 + $0x318] sm:$0xff] %v4106
  %4131 = vst [vmem:[#allocation4 + $0x320] sm:$0xff] %v4107
  %4132 = vst [vmem:[#allocation4 + $0x328] sm:$0xff] %v4108
  %4133 = vst [vmem:[#allocation4 + $0x330] sm:$0xff] %v4109
  %4134 = vst [vmem:[#allocation4 + $0x338] sm:$0xff] %v4110
  %4135 = vst [vmem:[#allocation4 + $0x340] sm:$0xff] %v4111
  %4136 = vst [vmem:[#allocation4 + $0x348] sm:$0xff] %v4112
  %4137 = vst [vmem:[#allocation4 + $0x350] sm:$0xff] %v4113
  %4138 = vst [vmem:[#allocation4 + $0x358] sm:$0xff] %v4114
  %4139 = vst [vmem:[#allocation4 + $0x360] sm:$0xff] %v4115
  %4140 = vst [vmem:[#allocation4 + $0x368] sm:$0xff] %v4116
  %4141 = vst [vmem:[#allocation4 + $0x370] sm:$0xff] %v4117
  %4142 = vst [vmem:[#allocation4 + $0x378] sm:$0xff] %v4118
  %4143 = vst [vmem:[#allocation4 + $0x380] sm:$0xff] %v4119
  %4144 = vst [vmem:[#allocation4 + $0x388] sm:$0xff] %v4120
  %4145 = vst [vmem:[#allocation4 + $0x390] sm:$0xff] %v4121
  %4146 = vst [vmem:[#allocation4 + $0x398] sm:$0xff] %v4122
  %4147 = vst [vmem:[#allocation4 + $0x3a0] sm:$0xff] %v4123
  %4148 = vst [vmem:[#allocation4 + $0x3a8] sm:$0xff] %v4124
  %4149 = vst [vmem:[#allocation4 + $0x3b0] sm:$0xff] %v4125
  %4150 = vst [vmem:[#allocation4 + $0x3b8] sm:$0xff] %v4126
  %v4151 = vld [vmem:[#allocation3 + $0x8] sm:$0xff]
  %v4152 = vld [vmem:[#allocation3 + $0x10] sm:$0xff]
  %v4153 = vld [vmem:[#allocation3 + $0x18] sm:$0xff]
  %v4154 = vld [vmem:[#allocation3 + $0x20] sm:$0xff]
  %v4155 = vld [vmem:[#allocation3 + $0x28] sm:$0xff]
  %v4156 = vld [vmem:[#allocation3 + $0x30] sm:$0xff]
  %v4157 = vld [vmem:[#allocation3 + $0x38] sm:$0xff]
  %v4158 = vld [vmem:[#allocation3 + $0x48] sm:$0xff]
  %v4159 = vld [vmem:[#allocation3 + $0x50] sm:$0xff]
  %v4160 = vld [vmem:[#allocation3 + $0x58] sm:$0xff]
  %v4161 = vld [vmem:[#allocation3 + $0x60] sm:$0xff]
  %v4162 = vld [vmem:[#allocation3 + $0x68] sm:$0xff]
  %v4163 = vld [vmem:[#allocation3 + $0x70] sm:$0xff]
  %v4164 = vld [vmem:[#allocation3 + $0x78] sm:$0xff]
  %v4165 = vld [vmem:[#allocation3 + $0x88] sm:$0xff]
  %v4166 = vld [vmem:[#allocation3 + $0x90] sm:$0xff]
  %v4167 = vld [vmem:[#allocation3 + $0x98] sm:$0xff]
  %v4168 = vld [vmem:[#allocation3 + $0xa0] sm:$0xff]
  %v4169 = vld [vmem:[#allocation3 + $0xa8] sm:$0xff]
  %v4170 = vld [vmem:[#allocation3 + $0xb0] sm:$0xff]
  %v4171 = vld [vmem:[#allocation3 + $0xb8] sm:$0xff]
  %v4172 = vld [vmem:[#allocation3 + $0xc8] sm:$0xff]
  %v4173 = vld [vmem:[#allocation3 + $0xd0] sm:$0xff]
  %v4174 = vld [vmem:[#allocation3 + $0xd8] sm:$0xff]
  %v4175 = vld [vmem:[#allocation3 + $0xe0] sm:$0xff]
  %v4176 = vld [vmem:[#allocation3 + $0xe8] sm:$0xff]
  %v4177 = vld [vmem:[#allocation3 + $0xf0] sm:$0xff]
  %v4178 = vld [vmem:[#allocation3 + $0xf8] sm:$0xff]
  %4207 = vrot.lane.b32.xlu0 %v4151, 127
  %v4208 = vpop.permute.xlu0 %4207
  %4209 = vrot.lane.b32.xlu0 %v4152, 127
  %v4210 = vpop.permute.xlu0 %4209
  %4211 = vrot.lane.b32.xlu0 %v4153, 127
  %v4212 = vpop.permute.xlu0 %4211
  %4213 = vrot.lane.b32.xlu0 %v4154, 127
  %v4214 = vpop.permute.xlu0 %4213
  %4215 = vrot.lane.b32.xlu0 %v4155, 127
  %v4216 = vpop.permute.xlu0 %4215
  %4217 = vrot.lane.b32.xlu0 %v4156, 127
  %v4218 = vpop.permute.xlu0 %4217
  %4219 = vrot.lane.b32.xlu0 %v4157, 127
  %v4220 = vpop.permute.xlu0 %4219
  %4221 = vrot.lane.b32.xlu0 %v4158, 127
  %v4222 = vpop.permute.xlu0 %4221
  %4223 = vrot.lane.b32.xlu0 %v4159, 127
  %v4224 = vpop.permute.xlu0 %4223
  %4225 = vrot.lane.b32.xlu0 %v4160, 127
  %v4226 = vpop.permute.xlu0 %4225
  %4227 = vrot.lane.b32.xlu0 %v4161, 127
  %v4228 = vpop.permute.xlu0 %4227
  %4229 = vrot.lane.b32.xlu0 %v4162, 127
  %v4230 = vpop.permute.xlu0 %4229
  %4231 = vrot.lane.b32.xlu0 %v4163, 127
  %v4232 = vpop.permute.xlu0 %4231
  %4233 = vrot.lane.b32.xlu0 %v4164, 127
  %v4234 = vpop.permute.xlu0 %4233
  %4235 = vrot.lane.b32.xlu0 %v4165, 127
  %v4236 = vpop.permute.xlu0 %4235
  %4237 = vrot.lane.b32.xlu0 %v4166, 127
  %v4238 = vpop.permute.xlu0 %4237
  %4239 = vrot.lane.b32.xlu0 %v4167, 127
  %v4240 = vpop.permute.xlu0 %4239
  %4241 = vrot.lane.b32.xlu0 %v4168, 127
  %v4242 = vpop.permute.xlu0 %4241
  %4243 = vrot.lane.b32.xlu0 %v4169, 127
  %v4244 = vpop.permute.xlu0 %4243
  %4245 = vrot.lane.b32.xlu0 %v4170, 127
  %v4246 = vpop.permute.xlu0 %4245
  %4247 = vrot.lane.b32.xlu0 %v4171, 127
  %v4248 = vpop.permute.xlu0 %4247
  %4249 = vrot.lane.b32.xlu0 %v4172, 127
  %v4250 = vpop.permute.xlu0 %4249
  %4251 = vrot.lane.b32.xlu0 %v4173, 127
  %v4252 = vpop.permute.xlu0 %4251
  %4253 = vrot.lane.b32.xlu0 %v4174, 127
  %v4254 = vpop.permute.xlu0 %4253
  %4255 = vrot.lane.b32.xlu0 %v4175, 127
  %v4256 = vpop.permute.xlu0 %4255
  %4257 = vrot.lane.b32.xlu0 %v4176, 127
  %v4258 = vpop.permute.xlu0 %4257
  %4259 = vrot.lane.b32.xlu0 %v4177, 127
  %v4260 = vpop.permute.xlu0 %4259
  %4261 = vrot.lane.b32.xlu0 %v4178, 127
  %v4262 = vpop.permute.xlu0 %4261
  %v4263 = vsel %vm137, %v4208, %v4210
  %v4264 = vsel %vm137, %v4210, %v4212
  %v4265 = vsel %vm137, %v4212, %v4214
  %v4266 = vsel %vm137, %v4214, %v4216
  %v4267 = vsel %vm137, %v4216, %v4218
  %v4268 = vsel %vm137, %v4218, %v4220
  %v4269 = vsel %vm137, %v4222, %v4224
  %v4270 = vsel %vm137, %v4224, %v4226
  %v4271 = vsel %vm137, %v4226, %v4228
  %v4272 = vsel %vm137, %v4228, %v4230
  %v4273 = vsel %vm137, %v4230, %v4232
  %v4274 = vsel %vm137, %v4232, %v4234
  %v4275 = vsel %vm137, %v4236, %v4238
  %v4276 = vsel %vm137, %v4238, %v4240
  %v4277 = vsel %vm137, %v4240, %v4242
  %v4278 = vsel %vm137, %v4242, %v4244
  %v4279 = vsel %vm137, %v4244, %v4246
  %v4280 = vsel %vm137, %v4246, %v4248
  %v4281 = vsel %vm137, %v4250, %v4252
  %v4282 = vsel %vm137, %v4252, %v4254
  %v4283 = vsel %vm137, %v4254, %v4256
  %v4284 = vsel %vm137, %v4256, %v4258
  %v4285 = vsel %vm137, %v4258, %v4260
  %v4286 = vsel %vm137, %v4260, %v4262
  %4311 = vst [vmem:[#allocation4 + $0x3c0] sm:$0xff] %v4263
  %4312 = vst [vmem:[#allocation4 + $0x3c8] sm:$0xff] %v4264
  %4313 = vst [vmem:[#allocation4 + $0x3d0] sm:$0xff] %v4265
  %4314 = vst [vmem:[#allocation4 + $0x3d8] sm:$0xff] %v4266
  %4315 = vst [vmem:[#allocation4 + $0x3e0] sm:$0xff] %v4267
  %4316 = vst [vmem:[#allocation4 + $0x3e8] sm:$0xff] %v4268
  %4317 = vst [vmem:[#allocation4 + $0x3f0] sm:$0xff] %v4269
  %4318 = vst [vmem:[#allocation4 + $0x3f8] sm:$0xff] %v4270
  %4319 = vst [vmem:[#allocation4 + $0x400] sm:$0xff] %v4271
  %4320 = vst [vmem:[#allocation4 + $0x408] sm:$0xff] %v4272
  %4321 = vst [vmem:[#allocation4 + $0x410] sm:$0xff] %v4273
  %4322 = vst [vmem:[#allocation4 + $0x418] sm:$0xff] %v4274
  %4323 = vst [vmem:[#allocation4 + $0x420] sm:$0xff] %v4275
  %4324 = vst [vmem:[#allocation4 + $0x428] sm:$0xff] %v4276
  %4325 = vst [vmem:[#allocation4 + $0x430] sm:$0xff] %v4277
  %4326 = vst [vmem:[#allocation4 + $0x438] sm:$0xff] %v4278
  %4327 = vst [vmem:[#allocation4 + $0x440] sm:$0xff] %v4279
  %4328 = vst [vmem:[#allocation4 + $0x448] sm:$0xff] %v4280
  %4329 = vst [vmem:[#allocation4 + $0x450] sm:$0xff] %v4281
  %4330 = vst [vmem:[#allocation4 + $0x458] sm:$0xff] %v4282
  %4331 = vst [vmem:[#allocation4 + $0x460] sm:$0xff] %v4283
  %4332 = vst [vmem:[#allocation4 + $0x468] sm:$0xff] %v4284
  %4333 = vst [vmem:[#allocation4 + $0x470] sm:$0xff] %v4285
  %4334 = vst [vmem:[#allocation4 + $0x478] sm:$0xff] %v4286
  %v4335 = vld [vmem:[#allocation3 + $0x8] sm:$0xff]
  %v4336 = vld [vmem:[#allocation3 + $0x10] sm:$0xff]
  %v4337 = vld [vmem:[#allocation3 + $0x18] sm:$0xff]
  %v4338 = vld [vmem:[#allocation3 + $0x20] sm:$0xff]
  %v4339 = vld [vmem:[#allocation3 + $0x28] sm:$0xff]
  %v4340 = vld [vmem:[#allocation3 + $0x30] sm:$0xff]
  %v4341 = vld [vmem:[#allocation3 + $0x38] sm:$0xff]
  %v4342 = vld [vmem:[#allocation3 + $0x48] sm:$0xff]
  %v4343 = vld [vmem:[#allocation3 + $0x50] sm:$0xff]
  %v4344 = vld [vmem:[#allocation3 + $0x58] sm:$0xff]
  %v4345 = vld [vmem:[#allocation3 + $0x60] sm:$0xff]
  %v4346 = vld [vmem:[#allocation3 + $0x68] sm:$0xff]
  %v4347 = vld [vmem:[#allocation3 + $0x70] sm:$0xff]
  %v4348 = vld [vmem:[#allocation3 + $0x78] sm:$0xff]
  %v4349 = vld [vmem:[#allocation3 + $0x88] sm:$0xff]
  %v4350 = vld [vmem:[#allocation3 + $0x90] sm:$0xff]
  %v4351 = vld [vmem:[#allocation3 + $0x98] sm:$0xff]
  %v4352 = vld [vmem:[#allocation3 + $0xa0] sm:$0xff]
  %v4353 = vld [vmem:[#allocation3 + $0xa8] sm:$0xff]
  %v4354 = vld [vmem:[#allocation3 + $0xb0] sm:$0xff]
  %v4355 = vld [vmem:[#allocation3 + $0xb8] sm:$0xff]
  %v4356 = vld [vmem:[#allocation3 + $0xc8] sm:$0xff]
  %v4357 = vld [vmem:[#allocation3 + $0xd0] sm:$0xff]
  %v4358 = vld [vmem:[#allocation3 + $0xd8] sm:$0xff]
  %v4359 = vld [vmem:[#allocation3 + $0xe0] sm:$0xff]
  %v4360 = vld [vmem:[#allocation3 + $0xe8] sm:$0xff]
  %v4361 = vld [vmem:[#allocation3 + $0xf0] sm:$0xff]
  %v4362 = vld [vmem:[#allocation3 + $0xf8] sm:$0xff]
  %4391 = vrot.lane.b32.xlu0 %v4335, 111
  %v4392 = vpop.permute.xlu0 %4391
  %4393 = vrot.lane.b32.xlu0 %v4336, 111
  %v4394 = vpop.permute.xlu0 %4393
  %4395 = vrot.lane.b32.xlu0 %v4337, 111
  %v4396 = vpop.permute.xlu0 %4395
  %4397 = vrot.lane.b32.xlu0 %v4338, 111
  %v4398 = vpop.permute.xlu0 %4397
  %4399 = vrot.lane.b32.xlu0 %v4339, 111
  %v4400 = vpop.permute.xlu0 %4399
  %4401 = vrot.lane.b32.xlu0 %v4340, 111
  %v4402 = vpop.permute.xlu0 %4401
  %4403 = vrot.lane.b32.xlu0 %v4341, 111
  %v4404 = vpop.permute.xlu0 %4403
  %4405 = vrot.lane.b32.xlu0 %v4342, 111
  %v4406 = vpop.permute.xlu0 %4405
  %4407 = vrot.lane.b32.xlu0 %v4343, 111
  %v4408 = vpop.permute.xlu0 %4407
  %4409 = vrot.lane.b32.xlu0 %v4344, 111
  %v4410 = vpop.permute.xlu0 %4409
  %4411 = vrot.lane.b32.xlu0 %v4345, 111
  %v4412 = vpop.permute.xlu0 %4411
  %4413 = vrot.lane.b32.xlu0 %v4346, 111
  %v4414 = vpop.permute.xlu0 %4413
  %4415 = vrot.lane.b32.xlu0 %v4347, 111
  %v4416 = vpop.permute.xlu0 %4415
  %4417 = vrot.lane.b32.xlu0 %v4348, 111
  %v4418 = vpop.permute.xlu0 %4417
  %4419 = vrot.lane.b32.xlu0 %v4349, 111
  %v4420 = vpop.permute.xlu0 %4419
  %4421 = vrot.lane.b32.xlu0 %v4350, 111
  %v4422 = vpop.permute.xlu0 %4421
  %4423 = vrot.lane.b32.xlu0 %v4351, 111
  %v4424 = vpop.permute.xlu0 %4423
  %4425 = vrot.lane.b32.xlu0 %v4352, 111
  %v4426 = vpop.permute.xlu0 %4425
  %4427 = vrot.lane.b32.xlu0 %v4353, 111
  %v4428 = vpop.permute.xlu0 %4427
  %4429 = vrot.lane.b32.xlu0 %v4354, 111
  %v4430 = vpop.permute.xlu0 %4429
  %4431 = vrot.lane.b32.xlu0 %v4355, 111
  %v4432 = vpop.permute.xlu0 %4431
  %4433 = vrot.lane.b32.xlu0 %v4356, 111
  %v4434 = vpop.permute.xlu0 %4433
  %4435 = vrot.lane.b32.xlu0 %v4357, 111
  %v4436 = vpop.permute.xlu0 %4435
  %4437 = vrot.lane.b32.xlu0 %v4358, 111
  %v4438 = vpop.permute.xlu0 %4437
  %4439 = vrot.lane.b32.xlu0 %v4359, 111
  %v4440 = vpop.permute.xlu0 %4439
  %4441 = vrot.lane.b32.xlu0 %v4360, 111
  %v4442 = vpop.permute.xlu0 %4441
  %4443 = vrot.lane.b32.xlu0 %v4361, 111
  %v4444 = vpop.permute.xlu0 %4443
  %4445 = vrot.lane.b32.xlu0 %v4362, 111
  %v4446 = vpop.permute.xlu0 %4445
  %v4447 = vsel %vm2031, %v4392, %v4394
  %v4448 = vsel %vm2031, %v4394, %v4396
  %v4449 = vsel %vm2031, %v4396, %v4398
  %v4450 = vsel %vm2031, %v4398, %v4400
  %v4451 = vsel %vm2031, %v4400, %v4402
  %v4452 = vsel %vm2031, %v4402, %v4404
  %v4453 = vsel %vm2031, %v4406, %v4408
  %v4454 = vsel %vm2031, %v4408, %v4410
  %v4455 = vsel %vm2031, %v4410, %v4412
  %v4456 = vsel %vm2031, %v4412, %v4414
  %v4457 = vsel %vm2031, %v4414, %v4416
  %v4458 = vsel %vm2031, %v4416, %v4418
  %v4459 = vsel %vm2031, %v4420, %v4422
  %v4460 = vsel %vm2031, %v4422, %v4424
  %v4461 = vsel %vm2031, %v4424, %v4426
  %v4462 = vsel %vm2031, %v4426, %v4428
  %v4463 = vsel %vm2031, %v4428, %v4430
  %v4464 = vsel %vm2031, %v4430, %v4432
  %v4465 = vsel %vm2031, %v4434, %v4436
  %v4466 = vsel %vm2031, %v4436, %v4438
  %v4467 = vsel %vm2031, %v4438, %v4440
  %v4468 = vsel %vm2031, %v4440, %v4442
  %v4469 = vsel %vm2031, %v4442, %v4444
  %v4470 = vsel %vm2031, %v4444, %v4446
  %4495 = vst [vmem:[#allocation4 + $0x480] sm:$0xff] %v4447
  %4496 = vst [vmem:[#allocation4 + $0x488] sm:$0xff] %v4448
  %4497 = vst [vmem:[#allocation4 + $0x490] sm:$0xff] %v4449
  %4498 = vst [vmem:[#allocation4 + $0x498] sm:$0xff] %v4450
  %4499 = vst [vmem:[#allocation4 + $0x4a0] sm:$0xff] %v4451
  %4500 = vst [vmem:[#allocation4 + $0x4a8] sm:$0xff] %v4452
  %4501 = vst [vmem:[#allocation4 + $0x4b0] sm:$0xff] %v4453
  %4502 = vst [vmem:[#allocation4 + $0x4b8] sm:$0xff] %v4454
  %4503 = vst [vmem:[#allocation4 + $0x4c0] sm:$0xff] %v4455
  %4504 = vst [vmem:[#allocation4 + $0x4c8] sm:$0xff] %v4456
  %4505 = vst [vmem:[#allocation4 + $0x4d0] sm:$0xff] %v4457
  %4506 = vst [vmem:[#allocation4 + $0x4d8] sm:$0xff] %v4458
  %4507 = vst [vmem:[#allocation4 + $0x4e0] sm:$0xff] %v4459
  %4508 = vst [vmem:[#allocation4 + $0x4e8] sm:$0xff] %v4460
  %4509 = vst [vmem:[#allocation4 + $0x4f0] sm:$0xff] %v4461
  %4510 = vst [vmem:[#allocation4 + $0x4f8] sm:$0xff] %v4462
  %4511 = vst [vmem:[#allocation4 + $0x500] sm:$0xff] %v4463
  %4512 = vst [vmem:[#allocation4 + $0x508] sm:$0xff] %v4464
  %4513 = vst [vmem:[#allocation4 + $0x510] sm:$0xff] %v4465
  %4514 = vst [vmem:[#allocation4 + $0x518] sm:$0xff] %v4466
  %4515 = vst [vmem:[#allocation4 + $0x520] sm:$0xff] %v4467
  %4516 = vst [vmem:[#allocation4 + $0x528] sm:$0xff] %v4468
  %4517 = vst [vmem:[#allocation4 + $0x530] sm:$0xff] %v4469
  %4518 = vst [vmem:[#allocation4 + $0x538] sm:$0xff] %v4470
  %v4519 = vld [vmem:[#allocation3 + $0x8] sm:$0xff]
  %v4520 = vld [vmem:[#allocation3 + $0x10] sm:$0xff]
  %v4521 = vld [vmem:[#allocation3 + $0x18] sm:$0xff]
  %v4522 = vld [vmem:[#allocation3 + $0x20] sm:$0xff]
  %v4523 = vld [vmem:[#allocation3 + $0x28] sm:$0xff]
  %v4524 = vld [vmem:[#allocation3 + $0x30] sm:$0xff]
  %v4525 = vld [vmem:[#allocation3 + $0x38] sm:$0xff]
  %v4526 = vld [vmem:[#allocation3 + $0x48] sm:$0xff]
  %v4527 = vld [vmem:[#allocation3 + $0x50] sm:$0xff]
  %v4528 = vld [vmem:[#allocation3 + $0x58] sm:$0xff]
  %v4529 = vld [vmem:[#allocation3 + $0x60] sm:$0xff]
  %v4530 = vld [vmem:[#allocation3 + $0x68] sm:$0xff]
  %v4531 = vld [vmem:[#allocation3 + $0x70] sm:$0xff]
  %v4532 = vld [vmem:[#allocation3 + $0x78] sm:$0xff]
  %v4533 = vld [vmem:[#allocation3 + $0x88] sm:$0xff]
  %v4534 = vld [vmem:[#allocation3 + $0x90] sm:$0xff]
  %v4535 = vld [vmem:[#allocation3 + $0x98] sm:$0xff]
  %v4536 = vld [vmem:[#allocation3 + $0xa0] sm:$0xff]
  %v4537 = vld [vmem:[#allocation3 + $0xa8] sm:$0xff]
  %v4538 = vld [vmem:[#allocation3 + $0xb0] sm:$0xff]
  %v4539 = vld [vmem:[#allocation3 + $0xb8] sm:$0xff]
  %v4540 = vld [vmem:[#allocation3 + $0xc8] sm:$0xff]
  %v4541 = vld [vmem:[#allocation3 + $0xd0] sm:$0xff]
  %v4542 = vld [vmem:[#allocation3 + $0xd8] sm:$0xff]
  %v4543 = vld [vmem:[#allocation3 + $0xe0] sm:$0xff]
  %v4544 = vld [vmem:[#allocation3 + $0xe8] sm:$0xff]
  %v4545 = vld [vmem:[#allocation3 + $0xf0] sm:$0xff]
  %v4546 = vld [vmem:[#allocation3 + $0xf8] sm:$0xff]
  %4575 = vrot.lane.b32.xlu0 %v4519, 110
  %v4576 = vpop.permute.xlu0 %4575
  %4577 = vrot.lane.b32.xlu0 %v4520, 110
  %v4578 = vpop.permute.xlu0 %4577
  %4579 = vrot.lane.b32.xlu0 %v4521, 110
  %v4580 = vpop.permute.xlu0 %4579
  %4581 = vrot.lane.b32.xlu0 %v4522, 110
  %v4582 = vpop.permute.xlu0 %4581
  %4583 = vrot.lane.b32.xlu0 %v4523, 110
  %v4584 = vpop.permute.xlu0 %4583
  %4585 = vrot.lane.b32.xlu0 %v4524, 110
  %v4586 = vpop.permute.xlu0 %4585
  %4587 = vrot.lane.b32.xlu0 %v4525, 110
  %v4588 = vpop.permute.xlu0 %4587
  %4589 = vrot.lane.b32.xlu0 %v4526, 110
  %v4590 = vpop.permute.xlu0 %4589
  %4591 = vrot.lane.b32.xlu0 %v4527, 110
  %v4592 = vpop.permute.xlu0 %4591
  %4593 = vrot.lane.b32.xlu0 %v4528, 110
  %v4594 = vpop.permute.xlu0 %4593
  %4595 = vrot.lane.b32.xlu0 %v4529, 110
  %v4596 = vpop.permute.xlu0 %4595
  %4597 = vrot.lane.b32.xlu0 %v4530, 110
  %v4598 = vpop.permute.xlu0 %4597
  %4599 = vrot.lane.b32.xlu0 %v4531, 110
  %v4600 = vpop.permute.xlu0 %4599
  %4601 = vrot.lane.b32.xlu0 %v4532, 110
  %v4602 = vpop.permute.xlu0 %4601
  %4603 = vrot.lane.b32.xlu0 %v4533, 110
  %v4604 = vpop.permute.xlu0 %4603
  %4605 = vrot.lane.b32.xlu0 %v4534, 110
  %v4606 = vpop.permute.xlu0 %4605
  %4607 = vrot.lane.b32.xlu0 %v4535, 110
  %v4608 = vpop.permute.xlu0 %4607
  %4609 = vrot.lane.b32.xlu0 %v4536, 110
  %v4610 = vpop.permute.xlu0 %4609
  %4611 = vrot.lane.b32.xlu0 %v4537, 110
  %v4612 = vpop.permute.xlu0 %4611
  %4613 = vrot.lane.b32.xlu0 %v4538, 110
  %v4614 = vpop.permute.xlu0 %4613
  %4615 = vrot.lane.b32.xlu0 %v4539, 110
  %v4616 = vpop.permute.xlu0 %4615
  %4617 = vrot.lane.b32.xlu0 %v4540, 110
  %v4618 = vpop.permute.xlu0 %4617
  %4619 = vrot.lane.b32.xlu0 %v4541, 110
  %v4620 = vpop.permute.xlu0 %4619
  %4621 = vrot.lane.b32.xlu0 %v4542, 110
  %v4622 = vpop.permute.xlu0 %4621
  %4623 = vrot.lane.b32.xlu0 %v4543, 110
  %v4624 = vpop.permute.xlu0 %4623
  %4625 = vrot.lane.b32.xlu0 %v4544, 110
  %v4626 = vpop.permute.xlu0 %4625
  %4627 = vrot.lane.b32.xlu0 %v4545, 110
  %v4628 = vpop.permute.xlu0 %4627
  %4629 = vrot.lane.b32.xlu0 %v4546, 110
  %v4630 = vpop.permute.xlu0 %4629
  %v4631 = vsel %vm193, %v4576, %v4578
  %v4632 = vsel %vm193, %v4578, %v4580
  %v4633 = vsel %vm193, %v4580, %v4582
  %v4634 = vsel %vm193, %v4582, %v4584
  %v4635 = vsel %vm193, %v4584, %v4586
  %v4636 = vsel %vm193, %v4586, %v4588
  %v4637 = vsel %vm193, %v4590, %v4592
  %v4638 = vsel %vm193, %v4592, %v4594
  %v4639 = vsel %vm193, %v4594, %v4596
  %v4640 = vsel %vm193, %v4596, %v4598
  %v4641 = vsel %vm193, %v4598, %v4600
  %v4642 = vsel %vm193, %v4600, %v4602
  %v4643 = vsel %vm193, %v4604, %v4606
  %v4644 = vsel %vm193, %v4606, %v4608
  %v4645 = vsel %vm193, %v4608, %v4610
  %v4646 = vsel %vm193, %v4610, %v4612
  %v4647 = vsel %vm193, %v4612, %v4614
  %v4648 = vsel %vm193, %v4614, %v4616
  %v4649 = vsel %vm193, %v4618, %v4620
  %v4650 = vsel %vm193, %v4620, %v4622
  %v4651 = vsel %vm193, %v4622, %v4624
  %v4652 = vsel %vm193, %v4624, %v4626
  %v4653 = vsel %vm193, %v4626, %v4628
  %v4654 = vsel %vm193, %v4628, %v4630
  %4679 = vst [vmem:[#allocation4 + $0x540] sm:$0xff] %v4631
  %4680 = vst [vmem:[#allocation4 + $0x548] sm:$0xff] %v4632
  %4681 = vst [vmem:[#allocation4 + $0x550] sm:$0xff] %v4633
  %4682 = vst [vmem:[#allocation4 + $0x558] sm:$0xff] %v4634
  %4683 = vst [vmem:[#allocation4 + $0x560] sm:$0xff] %v4635
  %4684 = vst [vmem:[#allocation4 + $0x568] sm:$0xff] %v4636
  %4685 = vst [vmem:[#allocation4 + $0x570] sm:$0xff] %v4637
  %4686 = vst [vmem:[#allocation4 + $0x578] sm:$0xff] %v4638
  %4687 = vst [vmem:[#allocation4 + $0x580] sm:$0xff] %v4639
  %4688 = vst [vmem:[#allocation4 + $0x588] sm:$0xff] %v4640
  %4689 = vst [vmem:[#allocation4 + $0x590] sm:$0xff] %v4641
  %4690 = vst [vmem:[#allocation4 + $0x598] sm:$0xff] %v4642
  %4691 = vst [vmem:[#allocation4 + $0x5a0] sm:$0xff] %v4643
  %4692 = vst [vmem:[#allocation4 + $0x5a8] sm:$0xff] %v4644
  %4693 = vst [vmem:[#allocation4 + $0x5b0] sm:$0xff] %v4645
  %4694 = vst [vmem:[#allocation4 + $0x5b8] sm:$0xff] %v4646
  %4695 = vst [vmem:[#allocation4 + $0x5c0] sm:$0xff] %v4647
  %4696 = vst [vmem:[#allocation4 + $0x5c8] sm:$0xff] %v4648
  %4697 = vst [vmem:[#allocation4 + $0x5d0] sm:$0xff] %v4649
  %4698 = vst [vmem:[#allocation4 + $0x5d8] sm:$0xff] %v4650
  %4699 = vst [vmem:[#allocation4 + $0x5e0] sm:$0xff] %v4651
  %4700 = vst [vmem:[#allocation4 + $0x5e8] sm:$0xff] %v4652
  %4701 = vst [vmem:[#allocation4 + $0x5f0] sm:$0xff] %v4653
  %4702 = vst [vmem:[#allocation4 + $0x5f8] sm:$0xff] %v4654
  %v4703 = vld [vmem:[#allocation3 + $0x8] sm:$0xff]
  %v4704 = vld [vmem:[#allocation3 + $0x10] sm:$0xff]
  %v4705 = vld [vmem:[#allocation3 + $0x18] sm:$0xff]
  %v4706 = vld [vmem:[#allocation3 + $0x20] sm:$0xff]
  %v4707 = vld [vmem:[#allocation3 + $0x28] sm:$0xff]
  %v4708 = vld [vmem:[#allocation3 + $0x30] sm:$0xff]
  %v4709 = vld [vmem:[#allocation3 + $0x38] sm:$0xff]
  %v4710 = vld [vmem:[#allocation3 + $0x48] sm:$0xff]
  %v4711 = vld [vmem:[#allocation3 + $0x50] sm:$0xff]
  %v4712 = vld [vmem:[#allocation3 + $0x58] sm:$0xff]
  %v4713 = vld [vmem:[#allocation3 + $0x60] sm:$0xff]
  %v4714 = vld [vmem:[#allocation3 + $0x68] sm:$0xff]
  %v4715 = vld [vmem:[#allocation3 + $0x70] sm:$0xff]
  %v4716 = vld [vmem:[#allocation3 + $0x78] sm:$0xff]
  %v4717 = vld [vmem:[#allocation3 + $0x88] sm:$0xff]
  %v4718 = vld [vmem:[#allocation3 + $0x90] sm:$0xff]
  %v4719 = vld [vmem:[#allocation3 + $0x98] sm:$0xff]
  %v4720 = vld [vmem:[#allocation3 + $0xa0] sm:$0xff]
  %v4721 = vld [vmem:[#allocation3 + $0xa8] sm:$0xff]
  %v4722 = vld [vmem:[#allocation3 + $0xb0] sm:$0xff]
  %v4723 = vld [vmem:[#allocation3 + $0xb8] sm:$0xff]
  %v4724 = vld [vmem:[#allocation3 + $0xc8] sm:$0xff]
  %v4725 = vld [vmem:[#allocation3 + $0xd0] sm:$0xff]
  %v4726 = vld [vmem:[#allocation3 + $0xd8] sm:$0xff]
  %v4727 = vld [vmem:[#allocation3 + $0xe0] sm:$0xff]
  %v4728 = vld [vmem:[#allocation3 + $0xe8] sm:$0xff]
  %v4729 = vld [vmem:[#allocation3 + $0xf0] sm:$0xff]
  %v4730 = vld [vmem:[#allocation3 + $0xf8] sm:$0xff]
  %4759 = vrot.lane.b32.xlu0 %v4703, 109
  %v4760 = vpop.permute.xlu0 %4759
  %4761 = vrot.lane.b32.xlu0 %v4704, 109
  %v4762 = vpop.permute.xlu0 %4761
  %4763 = vrot.lane.b32.xlu0 %v4705, 109
  %v4764 = vpop.permute.xlu0 %4763
  %4765 = vrot.lane.b32.xlu0 %v4706, 109
  %v4766 = vpop.permute.xlu0 %4765
  %4767 = vrot.lane.b32.xlu0 %v4707, 109
  %v4768 = vpop.permute.xlu0 %4767
  %4769 = vrot.lane.b32.xlu0 %v4708, 109
  %v4770 = vpop.permute.xlu0 %4769
  %4771 = vrot.lane.b32.xlu0 %v4709, 109
  %v4772 = vpop.permute.xlu0 %4771
  %4773 = vrot.lane.b32.xlu0 %v4710, 109
  %v4774 = vpop.permute.xlu0 %4773
  %4775 = vrot.lane.b32.xlu0 %v4711, 109
  %v4776 = vpop.permute.xlu0 %4775
  %4777 = vrot.lane.b32.xlu0 %v4712, 109
  %v4778 = vpop.permute.xlu0 %4777
  %4779 = vrot.lane.b32.xlu0 %v4713, 109
  %v4780 = vpop.permute.xlu0 %4779
  %4781 = vrot.lane.b32.xlu0 %v4714, 109
  %v4782 = vpop.permute.xlu0 %4781
  %4783 = vrot.lane.b32.xlu0 %v4715, 109
  %v4784 = vpop.permute.xlu0 %4783
  %4785 = vrot.lane.b32.xlu0 %v4716, 109
  %v4786 = vpop.permute.xlu0 %4785
  %4787 = vrot.lane.b32.xlu0 %v4717, 109
  %v4788 = vpop.permute.xlu0 %4787
  %4789 = vrot.lane.b32.xlu0 %v4718, 109
  %v4790 = vpop.permute.xlu0 %4789
  %4791 = vrot.lane.b32.xlu0 %v4719, 109
  %v4792 = vpop.permute.xlu0 %4791
  %4793 = vrot.lane.b32.xlu0 %v4720, 109
  %v4794 = vpop.permute.xlu0 %4793
  %4795 = vrot.lane.b32.xlu0 %v4721, 109
  %v4796 = vpop.permute.xlu0 %4795
  %4797 = vrot.lane.b32.xlu0 %v4722, 109
  %v4798 = vpop.permute.xlu0 %4797
  %4799 = vrot.lane.b32.xlu0 %v4723, 109
  %v4800 = vpop.permute.xlu0 %4799
  %4801 = vrot.lane.b32.xlu0 %v4724, 109
  %v4802 = vpop.permute.xlu0 %4801
  %4803 = vrot.lane.b32.xlu0 %v4725, 109
  %v4804 = vpop.permute.xlu0 %4803
  %4805 = vrot.lane.b32.xlu0 %v4726, 109
  %v4806 = vpop.permute.xlu0 %4805
  %4807 = vrot.lane.b32.xlu0 %v4727, 109
  %v4808 = vpop.permute.xlu0 %4807
  %4809 = vrot.lane.b32.xlu0 %v4728, 109
  %v4810 = vpop.permute.xlu0 %4809
  %4811 = vrot.lane.b32.xlu0 %v4729, 109
  %v4812 = vpop.permute.xlu0 %4811
  %4813 = vrot.lane.b32.xlu0 %v4730, 109
  %v4814 = vpop.permute.xlu0 %4813
  %v4815 = vsel %vm244, %v4760, %v4762
  %v4816 = vsel %vm244, %v4762, %v4764
  %v4817 = vsel %vm244, %v4764, %v4766
  %v4818 = vsel %vm244, %v4766, %v4768
  %v4819 = vsel %vm244, %v4768, %v4770
  %v4820 = vsel %vm244, %v4770, %v4772
  %v4821 = vsel %vm244, %v4774, %v4776
  %v4822 = vsel %vm244, %v4776, %v4778
  %v4823 = vsel %vm244, %v4778, %v4780
  %v4824 = vsel %vm244, %v4780, %v4782
  %v4825 = vsel %vm244, %v4782, %v4784
  %v4826 = vsel %vm244, %v4784, %v4786
  %v4827 = vsel %vm244, %v4788, %v4790
  %v4828 = vsel %vm244, %v4790, %v4792
  %v4829 = vsel %vm244, %v4792, %v4794
  %v4830 = vsel %vm244, %v4794, %v4796
  %v4831 = vsel %vm244, %v4796, %v4798
  %v4832 = vsel %vm244, %v4798, %v4800
  %v4833 = vsel %vm244, %v4802, %v4804
  %v4834 = vsel %vm244, %v4804, %v4806
  %v4835 = vsel %vm244, %v4806, %v4808
  %v4836 = vsel %vm244, %v4808, %v4810
  %v4837 = vsel %vm244, %v4810, %v4812
  %v4838 = vsel %vm244, %v4812, %v4814
  %4863 = vst [vmem:[#allocation4 + $0x600] sm:$0xff] %v4815
  %4864 = vst [vmem:[#allocation4 + $0x608] sm:$0xff] %v4816
  %4865 = vst [vmem:[#allocation4 + $0x610] sm:$0xff] %v4817
  %4866 = vst [vmem:[#allocation4 + $0x618] sm:$0xff] %v4818
  %4867 = vst [vmem:[#allocation4 + $0x620] sm:$0xff] %v4819
  %4868 = vst [vmem:[#allocation4 + $0x628] sm:$0xff] %v4820
  %4869 = vst [vmem:[#allocation4 + $0x630] sm:$0xff] %v4821
  %4870 = vst [vmem:[#allocation4 + $0x638] sm:$0xff] %v4822
  %4871 = vst [vmem:[#allocation4 + $0x640] sm:$0xff] %v4823
  %4872 = vst [vmem:[#allocation4 + $0x648] sm:$0xff] %v4824
  %4873 = vst [vmem:[#allocation4 + $0x650] sm:$0xff] %v4825
  %4874 = vst [vmem:[#allocation4 + $0x658] sm:$0xff] %v4826
  %4875 = vst [vmem:[#allocation4 + $0x660] sm:$0xff] %v4827
  %4876 = vst [vmem:[#allocation4 + $0x668] sm:$0xff] %v4828
  %4877 = vst [vmem:[#allocation4 + $0x670] sm:$0xff] %v4829
  %4878 = vst [vmem:[#allocation4 + $0x678] sm:$0xff] %v4830
  %4879 = vst [vmem:[#allocation4 + $0x680] sm:$0xff] %v4831
  %4880 = vst [vmem:[#allocation4 + $0x688] sm:$0xff] %v4832
  %4881 = vst [vmem:[#allocation4 + $0x690] sm:$0xff] %v4833
  %4882 = vst [vmem:[#allocation4 + $0x698] sm:$0xff] %v4834
  %4883 = vst [vmem:[#allocation4 + $0x6a0] sm:$0xff] %v4835
  %4884 = vst [vmem:[#allocation4 + $0x6a8] sm:$0xff] %v4836
  %4885 = vst [vmem:[#allocation4 + $0x6b0] sm:$0xff] %v4837
  %4886 = vst [vmem:[#allocation4 + $0x6b8] sm:$0xff] %v4838
  %v4887 = vld [vmem:[#allocation4] sm:$0xff]
  %v4888 = vld [vmem:[#allocation4 + $0x8] sm:$0xff]
  %v4889 = vld [vmem:[#allocation4 + $0x10] sm:$0xff]
  %v4890 = vld [vmem:[#allocation4 + $0x18] sm:$0xff]
  %v4891 = vld [vmem:[#allocation4 + $0x20] sm:$0xff]
  %v4892 = vld [vmem:[#allocation4 + $0x28] sm:$0xff]
  %v4893 = vld [vmem:[#allocation4 + $0x30] sm:$0xff]
  %v4894 = vld [vmem:[#allocation4 + $0x38] sm:$0xff]
  %v4895 = vld [vmem:[#allocation4 + $0x40] sm:$0xff]
  %v4896 = vld [vmem:[#allocation4 + $0x48] sm:$0xff]
  %v4897 = vld [vmem:[#allocation4 + $0x50] sm:$0xff]
  %v4898 = vld [vmem:[#allocation4 + $0x58] sm:$0xff]
  %v4899 = vld [vmem:[#allocation4 + $0x60] sm:$0xff]
  %v4900 = vld [vmem:[#allocation4 + $0x68] sm:$0xff]
  %v4901 = vld [vmem:[#allocation4 + $0x70] sm:$0xff]
  %v4902 = vld [vmem:[#allocation4 + $0x78] sm:$0xff]
  %v4903 = vld [vmem:[#allocation4 + $0x80] sm:$0xff]
  %v4904 = vld [vmem:[#allocation4 + $0x88] sm:$0xff]
  %v4905 = vld [vmem:[#allocation4 + $0x90] sm:$0xff]
  %v4906 = vld [vmem:[#allocation4 + $0x98] sm:$0xff]
  %v4907 = vld [vmem:[#allocation4 + $0xa0] sm:$0xff]
  %v4908 = vld [vmem:[#allocation4 + $0xa8] sm:$0xff]
  %v4909 = vld [vmem:[#allocation4 + $0xb0] sm:$0xff]
  %v4910 = vld [vmem:[#allocation4 + $0xb8] sm:$0xff]
  %v4911 = vld [vmem:[#allocation4 + $0xc0] sm:$0xff]
  %v4912 = vld [vmem:[#allocation4 + $0xc8] sm:$0xff]
  %v4913 = vld [vmem:[#allocation4 + $0xd0] sm:$0xff]
  %v4914 = vld [vmem:[#allocation4 + $0xd8] sm:$0xff]
  %v4915 = vld [vmem:[#allocation4 + $0xe0] sm:$0xff]
  %v4916 = vld [vmem:[#allocation4 + $0xe8] sm:$0xff]
  %v4917 = vld [vmem:[#allocation4 + $0xf0] sm:$0xff]
  %v4918 = vld [vmem:[#allocation4 + $0xf8] sm:$0xff]
  %v4919 = vld [vmem:[#allocation4 + $0x100] sm:$0xff]
  %v4920 = vld [vmem:[#allocation4 + $0x108] sm:$0xff]
  %v4921 = vld [vmem:[#allocation4 + $0x110] sm:$0xff]
  %v4922 = vld [vmem:[#allocation4 + $0x118] sm:$0xff]
  %v4923 = vld [vmem:[#allocation4 + $0x120] sm:$0xff]
  %v4924 = vld [vmem:[#allocation4 + $0x128] sm:$0xff]
  %v4925 = vld [vmem:[#allocation4 + $0x130] sm:$0xff]
  %v4926 = vld [vmem:[#allocation4 + $0x138] sm:$0xff]
  %v4927 = vld [vmem:[#allocation4 + $0x140] sm:$0xff]
  %v4928 = vld [vmem:[#allocation4 + $0x148] sm:$0xff]
  %v4929 = vld [vmem:[#allocation4 + $0x150] sm:$0xff]
  %v4930 = vld [vmem:[#allocation4 + $0x158] sm:$0xff]
  %v4931 = vld [vmem:[#allocation4 + $0x160] sm:$0xff]
  %v4932 = vld [vmem:[#allocation4 + $0x168] sm:$0xff]
  %v4933 = vld [vmem:[#allocation4 + $0x170] sm:$0xff]
  %v4934 = vld [vmem:[#allocation4 + $0x178] sm:$0xff]
  %v4935 = vld [vmem:[#allocation4 + $0x180] sm:$0xff]
  %v4936 = vld [vmem:[#allocation4 + $0x188] sm:$0xff]
  %v4937 = vld [vmem:[#allocation4 + $0x190] sm:$0xff]
  %v4938 = vld [vmem:[#allocation4 + $0x198] sm:$0xff]
  %v4939 = vld [vmem:[#allocation4 + $0x1a0] sm:$0xff]
  %v4940 = vld [vmem:[#allocation4 + $0x1a8] sm:$0xff]
  %v4941 = vld [vmem:[#allocation4 + $0x1b0] sm:$0xff]
  %v4942 = vld [vmem:[#allocation4 + $0x1b8] sm:$0xff]
  %v4943 = vld [vmem:[#allocation4 + $0x1c0] sm:$0xff]
  %v4944 = vld [vmem:[#allocation4 + $0x1c8] sm:$0xff]
  %v4945 = vld [vmem:[#allocation4 + $0x1d0] sm:$0xff]
  %v4946 = vld [vmem:[#allocation4 + $0x1d8] sm:$0xff]
  %v4947 = vld [vmem:[#allocation4 + $0x1e0] sm:$0xff]
  %v4948 = vld [vmem:[#allocation4 + $0x1e8] sm:$0xff]
  %v4949 = vld [vmem:[#allocation4 + $0x1f0] sm:$0xff]
  %v4950 = vld [vmem:[#allocation4 + $0x1f8] sm:$0xff]
  %v4951 = vld [vmem:[#allocation4 + $0x200] sm:$0xff]
  %v4952 = vld [vmem:[#allocation4 + $0x208] sm:$0xff]
  %v4953 = vld [vmem:[#allocation4 + $0x210] sm:$0xff]
  %v4954 = vld [vmem:[#allocation4 + $0x218] sm:$0xff]
  %v4955 = vld [vmem:[#allocation4 + $0x220] sm:$0xff]
  %v4956 = vld [vmem:[#allocation4 + $0x228] sm:$0xff]
  %v4957 = vld [vmem:[#allocation4 + $0x230] sm:$0xff]
  %v4958 = vld [vmem:[#allocation4 + $0x238] sm:$0xff]
  %v4959 = vld [vmem:[#allocation4 + $0x240] sm:$0xff]
  %v4960 = vld [vmem:[#allocation4 + $0x248] sm:$0xff]
  %v4961 = vld [vmem:[#allocation4 + $0x250] sm:$0xff]
  %v4962 = vld [vmem:[#allocation4 + $0x258] sm:$0xff]
  %v4963 = vld [vmem:[#allocation4 + $0x260] sm:$0xff]
  %v4964 = vld [vmem:[#allocation4 + $0x268] sm:$0xff]
  %v4965 = vld [vmem:[#allocation4 + $0x270] sm:$0xff]
  %v4966 = vld [vmem:[#allocation4 + $0x278] sm:$0xff]
  %v4967 = vld [vmem:[#allocation4 + $0x280] sm:$0xff]
  %v4968 = vld [vmem:[#allocation4 + $0x288] sm:$0xff]
  %v4969 = vld [vmem:[#allocation4 + $0x290] sm:$0xff]
  %v4970 = vld [vmem:[#allocation4 + $0x298] sm:$0xff]
  %v4971 = vld [vmem:[#allocation4 + $0x2a0] sm:$0xff]
  %v4972 = vld [vmem:[#allocation4 + $0x2a8] sm:$0xff]
  %v4973 = vld [vmem:[#allocation4 + $0x2b0] sm:$0xff]
  %v4974 = vld [vmem:[#allocation4 + $0x2b8] sm:$0xff]
  %v4975 = vld [vmem:[#allocation4 + $0x2c0] sm:$0xff]
  %v4976 = vld [vmem:[#allocation4 + $0x2c8] sm:$0xff]
  %v4977 = vld [vmem:[#allocation4 + $0x2d0] sm:$0xff]
  %v4978 = vld [vmem:[#allocation4 + $0x2d8] sm:$0xff]
  %v4979 = vld [vmem:[#allocation4 + $0x2e0] sm:$0xff]
  %v4980 = vld [vmem:[#allocation4 + $0x2e8] sm:$0xff]
  %v4981 = vld [vmem:[#allocation4 + $0x2f0] sm:$0xff]
  %v4982 = vld [vmem:[#allocation4 + $0x2f8] sm:$0xff]
  %v4983 = vld [vmem:[#allocation4 + $0x300] sm:$0xff]
  %v4984 = vld [vmem:[#allocation4 + $0x308] sm:$0xff]
  %v4985 = vld [vmem:[#allocation4 + $0x310] sm:$0xff]
  %v4986 = vld [vmem:[#allocation4 + $0x318] sm:$0xff]
  %v4987 = vld [vmem:[#allocation4 + $0x320] sm:$0xff]
  %v4988 = vld [vmem:[#allocation4 + $0x328] sm:$0xff]
  %v4989 = vld [vmem:[#allocation4 + $0x330] sm:$0xff]
  %v4990 = vld [vmem:[#allocation4 + $0x338] sm:$0xff]
  %v4991 = vld [vmem:[#allocation4 + $0x340] sm:$0xff]
  %v4992 = vld [vmem:[#allocation4 + $0x348] sm:$0xff]
  %v4993 = vld [vmem:[#allocation4 + $0x350] sm:$0xff]
  %v4994 = vld [vmem:[#allocation4 + $0x358] sm:$0xff]
  %v4995 = vld [vmem:[#allocation4 + $0x360] sm:$0xff]
  %v4996 = vld [vmem:[#allocation4 + $0x368] sm:$0xff]
  %v4997 = vld [vmem:[#allocation4 + $0x370] sm:$0xff]
  %v4998 = vld [vmem:[#allocation4 + $0x378] sm:$0xff]
  %v4999 = vld [vmem:[#allocation4 + $0x380] sm:$0xff]
  %v5000 = vld [vmem:[#allocation4 + $0x388] sm:$0xff]
  %v5001 = vld [vmem:[#allocation4 + $0x390] sm:$0xff]
  %v5002 = vld [vmem:[#allocation4 + $0x398] sm:$0xff]
  %v5003 = vld [vmem:[#allocation4 + $0x3a0] sm:$0xff]
  %v5004 = vld [vmem:[#allocation4 + $0x3a8] sm:$0xff]
  %v5005 = vld [vmem:[#allocation4 + $0x3b0] sm:$0xff]
  %v5006 = vld [vmem:[#allocation4 + $0x3b8] sm:$0xff]
  %v5007 = vld [vmem:[#allocation4 + $0x3c0] sm:$0xff]
  %v5008 = vld [vmem:[#allocation4 + $0x3c8] sm:$0xff]
  %v5009 = vld [vmem:[#allocation4 + $0x3d0] sm:$0xff]
  %v5010 = vld [vmem:[#allocation4 + $0x3d8] sm:$0xff]
  %v5011 = vld [vmem:[#allocation4 + $0x3e0] sm:$0xff]
  %v5012 = vld [vmem:[#allocation4 + $0x3e8] sm:$0xff]
  %v5013 = vld [vmem:[#allocation4 + $0x3f0] sm:$0xff]
  %v5014 = vld [vmem:[#allocation4 + $0x3f8] sm:$0xff]
  %v5015 = vld [vmem:[#allocation4 + $0x400] sm:$0xff]
  %v5016 = vld [vmem:[#allocation4 + $0x408] sm:$0xff]
  %v5017 = vld [vmem:[#allocation4 + $0x410] sm:$0xff]
  %v5018 = vld [vmem:[#allocation4 + $0x418] sm:$0xff]
  %v5019 = vld [vmem:[#allocation4 + $0x420] sm:$0xff]
  %v5020 = vld [vmem:[#allocation4 + $0x428] sm:$0xff]
  %v5021 = vld [vmem:[#allocation4 + $0x430] sm:$0xff]
  %v5022 = vld [vmem:[#allocation4 + $0x438] sm:$0xff]
  %v5023 = vld [vmem:[#allocation4 + $0x440] sm:$0xff]
  %v5024 = vld [vmem:[#allocation4 + $0x448] sm:$0xff]
  %v5025 = vld [vmem:[#allocation4 + $0x450] sm:$0xff]
  %v5026 = vld [vmem:[#allocation4 + $0x458] sm:$0xff]
  %v5027 = vld [vmem:[#allocation4 + $0x460] sm:$0xff]
  %v5028 = vld [vmem:[#allocation4 + $0x468] sm:$0xff]
  %v5029 = vld [vmem:[#allocation4 + $0x470] sm:$0xff]
  %v5030 = vld [vmem:[#allocation4 + $0x478] sm:$0xff]
  %v5031 = vld [vmem:[#allocation4 + $0x480] sm:$0xff]
  %v5032 = vld [vmem:[#allocation4 + $0x488] sm:$0xff]
  %v5033 = vld [vmem:[#allocation4 + $0x490] sm:$0xff]
  %v5034 = vld [vmem:[#allocation4 + $0x498] sm:$0xff]
  %v5035 = vld [vmem:[#allocation4 + $0x4a0] sm:$0xff]
  %v5036 = vld [vmem:[#allocation4 + $0x4a8] sm:$0xff]
  %v5037 = vld [vmem:[#allocation4 + $0x4b0] sm:$0xff]
  %v5038 = vld [vmem:[#allocation4 + $0x4b8] sm:$0xff]
  %v5039 = vld [vmem:[#allocation4 + $0x4c0] sm:$0xff]
  %v5040 = vld [vmem:[#allocation4 + $0x4c8] sm:$0xff]
  %v5041 = vld [vmem:[#allocation4 + $0x4d0] sm:$0xff]
  %v5042 = vld [vmem:[#allocation4 + $0x4d8] sm:$0xff]
  %v5043 = vld [vmem:[#allocation4 + $0x4e0] sm:$0xff]
  %v5044 = vld [vmem:[#allocation4 + $0x4e8] sm:$0xff]
  %v5045 = vld [vmem:[#allocation4 + $0x4f0] sm:$0xff]
  %v5046 = vld [vmem:[#allocation4 + $0x4f8] sm:$0xff]
  %v5047 = vld [vmem:[#allocation4 + $0x500] sm:$0xff]
  %v5048 = vld [vmem:[#allocation4 + $0x508] sm:$0xff]
  %v5049 = vld [vmem:[#allocation4 + $0x510] sm:$0xff]
  %v5050 = vld [vmem:[#allocation4 + $0x518] sm:$0xff]
  %v5051 = vld [vmem:[#allocation4 + $0x520] sm:$0xff]
  %v5052 = vld [vmem:[#allocation4 + $0x528] sm:$0xff]
  %v5053 = vld [vmem:[#allocation4 + $0x530] sm:$0xff]
  %v5054 = vld [vmem:[#allocation4 + $0x538] sm:$0xff]
  %v5055 = vld [vmem:[#allocation4 + $0x540] sm:$0xff]
  %v5056 = vld [vmem:[#allocation4 + $0x548] sm:$0xff]
  %v5057 = vld [vmem:[#allocation4 + $0x550] sm:$0xff]
  %v5058 = vld [vmem:[#allocation4 + $0x558] sm:$0xff]
  %v5059 = vld [vmem:[#allocation4 + $0x560] sm:$0xff]
  %v5060 = vld [vmem:[#allocation4 + $0x568] sm:$0xff]
  %v5061 = vld [vmem:[#allocation4 + $0x570] sm:$0xff]
  %v5062 = vld [vmem:[#allocation4 + $0x578] sm:$0xff]
  %v5063 = vld [vmem:[#allocation4 + $0x580] sm:$0xff]
  %v5064 = vld [vmem:[#allocation4 + $0x588] sm:$0xff]
  %v5065 = vld [vmem:[#allocation4 + $0x590] sm:$0xff]
  %v5066 = vld [vmem:[#allocation4 + $0x598] sm:$0xff]
  %v5067 = vld [vmem:[#allocation4 + $0x5a0] sm:$0xff]
  %v5068 = vld [vmem:[#allocation4 + $0x5a8] sm:$0xff]
  %v5069 = vld [vmem:[#allocation4 + $0x5b0] sm:$0xff]
  %v5070 = vld [vmem:[#allocation4 + $0x5b8] sm:$0xff]
  %v5071 = vld [vmem:[#allocation4 + $0x5c0] sm:$0xff]
  %v5072 = vld [vmem:[#allocation4 + $0x5c8] sm:$0xff]
  %v5073 = vld [vmem:[#allocation4 + $0x5d0] sm:$0xff]
  %v5074 = vld [vmem:[#allocation4 + $0x5d8] sm:$0xff]
  %v5075 = vld [vmem:[#allocation4 + $0x5e0] sm:$0xff]
  %v5076 = vld [vmem:[#allocation4 + $0x5e8] sm:$0xff]
  %v5077 = vld [vmem:[#allocation4 + $0x5f0] sm:$0xff]
  %v5078 = vld [vmem:[#allocation4 + $0x5f8] sm:$0xff]
  %v5079 = vld [vmem:[#allocation4 + $0x600] sm:$0xff]
  %v5080 = vld [vmem:[#allocation4 + $0x608] sm:$0xff]
  %v5081 = vld [vmem:[#allocation4 + $0x610] sm:$0xff]
  %v5082 = vld [vmem:[#allocation4 + $0x618] sm:$0xff]
  %v5083 = vld [vmem:[#allocation4 + $0x620] sm:$0xff]
  %v5084 = vld [vmem:[#allocation4 + $0x628] sm:$0xff]
  %v5085 = vld [vmem:[#allocation4 + $0x630] sm:$0xff]
  %v5086 = vld [vmem:[#allocation4 + $0x638] sm:$0xff]
  %v5087 = vld [vmem:[#allocation4 + $0x640] sm:$0xff]
  %v5088 = vld [vmem:[#allocation4 + $0x648] sm:$0xff]
  %v5089 = vld [vmem:[#allocation4 + $0x650] sm:$0xff]
  %v5090 = vld [vmem:[#allocation4 + $0x658] sm:$0xff]
  %v5091 = vld [vmem:[#allocation4 + $0x660] sm:$0xff]
  %v5092 = vld [vmem:[#allocation4 + $0x668] sm:$0xff]
  %v5093 = vld [vmem:[#allocation4 + $0x670] sm:$0xff]
  %v5094 = vld [vmem:[#allocation4 + $0x678] sm:$0xff]
  %v5095 = vld [vmem:[#allocation4 + $0x680] sm:$0xff]
  %v5096 = vld [vmem:[#allocation4 + $0x688] sm:$0xff]
  %v5097 = vld [vmem:[#allocation4 + $0x690] sm:$0xff]
  %v5098 = vld [vmem:[#allocation4 + $0x698] sm:$0xff]
  %v5099 = vld [vmem:[#allocation4 + $0x6a0] sm:$0xff]
  %v5100 = vld [vmem:[#allocation4 + $0x6a8] sm:$0xff]
  %v5101 = vld [vmem:[#allocation4 + $0x6b0] sm:$0xff]
  %v5102 = vld [vmem:[#allocation4 + $0x6b8] sm:$0xff]
  %v5103 = vld [vmem:[%s6] sm:$0xff]
  %v5104 = vld [vmem:[%s6 + $0x8] sm:$0xff]
  %v5105 = vld [vmem:[%s6 + $0x10] sm:$0xff]
  %v5106 = vld [vmem:[%s6 + $0x18] sm:$0xff]
  %v5107 = vld [vmem:[%s6 + $0x20] sm:$0xff]
  %v5108 = vld [vmem:[%s6 + $0x28] sm:$0xff]
  %v5109 = vld [vmem:[%s6 + $0x30] sm:$0xff]
  %v5110 = vld [vmem:[%s6 + $0x38] sm:$0xff]
  %v5111 = vld [vmem:[%s6 + $0x40] sm:$0xff]
  %v5112 = vld [vmem:[%s6 + $0x48] sm:$0xff]
  %v5113 = vld [vmem:[%s6 + $0x50] sm:$0xff]
  %v5114 = vld [vmem:[%s6 + $0x58] sm:$0xff]
  %v5116 = vsel %vm2700, %v5105, 0
  %v5119 = vsel %vm2700, %v5108, 0
  %v5122 = vsel %vm2700, %v5111, 0
  %v5125 = vsel %vm2700, %v5114, 0
  %5127 = vmatprep.subr.mxu0 %v4888
  %5128 = vmatpush1.msra.mxu0 %v4887
  %5129 = vmatprep.subr.mxu0 %v4894
  %5130 = vmatpush1.msra.mxu0 %v4893
  %5131 = vmatprep.subr.mxu0 %v4900
  %5132 = vmatpush1.msra.mxu0 %v4899
  %5133 = vmatprep.subr.mxu0 %v4906
  %5134 = vmatpush1.msra.mxu0 %v4905
  %5135 = vmatprep.subr.mxu0 %v4912
  %5136 = vmatpush1.msra.mxu0 %v4911
  %5137 = vmatprep.subr.mxu0 %v4918
  %5138 = vmatpush1.msra.mxu0 %v4917
  %5139 = vmatprep.subr.mxu0 %v4924
  %5140 = vmatpush1.msra.mxu0 %v4923
  %5141 = vmatprep.subr.mxu0 %v4930
  %5142 = vmatpush1.msra.mxu0 %v4929
  %5143 = vmatprep.subr.mxu0 %v4936
  %5144 = vmatpush1.msra.mxu0 %v4935
  %5145 = vmatprep.subr.mxu0 %v4942
  %5146 = vmatpush1.msra.mxu0 %v4941
  %5147 = vmatprep.subr.mxu0 %v4948
  %5148 = vmatpush1.msra.mxu0 %v4947
  %5149 = vmatprep.subr.mxu0 %v4954
  %5150 = vmatpush1.msra.mxu0 %v4953
  %5151 = vmatprep.subr.mxu0 %v4960
  %5152 = vmatpush1.msra.mxu0 %v4959
  %5153 = vmatprep.subr.mxu0 %v4966
  %5154 = vmatpush1.msra.mxu0 %v4965
  %5155 = vmatprep.subr.mxu0 %v4972
  %5156 = vmatpush1.msra.mxu0 %v4971
  %5157 = vmatprep.subr.mxu0 %v4978
  %5158 = vmatpush1.msra.mxu0 %v4977
  %5159 = vmatprep.subr.mxu0 %v4984
  %5160 = vmatpush1.msra.mxu0 %v4983
  %5161 = vmatprep.subr.mxu0 %v4990
  %5162 = vmatpush1.msra.mxu0 %v4989
  %5163 = vmatprep.subr.mxu0 %v4996
  %5164 = vmatpush1.msra.mxu0 %v4995
  %5165 = vmatprep.subr.mxu0 %v5002
  %5166 = vmatpush1.msra.mxu0 %v5001
  %5167 = vmatprep.subr.mxu0 %v5008
  %5168 = vmatpush1.msra.mxu0 %v5007
  %5169 = vmatprep.subr.mxu0 %v5014
  %5170 = vmatpush1.msra.mxu0 %v5013
  %5171 = vmatprep.subr.mxu0 %v5020
  %5172 = vmatpush1.msra.mxu0 %v5019
  %5173 = vmatprep.subr.mxu0 %v5026
  %5174 = vmatpush1.msra.mxu0 %v5025
  %5175 = vmatprep.subr.mxu0 %v5032
  %5176 = vmatpush1.msra.mxu0 %v5031
  %5177 = vmatprep.subr.mxu0 %v5038
  %5178 = vmatpush1.msra.mxu0 %v5037
  %5179 = vmatprep.subr.mxu0 %v5044
  %5180 = vmatpush1.msra.mxu0 %v5043
  %5181 = vmatprep.subr.mxu0 %v5050
  %5182 = vmatpush1.msra.mxu0 %v5049
  %5183 = vmatprep.subr.mxu0 %v5056
  %5184 = vmatpush1.msra.mxu0 %v5055
  %5185 = vmatprep.subr.mxu0 %v5062
  %5186 = vmatpush1.msra.mxu0 %v5061
  %5187 = vmatprep.subr.mxu0 %v5068
  %5188 = vmatpush1.msra.mxu0 %v5067
  %5189 = vmatprep.subr.mxu0 %v5074
  %5190 = vmatpush1.msra.mxu0 %v5073
  %5191 = vmatprep.mubr.f32.mxu0 %v5104
  %5192 = vmatmul.mubr.f32.gmra.mrb[0].mxu0 %v5103
  %v5193 = vpop.f32.mrb[0].mxu0
  %v5194 = vadd.f32 0.0, %v5193
  %v5195 = vpop.f32.mrb[0].mxu0
  %v5196 = vadd.f32 0.0, %v5195
  %5197 = vmatprep.mubr.f32.mxu0 %v5107
  %5198 = vmatmul.mubr.f32.gmra.mrb[0].mxu0 %v5106
  %v5199 = vpop.f32.mrb[0].mxu0
  %v5200 = vadd.f32 0.0, %v5199
  %v5201 = vpop.f32.mrb[0].mxu0
  %v5202 = vadd.f32 0.0, %v5201
  %5203 = vmatprep.mubr.f32.mxu0 %v5110
  %5204 = vmatmul.mubr.f32.gmra.mrb[0].mxu0 %v5109
  %v5205 = vpop.f32.mrb[0].mxu0
  %v5206 = vadd.f32 0.0, %v5205
  %v5207 = vpop.f32.mrb[0].mxu0
  %v5208 = vadd.f32 0.0, %v5207
  %5209 = vmatprep.mubr.f32.mxu0 %v5113
  %5210 = vmatmul.mubr.f32.gmra.mrb[0].mxu0 %v5112
  %v5211 = vpop.f32.mrb[0].mxu0
  %v5212 = vadd.f32 0.0, %v5211
  %v5213 = vpop.f32.mrb[0].mxu0
  %v5214 = vadd.f32 0.0, %v5213
  %5215 = vdwg.mxu0
  %5216 = vmatprep.subr.mxu0 %v5080
  %5217 = vmatpush1.msra.mxu0 %v5079
  %5218 = vmatprep.subr.mxu0 %v5086
  %5219 = vmatpush1.msra.mxu0 %v5085
  %5220 = vmatprep.subr.mxu0 %v5092
  %5221 = vmatpush1.msra.mxu0 %v5091
  %5222 = vmatprep.subr.mxu0 %v5098
  %5223 = vmatpush1.msra.mxu0 %v5097
  %5224 = vmatprep.subr.mxu0 0.0
  %5225 = vmatpush1.msra.mxu0 0.0
  %5226 = vmatprep.subr.mxu0 0.0
  %5227 = vmatpush1.msra.mxu0 0.0
  %5228 = vmatprep.subr.mxu0 0.0
  %5229 = vmatpush1.msra.mxu0 0.0
  %5230 = vmatprep.subr.mxu0 0.0
  %5231 = vmatpush1.msra.mxu0 0.0
  %5232 = vmatprep.subr.mxu0 0.0
  %5233 = vmatpush1.msra.mxu0 0.0
  %5234 = vmatprep.subr.mxu0 0.0
  %5235 = vmatpush1.msra.mxu0 0.0
  %5236 = vmatprep.subr.mxu0 0.0
  %5237 = vmatpush1.msra.mxu0 0.0
  %5238 = vmatprep.subr.mxu0 0.0
  %5239 = vmatpush1.msra.mxu0 0.0
  %5240 = vmatprep.subr.mxu0 0.0
  %5241 = vmatpush1.msra.mxu0 0.0
  %5242 = vmatprep.subr.mxu0 0.0
  %5243 = vmatpush1.msra.mxu0 0.0
  %5244 = vmatprep.subr.mxu0 0.0
  %5245 = vmatpush1.msra.mxu0 0.0
  %5246 = vmatprep.subr.mxu0 0.0
  %5247 = vmatpush1.msra.mxu0 0.0
  %5248 = vmatprep.subr.mxu0 0.0
  %5249 = vmatpush1.msra.mxu0 0.0
  %5250 = vmatprep.subr.mxu0 0.0
  %5251 = vmatpush1.msra.mxu0 0.0
  %5252 = vmatprep.subr.mxu0 0.0
  %5253 = vmatpush1.msra.mxu0 0.0
  %5254 = vmatprep.subr.mxu0 0.0
  %5255 = vmatpush1.msra.mxu0 0.0
  %5256 = vmatprep.subr.mxu0 0.0
  %5257 = vmatpush1.msra.mxu0 0.0
  %5258 = vmatprep.subr.mxu0 0.0
  %5259 = vmatpush1.msra.mxu0 0.0
  %5260 = vmatprep.subr.mxu0 0.0
  %5261 = vmatpush1.msra.mxu0 0.0
  %5262 = vmatprep.subr.mxu0 0.0
  %5263 = vmatpush1.msra.mxu0 0.0
  %5264 = vmatprep.subr.mxu0 0.0
  %5265 = vmatpush1.msra.mxu0 0.0
  %5266 = vmatprep.subr.mxu0 0.0
  %5267 = vmatpush1.msra.mxu0 0.0
  %5268 = vmatprep.subr.mxu0 0.0
  %5269 = vmatpush1.msra.mxu0 0.0
  %5270 = vmatprep.subr.mxu0 0.0
  %5271 = vmatpush1.msra.mxu0 0.0
  %5272 = vmatprep.subr.mxu0 0.0
  %5273 = vmatpush1.msra.mxu0 0.0
  %5274 = vmatprep.subr.mxu0 0.0
  %5275 = vmatpush1.msra.mxu0 0.0
  %5276 = vmatprep.subr.mxu0 0.0
  %5277 = vmatpush1.msra.mxu0 0.0
  %5278 = vmatprep.subr.mxu0 0.0
  %5279 = vmatpush1.msra.mxu0 0.0
  %5280 = vmatprep.mubr.f32.mxu0 0.0
  %5281 = vmatmul.mubr.f32.gmra.mrb[0].mxu0 %v5116
  %v5282 = vpop.f32.mrb[0].mxu0
  %v5283 = vadd.f32 %v5194, %v5282
  %v5284 = vpop.f32.mrb[0].mxu0
  %v5285 = vadd.f32 %v5196, %v5284
  %5286 = vmatprep.mubr.f32.mxu0 0.0
  %5287 = vmatmul.mubr.f32.gmra.mrb[0].mxu0 %v5119
  %v5288 = vpop.f32.mrb[0].mxu0
  %v5289 = vadd.f32 %v5200, %v5288
  %v5290 = vpop.f32.mrb[0].mxu0
  %v5291 = vadd.f32 %v5202, %v5290
  %5292 = vmatprep.mubr.f32.mxu0 0.0
  %5293 = vmatmul.mubr.f32.gmra.mrb[0].mxu0 %v5122
  %v5294 = vpop.f32.mrb[0].mxu0
  %v5295 = vadd.f32 %v5206, %v5294
  %v5296 = vpop.f32.mrb[0].mxu0
  %v5297 = vadd.f32 %v5208, %v5296
  %5298 = vmatprep.mubr.f32.mxu0 0.0
  %5299 = vmatmul.mubr.f32.gmra.mrb[0].mxu0 %v5125
  %v5300 = vpop.f32.mrb[0].mxu0
  %v5301 = vadd.f32 %v5212, %v5300
  %v5302 = vpop.f32.mrb[0].mxu0
  %v5303 = vadd.f32 %v5214, %v5302
  %5304 = vdwg.mxu0
  %5305 = vmatprep.subr.mxu0 %v4890
  %5306 = vmatpush1.msra.mxu0 %v4889
  %5307 = vmatprep.subr.mxu0 %v4896
  %5308 = vmatpush1.msra.mxu0 %v4895
  %5309 = vmatprep.subr.mxu0 %v4902
  %5310 = vmatpush1.msra.mxu0 %v4901
  %5311 = vmatprep.subr.mxu0 %v4908
  %5312 = vmatpush1.msra.mxu0 %v4907
  %5313 = vmatprep.subr.mxu0 %v4914
  %5314 = vmatpush1.msra.mxu0 %v4913
  %5315 = vmatprep.subr.mxu0 %v4920
  %5316 = vmatpush1.msra.mxu0 %v4919
  %5317 = vmatprep.subr.mxu0 %v4926
  %5318 = vmatpush1.msra.mxu0 %v4925
  %5319 = vmatprep.subr.mxu0 %v4932
  %5320 = vmatpush1.msra.mxu0 %v4931
  %5321 = vmatprep.subr.mxu0 %v4938
  %5322 = vmatpush1.msra.mxu0 %v4937
  %5323 = vmatprep.subr.mxu0 %v4944
  %5324 = vmatpush1.msra.mxu0 %v4943
  %5325 = vmatprep.subr.mxu0 %v4950
  %5326 = vmatpush1.msra.mxu0 %v4949
  %5327 = vmatprep.subr.mxu0 %v4956
  %5328 = vmatpush1.msra.mxu0 %v4955
  %5329 = vmatprep.subr.mxu0 %v4962
  %5330 = vmatpush1.msra.mxu0 %v4961
  %5331 = vmatprep.subr.mxu0 %v4968
  %5332 = vmatpush1.msra.mxu0 %v4967
  %5333 = vmatprep.subr.mxu0 %v4974
  %5334 = vmatpush1.msra.mxu0 %v4973
  %5335 = vmatprep.subr.mxu0 %v4980
  %5336 = vmatpush1.msra.mxu0 %v4979
  %5337 = vmatprep.subr.mxu0 %v4986
  %5338 = vmatpush1.msra.mxu0 %v4985
  %5339 = vmatprep.subr.mxu0 %v4992
  %5340 = vmatpush1.msra.mxu0 %v4991
  %5341 = vmatprep.subr.mxu0 %v4998
  %5342 = vmatpush1.msra.mxu0 %v4997
  %5343 = vmatprep.subr.mxu0 %v5004
  %5344 = vmatpush1.msra.mxu0 %v5003
  %5345 = vmatprep.subr.mxu0 %v5010
  %5346 = vmatpush1.msra.mxu0 %v5009
  %5347 = vmatprep.subr.mxu0 %v5016
  %5348 = vmatpush1.msra.mxu0 %v5015
  %5349 = vmatprep.subr.mxu0 %v5022
  %5350 = vmatpush1.msra.mxu0 %v5021
  %5351 = vmatprep.subr.mxu0 %v5028
  %5352 = vmatpush1.msra.mxu0 %v5027
  %5353 = vmatprep.subr.mxu0 %v5034
  %5354 = vmatpush1.msra.mxu0 %v5033
  %5355 = vmatprep.subr.mxu0 %v5040
  %5356 = vmatpush1.msra.mxu0 %v5039
  %5357 = vmatprep.subr.mxu0 %v5046
  %5358 = vmatpush1.msra.mxu0 %v5045
  %5359 = vmatprep.subr.mxu0 %v5052
  %5360 = vmatpush1.msra.mxu0 %v5051
  %5361 = vmatprep.subr.mxu0 %v5058
  %5362 = vmatpush1.msra.mxu0 %v5057
  %5363 = vmatprep.subr.mxu0 %v5064
  %5364 = vmatpush1.msra.mxu0 %v5063
  %5365 = vmatprep.subr.mxu0 %v5070
  %5366 = vmatpush1.msra.mxu0 %v5069
  %5367 = vmatprep.subr.mxu0 %v5076
  %5368 = vmatpush1.msra.mxu0 %v5075
  %5369 = vmatprep.mubr.f32.mxu0 %v5104
  %5370 = vmatmul.mubr.f32.gmra.mrb[0].mxu0 %v5103
  %v5371 = vpop.f32.mrb[0].mxu0
  %v5372 = vadd.f32 0.0, %v5371
  %v5373 = vpop.f32.mrb[0].mxu0
  %v5374 = vadd.f32 0.0, %v5373
  %5375 = vmatprep.mubr.f32.mxu0 %v5107
  %5376 = vmatmul.mubr.f32.gmra.mrb[0].mxu0 %v5106
  %v5377 = vpop.f32.mrb[0].mxu0
  %v5378 = vadd.f32 0.0, %v5377
  %v5379 = vpop.f32.mrb[0].mxu0
  %v5380 = vadd.f32 0.0, %v5379
  %5381 = vmatprep.mubr.f32.mxu0 %v5110
  %5382 = vmatmul.mubr.f32.gmra.mrb[0].mxu0 %v5109
  %v5383 = vpop.f32.mrb[0].mxu0
  %v5384 = vadd.f32 0.0, %v5383
  %v5385 = vpop.f32.mrb[0].mxu0
  %v5386 = vadd.f32 0.0, %v5385
  %5387 = vmatprep.mubr.f32.mxu0 %v5113
  %5388 = vmatmul.mubr.f32.gmra.mrb[0].mxu0 %v5112
  %v5389 = vpop.f32.mrb[0].mxu0
  %v5390 = vadd.f32 0.0, %v5389
  %v5391 = vpop.f32.mrb[0].mxu0
  %v5392 = vadd.f32 0.0, %v5391
  %5393 = vdwg.mxu0
  %5394 = vmatprep.subr.mxu0 %v5082
  %5395 = vmatpush1.msra.mxu0 %v5081
  %5396 = vmatprep.subr.mxu0 %v5088
  %5397 = vmatpush1.msra.mxu0 %v5087
  %5398 = vmatprep.subr.mxu0 %v5094
  %5399 = vmatpush1.msra.mxu0 %v5093
  %5400 = vmatprep.subr.mxu0 %v5100
  %5401 = vmatpush1.msra.mxu0 %v5099
  %5402 = vmatprep.subr.mxu0 0.0
  %5403 = vmatpush1.msra.mxu0 0.0
  %5404 = vmatprep.subr.mxu0 0.0
  %5405 = vmatpush1.msra.mxu0 0.0
  %5406 = vmatprep.subr.mxu0 0.0
  %5407 = vmatpush1.msra.mxu0 0.0
  %5408 = vmatprep.subr.mxu0 0.0
  %5409 = vmatpush1.msra.mxu0 0.0
  %5410 = vmatprep.subr.mxu0 0.0
  %5411 = vmatpush1.msra.mxu0 0.0
  %5412 = vmatprep.subr.mxu0 0.0
  %5413 = vmatpush1.msra.mxu0 0.0
  %5414 = vmatprep.subr.mxu0 0.0
  %5415 = vmatpush1.msra.mxu0 0.0
  %5416 = vmatprep.subr.mxu0 0.0
  %5417 = vmatpush1.msra.mxu0 0.0
  %5418 = vmatprep.subr.mxu0 0.0
  %5419 = vmatpush1.msra.mxu0 0.0
  %5420 = vmatprep.subr.mxu0 0.0
  %5421 = vmatpush1.msra.mxu0 0.0
  %5422 = vmatprep.subr.mxu0 0.0
  %5423 = vmatpush1.msra.mxu0 0.0
  %5424 = vmatprep.subr.mxu0 0.0
  %5425 = vmatpush1.msra.mxu0 0.0
  %5426 = vmatprep.subr.mxu0 0.0
  %5427 = vmatpush1.msra.mxu0 0.0
  %5428 = vmatprep.subr.mxu0 0.0
  %5429 = vmatpush1.msra.mxu0 0.0
  %5430 = vmatprep.subr.mxu0 0.0
  %5431 = vmatpush1.msra.mxu0 0.0
  %5432 = vmatprep.subr.mxu0 0.0
  %5433 = vmatpush1.msra.mxu0 0.0
  %5434 = vmatprep.subr.mxu0 0.0
  %5435 = vmatpush1.msra.mxu0 0.0
  %5436 = vmatprep.subr.mxu0 0.0
  %5437 = vmatpush1.msra.mxu0 0.0
  %5438 = vmatprep.subr.mxu0 0.0
  %5439 = vmatpush1.msra.mxu0 0.0
  %5440 = vmatprep.subr.mxu0 0.0
  %5441 = vmatpush1.msra.mxu0 0.0
  %5442 = vmatprep.subr.mxu0 0.0
  %5443 = vmatpush1.msra.mxu0 0.0
  %5444 = vmatprep.subr.mxu0 0.0
  %5445 = vmatpush1.msra.mxu0 0.0
  %5446 = vmatprep.subr.mxu0 0.0
  %5447 = vmatpush1.msra.mxu0 0.0
  %5448 = vmatprep.subr.mxu0 0.0
  %5449 = vmatpush1.msra.mxu0 0.0
  %5450 = vmatprep.subr.mxu0 0.0
  %5451 = vmatpush1.msra.mxu0 0.0
  %5452 = vmatprep.subr.mxu0 0.0
  %5453 = vmatpush1.msra.mxu0 0.0
  %5454 = vmatprep.subr.mxu0 0.0
  %5455 = vmatpush1.msra.mxu0 0.0
  %5456 = vmatprep.subr.mxu0 0.0
  %5457 = vmatpush1.msra.mxu0 0.0
  %5458 = vmatprep.mubr.f32.mxu0 0.0
  %5459 = vmatmul.mubr.f32.gmra.mrb[0].mxu0 %v5116
  %v5460 = vpop.f32.mrb[0].mxu0
  %v5461 = vadd.f32 %v5372, %v5460
  %v5462 = vpop.f32.mrb[0].mxu0
  %v5463 = vadd.f32 %v5374, %v5462
  %5464 = vmatprep.mubr.f32.mxu0 0.0
  %5465 = vmatmul.mubr.f32.gmra.mrb[0].mxu0 %v5119
  %v5466 = vpop.f32.mrb[0].mxu0
  %v5467 = vadd.f32 %v5378, %v5466
  %v5468 = vpop.f32.mrb[0].mxu0
  %v5469 = vadd.f32 %v5380, %v5468
  %5470 = vmatprep.mubr.f32.mxu0 0.0
  %5471 = vmatmul.mubr.f32.gmra.mrb[0].mxu0 %v5122
  %v5472 = vpop.f32.mrb[0].mxu0
  %v5473 = vadd.f32 %v5384, %v5472
  %v5474 = vpop.f32.mrb[0].mxu0
  %v5475 = vadd.f32 %v5386, %v5474
  %5476 = vmatprep.mubr.f32.mxu0 0.0
  %5477 = vmatmul.mubr.f32.gmra.mrb[0].mxu0 %v5125
  %v5478 = vpop.f32.mrb[0].mxu0
  %v5479 = vadd.f32 %v5390, %v5478
  %v5480 = vpop.f32.mrb[0].mxu0
  %v5481 = vadd.f32 %v5392, %v5480
  %5482 = vdwg.mxu0
  %5483 = vmatprep.subr.mxu0 %v4892
  %5484 = vmatpush1.msra.mxu0 %v4891
  %5485 = vmatprep.subr.mxu0 %v4898
  %5486 = vmatpush1.msra.mxu0 %v4897
  %5487 = vmatprep.subr.mxu0 %v4904
  %5488 = vmatpush1.msra.mxu0 %v4903
  %5489 = vmatprep.subr.mxu0 %v4910
  %5490 = vmatpush1.msra.mxu0 %v4909
  %5491 = vmatprep.subr.mxu0 %v4916
  %5492 = vmatpush1.msra.mxu0 %v4915
  %5493 = vmatprep.subr.mxu0 %v4922
  %5494 = vmatpush1.msra.mxu0 %v4921
  %5495 = vmatprep.subr.mxu0 %v4928
  %5496 = vmatpush1.msra.mxu0 %v4927
  %5497 = vmatprep.subr.mxu0 %v4934
  %5498 = vmatpush1.msra.mxu0 %v4933
  %5499 = vmatprep.subr.mxu0 %v4940
  %5500 = vmatpush1.msra.mxu0 %v4939
  %5501 = vmatprep.subr.mxu0 %v4946
  %5502 = vmatpush1.msra.mxu0 %v4945
  %5503 = vmatprep.subr.mxu0 %v4952
  %5504 = vmatpush1.msra.mxu0 %v4951
  %5505 = vmatprep.subr.mxu0 %v4958
  %5506 = vmatpush1.msra.mxu0 %v4957
  %5507 = vmatprep.subr.mxu0 %v4964
  %5508 = vmatpush1.msra.mxu0 %v4963
  %5509 = vmatprep.subr.mxu0 %v4970
  %5510 = vmatpush1.msra.mxu0 %v4969
  %5511 = vmatprep.subr.mxu0 %v4976
  %5512 = vmatpush1.msra.mxu0 %v4975
  %5513 = vmatprep.subr.mxu0 %v4982
  %5514 = vmatpush1.msra.mxu0 %v4981
  %5515 = vmatprep.subr.mxu0 %v4988
  %5516 = vmatpush1.msra.mxu0 %v4987
  %5517 = vmatprep.subr.mxu0 %v4994
  %5518 = vmatpush1.msra.mxu0 %v4993
  %5519 = vmatprep.subr.mxu0 %v5000
  %5520 = vmatpush1.msra.mxu0 %v4999
  %5521 = vmatprep.subr.mxu0 %v5006
  %5522 = vmatpush1.msra.mxu0 %v5005
  %5523 = vmatprep.subr.mxu0 %v5012
  %5524 = vmatpush1.msra.mxu0 %v5011
  %5525 = vmatprep.subr.mxu0 %v5018
  %5526 = vmatpush1.msra.mxu0 %v5017
  %5527 = vmatprep.subr.mxu0 %v5024
  %5528 = vmatpush1.msra.mxu0 %v5023
  %5529 = vmatprep.subr.mxu0 %v5030
  %5530 = vmatpush1.msra.mxu0 %v5029
  %5531 = vmatprep.subr.mxu0 %v5036
  %5532 = vmatpush1.msra.mxu0 %v5035
  %5533 = vmatprep.subr.mxu0 %v5042
  %5534 = vmatpush1.msra.mxu0 %v5041
  %5535 = vmatprep.subr.mxu0 %v5048
  %5536 = vmatpush1.msra.mxu0 %v5047
  %5537 = vmatprep.subr.mxu0 %v5054
  %5538 = vmatpush1.msra.mxu0 %v5053
  %5539 = vmatprep.subr.mxu0 %v5060
  %5540 = vmatpush1.msra.mxu0 %v5059
  %5541 = vmatprep.subr.mxu0 %v5066
  %5542 = vmatpush1.msra.mxu0 %v5065
  %5543 = vmatprep.subr.mxu0 %v5072
  %5544 = vmatpush1.msra.mxu0 %v5071
  %5545 = vmatprep.subr.mxu0 %v5078
  %5546 = vmatpush1.msra.mxu0 %v5077
  %5547 = vmatprep.mubr.f32.mxu0 %v5104
  %5548 = vmatmul.mubr.f32.gmra.mrb[0].mxu0 %v5103
  %v5549 = vpop.f32.mrb[0].mxu0
  %v5550 = vadd.f32 0.0, %v5549
  %v5551 = vpop.f32.mrb[0].mxu0
  %v5552 = vadd.f32 0.0, %v5551
  %5553 = vmatprep.mubr.f32.mxu0 %v5107
  %5554 = vmatmul.mubr.f32.gmra.mrb[0].mxu0 %v5106
  %v5555 = vpop.f32.mrb[0].mxu0
  %v5556 = vadd.f32 0.0, %v5555
  %v5557 = vpop.f32.mrb[0].mxu0
  %v5558 = vadd.f32 0.0, %v5557
  %5559 = vmatprep.mubr.f32.mxu0 %v5110
  %5560 = vmatmul.mubr.f32.gmra.mrb[0].mxu0 %v5109
  %v5561 = vpop.f32.mrb[0].mxu0
  %v5562 = vadd.f32 0.0, %v5561
  %v5563 = vpop.f32.mrb[0].mxu0
  %v5564 = vadd.f32 0.0, %v5563
  %5565 = vmatprep.mubr.f32.mxu0 %v5113
  %5566 = vmatmul.mubr.f32.gmra.mrb[0].mxu0 %v5112
  %v5567 = vpop.f32.mrb[0].mxu0
  %v5568 = vadd.f32 0.0, %v5567
  %v5569 = vpop.f32.mrb[0].mxu0
  %v5570 = vadd.f32 0.0, %v5569
  %5571 = vdwg.mxu0
  %5572 = vmatprep.subr.mxu0 %v5084
  %5573 = vmatpush1.msra.mxu0 %v5083
  %5574 = vmatprep.subr.mxu0 %v5090
  %5575 = vmatpush1.msra.mxu0 %v5089
  %5576 = vmatprep.subr.mxu0 %v5096
  %5577 = vmatpush1.msra.mxu0 %v5095
  %5578 = vmatprep.subr.mxu0 %v5102
  %5579 = vmatpush1.msra.mxu0 %v5101
  %5580 = vmatprep.subr.mxu0 0.0
  %5581 = vmatpush1.msra.mxu0 0.0
  %5582 = vmatprep.subr.mxu0 0.0
  %5583 = vmatpush1.msra.mxu0 0.0
  %5584 = vmatprep.subr.mxu0 0.0
  %5585 = vmatpush1.msra.mxu0 0.0
  %5586 = vmatprep.subr.mxu0 0.0
  %5587 = vmatpush1.msra.mxu0 0.0
  %5588 = vmatprep.subr.mxu0 0.0
  %5589 = vmatpush1.msra.mxu0 0.0
  %5590 = vmatprep.subr.mxu0 0.0
  %5591 = vmatpush1.msra.mxu0 0.0
  %5592 = vmatprep.subr.mxu0 0.0
  %5593 = vmatpush1.msra.mxu0 0.0
  %5594 = vmatprep.subr.mxu0 0.0
  %5595 = vmatpush1.msra.mxu0 0.0
  %5596 = vmatprep.subr.mxu0 0.0
  %5597 = vmatpush1.msra.mxu0 0.0
  %5598 = vmatprep.subr.mxu0 0.0
  %5599 = vmatpush1.msra.mxu0 0.0
  %5600 = vmatprep.subr.mxu0 0.0
  %5601 = vmatpush1.msra.mxu0 0.0
  %5602 = vmatprep.subr.mxu0 0.0
  %5603 = vmatpush1.msra.mxu0 0.0
  %5604 = vmatprep.subr.mxu0 0.0
  %5605 = vmatpush1.msra.mxu0 0.0
  %5606 = vmatprep.subr.mxu0 0.0
  %5607 = vmatpush1.msra.mxu0 0.0
  %5608 = vmatprep.subr.mxu0 0.0
  %5609 = vmatpush1.msra.mxu0 0.0
  %5610 = vmatprep.subr.mxu0 0.0
  %5611 = vmatpush1.msra.mxu0 0.0
  %5612 = vmatprep.subr.mxu0 0.0
  %5613 = vmatpush1.msra.mxu0 0.0
  %5614 = vmatprep.subr.mxu0 0.0
  %5615 = vmatpush1.msra.mxu0 0.0
  %5616 = vmatprep.subr.mxu0 0.0
  %5617 = vmatpush1.msra.mxu0 0.0
  %5618 = vmatprep.subr.mxu0 0.0
  %5619 = vmatpush1.msra.mxu0 0.0
  %5620 = vmatprep.subr.mxu0 0.0
  %5621 = vmatpush1.msra.mxu0 0.0
  %5622 = vmatprep.subr.mxu0 0.0
  %5623 = vmatpush1.msra.mxu0 0.0
  %5624 = vmatprep.subr.mxu0 0.0
  %5625 = vmatpush1.msra.mxu0 0.0
  %5626 = vmatprep.subr.mxu0 0.0
  %5627 = vmatpush1.msra.mxu0 0.0
  %5628 = vmatprep.subr.mxu0 0.0
  %5629 = vmatpush1.msra.mxu0 0.0
  %5630 = vmatprep.subr.mxu0 0.0
  %5631 = vmatpush1.msra.mxu0 0.0
  %5632 = vmatprep.subr.mxu0 0.0
  %5633 = vmatpush1.msra.mxu0 0.0
  %5634 = vmatprep.subr.mxu0 0.0
  %5635 = vmatpush1.msra.mxu0 0.0
  %5636 = vmatprep.mubr.f32.mxu0 0.0
  %5637 = vmatmul.mubr.f32.gmra.mrb[0].mxu0 %v5116
  %v5638 = vpop.f32.mrb[0].mxu0
  %v5639 = vadd.f32 %v5550, %v5638
  %v5640 = vpop.f32.mrb[0].mxu0
  %v5641 = vadd.f32 %v5552, %v5640
  %5642 = vmatprep.mubr.f32.mxu0 0.0
  %5643 = vmatmul.mubr.f32.gmra.mrb[0].mxu0 %v5119
  %v5644 = vpop.f32.mrb[0].mxu0
  %v5645 = vadd.f32 %v5556, %v5644
  %v5646 = vpop.f32.mrb[0].mxu0
  %v5647 = vadd.f32 %v5558, %v5646
  %5648 = vmatprep.mubr.f32.mxu0 0.0
  %5649 = vmatmul.mubr.f32.gmra.mrb[0].mxu0 %v5122
  %v5650 = vpop.f32.mrb[0].mxu0
  %v5651 = vadd.f32 %v5562, %v5650
  %v5652 = vpop.f32.mrb[0].mxu0
  %v5653 = vadd.f32 %v5564, %v5652
  %5654 = vmatprep.mubr.f32.mxu0 0.0
  %5655 = vmatmul.mubr.f32.gmra.mrb[0].mxu0 %v5125
  %v5656 = vpop.f32.mrb[0].mxu0
  %v5657 = vadd.f32 %v5568, %v5656
  %v5658 = vpop.f32.mrb[0].mxu0
  %v5659 = vadd.f32 %v5570, %v5658
  %5660 = vdwg.mxu0
  %v5661 = vadd.f32 %v3350, %v5283
  %v5662 = vadd.f32 %v3350, %v5285
  %v5663 = vadd.f32 %v3350, %v5461
  %v5664 = vadd.f32 %v3350, %v5463
  %v5665 = vadd.f32 %v3350, %v5639
  %v5666 = vadd.f32 %v3350, %v5641
  %v5667 = vadd.f32 %v3355, %v5289
  %v5668 = vadd.f32 %v3355, %v5291
  %v5669 = vadd.f32 %v3355, %v5467
  %v5670 = vadd.f32 %v3355, %v5469
  %v5671 = vadd.f32 %v3355, %v5645
  %v5672 = vadd.f32 %v3355, %v5647
  %v5673 = vadd.f32 %v3360, %v5295
  %v5674 = vadd.f32 %v3360, %v5297
  %v5675 = vadd.f32 %v3360, %v5473
  %v5676 = vadd.f32 %v3360, %v5475
  %v5677 = vadd.f32 %v3360, %v5651
  %v5678 = vadd.f32 %v3360, %v5653
  %v5679 = vadd.f32 %v3365, %v5301
  %v5680 = vadd.f32 %v3365, %v5303
  %v5681 = vadd.f32 %v3365, %v5479
  %v5682 = vadd.f32 %v3365, %v5481
  %v5683 = vadd.f32 %v3365, %v5657
  %v5684 = vadd.f32 %v3365, %v5659
  %v5685 = vmax.f32 %v5661, 0.0
  %v5686 = vmax.f32 %v5662, 0.0
  %v5687 = vmax.f32 %v5663, 0.0
  %v5688 = vmax.f32 %v5664, 0.0
  %v5689 = vmax.f32 %v5665, 0.0
  %v5690 = vmax.f32 %v5666, 0.0
  %v5691 = vmax.f32 %v5667, 0.0
  %v5692 = vmax.f32 %v5668, 0.0
  %v5693 = vmax.f32 %v5669, 0.0
  %v5694 = vmax.f32 %v5670, 0.0
  %v5695 = vmax.f32 %v5671, 0.0
  %v5696 = vmax.f32 %v5672, 0.0
  %v5697 = vmax.f32 %v5673, 0.0
  %v5698 = vmax.f32 %v5674, 0.0
  %v5699 = vmax.f32 %v5675, 0.0
  %v5700 = vmax.f32 %v5676, 0.0
  %v5701 = vmax.f32 %v5677, 0.0
  %v5702 = vmax.f32 %v5678, 0.0
  %v5703 = vmax.f32 %v5679, 0.0
  %v5704 = vmax.f32 %v5680, 0.0
  %v5705 = vmax.f32 %v5681, 0.0
  %v5706 = vmax.f32 %v5682, 0.0
  %v5707 = vmax.f32 %v5683, 0.0
  %v5708 = vmax.f32 %v5684, 0.0
  %v5709 = vmul.f32 %v5685, %v849
  %v5710 = vmul.f32 %v5686, %v853
  %v5711 = vmul.f32 %v5687, %v857
  %v5712 = vmul.f32 %v5688, %v861
  %v5713 = vmul.f32 %v5689, %v865
  %v5714 = vmul.f32 %v5690, %v869
  %v5715 = vmul.f32 %v5691, %v849
  %v5716 = vmul.f32 %v5692, %v853
  %v5717 = vmul.f32 %v5693, %v857
  %v5718 = vmul.f32 %v5694, %v861
  %v5719 = vmul.f32 %v5695, %v865
  %v5720 = vmul.f32 %v5696, %v869
  %v5721 = vmul.f32 %v5697, %v849
  %v5722 = vmul.f32 %v5698, %v853
  %v5723 = vmul.f32 %v5699, %v857
  %v5724 = vmul.f32 %v5700, %v861
  %v5725 = vmul.f32 %v5701, %v865
  %v5726 = vmul.f32 %v5702, %v869
  %v5727 = vmul.f32 %v5703, %v849
  %v5728 = vmul.f32 %v5704, %v853
  %v5729 = vmul.f32 %v5705, %v857
  %v5730 = vmul.f32 %v5706, %v861
  %v5731 = vmul.f32 %v5707, %v865
  %v5732 = vmul.f32 %v5708, %v869
  %5733 = vst [vmem:[#allocation2 + $0x8] sm:$0xff] %v5709
  %5734 = vst [vmem:[#allocation2 + $0x10] sm:$0xff] %v5710
  %5735 = vst [vmem:[#allocation2 + $0x18] sm:$0xff] %v5711
  %5736 = vst [vmem:[#allocation2 + $0x20] sm:$0xff] %v5712
  %5737 = vst [vmem:[#allocation2 + $0x28] sm:$0xff] %v5713
  %5738 = vst [vmem:[#allocation2 + $0x30] sm:$0xff] %v5714
  %5739 = vst [vmem:[#allocation2 + $0x48] sm:$0xff] %v5715
  %5740 = vst [vmem:[#allocation2 + $0x50] sm:$0xff] %v5716
  %5741 = vst [vmem:[#allocation2 + $0x58] sm:$0xff] %v5717
  %5742 = vst [vmem:[#allocation2 + $0x60] sm:$0xff] %v5718
  %5743 = vst [vmem:[#allocation2 + $0x68] sm:$0xff] %v5719
  %5744 = vst [vmem:[#allocation2 + $0x70] sm:$0xff] %v5720
  %5745 = vst [vmem:[#allocation2 + $0x88] sm:$0xff] %v5721
  %5746 = vst [vmem:[#allocation2 + $0x90] sm:$0xff] %v5722
  %5747 = vst [vmem:[#allocation2 + $0x98] sm:$0xff] %v5723
  %5748 = vst [vmem:[#allocation2 + $0xa0] sm:$0xff] %v5724
  %5749 = vst [vmem:[#allocation2 + $0xa8] sm:$0xff] %v5725
  %5750 = vst [vmem:[#allocation2 + $0xb0] sm:$0xff] %v5726
  %5751 = vst [vmem:[#allocation2 + $0xc8] sm:$0xff] %v5727
  %5752 = vst [vmem:[#allocation2 + $0xd0] sm:$0xff] %v5728
  %5753 = vst [vmem:[#allocation2 + $0xd8] sm:$0xff] %v5729
  %5754 = vst [vmem:[#allocation2 + $0xe0] sm:$0xff] %v5730
  %5755 = vst [vmem:[#allocation2 + $0xe8] sm:$0xff] %v5731
  %5756 = vst [vmem:[#allocation2 + $0xf0] sm:$0xff] %v5732
  %v5757 = vld [vmem:[%s9] sm:$0xff]
  %v5758 = vld [vmem:[%s9 + $0x8] sm:$0xff]
  %v5759 = vld [vmem:[%s9 + $0x10] sm:$0xff]
  %v5760 = vld [vmem:[%s9 + $0x18] sm:$0xff]
  %5762 = vset.pattern.permute.xlu0 0
  %5763 = vperm.xlu0 %5762, %v5757
  %v5764 = vpop.permute.xlu0 %5763
  %5767 = vset.pattern.permute.xlu0 0
  %5768 = vperm.xlu0 %5767, %v5758
  %v5769 = vpop.permute.xlu0 %5768
  %5772 = vset.pattern.permute.xlu0 0
  %5773 = vperm.xlu0 %5772, %v5759
  %v5774 = vpop.permute.xlu0 %5773
  %5777 = vset.pattern.permute.xlu0 0
  %5778 = vperm.xlu0 %5777, %v5760
  %v5779 = vpop.permute.xlu0 %5778
  %v5781 = vld [vmem:[#allocation2] sm:$0xff]
  %v5782 = vld [vmem:[#allocation2 + $0x8] sm:$0xff]
  %v5783 = vld [vmem:[#allocation2 + $0x10] sm:$0xff]
  %v5784 = vld [vmem:[#allocation2 + $0x18] sm:$0xff]
  %v5785 = vld [vmem:[#allocation2 + $0x20] sm:$0xff]
  %v5786 = vld [vmem:[#allocation2 + $0x28] sm:$0xff]
  %v5787 = vld [vmem:[#allocation2 + $0x30] sm:$0xff]
  %v5788 = vld [vmem:[#allocation2 + $0x40] sm:$0xff]
  %v5789 = vld [vmem:[#allocation2 + $0x48] sm:$0xff]
  %v5790 = vld [vmem:[#allocation2 + $0x50] sm:$0xff]
  %v5791 = vld [vmem:[#allocation2 + $0x58] sm:$0xff]
  %v5792 = vld [vmem:[#allocation2 + $0x60] sm:$0xff]
  %v5793 = vld [vmem:[#allocation2 + $0x68] sm:$0xff]
  %v5794 = vld [vmem:[#allocation2 + $0x70] sm:$0xff]
  %v5795 = vld [vmem:[#allocation2 + $0x80] sm:$0xff]
  %v5796 = vld [vmem:[#allocation2 + $0x88] sm:$0xff]
  %v5797 = vld [vmem:[#allocation2 + $0x90] sm:$0xff]
  %v5798 = vld [vmem:[#allocation2 + $0x98] sm:$0xff]
  %v5799 = vld [vmem:[#allocation2 + $0xa0] sm:$0xff]
  %v5800 = vld [vmem:[#allocation2 + $0xa8] sm:$0xff]
  %v5801 = vld [vmem:[#allocation2 + $0xb0] sm:$0xff]
  %v5802 = vld [vmem:[#allocation2 + $0xc0] sm:$0xff]
  %v5803 = vld [vmem:[#allocation2 + $0xc8] sm:$0xff]
  %v5804 = vld [vmem:[#allocation2 + $0xd0] sm:$0xff]
  %v5805 = vld [vmem:[#allocation2 + $0xd8] sm:$0xff]
  %v5806 = vld [vmem:[#allocation2 + $0xe0] sm:$0xff]
  %v5807 = vld [vmem:[#allocation2 + $0xe8] sm:$0xff]
  %v5808 = vld [vmem:[#allocation2 + $0xf0] sm:$0xff]
  %5837 = vrot.lane.b32.xlu0 %v5781, 19
  %v5838 = vpop.permute.xlu0 %5837
  %5839 = vrot.lane.b32.xlu0 %v5782, 19
  %v5840 = vpop.permute.xlu0 %5839
  %5841 = vrot.lane.b32.xlu0 %v5783, 19
  %v5842 = vpop.permute.xlu0 %5841
  %5843 = vrot.lane.b32.xlu0 %v5784, 19
  %v5844 = vpop.permute.xlu0 %5843
  %5845 = vrot.lane.b32.xlu0 %v5785, 19
  %v5846 = vpop.permute.xlu0 %5845
  %5847 = vrot.lane.b32.xlu0 %v5786, 19
  %v5848 = vpop.permute.xlu0 %5847
  %5849 = vrot.lane.b32.xlu0 %v5787, 19
  %v5850 = vpop.permute.xlu0 %5849
  %5851 = vrot.lane.b32.xlu0 %v5788, 19
  %v5852 = vpop.permute.xlu0 %5851
  %5853 = vrot.lane.b32.xlu0 %v5789, 19
  %v5854 = vpop.permute.xlu0 %5853
  %5855 = vrot.lane.b32.xlu0 %v5790, 19
  %v5856 = vpop.permute.xlu0 %5855
  %5857 = vrot.lane.b32.xlu0 %v5791, 19
  %v5858 = vpop.permute.xlu0 %5857
  %5859 = vrot.lane.b32.xlu0 %v5792, 19
  %v5860 = vpop.permute.xlu0 %5859
  %5861 = vrot.lane.b32.xlu0 %v5793, 19
  %v5862 = vpop.permute.xlu0 %5861
  %5863 = vrot.lane.b32.xlu0 %v5794, 19
  %v5864 = vpop.permute.xlu0 %5863
  %5865 = vrot.lane.b32.xlu0 %v5795, 19
  %v5866 = vpop.permute.xlu0 %5865
  %5867 = vrot.lane.b32.xlu0 %v5796, 19
  %v5868 = vpop.permute.xlu0 %5867
  %5869 = vrot.lane.b32.xlu0 %v5797, 19
  %v5870 = vpop.permute.xlu0 %5869
  %5871 = vrot.lane.b32.xlu0 %v5798, 19
  %v5872 = vpop.permute.xlu0 %5871
  %5873 = vrot.lane.b32.xlu0 %v5799, 19
  %v5874 = vpop.permute.xlu0 %5873
  %5875 = vrot.lane.b32.xlu0 %v5800, 19
  %v5876 = vpop.permute.xlu0 %5875
  %5877 = vrot.lane.b32.xlu0 %v5801, 19
  %v5878 = vpop.permute.xlu0 %5877
  %5879 = vrot.lane.b32.xlu0 %v5802, 19
  %v5880 = vpop.permute.xlu0 %5879
  %5881 = vrot.lane.b32.xlu0 %v5803, 19
  %v5882 = vpop.permute.xlu0 %5881
  %5883 = vrot.lane.b32.xlu0 %v5804, 19
  %v5884 = vpop.permute.xlu0 %5883
  %5885 = vrot.lane.b32.xlu0 %v5805, 19
  %v5886 = vpop.permute.xlu0 %5885
  %5887 = vrot.lane.b32.xlu0 %v5806, 19
  %v5888 = vpop.permute.xlu0 %5887
  %5889 = vrot.lane.b32.xlu0 %v5807, 19
  %v5890 = vpop.permute.xlu0 %5889
  %5891 = vrot.lane.b32.xlu0 %v5808, 19
  %v5892 = vpop.permute.xlu0 %5891
  %v5893 = vsel %vm486, %v5838, %v5840
  %v5894 = vsel %vm486, %v5840, %v5842
  %v5895 = vsel %vm486, %v5842, %v5844
  %v5896 = vsel %vm486, %v5844, %v5846
  %v5897 = vsel %vm486, %v5846, %v5848
  %v5898 = vsel %vm486, %v5848, %v5850
  %v5899 = vsel %vm486, %v5852, %v5854
  %v5900 = vsel %vm486, %v5854, %v5856
  %v5901 = vsel %vm486, %v5856, %v5858
  %v5902 = vsel %vm486, %v5858, %v5860
  %v5903 = vsel %vm486, %v5860, %v5862
  %v5904 = vsel %vm486, %v5862, %v5864
  %v5905 = vsel %vm486, %v5866, %v5868
  %v5906 = vsel %vm486, %v5868, %v5870
  %v5907 = vsel %vm486, %v5870, %v5872
  %v5908 = vsel %vm486, %v5872, %v5874
  %v5909 = vsel %vm486, %v5874, %v5876
  %v5910 = vsel %vm486, %v5876, %v5878
  %v5911 = vsel %vm486, %v5880, %v5882
  %v5912 = vsel %vm486, %v5882, %v5884
  %v5913 = vsel %vm486, %v5884, %v5886
  %v5914 = vsel %vm486, %v5886, %v5888
  %v5915 = vsel %vm486, %v5888, %v5890
  %v5916 = vsel %vm486, %v5890, %v5892
  %5941 = vst [vmem:[#allocation4] sm:$0xff] %v5893
  %5942 = vst [vmem:[#allocation4 + $0x8] sm:$0xff] %v5894
  %5943 = vst [vmem:[#allocation4 + $0x10] sm:$0xff] %v5895
  %5944 = vst [vmem:[#allocation4 + $0x18] sm:$0xff] %v5896
  %5945 = vst [vmem:[#allocation4 + $0x20] sm:$0xff] %v5897
  %5946 = vst [vmem:[#allocation4 + $0x28] sm:$0xff] %v5898
  %5947 = vst [vmem:[#allocation4 + $0x30] sm:$0xff] %v5899
  %5948 = vst [vmem:[#allocation4 + $0x38] sm:$0xff] %v5900
  %5949 = vst [vmem:[#allocation4 + $0x40] sm:$0xff] %v5901
  %5950 = vst [vmem:[#allocation4 + $0x48] sm:$0xff] %v5902
  %5951 = vst [vmem:[#allocation4 + $0x50] sm:$0xff] %v5903
  %5952 = vst [vmem:[#allocation4 + $0x58] sm:$0xff] %v5904
  %5953 = vst [vmem:[#allocation4 + $0x60] sm:$0xff] %v5905
  %5954 = vst [vmem:[#allocation4 + $0x68] sm:$0xff] %v5906
  %5955 = vst [vmem:[#allocation4 + $0x70] sm:$0xff] %v5907
  %5956 = vst [vmem:[#allocation4 + $0x78] sm:$0xff] %v5908
  %5957 = vst [vmem:[#allocation4 + $0x80] sm:$0xff] %v5909
  %5958 = vst [vmem:[#allocation4 + $0x88] sm:$0xff] %v5910
  %5959 = vst [vmem:[#allocation4 + $0x90] sm:$0xff] %v5911
  %5960 = vst [vmem:[#allocation4 + $0x98] sm:$0xff] %v5912
  %5961 = vst [vmem:[#allocation4 + $0xa0] sm:$0xff] %v5913
  %5962 = vst [vmem:[#allocation4 + $0xa8] sm:$0xff] %v5914
  %5963 = vst [vmem:[#allocation4 + $0xb0] sm:$0xff] %v5915
  %5964 = vst [vmem:[#allocation4 + $0xb8] sm:$0xff] %v5916
  %v5965 = vld [vmem:[#allocation2] sm:$0xff]
  %v5966 = vld [vmem:[#allocation2 + $0x8] sm:$0xff]
  %v5967 = vld [vmem:[#allocation2 + $0x10] sm:$0xff]
  %v5968 = vld [vmem:[#allocation2 + $0x18] sm:$0xff]
  %v5969 = vld [vmem:[#allocation2 + $0x20] sm:$0xff]
  %v5970 = vld [vmem:[#allocation2 + $0x28] sm:$0xff]
  %v5971 = vld [vmem:[#allocation2 + $0x30] sm:$0xff]
  %v5972 = vld [vmem:[#allocation2 + $0x40] sm:$0xff]
  %v5973 = vld [vmem:[#allocation2 + $0x48] sm:$0xff]
  %v5974 = vld [vmem:[#allocation2 + $0x50] sm:$0xff]
  %v5975 = vld [vmem:[#allocation2 + $0x58] sm:$0xff]
  %v5976 = vld [vmem:[#allocation2 + $0x60] sm:$0xff]
  %v5977 = vld [vmem:[#allocation2 + $0x68] sm:$0xff]
  %v5978 = vld [vmem:[#allocation2 + $0x70] sm:$0xff]
  %v5979 = vld [vmem:[#allocation2 + $0x80] sm:$0xff]
  %v5980 = vld [vmem:[#allocation2 + $0x88] sm:$0xff]
  %v5981 = vld [vmem:[#allocation2 + $0x90] sm:$0xff]
  %v5982 = vld [vmem:[#allocation2 + $0x98] sm:$0xff]
  %v5983 = vld [vmem:[#allocation2 + $0xa0] sm:$0xff]
  %v5984 = vld [vmem:[#allocation2 + $0xa8] sm:$0xff]
  %v5985 = vld [vmem:[#allocation2 + $0xb0] sm:$0xff]
  %v5986 = vld [vmem:[#allocation2 + $0xc0] sm:$0xff]
  %v5987 = vld [vmem:[#allocation2 + $0xc8] sm:$0xff]
  %v5988 = vld [vmem:[#allocation2 + $0xd0] sm:$0xff]
  %v5989 = vld [vmem:[#allocation2 + $0xd8] sm:$0xff]
  %v5990 = vld [vmem:[#allocation2 + $0xe0] sm:$0xff]
  %v5991 = vld [vmem:[#allocation2 + $0xe8] sm:$0xff]
  %v5992 = vld [vmem:[#allocation2 + $0xf0] sm:$0xff]
  %6021 = vrot.lane.b32.xlu0 %v5965, 18
  %v6022 = vpop.permute.xlu0 %6021
  %6023 = vrot.lane.b32.xlu0 %v5966, 18
  %v6024 = vpop.permute.xlu0 %6023
  %6025 = vrot.lane.b32.xlu0 %v5967, 18
  %v6026 = vpop.permute.xlu0 %6025
  %6027 = vrot.lane.b32.xlu0 %v5968, 18
  %v6028 = vpop.permute.xlu0 %6027
  %6029 = vrot.lane.b32.xlu0 %v5969, 18
  %v6030 = vpop.permute.xlu0 %6029
  %6031 = vrot.lane.b32.xlu0 %v5970, 18
  %v6032 = vpop.permute.xlu0 %6031
  %6033 = vrot.lane.b32.xlu0 %v5971, 18
  %v6034 = vpop.permute.xlu0 %6033
  %6035 = vrot.lane.b32.xlu0 %v5972, 18
  %v6036 = vpop.permute.xlu0 %6035
  %6037 = vrot.lane.b32.xlu0 %v5973, 18
  %v6038 = vpop.permute.xlu0 %6037
  %6039 = vrot.lane.b32.xlu0 %v5974, 18
  %v6040 = vpop.permute.xlu0 %6039
  %6041 = vrot.lane.b32.xlu0 %v5975, 18
  %v6042 = vpop.permute.xlu0 %6041
  %6043 = vrot.lane.b32.xlu0 %v5976, 18
  %v6044 = vpop.permute.xlu0 %6043
  %6045 = vrot.lane.b32.xlu0 %v5977, 18
  %v6046 = vpop.permute.xlu0 %6045
  %6047 = vrot.lane.b32.xlu0 %v5978, 18
  %v6048 = vpop.permute.xlu0 %6047
  %6049 = vrot.lane.b32.xlu0 %v5979, 18
  %v6050 = vpop.permute.xlu0 %6049
  %6051 = vrot.lane.b32.xlu0 %v5980, 18
  %v6052 = vpop.permute.xlu0 %6051
  %6053 = vrot.lane.b32.xlu0 %v5981, 18
  %v6054 = vpop.permute.xlu0 %6053
  %6055 = vrot.lane.b32.xlu0 %v5982, 18
  %v6056 = vpop.permute.xlu0 %6055
  %6057 = vrot.lane.b32.xlu0 %v5983, 18
  %v6058 = vpop.permute.xlu0 %6057
  %6059 = vrot.lane.b32.xlu0 %v5984, 18
  %v6060 = vpop.permute.xlu0 %6059
  %6061 = vrot.lane.b32.xlu0 %v5985, 18
  %v6062 = vpop.permute.xlu0 %6061
  %6063 = vrot.lane.b32.xlu0 %v5986, 18
  %v6064 = vpop.permute.xlu0 %6063
  %6065 = vrot.lane.b32.xlu0 %v5987, 18
  %v6066 = vpop.permute.xlu0 %6065
  %6067 = vrot.lane.b32.xlu0 %v5988, 18
  %v6068 = vpop.permute.xlu0 %6067
  %6069 = vrot.lane.b32.xlu0 %v5989, 18
  %v6070 = vpop.permute.xlu0 %6069
  %6071 = vrot.lane.b32.xlu0 %v5990, 18
  %v6072 = vpop.permute.xlu0 %6071
  %6073 = vrot.lane.b32.xlu0 %v5991, 18
  %v6074 = vpop.permute.xlu0 %6073
  %6075 = vrot.lane.b32.xlu0 %v5992, 18
  %v6076 = vpop.permute.xlu0 %6075
  %v6077 = vsel %vm1244, %v6022, %v6024
  %v6078 = vsel %vm1244, %v6024, %v6026
  %v6079 = vsel %vm1244, %v6026, %v6028
  %v6080 = vsel %vm1244, %v6028, %v6030
  %v6081 = vsel %vm1244, %v6030, %v6032
  %v6082 = vsel %vm1244, %v6032, %v6034
  %v6083 = vsel %vm1244, %v6036, %v6038
  %v6084 = vsel %vm1244, %v6038, %v6040
  %v6085 = vsel %vm1244, %v6040, %v6042
  %v6086 = vsel %vm1244, %v6042, %v6044
  %v6087 = vsel %vm1244, %v6044, %v6046
  %v6088 = vsel %vm1244, %v6046, %v6048
  %v6089 = vsel %vm1244, %v6050, %v6052
  %v6090 = vsel %vm1244, %v6052, %v6054
  %v6091 = vsel %vm1244, %v6054, %v6056
  %v6092 = vsel %vm1244, %v6056, %v6058
  %v6093 = vsel %vm1244, %v6058, %v6060
  %v6094 = vsel %vm1244, %v6060, %v6062
  %v6095 = vsel %vm1244, %v6064, %v6066
  %v6096 = vsel %vm1244, %v6066, %v6068
  %v6097 = vsel %vm1244, %v6068, %v6070
  %v6098 = vsel %vm1244, %v6070, %v6072
  %v6099 = vsel %vm1244, %v6072, %v6074
  %v6100 = vsel %vm1244, %v6074, %v6076
  %6125 = vst [vmem:[#allocation4 + $0xc0] sm:$0xff] %v6077
  %6126 = vst [vmem:[#allocation4 + $0xc8] sm:$0xff] %v6078
  %6127 = vst [vmem:[#allocation4 + $0xd0] sm:$0xff] %v6079
  %6128 = vst [vmem:[#allocation4 + $0xd8] sm:$0xff] %v6080
  %6129 = vst [vmem:[#allocation4 + $0xe0] sm:$0xff] %v6081
  %6130 = vst [vmem:[#allocation4 + $0xe8] sm:$0xff] %v6082
  %6131 = vst [vmem:[#allocation4 + $0xf0] sm:$0xff] %v6083
  %6132 = vst [vmem:[#allocation4 + $0xf8] sm:$0xff] %v6084
  %6133 = vst [vmem:[#allocation4 + $0x100] sm:$0xff] %v6085
  %6134 = vst [vmem:[#allocation4 + $0x108] sm:$0xff] %v6086
  %6135 = vst [vmem:[#allocation4 + $0x110] sm:$0xff] %v6087
  %6136 = vst [vmem:[#allocation4 + $0x118] sm:$0xff] %v6088
  %6137 = vst [vmem:[#allocation4 + $0x120] sm:$0xff] %v6089
  %6138 = vst [vmem:[#allocation4 + $0x128] sm:$0xff] %v6090
  %6139 = vst [vmem:[#allocation4 + $0x130] sm:$0xff] %v6091
  %6140 = vst [vmem:[#allocation4 + $0x138] sm:$0xff] %v6092
  %6141 = vst [vmem:[#allocation4 + $0x140] sm:$0xff] %v6093
  %6142 = vst [vmem:[#allocation4 + $0x148] sm:$0xff] %v6094
  %6143 = vst [vmem:[#allocation4 + $0x150] sm:$0xff] %v6095
  %6144 = vst [vmem:[#allocation4 + $0x158] sm:$0xff] %v6096
  %6145 = vst [vmem:[#allocation4 + $0x160] sm:$0xff] %v6097
  %6146 = vst [vmem:[#allocation4 + $0x168] sm:$0xff] %v6098
  %6147 = vst [vmem:[#allocation4 + $0x170] sm:$0xff] %v6099
  %6148 = vst [vmem:[#allocation4 + $0x178] sm:$0xff] %v6100
  %v6149 = vld [vmem:[#allocation2] sm:$0xff]
  %v6150 = vld [vmem:[#allocation2 + $0x8] sm:$0xff]
  %v6151 = vld [vmem:[#allocation2 + $0x10] sm:$0xff]
  %v6152 = vld [vmem:[#allocation2 + $0x18] sm:$0xff]
  %v6153 = vld [vmem:[#allocation2 + $0x20] sm:$0xff]
  %v6154 = vld [vmem:[#allocation2 + $0x28] sm:$0xff]
  %v6155 = vld [vmem:[#allocation2 + $0x30] sm:$0xff]
  %v6156 = vld [vmem:[#allocation2 + $0x40] sm:$0xff]
  %v6157 = vld [vmem:[#allocation2 + $0x48] sm:$0xff]
  %v6158 = vld [vmem:[#allocation2 + $0x50] sm:$0xff]
  %v6159 = vld [vmem:[#allocation2 + $0x58] sm:$0xff]
  %v6160 = vld [vmem:[#allocation2 + $0x60] sm:$0xff]
  %v6161 = vld [vmem:[#allocation2 + $0x68] sm:$0xff]
  %v6162 = vld [vmem:[#allocation2 + $0x70] sm:$0xff]
  %v6163 = vld [vmem:[#allocation2 + $0x80] sm:$0xff]
  %v6164 = vld [vmem:[#allocation2 + $0x88] sm:$0xff]
  %v6165 = vld [vmem:[#allocation2 + $0x90] sm:$0xff]
  %v6166 = vld [vmem:[#allocation2 + $0x98] sm:$0xff]
  %v6167 = vld [vmem:[#allocation2 + $0xa0] sm:$0xff]
  %v6168 = vld [vmem:[#allocation2 + $0xa8] sm:$0xff]
  %v6169 = vld [vmem:[#allocation2 + $0xb0] sm:$0xff]
  %v6170 = vld [vmem:[#allocation2 + $0xc0] sm:$0xff]
  %v6171 = vld [vmem:[#allocation2 + $0xc8] sm:$0xff]
  %v6172 = vld [vmem:[#allocation2 + $0xd0] sm:$0xff]
  %v6173 = vld [vmem:[#allocation2 + $0xd8] sm:$0xff]
  %v6174 = vld [vmem:[#allocation2 + $0xe0] sm:$0xff]
  %v6175 = vld [vmem:[#allocation2 + $0xe8] sm:$0xff]
  %v6176 = vld [vmem:[#allocation2 + $0xf0] sm:$0xff]
  %6205 = vrot.lane.b32.xlu0 %v6149, 17
  %v6206 = vpop.permute.xlu0 %6205
  %6207 = vrot.lane.b32.xlu0 %v6150, 17
  %v6208 = vpop.permute.xlu0 %6207
  %6209 = vrot.lane.b32.xlu0 %v6151, 17
  %v6210 = vpop.permute.xlu0 %6209
  %6211 = vrot.lane.b32.xlu0 %v6152, 17
  %v6212 = vpop.permute.xlu0 %6211
  %6213 = vrot.lane.b32.xlu0 %v6153, 17
  %v6214 = vpop.permute.xlu0 %6213
  %6215 = vrot.lane.b32.xlu0 %v6154, 17
  %v6216 = vpop.permute.xlu0 %6215
  %6217 = vrot.lane.b32.xlu0 %v6155, 17
  %v6218 = vpop.permute.xlu0 %6217
  %6219 = vrot.lane.b32.xlu0 %v6156, 17
  %v6220 = vpop.permute.xlu0 %6219
  %6221 = vrot.lane.b32.xlu0 %v6157, 17
  %v6222 = vpop.permute.xlu0 %6221
  %6223 = vrot.lane.b32.xlu0 %v6158, 17
  %v6224 = vpop.permute.xlu0 %6223
  %6225 = vrot.lane.b32.xlu0 %v6159, 17
  %v6226 = vpop.permute.xlu0 %6225
  %6227 = vrot.lane.b32.xlu0 %v6160, 17
  %v6228 = vpop.permute.xlu0 %6227
  %6229 = vrot.lane.b32.xlu0 %v6161, 17
  %v6230 = vpop.permute.xlu0 %6229
  %6231 = vrot.lane.b32.xlu0 %v6162, 17
  %v6232 = vpop.permute.xlu0 %6231
  %6233 = vrot.lane.b32.xlu0 %v6163, 17
  %v6234 = vpop.permute.xlu0 %6233
  %6235 = vrot.lane.b32.xlu0 %v6164, 17
  %v6236 = vpop.permute.xlu0 %6235
  %6237 = vrot.lane.b32.xlu0 %v6165, 17
  %v6238 = vpop.permute.xlu0 %6237
  %6239 = vrot.lane.b32.xlu0 %v6166, 17
  %v6240 = vpop.permute.xlu0 %6239
  %6241 = vrot.lane.b32.xlu0 %v6167, 17
  %v6242 = vpop.permute.xlu0 %6241
  %6243 = vrot.lane.b32.xlu0 %v6168, 17
  %v6244 = vpop.permute.xlu0 %6243
  %6245 = vrot.lane.b32.xlu0 %v6169, 17
  %v6246 = vpop.permute.xlu0 %6245
  %6247 = vrot.lane.b32.xlu0 %v6170, 17
  %v6248 = vpop.permute.xlu0 %6247
  %6249 = vrot.lane.b32.xlu0 %v6171, 17
  %v6250 = vpop.permute.xlu0 %6249
  %6251 = vrot.lane.b32.xlu0 %v6172, 17
  %v6252 = vpop.permute.xlu0 %6251
  %6253 = vrot.lane.b32.xlu0 %v6173, 17
  %v6254 = vpop.permute.xlu0 %6253
  %6255 = vrot.lane.b32.xlu0 %v6174, 17
  %v6256 = vpop.permute.xlu0 %6255
  %6257 = vrot.lane.b32.xlu0 %v6175, 17
  %v6258 = vpop.permute.xlu0 %6257
  %6259 = vrot.lane.b32.xlu0 %v6176, 17
  %v6260 = vpop.permute.xlu0 %6259
  %v6261 = vsel %vm1429, %v6206, %v6208
  %v6262 = vsel %vm1429, %v6208, %v6210
  %v6263 = vsel %vm1429, %v6210, %v6212
  %v6264 = vsel %vm1429, %v6212, %v6214
  %v6265 = vsel %vm1429, %v6214, %v6216
  %v6266 = vsel %vm1429, %v6216, %v6218
  %v6267 = vsel %vm1429, %v6220, %v6222
  %v6268 = vsel %vm1429, %v6222, %v6224
  %v6269 = vsel %vm1429, %v6224, %v6226
  %v6270 = vsel %vm1429, %v6226, %v6228
  %v6271 = vsel %vm1429, %v6228, %v6230
  %v6272 = vsel %vm1429, %v6230, %v6232
  %v6273 = vsel %vm1429, %v6234, %v6236
  %v6274 = vsel %vm1429, %v6236, %v6238
  %v6275 = vsel %vm1429, %v6238, %v6240
  %v6276 = vsel %vm1429, %v6240, %v6242
  %v6277 = vsel %vm1429, %v6242, %v6244
  %v6278 = vsel %vm1429, %v6244, %v6246
  %v6279 = vsel %vm1429, %v6248, %v6250
  %v6280 = vsel %vm1429, %v6250, %v6252
  %v6281 = vsel %vm1429, %v6252, %v6254
  %v6282 = vsel %vm1429, %v6254, %v6256
  %v6283 = vsel %vm1429, %v6256, %v6258
  %v6284 = vsel %vm1429, %v6258, %v6260
  %6309 = vst [vmem:[#allocation4 + $0x180] sm:$0xff] %v6261
  %6310 = vst [vmem:[#allocation4 + $0x188] sm:$0xff] %v6262
  %6311 = vst [vmem:[#allocation4 + $0x190] sm:$0xff] %v6263
  %6312 = vst [vmem:[#allocation4 + $0x198] sm:$0xff] %v6264
  %6313 = vst [vmem:[#allocation4 + $0x1a0] sm:$0xff] %v6265
  %6314 = vst [vmem:[#allocation4 + $0x1a8] sm:$0xff] %v6266
  %6315 = vst [vmem:[#allocation4 + $0x1b0] sm:$0xff] %v6267
  %6316 = vst [vmem:[#allocation4 + $0x1b8] sm:$0xff] %v6268
  %6317 = vst [vmem:[#allocation4 + $0x1c0] sm:$0xff] %v6269
  %6318 = vst [vmem:[#allocation4 + $0x1c8] sm:$0xff] %v6270
  %6319 = vst [vmem:[#allocation4 + $0x1d0] sm:$0xff] %v6271
  %6320 = vst [vmem:[#allocation4 + $0x1d8] sm:$0xff] %v6272
  %6321 = vst [vmem:[#allocation4 + $0x1e0] sm:$0xff] %v6273
  %6322 = vst [vmem:[#allocation4 + $0x1e8] sm:$0xff] %v6274
  %6323 = vst [vmem:[#allocation4 + $0x1f0] sm:$0xff] %v6275
  %6324 = vst [vmem:[#allocation4 + $0x1f8] sm:$0xff] %v6276
  %6325 = vst [vmem:[#allocation4 + $0x200] sm:$0xff] %v6277
  %6326 = vst [vmem:[#allocation4 + $0x208] sm:$0xff] %v6278
  %6327 = vst [vmem:[#allocation4 + $0x210] sm:$0xff] %v6279
  %6328 = vst [vmem:[#allocation4 + $0x218] sm:$0xff] %v6280
  %6329 = vst [vmem:[#allocation4 + $0x220] sm:$0xff] %v6281
  %6330 = vst [vmem:[#allocation4 + $0x228] sm:$0xff] %v6282
  %6331 = vst [vmem:[#allocation4 + $0x230] sm:$0xff] %v6283
  %6332 = vst [vmem:[#allocation4 + $0x238] sm:$0xff] %v6284
  %v6333 = vld [vmem:[#allocation2] sm:$0xff]
  %v6334 = vld [vmem:[#allocation2 + $0x8] sm:$0xff]
  %v6335 = vld [vmem:[#allocation2 + $0x10] sm:$0xff]
  %v6336 = vld [vmem:[#allocation2 + $0x18] sm:$0xff]
  %v6337 = vld [vmem:[#allocation2 + $0x20] sm:$0xff]
  %v6338 = vld [vmem:[#allocation2 + $0x28] sm:$0xff]
  %v6339 = vld [vmem:[#allocation2 + $0x30] sm:$0xff]
  %v6340 = vld [vmem:[#allocation2 + $0x40] sm:$0xff]
  %v6341 = vld [vmem:[#allocation2 + $0x48] sm:$0xff]
  %v6342 = vld [vmem:[#allocation2 + $0x50] sm:$0xff]
  %v6343 = vld [vmem:[#allocation2 + $0x58] sm:$0xff]
  %v6344 = vld [vmem:[#allocation2 + $0x60] sm:$0xff]
  %v6345 = vld [vmem:[#allocation2 + $0x68] sm:$0xff]
  %v6346 = vld [vmem:[#allocation2 + $0x70] sm:$0xff]
  %v6347 = vld [vmem:[#allocation2 + $0x80] sm:$0xff]
  %v6348 = vld [vmem:[#allocation2 + $0x88] sm:$0xff]
  %v6349 = vld [vmem:[#allocation2 + $0x90] sm:$0xff]
  %v6350 = vld [vmem:[#allocation2 + $0x98] sm:$0xff]
  %v6351 = vld [vmem:[#allocation2 + $0xa0] sm:$0xff]
  %v6352 = vld [vmem:[#allocation2 + $0xa8] sm:$0xff]
  %v6353 = vld [vmem:[#allocation2 + $0xb0] sm:$0xff]
  %v6354 = vld [vmem:[#allocation2 + $0xc0] sm:$0xff]
  %v6355 = vld [vmem:[#allocation2 + $0xc8] sm:$0xff]
  %v6356 = vld [vmem:[#allocation2 + $0xd0] sm:$0xff]
  %v6357 = vld [vmem:[#allocation2 + $0xd8] sm:$0xff]
  %v6358 = vld [vmem:[#allocation2 + $0xe0] sm:$0xff]
  %v6359 = vld [vmem:[#allocation2 + $0xe8] sm:$0xff]
  %v6360 = vld [vmem:[#allocation2 + $0xf0] sm:$0xff]
  %6389 = vrot.lane.b32.xlu0 %v6333, 1
  %v6390 = vpop.permute.xlu0 %6389
  %6391 = vrot.lane.b32.xlu0 %v6334, 1
  %v6392 = vpop.permute.xlu0 %6391
  %6393 = vrot.lane.b32.xlu0 %v6335, 1
  %v6394 = vpop.permute.xlu0 %6393
  %6395 = vrot.lane.b32.xlu0 %v6336, 1
  %v6396 = vpop.permute.xlu0 %6395
  %6397 = vrot.lane.b32.xlu0 %v6337, 1
  %v6398 = vpop.permute.xlu0 %6397
  %6399 = vrot.lane.b32.xlu0 %v6338, 1
  %v6400 = vpop.permute.xlu0 %6399
  %6401 = vrot.lane.b32.xlu0 %v6339, 1
  %v6402 = vpop.permute.xlu0 %6401
  %6403 = vrot.lane.b32.xlu0 %v6340, 1
  %v6404 = vpop.permute.xlu0 %6403
  %6405 = vrot.lane.b32.xlu0 %v6341, 1
  %v6406 = vpop.permute.xlu0 %6405
  %6407 = vrot.lane.b32.xlu0 %v6342, 1
  %v6408 = vpop.permute.xlu0 %6407
  %6409 = vrot.lane.b32.xlu0 %v6343, 1
  %v6410 = vpop.permute.xlu0 %6409
  %6411 = vrot.lane.b32.xlu0 %v6344, 1
  %v6412 = vpop.permute.xlu0 %6411
  %6413 = vrot.lane.b32.xlu0 %v6345, 1
  %v6414 = vpop.permute.xlu0 %6413
  %6415 = vrot.lane.b32.xlu0 %v6346, 1
  %v6416 = vpop.permute.xlu0 %6415
  %6417 = vrot.lane.b32.xlu0 %v6347, 1
  %v6418 = vpop.permute.xlu0 %6417
  %6419 = vrot.lane.b32.xlu0 %v6348, 1
  %v6420 = vpop.permute.xlu0 %6419
  %6421 = vrot.lane.b32.xlu0 %v6349, 1
  %v6422 = vpop.permute.xlu0 %6421
  %6423 = vrot.lane.b32.xlu0 %v6350, 1
  %v6424 = vpop.permute.xlu0 %6423
  %6425 = vrot.lane.b32.xlu0 %v6351, 1
  %v6426 = vpop.permute.xlu0 %6425
  %6427 = vrot.lane.b32.xlu0 %v6352, 1
  %v6428 = vpop.permute.xlu0 %6427
  %6429 = vrot.lane.b32.xlu0 %v6353, 1
  %v6430 = vpop.permute.xlu0 %6429
  %6431 = vrot.lane.b32.xlu0 %v6354, 1
  %v6432 = vpop.permute.xlu0 %6431
  %6433 = vrot.lane.b32.xlu0 %v6355, 1
  %v6434 = vpop.permute.xlu0 %6433
  %6435 = vrot.lane.b32.xlu0 %v6356, 1
  %v6436 = vpop.permute.xlu0 %6435
  %6437 = vrot.lane.b32.xlu0 %v6357, 1
  %v6438 = vpop.permute.xlu0 %6437
  %6439 = vrot.lane.b32.xlu0 %v6358, 1
  %v6440 = vpop.permute.xlu0 %6439
  %6441 = vrot.lane.b32.xlu0 %v6359, 1
  %v6442 = vpop.permute.xlu0 %6441
  %6443 = vrot.lane.b32.xlu0 %v6360, 1
  %v6444 = vpop.permute.xlu0 %6443
  %v6445 = vsel %vm1614, %v6390, %v6392
  %v6446 = vsel %vm1614, %v6392, %v6394
  %v6447 = vsel %vm1614, %v6394, %v6396
  %v6448 = vsel %vm1614, %v6396, %v6398
  %v6449 = vsel %vm1614, %v6398, %v6400
  %v6450 = vsel %vm1614, %v6400, %v6402
  %v6451 = vsel %vm1614, %v6404, %v6406
  %v6452 = vsel %vm1614, %v6406, %v6408
  %v6453 = vsel %vm1614, %v6408, %v6410
  %v6454 = vsel %vm1614, %v6410, %v6412
  %v6455 = vsel %vm1614, %v6412, %v6414
  %v6456 = vsel %vm1614, %v6414, %v6416
  %v6457 = vsel %vm1614, %v6418, %v6420
  %v6458 = vsel %vm1614, %v6420, %v6422
  %v6459 = vsel %vm1614, %v6422, %v6424
  %v6460 = vsel %vm1614, %v6424, %v6426
  %v6461 = vsel %vm1614, %v6426, %v6428
  %v6462 = vsel %vm1614, %v6428, %v6430
  %v6463 = vsel %vm1614, %v6432, %v6434
  %v6464 = vsel %vm1614, %v6434, %v6436
  %v6465 = vsel %vm1614, %v6436, %v6438
  %v6466 = vsel %vm1614, %v6438, %v6440
  %v6467 = vsel %vm1614, %v6440, %v6442
  %v6468 = vsel %vm1614, %v6442, %v6444
  %6493 = vst [vmem:[#allocation4 + $0x240] sm:$0xff] %v6445
  %6494 = vst [vmem:[#allocation4 + $0x248] sm:$0xff] %v6446
  %6495 = vst [vmem:[#allocation4 + $0x250] sm:$0xff] %v6447
  %6496 = vst [vmem:[#allocation4 + $0x258] sm:$0xff] %v6448
  %6497 = vst [vmem:[#allocation4 + $0x260] sm:$0xff] %v6449
  %6498 = vst [vmem:[#allocation4 + $0x268] sm:$0xff] %v6450
  %6499 = vst [vmem:[#allocation4 + $0x270] sm:$0xff] %v6451
  %6500 = vst [vmem:[#allocation4 + $0x278] sm:$0xff] %v6452
  %6501 = vst [vmem:[#allocation4 + $0x280] sm:$0xff] %v6453
  %6502 = vst [vmem:[#allocation4 + $0x288] sm:$0xff] %v6454
  %6503 = vst [vmem:[#allocation4 + $0x290] sm:$0xff] %v6455
  %6504 = vst [vmem:[#allocation4 + $0x298] sm:$0xff] %v6456
  %6505 = vst [vmem:[#allocation4 + $0x2a0] sm:$0xff] %v6457
  %6506 = vst [vmem:[#allocation4 + $0x2a8] sm:$0xff] %v6458
  %6507 = vst [vmem:[#allocation4 + $0x2b0] sm:$0xff] %v6459
  %6508 = vst [vmem:[#allocation4 + $0x2b8] sm:$0xff] %v6460
  %6509 = vst [vmem:[#allocation4 + $0x2c0] sm:$0xff] %v6461
  %6510 = vst [vmem:[#allocation4 + $0x2c8] sm:$0xff] %v6462
  %6511 = vst [vmem:[#allocation4 + $0x2d0] sm:$0xff] %v6463
  %6512 = vst [vmem:[#allocation4 + $0x2d8] sm:$0xff] %v6464
  %6513 = vst [vmem:[#allocation4 + $0x2e0] sm:$0xff] %v6465
  %6514 = vst [vmem:[#allocation4 + $0x2e8] sm:$0xff] %v6466
  %6515 = vst [vmem:[#allocation4 + $0x2f0] sm:$0xff] %v6467
  %6516 = vst [vmem:[#allocation4 + $0x2f8] sm:$0xff] %v6468
  %v6517 = vld [vmem:[#allocation2 + $0x8] sm:$0xff]
  %v6518 = vld [vmem:[#allocation2 + $0x10] sm:$0xff]
  %v6519 = vld [vmem:[#allocation2 + $0x18] sm:$0xff]
  %v6520 = vld [vmem:[#allocation2 + $0x20] sm:$0xff]
  %v6521 = vld [vmem:[#allocation2 + $0x28] sm:$0xff]
  %v6522 = vld [vmem:[#allocation2 + $0x30] sm:$0xff]
  %v6523 = vld [vmem:[#allocation2 + $0x48] sm:$0xff]
  %v6524 = vld [vmem:[#allocation2 + $0x50] sm:$0xff]
  %v6525 = vld [vmem:[#allocation2 + $0x58] sm:$0xff]
  %v6526 = vld [vmem:[#allocation2 + $0x60] sm:$0xff]
  %v6527 = vld [vmem:[#allocation2 + $0x68] sm:$0xff]
  %v6528 = vld [vmem:[#allocation2 + $0x70] sm:$0xff]
  %v6529 = vld [vmem:[#allocation2 + $0x88] sm:$0xff]
  %v6530 = vld [vmem:[#allocation2 + $0x90] sm:$0xff]
  %v6531 = vld [vmem:[#allocation2 + $0x98] sm:$0xff]
  %v6532 = vld [vmem:[#allocation2 + $0xa0] sm:$0xff]
  %v6533 = vld [vmem:[#allocation2 + $0xa8] sm:$0xff]
  %v6534 = vld [vmem:[#allocation2 + $0xb0] sm:$0xff]
  %v6535 = vld [vmem:[#allocation2 + $0xc8] sm:$0xff]
  %v6536 = vld [vmem:[#allocation2 + $0xd0] sm:$0xff]
  %v6537 = vld [vmem:[#allocation2 + $0xd8] sm:$0xff]
  %v6538 = vld [vmem:[#allocation2 + $0xe0] sm:$0xff]
  %v6539 = vld [vmem:[#allocation2 + $0xe8] sm:$0xff]
  %v6540 = vld [vmem:[#allocation2 + $0xf0] sm:$0xff]
  %6541 = vst [vmem:[#allocation4 + $0x300] sm:$0xff] %v6517
  %6542 = vst [vmem:[#allocation4 + $0x308] sm:$0xff] %v6518
  %6543 = vst [vmem:[#allocation4 + $0x310] sm:$0xff] %v6519
  %6544 = vst [vmem:[#allocation4 + $0x318] sm:$0xff] %v6520
  %6545 = vst [vmem:[#allocation4 + $0x320] sm:$0xff] %v6521
  %6546 = vst [vmem:[#allocation4 + $0x328] sm:$0xff] %v6522
  %6547 = vst [vmem:[#allocation4 + $0x330] sm:$0xff] %v6523
  %6548 = vst [vmem:[#allocation4 + $0x338] sm:$0xff] %v6524
  %6549 = vst [vmem:[#allocation4 + $0x340] sm:$0xff] %v6525
  %6550 = vst [vmem:[#allocation4 + $0x348] sm:$0xff] %v6526
  %6551 = vst [vmem:[#allocation4 + $0x350] sm:$0xff] %v6527
  %6552 = vst [vmem:[#allocation4 + $0x358] sm:$0xff] %v6528
  %6553 = vst [vmem:[#allocation4 + $0x360] sm:$0xff] %v6529
  %6554 = vst [vmem:[#allocation4 + $0x368] sm:$0xff] %v6530
  %6555 = vst [vmem:[#allocation4 + $0x370] sm:$0xff] %v6531
  %6556 = vst [vmem:[#allocation4 + $0x378] sm:$0xff] %v6532
  %6557 = vst [vmem:[#allocation4 + $0x380] sm:$0xff] %v6533
  %6558 = vst [vmem:[#allocation4 + $0x388] sm:$0xff] %v6534
  %6559 = vst [vmem:[#allocation4 + $0x390] sm:$0xff] %v6535
  %6560 = vst [vmem:[#allocation4 + $0x398] sm:$0xff] %v6536
  %6561 = vst [vmem:[#allocation4 + $0x3a0] sm:$0xff] %v6537
  %6562 = vst [vmem:[#allocation4 + $0x3a8] sm:$0xff] %v6538
  %6563 = vst [vmem:[#allocation4 + $0x3b0] sm:$0xff] %v6539
  %6564 = vst [vmem:[#allocation4 + $0x3b8] sm:$0xff] %v6540
  %v6565 = vld [vmem:[#allocation2 + $0x8] sm:$0xff]
  %v6566 = vld [vmem:[#allocation2 + $0x10] sm:$0xff]
  %v6567 = vld [vmem:[#allocation2 + $0x18] sm:$0xff]
  %v6568 = vld [vmem:[#allocation2 + $0x20] sm:$0xff]
  %v6569 = vld [vmem:[#allocation2 + $0x28] sm:$0xff]
  %v6570 = vld [vmem:[#allocation2 + $0x30] sm:$0xff]
  %v6571 = vld [vmem:[#allocation2 + $0x38] sm:$0xff]
  %v6572 = vld [vmem:[#allocation2 + $0x48] sm:$0xff]
  %v6573 = vld [vmem:[#allocation2 + $0x50] sm:$0xff]
  %v6574 = vld [vmem:[#allocation2 + $0x58] sm:$0xff]
  %v6575 = vld [vmem:[#allocation2 + $0x60] sm:$0xff]
  %v6576 = vld [vmem:[#allocation2 + $0x68] sm:$0xff]
  %v6577 = vld [vmem:[#allocation2 + $0x70] sm:$0xff]
  %v6578 = vld [vmem:[#allocation2 + $0x78] sm:$0xff]
  %v6579 = vld [vmem:[#allocation2 + $0x88] sm:$0xff]
  %v6580 = vld [vmem:[#allocation2 + $0x90] sm:$0xff]
  %v6581 = vld [vmem:[#allocation2 + $0x98] sm:$0xff]
  %v6582 = vld [vmem:[#allocation2 + $0xa0] sm:$0xff]
  %v6583 = vld [vmem:[#allocation2 + $0xa8] sm:$0xff]
  %v6584 = vld [vmem:[#allocation2 + $0xb0] sm:$0xff]
  %v6585 = vld [vmem:[#allocation2 + $0xb8] sm:$0xff]
  %v6586 = vld [vmem:[#allocation2 + $0xc8] sm:$0xff]
  %v6587 = vld [vmem:[#allocation2 + $0xd0] sm:$0xff]
  %v6588 = vld [vmem:[#allocation2 + $0xd8] sm:$0xff]
  %v6589 = vld [vmem:[#allocation2 + $0xe0] sm:$0xff]
  %v6590 = vld [vmem:[#allocation2 + $0xe8] sm:$0xff]
  %v6591 = vld [vmem:[#allocation2 + $0xf0] sm:$0xff]
  %v6592 = vld [vmem:[#allocation2 + $0xf8] sm:$0xff]
  %6621 = vrot.lane.b32.xlu0 %v6565, 127
  %v6622 = vpop.permute.xlu0 %6621
  %6623 = vrot.lane.b32.xlu0 %v6566, 127
  %v6624 = vpop.permute.xlu0 %6623
  %6625 = vrot.lane.b32.xlu0 %v6567, 127
  %v6626 = vpop.permute.xlu0 %6625
  %6627 = vrot.lane.b32.xlu0 %v6568, 127
  %v6628 = vpop.permute.xlu0 %6627
  %6629 = vrot.lane.b32.xlu0 %v6569, 127
  %v6630 = vpop.permute.xlu0 %6629
  %6631 = vrot.lane.b32.xlu0 %v6570, 127
  %v6632 = vpop.permute.xlu0 %6631
  %6633 = vrot.lane.b32.xlu0 %v6571, 127
  %v6634 = vpop.permute.xlu0 %6633
  %6635 = vrot.lane.b32.xlu0 %v6572, 127
  %v6636 = vpop.permute.xlu0 %6635
  %6637 = vrot.lane.b32.xlu0 %v6573, 127
  %v6638 = vpop.permute.xlu0 %6637
  %6639 = vrot.lane.b32.xlu0 %v6574, 127
  %v6640 = vpop.permute.xlu0 %6639
  %6641 = vrot.lane.b32.xlu0 %v6575, 127
  %v6642 = vpop.permute.xlu0 %6641
  %6643 = vrot.lane.b32.xlu0 %v6576, 127
  %v6644 = vpop.permute.xlu0 %6643
  %6645 = vrot.lane.b32.xlu0 %v6577, 127
  %v6646 = vpop.permute.xlu0 %6645
  %6647 = vrot.lane.b32.xlu0 %v6578, 127
  %v6648 = vpop.permute.xlu0 %6647
  %6649 = vrot.lane.b32.xlu0 %v6579, 127
  %v6650 = vpop.permute.xlu0 %6649
  %6651 = vrot.lane.b32.xlu0 %v6580, 127
  %v6652 = vpop.permute.xlu0 %6651
  %6653 = vrot.lane.b32.xlu0 %v6581, 127
  %v6654 = vpop.permute.xlu0 %6653
  %6655 = vrot.lane.b32.xlu0 %v6582, 127
  %v6656 = vpop.permute.xlu0 %6655
  %6657 = vrot.lane.b32.xlu0 %v6583, 127
  %v6658 = vpop.permute.xlu0 %6657
  %6659 = vrot.lane.b32.xlu0 %v6584, 127
  %v6660 = vpop.permute.xlu0 %6659
  %6661 = vrot.lane.b32.xlu0 %v6585, 127
  %v6662 = vpop.permute.xlu0 %6661
  %6663 = vrot.lane.b32.xlu0 %v6586, 127
  %v6664 = vpop.permute.xlu0 %6663
  %6665 = vrot.lane.b32.xlu0 %v6587, 127
  %v6666 = vpop.permute.xlu0 %6665
  %6667 = vrot.lane.b32.xlu0 %v6588, 127
  %v6668 = vpop.permute.xlu0 %6667
  %6669 = vrot.lane.b32.xlu0 %v6589, 127
  %v6670 = vpop.permute.xlu0 %6669
  %6671 = vrot.lane.b32.xlu0 %v6590, 127
  %v6672 = vpop.permute.xlu0 %6671
  %6673 = vrot.lane.b32.xlu0 %v6591, 127
  %v6674 = vpop.permute.xlu0 %6673
  %6675 = vrot.lane.b32.xlu0 %v6592, 127
  %v6676 = vpop.permute.xlu0 %6675
  %v6677 = vsel %vm137, %v6622, %v6624
  %v6678 = vsel %vm137, %v6624, %v6626
  %v6679 = vsel %vm137, %v6626, %v6628
  %v6680 = vsel %vm137, %v6628, %v6630
  %v6681 = vsel %vm137, %v6630, %v6632
  %v6682 = vsel %vm137, %v6632, %v6634
  %v6683 = vsel %vm137, %v6636, %v6638
  %v6684 = vsel %vm137, %v6638, %v6640
  %v6685 = vsel %vm137, %v6640, %v6642
  %v6686 = vsel %vm137, %v6642, %v6644
  %v6687 = vsel %vm137, %v6644, %v6646
  %v6688 = vsel %vm137, %v6646, %v6648
  %v6689 = vsel %vm137, %v6650, %v6652
  %v6690 = vsel %vm137, %v6652, %v6654
  %v6691 = vsel %vm137, %v6654, %v6656
  %v6692 = vsel %vm137, %v6656, %v6658
  %v6693 = vsel %vm137, %v6658, %v6660
  %v6694 = vsel %vm137, %v6660, %v6662
  %v6695 = vsel %vm137, %v6664, %v6666
  %v6696 = vsel %vm137, %v6666, %v6668
  %v6697 = vsel %vm137, %v6668, %v6670
  %v6698 = vsel %vm137, %v6670, %v6672
  %v6699 = vsel %vm137, %v6672, %v6674
  %v6700 = vsel %vm137, %v6674, %v6676
  %6725 = vst [vmem:[#allocation4 + $0x3c0] sm:$0xff] %v6677
  %6726 = vst [vmem:[#allocation4 + $0x3c8] sm:$0xff] %v6678
  %6727 = vst [vmem:[#allocation4 + $0x3d0] sm:$0xff] %v6679
  %6728 = vst [vmem:[#allocation4 + $0x3d8] sm:$0xff] %v6680
  %6729 = vst [vmem:[#allocation4 + $0x3e0] sm:$0xff] %v6681
  %6730 = vst [vmem:[#allocation4 + $0x3e8] sm:$0xff] %v6682
  %6731 = vst [vmem:[#allocation4 + $0x3f0] sm:$0xff] %v6683
  %6732 = vst [vmem:[#allocation4 + $0x3f8] sm:$0xff] %v6684
  %6733 = vst [vmem:[#allocation4 + $0x400] sm:$0xff] %v6685
  %6734 = vst [vmem:[#allocation4 + $0x408] sm:$0xff] %v6686
  %6735 = vst [vmem:[#allocation4 + $0x410] sm:$0xff] %v6687
  %6736 = vst [vmem:[#allocation4 + $0x418] sm:$0xff] %v6688
  %6737 = vst [vmem:[#allocation4 + $0x420] sm:$0xff] %v6689
  %6738 = vst [vmem:[#allocation4 + $0x428] sm:$0xff] %v6690
  %6739 = vst [vmem:[#allocation4 + $0x430] sm:$0xff] %v6691
  %6740 = vst [vmem:[#allocation4 + $0x438] sm:$0xff] %v6692
  %6741 = vst [vmem:[#allocation4 + $0x440] sm:$0xff] %v6693
  %6742 = vst [vmem:[#allocation4 + $0x448] sm:$0xff] %v6694
  %6743 = vst [vmem:[#allocation4 + $0x450] sm:$0xff] %v6695
  %6744 = vst [vmem:[#allocation4 + $0x458] sm:$0xff] %v6696
  %6745 = vst [vmem:[#allocation4 + $0x460] sm:$0xff] %v6697
  %6746 = vst [vmem:[#allocation4 + $0x468] sm:$0xff] %v6698
  %6747 = vst [vmem:[#allocation4 + $0x470] sm:$0xff] %v6699
  %6748 = vst [vmem:[#allocation4 + $0x478] sm:$0xff] %v6700
  %v6749 = vld [vmem:[#allocation2 + $0x8] sm:$0xff]
  %v6750 = vld [vmem:[#allocation2 + $0x10] sm:$0xff]
  %v6751 = vld [vmem:[#allocation2 + $0x18] sm:$0xff]
  %v6752 = vld [vmem:[#allocation2 + $0x20] sm:$0xff]
  %v6753 = vld [vmem:[#allocation2 + $0x28] sm:$0xff]
  %v6754 = vld [vmem:[#allocation2 + $0x30] sm:$0xff]
  %v6755 = vld [vmem:[#allocation2 + $0x38] sm:$0xff]
  %v6756 = vld [vmem:[#allocation2 + $0x48] sm:$0xff]
  %v6757 = vld [vmem:[#allocation2 + $0x50] sm:$0xff]
  %v6758 = vld [vmem:[#allocation2 + $0x58] sm:$0xff]
  %v6759 = vld [vmem:[#allocation2 + $0x60] sm:$0xff]
  %v6760 = vld [vmem:[#allocation2 + $0x68] sm:$0xff]
  %v6761 = vld [vmem:[#allocation2 + $0x70] sm:$0xff]
  %v6762 = vld [vmem:[#allocation2 + $0x78] sm:$0xff]
  %v6763 = vld [vmem:[#allocation2 + $0x88] sm:$0xff]
  %v6764 = vld [vmem:[#allocation2 + $0x90] sm:$0xff]
  %v6765 = vld [vmem:[#allocation2 + $0x98] sm:$0xff]
  %v6766 = vld [vmem:[#allocation2 + $0xa0] sm:$0xff]
  %v6767 = vld [vmem:[#allocation2 + $0xa8] sm:$0xff]
  %v6768 = vld [vmem:[#allocation2 + $0xb0] sm:$0xff]
  %v6769 = vld [vmem:[#allocation2 + $0xb8] sm:$0xff]
  %v6770 = vld [vmem:[#allocation2 + $0xc8] sm:$0xff]
  %v6771 = vld [vmem:[#allocation2 + $0xd0] sm:$0xff]
  %v6772 = vld [vmem:[#allocation2 + $0xd8] sm:$0xff]
  %v6773 = vld [vmem:[#allocation2 + $0xe0] sm:$0xff]
  %v6774 = vld [vmem:[#allocation2 + $0xe8] sm:$0xff]
  %v6775 = vld [vmem:[#allocation2 + $0xf0] sm:$0xff]
  %v6776 = vld [vmem:[#allocation2 + $0xf8] sm:$0xff]
  %6805 = vrot.lane.b32.xlu0 %v6749, 111
  %v6806 = vpop.permute.xlu0 %6805
  %6807 = vrot.lane.b32.xlu0 %v6750, 111
  %v6808 = vpop.permute.xlu0 %6807
  %6809 = vrot.lane.b32.xlu0 %v6751, 111
  %v6810 = vpop.permute.xlu0 %6809
  %6811 = vrot.lane.b32.xlu0 %v6752, 111
  %v6812 = vpop.permute.xlu0 %6811
  %6813 = vrot.lane.b32.xlu0 %v6753, 111
  %v6814 = vpop.permute.xlu0 %6813
  %6815 = vrot.lane.b32.xlu0 %v6754, 111
  %v6816 = vpop.permute.xlu0 %6815
  %6817 = vrot.lane.b32.xlu0 %v6755, 111
  %v6818 = vpop.permute.xlu0 %6817
  %6819 = vrot.lane.b32.xlu0 %v6756, 111
  %v6820 = vpop.permute.xlu0 %6819
  %6821 = vrot.lane.b32.xlu0 %v6757, 111
  %v6822 = vpop.permute.xlu0 %6821
  %6823 = vrot.lane.b32.xlu0 %v6758, 111
  %v6824 = vpop.permute.xlu0 %6823
  %6825 = vrot.lane.b32.xlu0 %v6759, 111
  %v6826 = vpop.permute.xlu0 %6825
  %6827 = vrot.lane.b32.xlu0 %v6760, 111
  %v6828 = vpop.permute.xlu0 %6827
  %6829 = vrot.lane.b32.xlu0 %v6761, 111
  %v6830 = vpop.permute.xlu0 %6829
  %6831 = vrot.lane.b32.xlu0 %v6762, 111
  %v6832 = vpop.permute.xlu0 %6831
  %6833 = vrot.lane.b32.xlu0 %v6763, 111
  %v6834 = vpop.permute.xlu0 %6833
  %6835 = vrot.lane.b32.xlu0 %v6764, 111
  %v6836 = vpop.permute.xlu0 %6835
  %6837 = vrot.lane.b32.xlu0 %v6765, 111
  %v6838 = vpop.permute.xlu0 %6837
  %6839 = vrot.lane.b32.xlu0 %v6766, 111
  %v6840 = vpop.permute.xlu0 %6839
  %6841 = vrot.lane.b32.xlu0 %v6767, 111
  %v6842 = vpop.permute.xlu0 %6841
  %6843 = vrot.lane.b32.xlu0 %v6768, 111
  %v6844 = vpop.permute.xlu0 %6843
  %6845 = vrot.lane.b32.xlu0 %v6769, 111
  %v6846 = vpop.permute.xlu0 %6845
  %6847 = vrot.lane.b32.xlu0 %v6770, 111
  %v6848 = vpop.permute.xlu0 %6847
  %6849 = vrot.lane.b32.xlu0 %v6771, 111
  %v6850 = vpop.permute.xlu0 %6849
  %6851 = vrot.lane.b32.xlu0 %v6772, 111
  %v6852 = vpop.permute.xlu0 %6851
  %6853 = vrot.lane.b32.xlu0 %v6773, 111
  %v6854 = vpop.permute.xlu0 %6853
  %6855 = vrot.lane.b32.xlu0 %v6774, 111
  %v6856 = vpop.permute.xlu0 %6855
  %6857 = vrot.lane.b32.xlu0 %v6775, 111
  %v6858 = vpop.permute.xlu0 %6857
  %6859 = vrot.lane.b32.xlu0 %v6776, 111
  %v6860 = vpop.permute.xlu0 %6859
  %v6861 = vsel %vm2031, %v6806, %v6808
  %v6862 = vsel %vm2031, %v6808, %v6810
  %v6863 = vsel %vm2031, %v6810, %v6812
  %v6864 = vsel %vm2031, %v6812, %v6814
  %v6865 = vsel %vm2031, %v6814, %v6816
  %v6866 = vsel %vm2031, %v6816, %v6818
  %v6867 = vsel %vm2031, %v6820, %v6822
  %v6868 = vsel %vm2031, %v6822, %v6824
  %v6869 = vsel %vm2031, %v6824, %v6826
  %v6870 = vsel %vm2031, %v6826, %v6828
  %v6871 = vsel %vm2031, %v6828, %v6830
  %v6872 = vsel %vm2031, %v6830, %v6832
  %v6873 = vsel %vm2031, %v6834, %v6836
  %v6874 = vsel %vm2031, %v6836, %v6838
  %v6875 = vsel %vm2031, %v6838, %v6840
  %v6876 = vsel %vm2031, %v6840, %v6842
  %v6877 = vsel %vm2031, %v6842, %v6844
  %v6878 = vsel %vm2031, %v6844, %v6846
  %v6879 = vsel %vm2031, %v6848, %v6850
  %v6880 = vsel %vm2031, %v6850, %v6852
  %v6881 = vsel %vm2031, %v6852, %v6854
  %v6882 = vsel %vm2031, %v6854, %v6856
  %v6883 = vsel %vm2031, %v6856, %v6858
  %v6884 = vsel %vm2031, %v6858, %v6860
  %6909 = vst [vmem:[#allocation4 + $0x480] sm:$0xff] %v6861
  %6910 = vst [vmem:[#allocation4 + $0x488] sm:$0xff] %v6862
  %6911 = vst [vmem:[#allocation4 + $0x490] sm:$0xff] %v6863
  %6912 = vst [vmem:[#allocation4 + $0x498] sm:$0xff] %v6864
  %6913 = vst [vmem:[#allocation4 + $0x4a0] sm:$0xff] %v6865
  %6914 = vst [vmem:[#allocation4 + $0x4a8] sm:$0xff] %v6866
  %6915 = vst [vmem:[#allocation4 + $0x4b0] sm:$0xff] %v6867
  %6916 = vst [vmem:[#allocation4 + $0x4b8] sm:$0xff] %v6868
  %6917 = vst [vmem:[#allocation4 + $0x4c0] sm:$0xff] %v6869
  %6918 = vst [vmem:[#allocation4 + $0x4c8] sm:$0xff] %v6870
  %6919 = vst [vmem:[#allocation4 + $0x4d0] sm:$0xff] %v6871
  %6920 = vst [vmem:[#allocation4 + $0x4d8] sm:$0xff] %v6872
  %6921 = vst [vmem:[#allocation4 + $0x4e0] sm:$0xff] %v6873
  %6922 = vst [vmem:[#allocation4 + $0x4e8] sm:$0xff] %v6874
  %6923 = vst [vmem:[#allocation4 + $0x4f0] sm:$0xff] %v6875
  %6924 = vst [vmem:[#allocation4 + $0x4f8] sm:$0xff] %v6876
  %6925 = vst [vmem:[#allocation4 + $0x500] sm:$0xff] %v6877
  %6926 = vst [vmem:[#allocation4 + $0x508] sm:$0xff] %v6878
  %6927 = vst [vmem:[#allocation4 + $0x510] sm:$0xff] %v6879
  %6928 = vst [vmem:[#allocation4 + $0x518] sm:$0xff] %v6880
  %6929 = vst [vmem:[#allocation4 + $0x520] sm:$0xff] %v6881
  %6930 = vst [vmem:[#allocation4 + $0x528] sm:$0xff] %v6882
  %6931 = vst [vmem:[#allocation4 + $0x530] sm:$0xff] %v6883
  %6932 = vst [vmem:[#allocation4 + $0x538] sm:$0xff] %v6884
  %v6933 = vld [vmem:[#allocation2 + $0x8] sm:$0xff]
  %v6934 = vld [vmem:[#allocation2 + $0x10] sm:$0xff]
  %v6935 = vld [vmem:[#allocation2 + $0x18] sm:$0xff]
  %v6936 = vld [vmem:[#allocation2 + $0x20] sm:$0xff]
  %v6937 = vld [vmem:[#allocation2 + $0x28] sm:$0xff]
  %v6938 = vld [vmem:[#allocation2 + $0x30] sm:$0xff]
  %v6939 = vld [vmem:[#allocation2 + $0x38] sm:$0xff]
  %v6940 = vld [vmem:[#allocation2 + $0x48] sm:$0xff]
  %v6941 = vld [vmem:[#allocation2 + $0x50] sm:$0xff]
  %v6942 = vld [vmem:[#allocation2 + $0x58] sm:$0xff]
  %v6943 = vld [vmem:[#allocation2 + $0x60] sm:$0xff]
  %v6944 = vld [vmem:[#allocation2 + $0x68] sm:$0xff]
  %v6945 = vld [vmem:[#allocation2 + $0x70] sm:$0xff]
  %v6946 = vld [vmem:[#allocation2 + $0x78] sm:$0xff]
  %v6947 = vld [vmem:[#allocation2 + $0x88] sm:$0xff]
  %v6948 = vld [vmem:[#allocation2 + $0x90] sm:$0xff]
  %v6949 = vld [vmem:[#allocation2 + $0x98] sm:$0xff]
  %v6950 = vld [vmem:[#allocation2 + $0xa0] sm:$0xff]
  %v6951 = vld [vmem:[#allocation2 + $0xa8] sm:$0xff]
  %v6952 = vld [vmem:[#allocation2 + $0xb0] sm:$0xff]
  %v6953 = vld [vmem:[#allocation2 + $0xb8] sm:$0xff]
  %v6954 = vld [vmem:[#allocation2 + $0xc8] sm:$0xff]
  %v6955 = vld [vmem:[#allocation2 + $0xd0] sm:$0xff]
  %v6956 = vld [vmem:[#allocation2 + $0xd8] sm:$0xff]
  %v6957 = vld [vmem:[#allocation2 + $0xe0] sm:$0xff]
  %v6958 = vld [vmem:[#allocation2 + $0xe8] sm:$0xff]
  %v6959 = vld [vmem:[#allocation2 + $0xf0] sm:$0xff]
  %v6960 = vld [vmem:[#allocation2 + $0xf8] sm:$0xff]
  %6989 = vrot.lane.b32.xlu0 %v6933, 110
  %v6990 = vpop.permute.xlu0 %6989
  %6991 = vrot.lane.b32.xlu0 %v6934, 110
  %v6992 = vpop.permute.xlu0 %6991
  %6993 = vrot.lane.b32.xlu0 %v6935, 110
  %v6994 = vpop.permute.xlu0 %6993
  %6995 = vrot.lane.b32.xlu0 %v6936, 110
  %v6996 = vpop.permute.xlu0 %6995
  %6997 = vrot.lane.b32.xlu0 %v6937, 110
  %v6998 = vpop.permute.xlu0 %6997
  %6999 = vrot.lane.b32.xlu0 %v6938, 110
  %v7000 = vpop.permute.xlu0 %6999
  %7001 = vrot.lane.b32.xlu0 %v6939, 110
  %v7002 = vpop.permute.xlu0 %7001
  %7003 = vrot.lane.b32.xlu0 %v6940, 110
  %v7004 = vpop.permute.xlu0 %7003
  %7005 = vrot.lane.b32.xlu0 %v6941, 110
  %v7006 = vpop.permute.xlu0 %7005
  %7007 = vrot.lane.b32.xlu0 %v6942, 110
  %v7008 = vpop.permute.xlu0 %7007
  %7009 = vrot.lane.b32.xlu0 %v6943, 110
  %v7010 = vpop.permute.xlu0 %7009
  %7011 = vrot.lane.b32.xlu0 %v6944, 110
  %v7012 = vpop.permute.xlu0 %7011
  %7013 = vrot.lane.b32.xlu0 %v6945, 110
  %v7014 = vpop.permute.xlu0 %7013
  %7015 = vrot.lane.b32.xlu0 %v6946, 110
  %v7016 = vpop.permute.xlu0 %7015
  %7017 = vrot.lane.b32.xlu0 %v6947, 110
  %v7018 = vpop.permute.xlu0 %7017
  %7019 = vrot.lane.b32.xlu0 %v6948, 110
  %v7020 = vpop.permute.xlu0 %7019
  %7021 = vrot.lane.b32.xlu0 %v6949, 110
  %v7022 = vpop.permute.xlu0 %7021
  %7023 = vrot.lane.b32.xlu0 %v6950, 110
  %v7024 = vpop.permute.xlu0 %7023
  %7025 = vrot.lane.b32.xlu0 %v6951, 110
  %v7026 = vpop.permute.xlu0 %7025
  %7027 = vrot.lane.b32.xlu0 %v6952, 110
  %v7028 = vpop.permute.xlu0 %7027
  %7029 = vrot.lane.b32.xlu0 %v6953, 110
  %v7030 = vpop.permute.xlu0 %7029
  %7031 = vrot.lane.b32.xlu0 %v6954, 110
  %v7032 = vpop.permute.xlu0 %7031
  %7033 = vrot.lane.b32.xlu0 %v6955, 110
  %v7034 = vpop.permute.xlu0 %7033
  %7035 = vrot.lane.b32.xlu0 %v6956, 110
  %v7036 = vpop.permute.xlu0 %7035
  %7037 = vrot.lane.b32.xlu0 %v6957, 110
  %v7038 = vpop.permute.xlu0 %7037
  %7039 = vrot.lane.b32.xlu0 %v6958, 110
  %v7040 = vpop.permute.xlu0 %7039
  %7041 = vrot.lane.b32.xlu0 %v6959, 110
  %v7042 = vpop.permute.xlu0 %7041
  %7043 = vrot.lane.b32.xlu0 %v6960, 110
  %v7044 = vpop.permute.xlu0 %7043
  %v7045 = vsel %vm193, %v6990, %v6992
  %v7046 = vsel %vm193, %v6992, %v6994
  %v7047 = vsel %vm193, %v6994, %v6996
  %v7048 = vsel %vm193, %v6996, %v6998
  %v7049 = vsel %vm193, %v6998, %v7000
  %v7050 = vsel %vm193, %v7000, %v7002
  %v7051 = vsel %vm193, %v7004, %v7006
  %v7052 = vsel %vm193, %v7006, %v7008
  %v7053 = vsel %vm193, %v7008, %v7010
  %v7054 = vsel %vm193, %v7010, %v7012
  %v7055 = vsel %vm193, %v7012, %v7014
  %v7056 = vsel %vm193, %v7014, %v7016
  %v7057 = vsel %vm193, %v7018, %v7020
  %v7058 = vsel %vm193, %v7020, %v7022
  %v7059 = vsel %vm193, %v7022, %v7024
  %v7060 = vsel %vm193, %v7024, %v7026
  %v7061 = vsel %vm193, %v7026, %v7028
  %v7062 = vsel %vm193, %v7028, %v7030
  %v7063 = vsel %vm193, %v7032, %v7034
  %v7064 = vsel %vm193, %v7034, %v7036
  %v7065 = vsel %vm193, %v7036, %v7038
  %v7066 = vsel %vm193, %v7038, %v7040
  %v7067 = vsel %vm193, %v7040, %v7042
  %v7068 = vsel %vm193, %v7042, %v7044
  %7093 = vst [vmem:[#allocation4 + $0x540] sm:$0xff] %v7045
  %7094 = vst [vmem:[#allocation4 + $0x548] sm:$0xff] %v7046
  %7095 = vst [vmem:[#allocation4 + $0x550] sm:$0xff] %v7047
  %7096 = vst [vmem:[#allocation4 + $0x558] sm:$0xff] %v7048
  %7097 = vst [vmem:[#allocation4 + $0x560] sm:$0xff] %v7049
  %7098 = vst [vmem:[#allocation4 + $0x568] sm:$0xff] %v7050
  %7099 = vst [vmem:[#allocation4 + $0x570] sm:$0xff] %v7051
  %7100 = vst [vmem:[#allocation4 + $0x578] sm:$0xff] %v7052
  %7101 = vst [vmem:[#allocation4 + $0x580] sm:$0xff] %v7053
  %7102 = vst [vmem:[#allocation4 + $0x588] sm:$0xff] %v7054
  %7103 = vst [vmem:[#allocation4 + $0x590] sm:$0xff] %v7055
  %7104 = vst [vmem:[#allocation4 + $0x598] sm:$0xff] %v7056
  %7105 = vst [vmem:[#allocation4 + $0x5a0] sm:$0xff] %v7057
  %7106 = vst [vmem:[#allocation4 + $0x5a8] sm:$0xff] %v7058
  %7107 = vst [vmem:[#allocation4 + $0x5b0] sm:$0xff] %v7059
  %7108 = vst [vmem:[#allocation4 + $0x5b8] sm:$0xff] %v7060
  %7109 = vst [vmem:[#allocation4 + $0x5c0] sm:$0xff] %v7061
  %7110 = vst [vmem:[#allocation4 + $0x5c8] sm:$0xff] %v7062
  %7111 = vst [vmem:[#allocation4 + $0x5d0] sm:$0xff] %v7063
  %7112 = vst [vmem:[#allocation4 + $0x5d8] sm:$0xff] %v7064
  %7113 = vst [vmem:[#allocation4 + $0x5e0] sm:$0xff] %v7065
  %7114 = vst [vmem:[#allocation4 + $0x5e8] sm:$0xff] %v7066
  %7115 = vst [vmem:[#allocation4 + $0x5f0] sm:$0xff] %v7067
  %7116 = vst [vmem:[#allocation4 + $0x5f8] sm:$0xff] %v7068
  %v7117 = vld [vmem:[#allocation2 + $0x8] sm:$0xff]
  %v7118 = vld [vmem:[#allocation2 + $0x10] sm:$0xff]
  %v7119 = vld [vmem:[#allocation2 + $0x18] sm:$0xff]
  %v7120 = vld [vmem:[#allocation2 + $0x20] sm:$0xff]
  %v7121 = vld [vmem:[#allocation2 + $0x28] sm:$0xff]
  %v7122 = vld [vmem:[#allocation2 + $0x30] sm:$0xff]
  %v7123 = vld [vmem:[#allocation2 + $0x38] sm:$0xff]
  %v7124 = vld [vmem:[#allocation2 + $0x48] sm:$0xff]
  %v7125 = vld [vmem:[#allocation2 + $0x50] sm:$0xff]
  %v7126 = vld [vmem:[#allocation2 + $0x58] sm:$0xff]
  %v7127 = vld [vmem:[#allocation2 + $0x60] sm:$0xff]
  %v7128 = vld [vmem:[#allocation2 + $0x68] sm:$0xff]
  %v7129 = vld [vmem:[#allocation2 + $0x70] sm:$0xff]
  %v7130 = vld [vmem:[#allocation2 + $0x78] sm:$0xff]
  %v7131 = vld [vmem:[#allocation2 + $0x88] sm:$0xff]
  %v7132 = vld [vmem:[#allocation2 + $0x90] sm:$0xff]
  %v7133 = vld [vmem:[#allocation2 + $0x98] sm:$0xff]
  %v7134 = vld [vmem:[#allocation2 + $0xa0] sm:$0xff]
  %v7135 = vld [vmem:[#allocation2 + $0xa8] sm:$0xff]
  %v7136 = vld [vmem:[#allocation2 + $0xb0] sm:$0xff]
  %v7137 = vld [vmem:[#allocation2 + $0xb8] sm:$0xff]
  %v7138 = vld [vmem:[#allocation2 + $0xc8] sm:$0xff]
  %v7139 = vld [vmem:[#allocation2 + $0xd0] sm:$0xff]
  %v7140 = vld [vmem:[#allocation2 + $0xd8] sm:$0xff]
  %v7141 = vld [vmem:[#allocation2 + $0xe0] sm:$0xff]
  %v7142 = vld [vmem:[#allocation2 + $0xe8] sm:$0xff]
  %v7143 = vld [vmem:[#allocation2 + $0xf0] sm:$0xff]
  %v7144 = vld [vmem:[#allocation2 + $0xf8] sm:$0xff]
  %7173 = vrot.lane.b32.xlu0 %v7117, 109
  %v7174 = vpop.permute.xlu0 %7173
  %7175 = vrot.lane.b32.xlu0 %v7118, 109
  %v7176 = vpop.permute.xlu0 %7175
  %7177 = vrot.lane.b32.xlu0 %v7119, 109
  %v7178 = vpop.permute.xlu0 %7177
  %7179 = vrot.lane.b32.xlu0 %v7120, 109
  %v7180 = vpop.permute.xlu0 %7179
  %7181 = vrot.lane.b32.xlu0 %v7121, 109
  %v7182 = vpop.permute.xlu0 %7181
  %7183 = vrot.lane.b32.xlu0 %v7122, 109
  %v7184 = vpop.permute.xlu0 %7183
  %7185 = vrot.lane.b32.xlu0 %v7123, 109
  %v7186 = vpop.permute.xlu0 %7185
  %7187 = vrot.lane.b32.xlu0 %v7124, 109
  %v7188 = vpop.permute.xlu0 %7187
  %7189 = vrot.lane.b32.xlu0 %v7125, 109
  %v7190 = vpop.permute.xlu0 %7189
  %7191 = vrot.lane.b32.xlu0 %v7126, 109
  %v7192 = vpop.permute.xlu0 %7191
  %7193 = vrot.lane.b32.xlu0 %v7127, 109
  %v7194 = vpop.permute.xlu0 %7193
  %7195 = vrot.lane.b32.xlu0 %v7128, 109
  %v7196 = vpop.permute.xlu0 %7195
  %7197 = vrot.lane.b32.xlu0 %v7129, 109
  %v7198 = vpop.permute.xlu0 %7197
  %7199 = vrot.lane.b32.xlu0 %v7130, 109
  %v7200 = vpop.permute.xlu0 %7199
  %7201 = vrot.lane.b32.xlu0 %v7131, 109
  %v7202 = vpop.permute.xlu0 %7201
  %7203 = vrot.lane.b32.xlu0 %v7132, 109
  %v7204 = vpop.permute.xlu0 %7203
  %7205 = vrot.lane.b32.xlu0 %v7133, 109
  %v7206 = vpop.permute.xlu0 %7205
  %7207 = vrot.lane.b32.xlu0 %v7134, 109
  %v7208 = vpop.permute.xlu0 %7207
  %7209 = vrot.lane.b32.xlu0 %v7135, 109
  %v7210 = vpop.permute.xlu0 %7209
  %7211 = vrot.lane.b32.xlu0 %v7136, 109
  %v7212 = vpop.permute.xlu0 %7211
  %7213 = vrot.lane.b32.xlu0 %v7137, 109
  %v7214 = vpop.permute.xlu0 %7213
  %7215 = vrot.lane.b32.xlu0 %v7138, 109
  %v7216 = vpop.permute.xlu0 %7215
  %7217 = vrot.lane.b32.xlu0 %v7139, 109
  %v7218 = vpop.permute.xlu0 %7217
  %7219 = vrot.lane.b32.xlu0 %v7140, 109
  %v7220 = vpop.permute.xlu0 %7219
  %7221 = vrot.lane.b32.xlu0 %v7141, 109
  %v7222 = vpop.permute.xlu0 %7221
  %7223 = vrot.lane.b32.xlu0 %v7142, 109
  %v7224 = vpop.permute.xlu0 %7223
  %7225 = vrot.lane.b32.xlu0 %v7143, 109
  %v7226 = vpop.permute.xlu0 %7225
  %7227 = vrot.lane.b32.xlu0 %v7144, 109
  %v7228 = vpop.permute.xlu0 %7227
  %v7229 = vsel %vm244, %v7174, %v7176
  %v7230 = vsel %vm244, %v7176, %v7178
  %v7231 = vsel %vm244, %v7178, %v7180
  %v7232 = vsel %vm244, %v7180, %v7182
  %v7233 = vsel %vm244, %v7182, %v7184
  %v7234 = vsel %vm244, %v7184, %v7186
  %v7235 = vsel %vm244, %v7188, %v7190
  %v7236 = vsel %vm244, %v7190, %v7192
  %v7237 = vsel %vm244, %v7192, %v7194
  %v7238 = vsel %vm244, %v7194, %v7196
  %v7239 = vsel %vm244, %v7196, %v7198
  %v7240 = vsel %vm244, %v7198, %v7200
  %v7241 = vsel %vm244, %v7202, %v7204
  %v7242 = vsel %vm244, %v7204, %v7206
  %v7243 = vsel %vm244, %v7206, %v7208
  %v7244 = vsel %vm244, %v7208, %v7210
  %v7245 = vsel %vm244, %v7210, %v7212
  %v7246 = vsel %vm244, %v7212, %v7214
  %v7247 = vsel %vm244, %v7216, %v7218
  %v7248 = vsel %vm244, %v7218, %v7220
  %v7249 = vsel %vm244, %v7220, %v7222
  %v7250 = vsel %vm244, %v7222, %v7224
  %v7251 = vsel %vm244, %v7224, %v7226
  %v7252 = vsel %vm244, %v7226, %v7228
  %7277 = vst [vmem:[#allocation4 + $0x600] sm:$0xff] %v7229
  %7278 = vst [vmem:[#allocation4 + $0x608] sm:$0xff] %v7230
  %7279 = vst [vmem:[#allocation4 + $0x610] sm:$0xff] %v7231
  %7280 = vst [vmem:[#allocation4 + $0x618] sm:$0xff] %v7232
  %7281 = vst [vmem:[#allocation4 + $0x620] sm:$0xff] %v7233
  %7282 = vst [vmem:[#allocation4 + $0x628] sm:$0xff] %v7234
  %7283 = vst [vmem:[#allocation4 + $0x630] sm:$0xff] %v7235
  %7284 = vst [vmem:[#allocation4 + $0x638] sm:$0xff] %v7236
  %7285 = vst [vmem:[#allocation4 + $0x640] sm:$0xff] %v7237
  %7286 = vst [vmem:[#allocation4 + $0x648] sm:$0xff] %v7238
  %7287 = vst [vmem:[#allocation4 + $0x650] sm:$0xff] %v7239
  %7288 = vst [vmem:[#allocation4 + $0x658] sm:$0xff] %v7240
  %7289 = vst [vmem:[#allocation4 + $0x660] sm:$0xff] %v7241
  %7290 = vst [vmem:[#allocation4 + $0x668] sm:$0xff] %v7242
  %7291 = vst [vmem:[#allocation4 + $0x670] sm:$0xff] %v7243
  %7292 = vst [vmem:[#allocation4 + $0x678] sm:$0xff] %v7244
  %7293 = vst [vmem:[#allocation4 + $0x680] sm:$0xff] %v7245
  %7294 = vst [vmem:[#allocation4 + $0x688] sm:$0xff] %v7246
  %7295 = vst [vmem:[#allocation4 + $0x690] sm:$0xff] %v7247
  %7296 = vst [vmem:[#allocation4 + $0x698] sm:$0xff] %v7248
  %7297 = vst [vmem:[#allocation4 + $0x6a0] sm:$0xff] %v7249
  %7298 = vst [vmem:[#allocation4 + $0x6a8] sm:$0xff] %v7250
  %7299 = vst [vmem:[#allocation4 + $0x6b0] sm:$0xff] %v7251
  %7300 = vst [vmem:[#allocation4 + $0x6b8] sm:$0xff] %v7252
  %v7301 = vld [vmem:[#allocation4] sm:$0xff]
  %v7302 = vld [vmem:[#allocation4 + $0x8] sm:$0xff]
  %v7303 = vld [vmem:[#allocation4 + $0x10] sm:$0xff]
  %v7304 = vld [vmem:[#allocation4 + $0x18] sm:$0xff]
  %v7305 = vld [vmem:[#allocation4 + $0x20] sm:$0xff]
  %v7306 = vld [vmem:[#allocation4 + $0x28] sm:$0xff]
  %v7307 = vld [vmem:[#allocation4 + $0x30] sm:$0xff]
  %v7308 = vld [vmem:[#allocation4 + $0x38] sm:$0xff]
  %v7309 = vld [vmem:[#allocation4 + $0x40] sm:$0xff]
  %v7310 = vld [vmem:[#allocation4 + $0x48] sm:$0xff]
  %v7311 = vld [vmem:[#allocation4 + $0x50] sm:$0xff]
  %v7312 = vld [vmem:[#allocation4 + $0x58] sm:$0xff]
  %v7313 = vld [vmem:[#allocation4 + $0x60] sm:$0xff]
  %v7314 = vld [vmem:[#allocation4 + $0x68] sm:$0xff]
  %v7315 = vld [vmem:[#allocation4 + $0x70] sm:$0xff]
  %v7316 = vld [vmem:[#allocation4 + $0x78] sm:$0xff]
  %v7317 = vld [vmem:[#allocation4 + $0x80] sm:$0xff]
  %v7318 = vld [vmem:[#allocation4 + $0x88] sm:$0xff]
  %v7319 = vld [vmem:[#allocation4 + $0x90] sm:$0xff]
  %v7320 = vld [vmem:[#allocation4 + $0x98] sm:$0xff]
  %v7321 = vld [vmem:[#allocation4 + $0xa0] sm:$0xff]
  %v7322 = vld [vmem:[#allocation4 + $0xa8] sm:$0xff]
  %v7323 = vld [vmem:[#allocation4 + $0xb0] sm:$0xff]
  %v7324 = vld [vmem:[#allocation4 + $0xb8] sm:$0xff]
  %v7325 = vld [vmem:[#allocation4 + $0xc0] sm:$0xff]
  %v7326 = vld [vmem:[#allocation4 + $0xc8] sm:$0xff]
  %v7327 = vld [vmem:[#allocation4 + $0xd0] sm:$0xff]
  %v7328 = vld [vmem:[#allocation4 + $0xd8] sm:$0xff]
  %v7329 = vld [vmem:[#allocation4 + $0xe0] sm:$0xff]
  %v7330 = vld [vmem:[#allocation4 + $0xe8] sm:$0xff]
  %v7331 = vld [vmem:[#allocation4 + $0xf0] sm:$0xff]
  %v7332 = vld [vmem:[#allocation4 + $0xf8] sm:$0xff]
  %v7333 = vld [vmem:[#allocation4 + $0x100] sm:$0xff]
  %v7334 = vld [vmem:[#allocation4 + $0x108] sm:$0xff]
  %v7335 = vld [vmem:[#allocation4 + $0x110] sm:$0xff]
  %v7336 = vld [vmem:[#allocation4 + $0x118] sm:$0xff]
  %v7337 = vld [vmem:[#allocation4 + $0x120] sm:$0xff]
  %v7338 = vld [vmem:[#allocation4 + $0x128] sm:$0xff]
  %v7339 = vld [vmem:[#allocation4 + $0x130] sm:$0xff]
  %v7340 = vld [vmem:[#allocation4 + $0x138] sm:$0xff]
  %v7341 = vld [vmem:[#allocation4 + $0x140] sm:$0xff]
  %v7342 = vld [vmem:[#allocation4 + $0x148] sm:$0xff]
  %v7343 = vld [vmem:[#allocation4 + $0x150] sm:$0xff]
  %v7344 = vld [vmem:[#allocation4 + $0x158] sm:$0xff]
  %v7345 = vld [vmem:[#allocation4 + $0x160] sm:$0xff]
  %v7346 = vld [vmem:[#allocation4 + $0x168] sm:$0xff]
  %v7347 = vld [vmem:[#allocation4 + $0x170] sm:$0xff]
  %v7348 = vld [vmem:[#allocation4 + $0x178] sm:$0xff]
  %v7349 = vld [vmem:[#allocation4 + $0x180] sm:$0xff]
  %v7350 = vld [vmem:[#allocation4 + $0x188] sm:$0xff]
  %v7351 = vld [vmem:[#allocation4 + $0x190] sm:$0xff]
  %v7352 = vld [vmem:[#allocation4 + $0x198] sm:$0xff]
  %v7353 = vld [vmem:[#allocation4 + $0x1a0] sm:$0xff]
  %v7354 = vld [vmem:[#allocation4 + $0x1a8] sm:$0xff]
  %v7355 = vld [vmem:[#allocation4 + $0x1b0] sm:$0xff]
  %v7356 = vld [vmem:[#allocation4 + $0x1b8] sm:$0xff]
  %v7357 = vld [vmem:[#allocation4 + $0x1c0] sm:$0xff]
  %v7358 = vld [vmem:[#allocation4 + $0x1c8] sm:$0xff]
  %v7359 = vld [vmem:[#allocation4 + $0x1d0] sm:$0xff]
  %v7360 = vld [vmem:[#allocation4 + $0x1d8] sm:$0xff]
  %v7361 = vld [vmem:[#allocation4 + $0x1e0] sm:$0xff]
  %v7362 = vld [vmem:[#allocation4 + $0x1e8] sm:$0xff]
  %v7363 = vld [vmem:[#allocation4 + $0x1f0] sm:$0xff]
  %v7364 = vld [vmem:[#allocation4 + $0x1f8] sm:$0xff]
  %v7365 = vld [vmem:[#allocation4 + $0x200] sm:$0xff]
  %v7366 = vld [vmem:[#allocation4 + $0x208] sm:$0xff]
  %v7367 = vld [vmem:[#allocation4 + $0x210] sm:$0xff]
  %v7368 = vld [vmem:[#allocation4 + $0x218] sm:$0xff]
  %v7369 = vld [vmem:[#allocation4 + $0x220] sm:$0xff]
  %v7370 = vld [vmem:[#allocation4 + $0x228] sm:$0xff]
  %v7371 = vld [vmem:[#allocation4 + $0x230] sm:$0xff]
  %v7372 = vld [vmem:[#allocation4 + $0x238] sm:$0xff]
  %v7373 = vld [vmem:[#allocation4 + $0x240] sm:$0xff]
  %v7374 = vld [vmem:[#allocation4 + $0x248] sm:$0xff]
  %v7375 = vld [vmem:[#allocation4 + $0x250] sm:$0xff]
  %v7376 = vld [vmem:[#allocation4 + $0x258] sm:$0xff]
  %v7377 = vld [vmem:[#allocation4 + $0x260] sm:$0xff]
  %v7378 = vld [vmem:[#allocation4 + $0x268] sm:$0xff]
  %v7379 = vld [vmem:[#allocation4 + $0x270] sm:$0xff]
  %v7380 = vld [vmem:[#allocation4 + $0x278] sm:$0xff]
  %v7381 = vld [vmem:[#allocation4 + $0x280] sm:$0xff]
  %v7382 = vld [vmem:[#allocation4 + $0x288] sm:$0xff]
  %v7383 = vld [vmem:[#allocation4 + $0x290] sm:$0xff]
  %v7384 = vld [vmem:[#allocation4 + $0x298] sm:$0xff]
  %v7385 = vld [vmem:[#allocation4 + $0x2a0] sm:$0xff]
  %v7386 = vld [vmem:[#allocation4 + $0x2a8] sm:$0xff]
  %v7387 = vld [vmem:[#allocation4 + $0x2b0] sm:$0xff]
  %v7388 = vld [vmem:[#allocation4 + $0x2b8] sm:$0xff]
  %v7389 = vld [vmem:[#allocation4 + $0x2c0] sm:$0xff]
  %v7390 = vld [vmem:[#allocation4 + $0x2c8] sm:$0xff]
  %v7391 = vld [vmem:[#allocation4 + $0x2d0] sm:$0xff]
  %v7392 = vld [vmem:[#allocation4 + $0x2d8] sm:$0xff]
  %v7393 = vld [vmem:[#allocation4 + $0x2e0] sm:$0xff]
  %v7394 = vld [vmem:[#allocation4 + $0x2e8] sm:$0xff]
  %v7395 = vld [vmem:[#allocation4 + $0x2f0] sm:$0xff]
  %v7396 = vld [vmem:[#allocation4 + $0x2f8] sm:$0xff]
  %v7397 = vld [vmem:[#allocation4 + $0x300] sm:$0xff]
  %v7398 = vld [vmem:[#allocation4 + $0x308] sm:$0xff]
  %v7399 = vld [vmem:[#allocation4 + $0x310] sm:$0xff]
  %v7400 = vld [vmem:[#allocation4 + $0x318] sm:$0xff]
  %v7401 = vld [vmem:[#allocation4 + $0x320] sm:$0xff]
  %v7402 = vld [vmem:[#allocation4 + $0x328] sm:$0xff]
  %v7403 = vld [vmem:[#allocation4 + $0x330] sm:$0xff]
  %v7404 = vld [vmem:[#allocation4 + $0x338] sm:$0xff]
  %v7405 = vld [vmem:[#allocation4 + $0x340] sm:$0xff]
  %v7406 = vld [vmem:[#allocation4 + $0x348] sm:$0xff]
  %v7407 = vld [vmem:[#allocation4 + $0x350] sm:$0xff]
  %v7408 = vld [vmem:[#allocation4 + $0x358] sm:$0xff]
  %v7409 = vld [vmem:[#allocation4 + $0x360] sm:$0xff]
  %v7410 = vld [vmem:[#allocation4 + $0x368] sm:$0xff]
  %v7411 = vld [vmem:[#allocation4 + $0x370] sm:$0xff]
  %v7412 = vld [vmem:[#allocation4 + $0x378] sm:$0xff]
  %v7413 = vld [vmem:[#allocation4 + $0x380] sm:$0xff]
  %v7414 = vld [vmem:[#allocation4 + $0x388] sm:$0xff]
  %v7415 = vld [vmem:[#allocation4 + $0x390] sm:$0xff]
  %v7416 = vld [vmem:[#allocation4 + $0x398] sm:$0xff]
  %v7417 = vld [vmem:[#allocation4 + $0x3a0] sm:$0xff]
  %v7418 = vld [vmem:[#allocation4 + $0x3a8] sm:$0xff]
  %v7419 = vld [vmem:[#allocation4 + $0x3b0] sm:$0xff]
  %v7420 = vld [vmem:[#allocation4 + $0x3b8] sm:$0xff]
  %v7421 = vld [vmem:[#allocation4 + $0x3c0] sm:$0xff]
  %v7422 = vld [vmem:[#allocation4 + $0x3c8] sm:$0xff]
  %v7423 = vld [vmem:[#allocation4 + $0x3d0] sm:$0xff]
  %v7424 = vld [vmem:[#allocation4 + $0x3d8] sm:$0xff]
  %v7425 = vld [vmem:[#allocation4 + $0x3e0] sm:$0xff]
  %v7426 = vld [vmem:[#allocation4 + $0x3e8] sm:$0xff]
  %v7427 = vld [vmem:[#allocation4 + $0x3f0] sm:$0xff]
  %v7428 = vld [vmem:[#allocation4 + $0x3f8] sm:$0xff]
  %v7429 = vld [vmem:[#allocation4 + $0x400] sm:$0xff]
  %v7430 = vld [vmem:[#allocation4 + $0x408] sm:$0xff]
  %v7431 = vld [vmem:[#allocation4 + $0x410] sm:$0xff]
  %v7432 = vld [vmem:[#allocation4 + $0x418] sm:$0xff]
  %v7433 = vld [vmem:[#allocation4 + $0x420] sm:$0xff]
  %v7434 = vld [vmem:[#allocation4 + $0x428] sm:$0xff]
  %v7435 = vld [vmem:[#allocation4 + $0x430] sm:$0xff]
  %v7436 = vld [vmem:[#allocation4 + $0x438] sm:$0xff]
  %v7437 = vld [vmem:[#allocation4 + $0x440] sm:$0xff]
  %v7438 = vld [vmem:[#allocation4 + $0x448] sm:$0xff]
  %v7439 = vld [vmem:[#allocation4 + $0x450] sm:$0xff]
  %v7440 = vld [vmem:[#allocation4 + $0x458] sm:$0xff]
  %v7441 = vld [vmem:[#allocation4 + $0x460] sm:$0xff]
  %v7442 = vld [vmem:[#allocation4 + $0x468] sm:$0xff]
  %v7443 = vld [vmem:[#allocation4 + $0x470] sm:$0xff]
  %v7444 = vld [vmem:[#allocation4 + $0x478] sm:$0xff]
  %v7445 = vld [vmem:[#allocation4 + $0x480] sm:$0xff]
  %v7446 = vld [vmem:[#allocation4 + $0x488] sm:$0xff]
  %v7447 = vld [vmem:[#allocation4 + $0x490] sm:$0xff]
  %v7448 = vld [vmem:[#allocation4 + $0x498] sm:$0xff]
  %v7449 = vld [vmem:[#allocation4 + $0x4a0] sm:$0xff]
  %v7450 = vld [vmem:[#allocation4 + $0x4a8] sm:$0xff]
  %v7451 = vld [vmem:[#allocation4 + $0x4b0] sm:$0xff]
  %v7452 = vld [vmem:[#allocation4 + $0x4b8] sm:$0xff]
  %v7453 = vld [vmem:[#allocation4 + $0x4c0] sm:$0xff]
  %v7454 = vld [vmem:[#allocation4 + $0x4c8] sm:$0xff]
  %v7455 = vld [vmem:[#allocation4 + $0x4d0] sm:$0xff]
  %v7456 = vld [vmem:[#allocation4 + $0x4d8] sm:$0xff]
  %v7457 = vld [vmem:[#allocation4 + $0x4e0] sm:$0xff]
  %v7458 = vld [vmem:[#allocation4 + $0x4e8] sm:$0xff]
  %v7459 = vld [vmem:[#allocation4 + $0x4f0] sm:$0xff]
  %v7460 = vld [vmem:[#allocation4 + $0x4f8] sm:$0xff]
  %v7461 = vld [vmem:[#allocation4 + $0x500] sm:$0xff]
  %v7462 = vld [vmem:[#allocation4 + $0x508] sm:$0xff]
  %v7463 = vld [vmem:[#allocation4 + $0x510] sm:$0xff]
  %v7464 = vld [vmem:[#allocation4 + $0x518] sm:$0xff]
  %v7465 = vld [vmem:[#allocation4 + $0x520] sm:$0xff]
  %v7466 = vld [vmem:[#allocation4 + $0x528] sm:$0xff]
  %v7467 = vld [vmem:[#allocation4 + $0x530] sm:$0xff]
  %v7468 = vld [vmem:[#allocation4 + $0x538] sm:$0xff]
  %v7469 = vld [vmem:[#allocation4 + $0x540] sm:$0xff]
  %v7470 = vld [vmem:[#allocation4 + $0x548] sm:$0xff]
  %v7471 = vld [vmem:[#allocation4 + $0x550] sm:$0xff]
  %v7472 = vld [vmem:[#allocation4 + $0x558] sm:$0xff]
  %v7473 = vld [vmem:[#allocation4 + $0x560] sm:$0xff]
  %v7474 = vld [vmem:[#allocation4 + $0x568] sm:$0xff]
  %v7475 = vld [vmem:[#allocation4 + $0x570] sm:$0xff]
  %v7476 = vld [vmem:[#allocation4 + $0x578] sm:$0xff]
  %v7477 = vld [vmem:[#allocation4 + $0x580] sm:$0xff]
  %v7478 = vld [vmem:[#allocation4 + $0x588] sm:$0xff]
  %v7479 = vld [vmem:[#allocation4 + $0x590] sm:$0xff]
  %v7480 = vld [vmem:[#allocation4 + $0x598] sm:$0xff]
  %v7481 = vld [vmem:[#allocation4 + $0x5a0] sm:$0xff]
  %v7482 = vld [vmem:[#allocation4 + $0x5a8] sm:$0xff]
  %v7483 = vld [vmem:[#allocation4 + $0x5b0] sm:$0xff]
  %v7484 = vld [vmem:[#allocation4 + $0x5b8] sm:$0xff]
  %v7485 = vld [vmem:[#allocation4 + $0x5c0] sm:$0xff]
  %v7486 = vld [vmem:[#allocation4 + $0x5c8] sm:$0xff]
  %v7487 = vld [vmem:[#allocation4 + $0x5d0] sm:$0xff]
  %v7488 = vld [vmem:[#allocation4 + $0x5d8] sm:$0xff]
  %v7489 = vld [vmem:[#allocation4 + $0x5e0] sm:$0xff]
  %v7490 = vld [vmem:[#allocation4 + $0x5e8] sm:$0xff]
  %v7491 = vld [vmem:[#allocation4 + $0x5f0] sm:$0xff]
  %v7492 = vld [vmem:[#allocation4 + $0x5f8] sm:$0xff]
  %v7493 = vld [vmem:[#allocation4 + $0x600] sm:$0xff]
  %v7494 = vld [vmem:[#allocation4 + $0x608] sm:$0xff]
  %v7495 = vld [vmem:[#allocation4 + $0x610] sm:$0xff]
  %v7496 = vld [vmem:[#allocation4 + $0x618] sm:$0xff]
  %v7497 = vld [vmem:[#allocation4 + $0x620] sm:$0xff]
  %v7498 = vld [vmem:[#allocation4 + $0x628] sm:$0xff]
  %v7499 = vld [vmem:[#allocation4 + $0x630] sm:$0xff]
  %v7500 = vld [vmem:[#allocation4 + $0x638] sm:$0xff]
  %v7501 = vld [vmem:[#allocation4 + $0x640] sm:$0xff]
  %v7502 = vld [vmem:[#allocation4 + $0x648] sm:$0xff]
  %v7503 = vld [vmem:[#allocation4 + $0x650] sm:$0xff]
  %v7504 = vld [vmem:[#allocation4 + $0x658] sm:$0xff]
  %v7505 = vld [vmem:[#allocation4 + $0x660] sm:$0xff]
  %v7506 = vld [vmem:[#allocation4 + $0x668] sm:$0xff]
  %v7507 = vld [vmem:[#allocation4 + $0x670] sm:$0xff]
  %v7508 = vld [vmem:[#allocation4 + $0x678] sm:$0xff]
  %v7509 = vld [vmem:[#allocation4 + $0x680] sm:$0xff]
  %v7510 = vld [vmem:[#allocation4 + $0x688] sm:$0xff]
  %v7511 = vld [vmem:[#allocation4 + $0x690] sm:$0xff]
  %v7512 = vld [vmem:[#allocation4 + $0x698] sm:$0xff]
  %v7513 = vld [vmem:[#allocation4 + $0x6a0] sm:$0xff]
  %v7514 = vld [vmem:[#allocation4 + $0x6a8] sm:$0xff]
  %v7515 = vld [vmem:[#allocation4 + $0x6b0] sm:$0xff]
  %v7516 = vld [vmem:[#allocation4 + $0x6b8] sm:$0xff]
  %v7517 = vld [vmem:[%s8] sm:$0xff]
  %v7518 = vld [vmem:[%s8 + $0x8] sm:$0xff]
  %v7519 = vld [vmem:[%s8 + $0x10] sm:$0xff]
  %v7520 = vld [vmem:[%s8 + $0x18] sm:$0xff]
  %v7521 = vld [vmem:[%s8 + $0x20] sm:$0xff]
  %v7522 = vld [vmem:[%s8 + $0x28] sm:$0xff]
  %v7523 = vld [vmem:[%s8 + $0x30] sm:$0xff]
  %v7524 = vld [vmem:[%s8 + $0x38] sm:$0xff]
  %v7525 = vld [vmem:[%s8 + $0x40] sm:$0xff]
  %v7526 = vld [vmem:[%s8 + $0x48] sm:$0xff]
  %v7527 = vld [vmem:[%s8 + $0x50] sm:$0xff]
  %v7528 = vld [vmem:[%s8 + $0x58] sm:$0xff]
  %v7530 = vsel %vm2700, %v7519, 0
  %v7533 = vsel %vm2700, %v7522, 0
  %v7536 = vsel %vm2700, %v7525, 0
  %v7539 = vsel %vm2700, %v7528, 0
  %7541 = vmatprep.subr.mxu0 %v7302
  %7542 = vmatpush1.msra.mxu0 %v7301
  %7543 = vmatprep.subr.mxu0 %v7308
  %7544 = vmatpush1.msra.mxu0 %v7307
  %7545 = vmatprep.subr.mxu0 %v7314
  %7546 = vmatpush1.msra.mxu0 %v7313
  %7547 = vmatprep.subr.mxu0 %v7320
  %7548 = vmatpush1.msra.mxu0 %v7319
  %7549 = vmatprep.subr.mxu0 %v7326
  %7550 = vmatpush1.msra.mxu0 %v7325
  %7551 = vmatprep.subr.mxu0 %v7332
  %7552 = vmatpush1.msra.mxu0 %v7331
  %7553 = vmatprep.subr.mxu0 %v7338
  %7554 = vmatpush1.msra.mxu0 %v7337
  %7555 = vmatprep.subr.mxu0 %v7344
  %7556 = vmatpush1.msra.mxu0 %v7343
  %7557 = vmatprep.subr.mxu0 %v7350
  %7558 = vmatpush1.msra.mxu0 %v7349
  %7559 = vmatprep.subr.mxu0 %v7356
  %7560 = vmatpush1.msra.mxu0 %v7355
  %7561 = vmatprep.subr.mxu0 %v7362
  %7562 = vmatpush1.msra.mxu0 %v7361
  %7563 = vmatprep.subr.mxu0 %v7368
  %7564 = vmatpush1.msra.mxu0 %v7367
  %7565 = vmatprep.subr.mxu0 %v7374
  %7566 = vmatpush1.msra.mxu0 %v7373
  %7567 = vmatprep.subr.mxu0 %v7380
  %7568 = vmatpush1.msra.mxu0 %v7379
  %7569 = vmatprep.subr.mxu0 %v7386
  %7570 = vmatpush1.msra.mxu0 %v7385
  %7571 = vmatprep.subr.mxu0 %v7392
  %7572 = vmatpush1.msra.mxu0 %v7391
  %7573 = vmatprep.subr.mxu0 %v7398
  %7574 = vmatpush1.msra.mxu0 %v7397
  %7575 = vmatprep.subr.mxu0 %v7404
  %7576 = vmatpush1.msra.mxu0 %v7403
  %7577 = vmatprep.subr.mxu0 %v7410
  %7578 = vmatpush1.msra.mxu0 %v7409
  %7579 = vmatprep.subr.mxu0 %v7416
  %7580 = vmatpush1.msra.mxu0 %v7415
  %7581 = vmatprep.subr.mxu0 %v7422
  %7582 = vmatpush1.msra.mxu0 %v7421
  %7583 = vmatprep.subr.mxu0 %v7428
  %7584 = vmatpush1.msra.mxu0 %v7427
  %7585 = vmatprep.subr.mxu0 %v7434
  %7586 = vmatpush1.msra.mxu0 %v7433
  %7587 = vmatprep.subr.mxu0 %v7440
  %7588 = vmatpush1.msra.mxu0 %v7439
  %7589 = vmatprep.subr.mxu0 %v7446
  %7590 = vmatpush1.msra.mxu0 %v7445
  %7591 = vmatprep.subr.mxu0 %v7452
  %7592 = vmatpush1.msra.mxu0 %v7451
  %7593 = vmatprep.subr.mxu0 %v7458
  %7594 = vmatpush1.msra.mxu0 %v7457
  %7595 = vmatprep.subr.mxu0 %v7464
  %7596 = vmatpush1.msra.mxu0 %v7463
  %7597 = vmatprep.subr.mxu0 %v7470
  %7598 = vmatpush1.msra.mxu0 %v7469
  %7599 = vmatprep.subr.mxu0 %v7476
  %7600 = vmatpush1.msra.mxu0 %v7475
  %7601 = vmatprep.subr.mxu0 %v7482
  %7602 = vmatpush1.msra.mxu0 %v7481
  %7603 = vmatprep.subr.mxu0 %v7488
  %7604 = vmatpush1.msra.mxu0 %v7487
  %7605 = vmatprep.mubr.f32.mxu0 %v7518
  %7606 = vmatmul.mubr.f32.gmra.mrb[0].mxu0 %v7517
  %v7607 = vpop.f32.mrb[0].mxu0
  %v7608 = vadd.f32 0.0, %v7607
  %v7609 = vpop.f32.mrb[0].mxu0
  %v7610 = vadd.f32 0.0, %v7609
  %7611 = vmatprep.mubr.f32.mxu0 %v7521
  %7612 = vmatmul.mubr.f32.gmra.mrb[0].mxu0 %v7520
  %v7613 = vpop.f32.mrb[0].mxu0
  %v7614 = vadd.f32 0.0, %v7613
  %v7615 = vpop.f32.mrb[0].mxu0
  %v7616 = vadd.f32 0.0, %v7615
  %7617 = vmatprep.mubr.f32.mxu0 %v7524
  %7618 = vmatmul.mubr.f32.gmra.mrb[0].mxu0 %v7523
  %v7619 = vpop.f32.mrb[0].mxu0
  %v7620 = vadd.f32 0.0, %v7619
  %v7621 = vpop.f32.mrb[0].mxu0
  %v7622 = vadd.f32 0.0, %v7621
  %7623 = vmatprep.mubr.f32.mxu0 %v7527
  %7624 = vmatmul.mubr.f32.gmra.mrb[0].mxu0 %v7526
  %v7625 = vpop.f32.mrb[0].mxu0
  %v7626 = vadd.f32 0.0, %v7625
  %v7627 = vpop.f32.mrb[0].mxu0
  %v7628 = vadd.f32 0.0, %v7627
  %7629 = vdwg.mxu0
  %7630 = vmatprep.subr.mxu0 %v7494
  %7631 = vmatpush1.msra.mxu0 %v7493
  %7632 = vmatprep.subr.mxu0 %v7500
  %7633 = vmatpush1.msra.mxu0 %v7499
  %7634 = vmatprep.subr.mxu0 %v7506
  %7635 = vmatpush1.msra.mxu0 %v7505
  %7636 = vmatprep.subr.mxu0 %v7512
  %7637 = vmatpush1.msra.mxu0 %v7511
  %7638 = vmatprep.subr.mxu0 0.0
  %7639 = vmatpush1.msra.mxu0 0.0
  %7640 = vmatprep.subr.mxu0 0.0
  %7641 = vmatpush1.msra.mxu0 0.0
  %7642 = vmatprep.subr.mxu0 0.0
  %7643 = vmatpush1.msra.mxu0 0.0
  %7644 = vmatprep.subr.mxu0 0.0
  %7645 = vmatpush1.msra.mxu0 0.0
  %7646 = vmatprep.subr.mxu0 0.0
  %7647 = vmatpush1.msra.mxu0 0.0
  %7648 = vmatprep.subr.mxu0 0.0
  %7649 = vmatpush1.msra.mxu0 0.0
  %7650 = vmatprep.subr.mxu0 0.0
  %7651 = vmatpush1.msra.mxu0 0.0
  %7652 = vmatprep.subr.mxu0 0.0
  %7653 = vmatpush1.msra.mxu0 0.0
  %7654 = vmatprep.subr.mxu0 0.0
  %7655 = vmatpush1.msra.mxu0 0.0
  %7656 = vmatprep.subr.mxu0 0.0
  %7657 = vmatpush1.msra.mxu0 0.0
  %7658 = vmatprep.subr.mxu0 0.0
  %7659 = vmatpush1.msra.mxu0 0.0
  %7660 = vmatprep.subr.mxu0 0.0
  %7661 = vmatpush1.msra.mxu0 0.0
  %7662 = vmatprep.subr.mxu0 0.0
  %7663 = vmatpush1.msra.mxu0 0.0
  %7664 = vmatprep.subr.mxu0 0.0
  %7665 = vmatpush1.msra.mxu0 0.0
  %7666 = vmatprep.subr.mxu0 0.0
  %7667 = vmatpush1.msra.mxu0 0.0
  %7668 = vmatprep.subr.mxu0 0.0
  %7669 = vmatpush1.msra.mxu0 0.0
  %7670 = vmatprep.subr.mxu0 0.0
  %7671 = vmatpush1.msra.mxu0 0.0
  %7672 = vmatprep.subr.mxu0 0.0
  %7673 = vmatpush1.msra.mxu0 0.0
  %7674 = vmatprep.subr.mxu0 0.0
  %7675 = vmatpush1.msra.mxu0 0.0
  %7676 = vmatprep.subr.mxu0 0.0
  %7677 = vmatpush1.msra.mxu0 0.0
  %7678 = vmatprep.subr.mxu0 0.0
  %7679 = vmatpush1.msra.mxu0 0.0
  %7680 = vmatprep.subr.mxu0 0.0
  %7681 = vmatpush1.msra.mxu0 0.0
  %7682 = vmatprep.subr.mxu0 0.0
  %7683 = vmatpush1.msra.mxu0 0.0
  %7684 = vmatprep.subr.mxu0 0.0
  %7685 = vmatpush1.msra.mxu0 0.0
  %7686 = vmatprep.subr.mxu0 0.0
  %7687 = vmatpush1.msra.mxu0 0.0
  %7688 = vmatprep.subr.mxu0 0.0
  %7689 = vmatpush1.msra.mxu0 0.0
  %7690 = vmatprep.subr.mxu0 0.0
  %7691 = vmatpush1.msra.mxu0 0.0
  %7692 = vmatprep.subr.mxu0 0.0
  %7693 = vmatpush1.msra.mxu0 0.0
  %7694 = vmatprep.mubr.f32.mxu0 0.0
  %7695 = vmatmul.mubr.f32.gmra.mrb[0].mxu0 %v7530
  %v7696 = vpop.f32.mrb[0].mxu0
  %v7697 = vadd.f32 %v7608, %v7696
  %v7698 = vpop.f32.mrb[0].mxu0
  %v7699 = vadd.f32 %v7610, %v7698
  %7700 = vmatprep.mubr.f32.mxu0 0.0
  %7701 = vmatmul.mubr.f32.gmra.mrb[0].mxu0 %v7533
  %v7702 = vpop.f32.mrb[0].mxu0
  %v7703 = vadd.f32 %v7614, %v7702
  %v7704 = vpop.f32.mrb[0].mxu0
  %v7705 = vadd.f32 %v7616, %v7704
  %7706 = vmatprep.mubr.f32.mxu0 0.0
  %7707 = vmatmul.mubr.f32.gmra.mrb[0].mxu0 %v7536
  %v7708 = vpop.f32.mrb[0].mxu0
  %v7709 = vadd.f32 %v7620, %v7708
  %v7710 = vpop.f32.mrb[0].mxu0
  %v7711 = vadd.f32 %v7622, %v7710
  %7712 = vmatprep.mubr.f32.mxu0 0.0
  %7713 = vmatmul.mubr.f32.gmra.mrb[0].mxu0 %v7539
  %v7714 = vpop.f32.mrb[0].mxu0
  %v7715 = vadd.f32 %v7626, %v7714
  %v7716 = vpop.f32.mrb[0].mxu0
  %v7717 = vadd.f32 %v7628, %v7716
  %7718 = vdwg.mxu0
  %7719 = vmatprep.subr.mxu0 %v7304
  %7720 = vmatpush1.msra.mxu0 %v7303
  %7721 = vmatprep.subr.mxu0 %v7310
  %7722 = vmatpush1.msra.mxu0 %v7309
  %7723 = vmatprep.subr.mxu0 %v7316
  %7724 = vmatpush1.msra.mxu0 %v7315
  %7725 = vmatprep.subr.mxu0 %v7322
  %7726 = vmatpush1.msra.mxu0 %v7321
  %7727 = vmatprep.subr.mxu0 %v7328
  %7728 = vmatpush1.msra.mxu0 %v7327
  %7729 = vmatprep.subr.mxu0 %v7334
  %7730 = vmatpush1.msra.mxu0 %v7333
  %7731 = vmatprep.subr.mxu0 %v7340
  %7732 = vmatpush1.msra.mxu0 %v7339
  %7733 = vmatprep.subr.mxu0 %v7346
  %7734 = vmatpush1.msra.mxu0 %v7345
  %7735 = vmatprep.subr.mxu0 %v7352
  %7736 = vmatpush1.msra.mxu0 %v7351
  %7737 = vmatprep.subr.mxu0 %v7358
  %7738 = vmatpush1.msra.mxu0 %v7357
  %7739 = vmatprep.subr.mxu0 %v7364
  %7740 = vmatpush1.msra.mxu0 %v7363
  %7741 = vmatprep.subr.mxu0 %v7370
  %7742 = vmatpush1.msra.mxu0 %v7369
  %7743 = vmatprep.subr.mxu0 %v7376
  %7744 = vmatpush1.msra.mxu0 %v7375
  %7745 = vmatprep.subr.mxu0 %v7382
  %7746 = vmatpush1.msra.mxu0 %v7381
  %7747 = vmatprep.subr.mxu0 %v7388
  %7748 = vmatpush1.msra.mxu0 %v7387
  %7749 = vmatprep.subr.mxu0 %v7394
  %7750 = vmatpush1.msra.mxu0 %v7393
  %7751 = vmatprep.subr.mxu0 %v7400
  %7752 = vmatpush1.msra.mxu0 %v7399
  %7753 = vmatprep.subr.mxu0 %v7406
  %7754 = vmatpush1.msra.mxu0 %v7405
  %7755 = vmatprep.subr.mxu0 %v7412
  %7756 = vmatpush1.msra.mxu0 %v7411
  %7757 = vmatprep.subr.mxu0 %v7418
  %7758 = vmatpush1.msra.mxu0 %v7417
  %7759 = vmatprep.subr.mxu0 %v7424
  %7760 = vmatpush1.msra.mxu0 %v7423
  %7761 = vmatprep.subr.mxu0 %v7430
  %7762 = vmatpush1.msra.mxu0 %v7429
  %7763 = vmatprep.subr.mxu0 %v7436
  %7764 = vmatpush1.msra.mxu0 %v7435
  %7765 = vmatprep.subr.mxu0 %v7442
  %7766 = vmatpush1.msra.mxu0 %v7441
  %7767 = vmatprep.subr.mxu0 %v7448
  %7768 = vmatpush1.msra.mxu0 %v7447
  %7769 = vmatprep.subr.mxu0 %v7454
  %7770 = vmatpush1.msra.mxu0 %v7453
  %7771 = vmatprep.subr.mxu0 %v7460
  %7772 = vmatpush1.msra.mxu0 %v7459
  %7773 = vmatprep.subr.mxu0 %v7466
  %7774 = vmatpush1.msra.mxu0 %v7465
  %7775 = vmatprep.subr.mxu0 %v7472
  %7776 = vmatpush1.msra.mxu0 %v7471
  %7777 = vmatprep.subr.mxu0 %v7478
  %7778 = vmatpush1.msra.mxu0 %v7477
  %7779 = vmatprep.subr.mxu0 %v7484
  %7780 = vmatpush1.msra.mxu0 %v7483
  %7781 = vmatprep.subr.mxu0 %v7490
  %7782 = vmatpush1.msra.mxu0 %v7489
  %7783 = vmatprep.mubr.f32.mxu0 %v7518
  %7784 = vmatmul.mubr.f32.gmra.mrb[0].mxu0 %v7517
  %v7785 = vpop.f32.mrb[0].mxu0
  %v7786 = vadd.f32 0.0, %v7785
  %v7787 = vpop.f32.mrb[0].mxu0
  %v7788 = vadd.f32 0.0, %v7787
  %7789 = vmatprep.mubr.f32.mxu0 %v7521
  %7790 = vmatmul.mubr.f32.gmra.mrb[0].mxu0 %v7520
  %v7791 = vpop.f32.mrb[0].mxu0
  %v7792 = vadd.f32 0.0, %v7791
  %v7793 = vpop.f32.mrb[0].mxu0
  %v7794 = vadd.f32 0.0, %v7793
  %7795 = vmatprep.mubr.f32.mxu0 %v7524
  %7796 = vmatmul.mubr.f32.gmra.mrb[0].mxu0 %v7523
  %v7797 = vpop.f32.mrb[0].mxu0
  %v7798 = vadd.f32 0.0, %v7797
  %v7799 = vpop.f32.mrb[0].mxu0
  %v7800 = vadd.f32 0.0, %v7799
  %7801 = vmatprep.mubr.f32.mxu0 %v7527
  %7802 = vmatmul.mubr.f32.gmra.mrb[0].mxu0 %v7526
  %v7803 = vpop.f32.mrb[0].mxu0
  %v7804 = vadd.f32 0.0, %v7803
  %v7805 = vpop.f32.mrb[0].mxu0
  %v7806 = vadd.f32 0.0, %v7805
  %7807 = vdwg.mxu0
  %7808 = vmatprep.subr.mxu0 %v7496
  %7809 = vmatpush1.msra.mxu0 %v7495
  %7810 = vmatprep.subr.mxu0 %v7502
  %7811 = vmatpush1.msra.mxu0 %v7501
  %7812 = vmatprep.subr.mxu0 %v7508
  %7813 = vmatpush1.msra.mxu0 %v7507
  %7814 = vmatprep.subr.mxu0 %v7514
  %7815 = vmatpush1.msra.mxu0 %v7513
  %7816 = vmatprep.subr.mxu0 0.0
  %7817 = vmatpush1.msra.mxu0 0.0
  %7818 = vmatprep.subr.mxu0 0.0
  %7819 = vmatpush1.msra.mxu0 0.0
  %7820 = vmatprep.subr.mxu0 0.0
  %7821 = vmatpush1.msra.mxu0 0.0
  %7822 = vmatprep.subr.mxu0 0.0
  %7823 = vmatpush1.msra.mxu0 0.0
  %7824 = vmatprep.subr.mxu0 0.0
  %7825 = vmatpush1.msra.mxu0 0.0
  %7826 = vmatprep.subr.mxu0 0.0
  %7827 = vmatpush1.msra.mxu0 0.0
  %7828 = vmatprep.subr.mxu0 0.0
  %7829 = vmatpush1.msra.mxu0 0.0
  %7830 = vmatprep.subr.mxu0 0.0
  %7831 = vmatpush1.msra.mxu0 0.0
  %7832 = vmatprep.subr.mxu0 0.0
  %7833 = vmatpush1.msra.mxu0 0.0
  %7834 = vmatprep.subr.mxu0 0.0
  %7835 = vmatpush1.msra.mxu0 0.0
  %7836 = vmatprep.subr.mxu0 0.0
  %7837 = vmatpush1.msra.mxu0 0.0
  %7838 = vmatprep.subr.mxu0 0.0
  %7839 = vmatpush1.msra.mxu0 0.0
  %7840 = vmatprep.subr.mxu0 0.0
  %7841 = vmatpush1.msra.mxu0 0.0
  %7842 = vmatprep.subr.mxu0 0.0
  %7843 = vmatpush1.msra.mxu0 0.0
  %7844 = vmatprep.subr.mxu0 0.0
  %7845 = vmatpush1.msra.mxu0 0.0
  %7846 = vmatprep.subr.mxu0 0.0
  %7847 = vmatpush1.msra.mxu0 0.0
  %7848 = vmatprep.subr.mxu0 0.0
  %7849 = vmatpush1.msra.mxu0 0.0
  %7850 = vmatprep.subr.mxu0 0.0
  %7851 = vmatpush1.msra.mxu0 0.0
  %7852 = vmatprep.subr.mxu0 0.0
  %7853 = vmatpush1.msra.mxu0 0.0
  %7854 = vmatprep.subr.mxu0 0.0
  %7855 = vmatpush1.msra.mxu0 0.0
  %7856 = vmatprep.subr.mxu0 0.0
  %7857 = vmatpush1.msra.mxu0 0.0
  %7858 = vmatprep.subr.mxu0 0.0
  %7859 = vmatpush1.msra.mxu0 0.0
  %7860 = vmatprep.subr.mxu0 0.0
  %7861 = vmatpush1.msra.mxu0 0.0
  %7862 = vmatprep.subr.mxu0 0.0
  %7863 = vmatpush1.msra.mxu0 0.0
  %7864 = vmatprep.subr.mxu0 0.0
  %7865 = vmatpush1.msra.mxu0 0.0
  %7866 = vmatprep.subr.mxu0 0.0
  %7867 = vmatpush1.msra.mxu0 0.0
  %7868 = vmatprep.subr.mxu0 0.0
  %7869 = vmatpush1.msra.mxu0 0.0
  %7870 = vmatprep.subr.mxu0 0.0
  %7871 = vmatpush1.msra.mxu0 0.0
  %7872 = vmatprep.mubr.f32.mxu0 0.0
  %7873 = vmatmul.mubr.f32.gmra.mrb[0].mxu0 %v7530
  %v7874 = vpop.f32.mrb[0].mxu0
  %v7875 = vadd.f32 %v7786, %v7874
  %v7876 = vpop.f32.mrb[0].mxu0
  %v7877 = vadd.f32 %v7788, %v7876
  %7878 = vmatprep.mubr.f32.mxu0 0.0
  %7879 = vmatmul.mubr.f32.gmra.mrb[0].mxu0 %v7533
  %v7880 = vpop.f32.mrb[0].mxu0
  %v7881 = vadd.f32 %v7792, %v7880
  %v7882 = vpop.f32.mrb[0].mxu0
  %v7883 = vadd.f32 %v7794, %v7882
  %7884 = vmatprep.mubr.f32.mxu0 0.0
  %7885 = vmatmul.mubr.f32.gmra.mrb[0].mxu0 %v7536
  %v7886 = vpop.f32.mrb[0].mxu0
  %v7887 = vadd.f32 %v7798, %v7886
  %v7888 = vpop.f32.mrb[0].mxu0
  %v7889 = vadd.f32 %v7800, %v7888
  %7890 = vmatprep.mubr.f32.mxu0 0.0
  %7891 = vmatmul.mubr.f32.gmra.mrb[0].mxu0 %v7539
  %v7892 = vpop.f32.mrb[0].mxu0
  %v7893 = vadd.f32 %v7804, %v7892
  %v7894 = vpop.f32.mrb[0].mxu0
  %v7895 = vadd.f32 %v7806, %v7894
  %7896 = vdwg.mxu0
  %7897 = vmatprep.subr.mxu0 %v7306
  %7898 = vmatpush1.msra.mxu0 %v7305
  %7899 = vmatprep.subr.mxu0 %v7312
  %7900 = vmatpush1.msra.mxu0 %v7311
  %7901 = vmatprep.subr.mxu0 %v7318
  %7902 = vmatpush1.msra.mxu0 %v7317
  %7903 = vmatprep.subr.mxu0 %v7324
  %7904 = vmatpush1.msra.mxu0 %v7323
  %7905 = vmatprep.subr.mxu0 %v7330
  %7906 = vmatpush1.msra.mxu0 %v7329
  %7907 = vmatprep.subr.mxu0 %v7336
  %7908 = vmatpush1.msra.mxu0 %v7335
  %7909 = vmatprep.subr.mxu0 %v7342
  %7910 = vmatpush1.msra.mxu0 %v7341
  %7911 = vmatprep.subr.mxu0 %v7348
  %7912 = vmatpush1.msra.mxu0 %v7347
  %7913 = vmatprep.subr.mxu0 %v7354
  %7914 = vmatpush1.msra.mxu0 %v7353
  %7915 = vmatprep.subr.mxu0 %v7360
  %7916 = vmatpush1.msra.mxu0 %v7359
  %7917 = vmatprep.subr.mxu0 %v7366
  %7918 = vmatpush1.msra.mxu0 %v7365
  %7919 = vmatprep.subr.mxu0 %v7372
  %7920 = vmatpush1.msra.mxu0 %v7371
  %7921 = vmatprep.subr.mxu0 %v7378
  %7922 = vmatpush1.msra.mxu0 %v7377
  %7923 = vmatprep.subr.mxu0 %v7384
  %7924 = vmatpush1.msra.mxu0 %v7383
  %7925 = vmatprep.subr.mxu0 %v7390
  %7926 = vmatpush1.msra.mxu0 %v7389
  %7927 = vmatprep.subr.mxu0 %v7396
  %7928 = vmatpush1.msra.mxu0 %v7395
  %7929 = vmatprep.subr.mxu0 %v7402
  %7930 = vmatpush1.msra.mxu0 %v7401
  %7931 = vmatprep.subr.mxu0 %v7408
  %7932 = vmatpush1.msra.mxu0 %v7407
  %7933 = vmatprep.subr.mxu0 %v7414
  %7934 = vmatpush1.msra.mxu0 %v7413
  %7935 = vmatprep.subr.mxu0 %v7420
  %7936 = vmatpush1.msra.mxu0 %v7419
  %7937 = vmatprep.subr.mxu0 %v7426
  %7938 = vmatpush1.msra.mxu0 %v7425
  %7939 = vmatprep.subr.mxu0 %v7432
  %7940 = vmatpush1.msra.mxu0 %v7431
  %7941 = vmatprep.subr.mxu0 %v7438
  %7942 = vmatpush1.msra.mxu0 %v7437
  %7943 = vmatprep.subr.mxu0 %v7444
  %7944 = vmatpush1.msra.mxu0 %v7443
  %7945 = vmatprep.subr.mxu0 %v7450
  %7946 = vmatpush1.msra.mxu0 %v7449
  %7947 = vmatprep.subr.mxu0 %v7456
  %7948 = vmatpush1.msra.mxu0 %v7455
  %7949 = vmatprep.subr.mxu0 %v7462
  %7950 = vmatpush1.msra.mxu0 %v7461
  %7951 = vmatprep.subr.mxu0 %v7468
  %7952 = vmatpush1.msra.mxu0 %v7467
  %7953 = vmatprep.subr.mxu0 %v7474
  %7954 = vmatpush1.msra.mxu0 %v7473
  %7955 = vmatprep.subr.mxu0 %v7480
  %7956 = vmatpush1.msra.mxu0 %v7479
  %7957 = vmatprep.subr.mxu0 %v7486
  %7958 = vmatpush1.msra.mxu0 %v7485
  %7959 = vmatprep.subr.mxu0 %v7492
  %7960 = vmatpush1.msra.mxu0 %v7491
  %7961 = vmatprep.mubr.f32.mxu0 %v7518
  %7962 = vmatmul.mubr.f32.gmra.mrb[0].mxu0 %v7517
  %v7963 = vpop.f32.mrb[0].mxu0
  %v7964 = vadd.f32 0.0, %v7963
  %v7965 = vpop.f32.mrb[0].mxu0
  %v7966 = vadd.f32 0.0, %v7965
  %7967 = vmatprep.mubr.f32.mxu0 %v7521
  %7968 = vmatmul.mubr.f32.gmra.mrb[0].mxu0 %v7520
  %v7969 = vpop.f32.mrb[0].mxu0
  %v7970 = vadd.f32 0.0, %v7969
  %v7971 = vpop.f32.mrb[0].mxu0
  %v7972 = vadd.f32 0.0, %v7971
  %7973 = vmatprep.mubr.f32.mxu0 %v7524
  %7974 = vmatmul.mubr.f32.gmra.mrb[0].mxu0 %v7523
  %v7975 = vpop.f32.mrb[0].mxu0
  %v7976 = vadd.f32 0.0, %v7975
  %v7977 = vpop.f32.mrb[0].mxu0
  %v7978 = vadd.f32 0.0, %v7977
  %7979 = vmatprep.mubr.f32.mxu0 %v7527
  %7980 = vmatmul.mubr.f32.gmra.mrb[0].mxu0 %v7526
  %v7981 = vpop.f32.mrb[0].mxu0
  %v7982 = vadd.f32 0.0, %v7981
  %v7983 = vpop.f32.mrb[0].mxu0
  %v7984 = vadd.f32 0.0, %v7983
  %7985 = vdwg.mxu0
  %7986 = vmatprep.subr.mxu0 %v7498
  %7987 = vmatpush1.msra.mxu0 %v7497
  %7988 = vmatprep.subr.mxu0 %v7504
  %7989 = vmatpush1.msra.mxu0 %v7503
  %7990 = vmatprep.subr.mxu0 %v7510
  %7991 = vmatpush1.msra.mxu0 %v7509
  %7992 = vmatprep.subr.mxu0 %v7516
  %7993 = vmatpush1.msra.mxu0 %v7515
  %7994 = vmatprep.subr.mxu0 0.0
  %7995 = vmatpush1.msra.mxu0 0.0
  %7996 = vmatprep.subr.mxu0 0.0
  %7997 = vmatpush1.msra.mxu0 0.0
  %7998 = vmatprep.subr.mxu0 0.0
  %7999 = vmatpush1.msra.mxu0 0.0
  %8000 = vmatprep.subr.mxu0 0.0
  %8001 = vmatpush1.msra.mxu0 0.0
  %8002 = vmatprep.subr.mxu0 0.0
  %8003 = vmatpush1.msra.mxu0 0.0
  %8004 = vmatprep.subr.mxu0 0.0
  %8005 = vmatpush1.msra.mxu0 0.0
  %8006 = vmatprep.subr.mxu0 0.0
  %8007 = vmatpush1.msra.mxu0 0.0
  %8008 = vmatprep.subr.mxu0 0.0
  %8009 = vmatpush1.msra.mxu0 0.0
  %8010 = vmatprep.subr.mxu0 0.0
  %8011 = vmatpush1.msra.mxu0 0.0
  %8012 = vmatprep.subr.mxu0 0.0
  %8013 = vmatpush1.msra.mxu0 0.0
  %8014 = vmatprep.subr.mxu0 0.0
  %8015 = vmatpush1.msra.mxu0 0.0
  %8016 = vmatprep.subr.mxu0 0.0
  %8017 = vmatpush1.msra.mxu0 0.0
  %8018 = vmatprep.subr.mxu0 0.0
  %8019 = vmatpush1.msra.mxu0 0.0
  %8020 = vmatprep.subr.mxu0 0.0
  %8021 = vmatpush1.msra.mxu0 0.0
  %8022 = vmatprep.subr.mxu0 0.0
  %8023 = vmatpush1.msra.mxu0 0.0
  %8024 = vmatprep.subr.mxu0 0.0
  %8025 = vmatpush1.msra.mxu0 0.0
  %8026 = vmatprep.subr.mxu0 0.0
  %8027 = vmatpush1.msra.mxu0 0.0
  %8028 = vmatprep.subr.mxu0 0.0
  %8029 = vmatpush1.msra.mxu0 0.0
  %8030 = vmatprep.subr.mxu0 0.0
  %8031 = vmatpush1.msra.mxu0 0.0
  %8032 = vmatprep.subr.mxu0 0.0
  %8033 = vmatpush1.msra.mxu0 0.0
  %8034 = vmatprep.subr.mxu0 0.0
  %8035 = vmatpush1.msra.mxu0 0.0
  %8036 = vmatprep.subr.mxu0 0.0
  %8037 = vmatpush1.msra.mxu0 0.0
  %8038 = vmatprep.subr.mxu0 0.0
  %8039 = vmatpush1.msra.mxu0 0.0
  %8040 = vmatprep.subr.mxu0 0.0
  %8041 = vmatpush1.msra.mxu0 0.0
  %8042 = vmatprep.subr.mxu0 0.0
  %8043 = vmatpush1.msra.mxu0 0.0
  %8044 = vmatprep.subr.mxu0 0.0
  %8045 = vmatpush1.msra.mxu0 0.0
  %8046 = vmatprep.subr.mxu0 0.0
  %8047 = vmatpush1.msra.mxu0 0.0
  %8048 = vmatprep.subr.mxu0 0.0
  %8049 = vmatpush1.msra.mxu0 0.0
  %8050 = vmatprep.mubr.f32.mxu0 0.0
  %8051 = vmatmul.mubr.f32.gmra.mrb[0].mxu0 %v7530
  %v8052 = vpop.f32.mrb[0].mxu0
  %v8053 = vadd.f32 %v7964, %v8052
  %v8054 = vpop.f32.mrb[0].mxu0
  %v8055 = vadd.f32 %v7966, %v8054
  %8056 = vmatprep.mubr.f32.mxu0 0.0
  %8057 = vmatmul.mubr.f32.gmra.mrb[0].mxu0 %v7533
  %v8058 = vpop.f32.mrb[0].mxu0
  %v8059 = vadd.f32 %v7970, %v8058
  %v8060 = vpop.f32.mrb[0].mxu0
  %v8061 = vadd.f32 %v7972, %v8060
  %8062 = vmatprep.mubr.f32.mxu0 0.0
  %8063 = vmatmul.mubr.f32.gmra.mrb[0].mxu0 %v7536
  %v8064 = vpop.f32.mrb[0].mxu0
  %v8065 = vadd.f32 %v7976, %v8064
  %v8066 = vpop.f32.mrb[0].mxu0
  %v8067 = vadd.f32 %v7978, %v8066
  %8068 = vmatprep.mubr.f32.mxu0 0.0
  %8069 = vmatmul.mubr.f32.gmra.mrb[0].mxu0 %v7539
  %v8070 = vpop.f32.mrb[0].mxu0
  %v8071 = vadd.f32 %v7982, %v8070
  %v8072 = vpop.f32.mrb[0].mxu0
  %v8073 = vadd.f32 %v7984, %v8072
  %8074 = vdwg.mxu0
  %v8075 = vadd.f32 %v5764, %v7697
  %v8076 = vadd.f32 %v5764, %v7699
  %v8077 = vadd.f32 %v5764, %v7875
  %v8078 = vadd.f32 %v5764, %v7877
  %v8079 = vadd.f32 %v5764, %v8053
  %v8080 = vadd.f32 %v5764, %v8055
  %v8081 = vadd.f32 %v5769, %v7703
  %v8082 = vadd.f32 %v5769, %v7705
  %v8083 = vadd.f32 %v5769, %v7881
  %v8084 = vadd.f32 %v5769, %v7883
  %v8085 = vadd.f32 %v5769, %v8059
  %v8086 = vadd.f32 %v5769, %v8061
  %v8087 = vadd.f32 %v5774, %v7709
  %v8088 = vadd.f32 %v5774, %v7711
  %v8089 = vadd.f32 %v5774, %v7887
  %v8090 = vadd.f32 %v5774, %v7889
  %v8091 = vadd.f32 %v5774, %v8065
  %v8092 = vadd.f32 %v5774, %v8067
  %v8093 = vadd.f32 %v5779, %v7715
  %v8094 = vadd.f32 %v5779, %v7717
  %v8095 = vadd.f32 %v5779, %v7893
  %v8096 = vadd.f32 %v5779, %v7895
  %v8097 = vadd.f32 %v5779, %v8071
  %v8098 = vadd.f32 %v5779, %v8073
  %v8099 = vmax.f32 %v8075, 0.0
  %v8100 = vmax.f32 %v8076, 0.0
  %v8101 = vmax.f32 %v8077, 0.0
  %v8102 = vmax.f32 %v8078, 0.0
  %v8103 = vmax.f32 %v8079, 0.0
  %v8104 = vmax.f32 %v8080, 0.0
  %v8105 = vmax.f32 %v8081, 0.0
  %v8106 = vmax.f32 %v8082, 0.0
  %v8107 = vmax.f32 %v8083, 0.0
  %v8108 = vmax.f32 %v8084, 0.0
  %v8109 = vmax.f32 %v8085, 0.0
  %v8110 = vmax.f32 %v8086, 0.0
  %v8111 = vmax.f32 %v8087, 0.0
  %v8112 = vmax.f32 %v8088, 0.0
  %v8113 = vmax.f32 %v8089, 0.0
  %v8114 = vmax.f32 %v8090, 0.0
  %v8115 = vmax.f32 %v8091, 0.0
  %v8116 = vmax.f32 %v8092, 0.0
  %v8117 = vmax.f32 %v8093, 0.0
  %v8118 = vmax.f32 %v8094, 0.0
  %v8119 = vmax.f32 %v8095, 0.0
  %v8120 = vmax.f32 %v8096, 0.0
  %v8121 = vmax.f32 %v8097, 0.0
  %v8122 = vmax.f32 %v8098, 0.0
  %v8123 = vmul.f32 %v8099, %v849
  %v8124 = vmul.f32 %v8100, %v853
  %v8125 = vmul.f32 %v8101, %v857
  %v8126 = vmul.f32 %v8102, %v861
  %v8127 = vmul.f32 %v8103, %v865
  %v8128 = vmul.f32 %v8104, %v869
  %v8129 = vmul.f32 %v8105, %v849
  %v8130 = vmul.f32 %v8106, %v853
  %v8131 = vmul.f32 %v8107, %v857
  %v8132 = vmul.f32 %v8108, %v861
  %v8133 = vmul.f32 %v8109, %v865
  %v8134 = vmul.f32 %v8110, %v869
  %v8135 = vmul.f32 %v8111, %v849
  %v8136 = vmul.f32 %v8112, %v853
  %v8137 = vmul.f32 %v8113, %v857
  %v8138 = vmul.f32 %v8114, %v861
  %v8139 = vmul.f32 %v8115, %v865
  %v8140 = vmul.f32 %v8116, %v869
  %v8141 = vmul.f32 %v8117, %v849
  %v8142 = vmul.f32 %v8118, %v853
  %v8143 = vmul.f32 %v8119, %v857
  %v8144 = vmul.f32 %v8120, %v861
  %v8145 = vmul.f32 %v8121, %v865
  %v8146 = vmul.f32 %v8122, %v869
  %8147 = vst [vmem:[#allocation3 + $0x8] sm:$0xff] %v8123
  %8148 = vst [vmem:[#allocation3 + $0x10] sm:$0xff] %v8124
  %8149 = vst [vmem:[#allocation3 + $0x18] sm:$0xff] %v8125
  %8150 = vst [vmem:[#allocation3 + $0x20] sm:$0xff] %v8126
  %8151 = vst [vmem:[#allocation3 + $0x28] sm:$0xff] %v8127
  %8152 = vst [vmem:[#allocation3 + $0x30] sm:$0xff] %v8128
  %8153 = vst [vmem:[#allocation3 + $0x48] sm:$0xff] %v8129
  %8154 = vst [vmem:[#allocation3 + $0x50] sm:$0xff] %v8130
  %8155 = vst [vmem:[#allocation3 + $0x58] sm:$0xff] %v8131
  %8156 = vst [vmem:[#allocation3 + $0x60] sm:$0xff] %v8132
  %8157 = vst [vmem:[#allocation3 + $0x68] sm:$0xff] %v8133
  %8158 = vst [vmem:[#allocation3 + $0x70] sm:$0xff] %v8134
  %8159 = vst [vmem:[#allocation3 + $0x88] sm:$0xff] %v8135
  %8160 = vst [vmem:[#allocation3 + $0x90] sm:$0xff] %v8136
  %8161 = vst [vmem:[#allocation3 + $0x98] sm:$0xff] %v8137
  %8162 = vst [vmem:[#allocation3 + $0xa0] sm:$0xff] %v8138
  %8163 = vst [vmem:[#allocation3 + $0xa8] sm:$0xff] %v8139
  %8164 = vst [vmem:[#allocation3 + $0xb0] sm:$0xff] %v8140
  %8165 = vst [vmem:[#allocation3 + $0xc8] sm:$0xff] %v8141
  %8166 = vst [vmem:[#allocation3 + $0xd0] sm:$0xff] %v8142
  %8167 = vst [vmem:[#allocation3 + $0xd8] sm:$0xff] %v8143
  %8168 = vst [vmem:[#allocation3 + $0xe0] sm:$0xff] %v8144
  %8169 = vst [vmem:[#allocation3 + $0xe8] sm:$0xff] %v8145
  %8170 = vst [vmem:[#allocation3 + $0xf0] sm:$0xff] %v8146
  %v8171 = vld [vmem:[#allocation5] sm:$0x1]
  %8173 = vset.pattern.permute.xlu0 0
  %8174 = vperm.xlu0 %8173, %v8171
  %v8175 = vpop.permute.xlu0 %8174
  %v8177 = vlaneseq
  %v8178 = vshrl.u32 %v8177, 7
  %v8179 = vsub.s32 0, %v8178
  %v8180 = vrot.slane %v8175, %v8179
  %v8181 = vld [vmem:[#allocation3] sm:$0xff]
  %v8182 = vld [vmem:[#allocation3 + $0x8] sm:$0xff]
  %v8183 = vld [vmem:[#allocation3 + $0x10] sm:$0xff]
  %v8184 = vld [vmem:[#allocation3 + $0x18] sm:$0xff]
  %v8185 = vld [vmem:[#allocation3 + $0x20] sm:$0xff]
  %v8186 = vld [vmem:[#allocation3 + $0x28] sm:$0xff]
  %v8187 = vld [vmem:[#allocation3 + $0x30] sm:$0xff]
  %v8188 = vld [vmem:[#allocation3 + $0x40] sm:$0xff]
  %v8189 = vld [vmem:[#allocation3 + $0x48] sm:$0xff]
  %v8190 = vld [vmem:[#allocation3 + $0x50] sm:$0xff]
  %v8191 = vld [vmem:[#allocation3 + $0x58] sm:$0xff]
  %v8192 = vld [vmem:[#allocation3 + $0x60] sm:$0xff]
  %v8193 = vld [vmem:[#allocation3 + $0x68] sm:$0xff]
  %v8194 = vld [vmem:[#allocation3 + $0x70] sm:$0xff]
  %v8195 = vld [vmem:[#allocation3 + $0x80] sm:$0xff]
  %v8196 = vld [vmem:[#allocation3 + $0x88] sm:$0xff]
  %v8197 = vld [vmem:[#allocation3 + $0x90] sm:$0xff]
  %v8198 = vld [vmem:[#allocation3 + $0x98] sm:$0xff]
  %v8199 = vld [vmem:[#allocation3 + $0xa0] sm:$0xff]
  %v8200 = vld [vmem:[#allocation3 + $0xa8] sm:$0xff]
  %v8201 = vld [vmem:[#allocation3 + $0xb0] sm:$0xff]
  %v8202 = vld [vmem:[#allocation3 + $0xc0] sm:$0xff]
  %v8203 = vld [vmem:[#allocation3 + $0xc8] sm:$0xff]
  %v8204 = vld [vmem:[#allocation3 + $0xd0] sm:$0xff]
  %v8205 = vld [vmem:[#allocation3 + $0xd8] sm:$0xff]
  %v8206 = vld [vmem:[#allocation3 + $0xe0] sm:$0xff]
  %v8207 = vld [vmem:[#allocation3 + $0xe8] sm:$0xff]
  %v8208 = vld [vmem:[#allocation3 + $0xf0] sm:$0xff]
  %8237 = vrot.lane.b32.xlu0 %v8181, 19
  %v8238 = vpop.permute.xlu0 %8237
  %8239 = vrot.lane.b32.xlu0 %v8182, 19
  %v8240 = vpop.permute.xlu0 %8239
  %8241 = vrot.lane.b32.xlu0 %v8183, 19
  %v8242 = vpop.permute.xlu0 %8241
  %8243 = vrot.lane.b32.xlu0 %v8184, 19
  %v8244 = vpop.permute.xlu0 %8243
  %8245 = vrot.lane.b32.xlu0 %v8185, 19
  %v8246 = vpop.permute.xlu0 %8245
  %8247 = vrot.lane.b32.xlu0 %v8186, 19
  %v8248 = vpop.permute.xlu0 %8247
  %8249 = vrot.lane.b32.xlu0 %v8187, 19
  %v8250 = vpop.permute.xlu0 %8249
  %8251 = vrot.lane.b32.xlu0 %v8188, 19
  %v8252 = vpop.permute.xlu0 %8251
  %8253 = vrot.lane.b32.xlu0 %v8189, 19
  %v8254 = vpop.permute.xlu0 %8253
  %8255 = vrot.lane.b32.xlu0 %v8190, 19
  %v8256 = vpop.permute.xlu0 %8255
  %8257 = vrot.lane.b32.xlu0 %v8191, 19
  %v8258 = vpop.permute.xlu0 %8257
  %8259 = vrot.lane.b32.xlu0 %v8192, 19
  %v8260 = vpop.permute.xlu0 %8259
  %8261 = vrot.lane.b32.xlu0 %v8193, 19
  %v8262 = vpop.permute.xlu0 %8261
  %8263 = vrot.lane.b32.xlu0 %v8194, 19
  %v8264 = vpop.permute.xlu0 %8263
  %8265 = vrot.lane.b32.xlu0 %v8195, 19
  %v8266 = vpop.permute.xlu0 %8265
  %8267 = vrot.lane.b32.xlu0 %v8196, 19
  %v8268 = vpop.permute.xlu0 %8267
  %8269 = vrot.lane.b32.xlu0 %v8197, 19
  %v8270 = vpop.permute.xlu0 %8269
  %8271 = vrot.lane.b32.xlu0 %v8198, 19
  %v8272 = vpop.permute.xlu0 %8271
  %8273 = vrot.lane.b32.xlu0 %v8199, 19
  %v8274 = vpop.permute.xlu0 %8273
  %8275 = vrot.lane.b32.xlu0 %v8200, 19
  %v8276 = vpop.permute.xlu0 %8275
  %8277 = vrot.lane.b32.xlu0 %v8201, 19
  %v8278 = vpop.permute.xlu0 %8277
  %8279 = vrot.lane.b32.xlu0 %v8202, 19
  %v8280 = vpop.permute.xlu0 %8279
  %8281 = vrot.lane.b32.xlu0 %v8203, 19
  %v8282 = vpop.permute.xlu0 %8281
  %8283 = vrot.lane.b32.xlu0 %v8204, 19
  %v8284 = vpop.permute.xlu0 %8283
  %8285 = vrot.lane.b32.xlu0 %v8205, 19
  %v8286 = vpop.permute.xlu0 %8285
  %8287 = vrot.lane.b32.xlu0 %v8206, 19
  %v8288 = vpop.permute.xlu0 %8287
  %8289 = vrot.lane.b32.xlu0 %v8207, 19
  %v8290 = vpop.permute.xlu0 %8289
  %8291 = vrot.lane.b32.xlu0 %v8208, 19
  %v8292 = vpop.permute.xlu0 %8291
  %v8293 = vsel %vm486, %v8238, %v8240
  %v8294 = vsel %vm486, %v8240, %v8242
  %v8295 = vsel %vm486, %v8242, %v8244
  %v8296 = vsel %vm486, %v8244, %v8246
  %v8297 = vsel %vm486, %v8246, %v8248
  %v8298 = vsel %vm486, %v8248, %v8250
  %v8299 = vsel %vm486, %v8252, %v8254
  %v8300 = vsel %vm486, %v8254, %v8256
  %v8301 = vsel %vm486, %v8256, %v8258
  %v8302 = vsel %vm486, %v8258, %v8260
  %v8303 = vsel %vm486, %v8260, %v8262
  %v8304 = vsel %vm486, %v8262, %v8264
  %v8305 = vsel %vm486, %v8266, %v8268
  %v8306 = vsel %vm486, %v8268, %v8270
  %v8307 = vsel %vm486, %v8270, %v8272
  %v8308 = vsel %vm486, %v8272, %v8274
  %v8309 = vsel %vm486, %v8274, %v8276
  %v8310 = vsel %vm486, %v8276, %v8278
  %v8311 = vsel %vm486, %v8280, %v8282
  %v8312 = vsel %vm486, %v8282, %v8284
  %v8313 = vsel %vm486, %v8284, %v8286
  %v8314 = vsel %vm486, %v8286, %v8288
  %v8315 = vsel %vm486, %v8288, %v8290
  %v8316 = vsel %vm486, %v8290, %v8292
  %8341 = vst [vmem:[#allocation4] sm:$0xff] %v8293
  %8342 = vst [vmem:[#allocation4 + $0x8] sm:$0xff] %v8294
  %8343 = vst [vmem:[#allocation4 + $0x10] sm:$0xff] %v8295
  %8344 = vst [vmem:[#allocation4 + $0x18] sm:$0xff] %v8296
  %8345 = vst [vmem:[#allocation4 + $0x20] sm:$0xff] %v8297
  %8346 = vst [vmem:[#allocation4 + $0x28] sm:$0xff] %v8298
  %8347 = vst [vmem:[#allocation4 + $0x30] sm:$0xff] %v8299
  %8348 = vst [vmem:[#allocation4 + $0x38] sm:$0xff] %v8300
  %8349 = vst [vmem:[#allocation4 + $0x40] sm:$0xff] %v8301
  %8350 = vst [vmem:[#allocation4 + $0x48] sm:$0xff] %v8302
  %8351 = vst [vmem:[#allocation4 + $0x50] sm:$0xff] %v8303
  %8352 = vst [vmem:[#allocation4 + $0x58] sm:$0xff] %v8304
  %8353 = vst [vmem:[#allocation4 + $0x60] sm:$0xff] %v8305
  %8354 = vst [vmem:[#allocation4 + $0x68] sm:$0xff] %v8306
  %8355 = vst [vmem:[#allocation4 + $0x70] sm:$0xff] %v8307
  %8356 = vst [vmem:[#allocation4 + $0x78] sm:$0xff] %v8308
  %8357 = vst [vmem:[#allocation4 + $0x80] sm:$0xff] %v8309
  %8358 = vst [vmem:[#allocation4 + $0x88] sm:$0xff] %v8310
  %8359 = vst [vmem:[#allocation4 + $0x90] sm:$0xff] %v8311
  %8360 = vst [vmem:[#allocation4 + $0x98] sm:$0xff] %v8312
  %8361 = vst [vmem:[#allocation4 + $0xa0] sm:$0xff] %v8313
  %8362 = vst [vmem:[#allocation4 + $0xa8] sm:$0xff] %v8314
  %8363 = vst [vmem:[#allocation4 + $0xb0] sm:$0xff] %v8315
  %8364 = vst [vmem:[#allocation4 + $0xb8] sm:$0xff] %v8316
  %v8365 = vld [vmem:[#allocation3] sm:$0xff]
  %v8366 = vld [vmem:[#allocation3 + $0x8] sm:$0xff]
  %v8367 = vld [vmem:[#allocation3 + $0x10] sm:$0xff]
  %v8368 = vld [vmem:[#allocation3 + $0x18] sm:$0xff]
  %v8369 = vld [vmem:[#allocation3 + $0x20] sm:$0xff]
  %v8370 = vld [vmem:[#allocation3 + $0x28] sm:$0xff]
  %v8371 = vld [vmem:[#allocation3 + $0x30] sm:$0xff]
  %v8372 = vld [vmem:[#allocation3 + $0x40] sm:$0xff]
  %v8373 = vld [vmem:[#allocation3 + $0x48] sm:$0xff]
  %v8374 = vld [vmem:[#allocation3 + $0x50] sm:$0xff]
  %v8375 = vld [vmem:[#allocation3 + $0x58] sm:$0xff]
  %v8376 = vld [vmem:[#allocation3 + $0x60] sm:$0xff]
  %v8377 = vld [vmem:[#allocation3 + $0x68] sm:$0xff]
  %v8378 = vld [vmem:[#allocation3 + $0x70] sm:$0xff]
  %v8379 = vld [vmem:[#allocation3 + $0x80] sm:$0xff]
  %v8380 = vld [vmem:[#allocation3 + $0x88] sm:$0xff]
  %v8381 = vld [vmem:[#allocation3 + $0x90] sm:$0xff]
  %v8382 = vld [vmem:[#allocation3 + $0x98] sm:$0xff]
  %v8383 = vld [vmem:[#allocation3 + $0xa0] sm:$0xff]
  %v8384 = vld [vmem:[#allocation3 + $0xa8] sm:$0xff]
  %v8385 = vld [vmem:[#allocation3 + $0xb0] sm:$0xff]
  %v8386 = vld [vmem:[#allocation3 + $0xc0] sm:$0xff]
  %v8387 = vld [vmem:[#allocation3 + $0xc8] sm:$0xff]
  %v8388 = vld [vmem:[#allocation3 + $0xd0] sm:$0xff]
  %v8389 = vld [vmem:[#allocation3 + $0xd8] sm:$0xff]
  %v8390 = vld [vmem:[#allocation3 + $0xe0] sm:$0xff]
  %v8391 = vld [vmem:[#allocation3 + $0xe8] sm:$0xff]
  %v8392 = vld [vmem:[#allocation3 + $0xf0] sm:$0xff]
  %8421 = vrot.lane.b32.xlu0 %v8365, 18
  %v8422 = vpop.permute.xlu0 %8421
  %8423 = vrot.lane.b32.xlu0 %v8366, 18
  %v8424 = vpop.permute.xlu0 %8423
  %8425 = vrot.lane.b32.xlu0 %v8367, 18
  %v8426 = vpop.permute.xlu0 %8425
  %8427 = vrot.lane.b32.xlu0 %v8368, 18
  %v8428 = vpop.permute.xlu0 %8427
  %8429 = vrot.lane.b32.xlu0 %v8369, 18
  %v8430 = vpop.permute.xlu0 %8429
  %8431 = vrot.lane.b32.xlu0 %v8370, 18
  %v8432 = vpop.permute.xlu0 %8431
  %8433 = vrot.lane.b32.xlu0 %v8371, 18
  %v8434 = vpop.permute.xlu0 %8433
  %8435 = vrot.lane.b32.xlu0 %v8372, 18
  %v8436 = vpop.permute.xlu0 %8435
  %8437 = vrot.lane.b32.xlu0 %v8373, 18
  %v8438 = vpop.permute.xlu0 %8437
  %8439 = vrot.lane.b32.xlu0 %v8374, 18
  %v8440 = vpop.permute.xlu0 %8439
  %8441 = vrot.lane.b32.xlu0 %v8375, 18
  %v8442 = vpop.permute.xlu0 %8441
  %8443 = vrot.lane.b32.xlu0 %v8376, 18
  %v8444 = vpop.permute.xlu0 %8443
  %8445 = vrot.lane.b32.xlu0 %v8377, 18
  %v8446 = vpop.permute.xlu0 %8445
  %8447 = vrot.lane.b32.xlu0 %v8378, 18
  %v8448 = vpop.permute.xlu0 %8447
  %8449 = vrot.lane.b32.xlu0 %v8379, 18
  %v8450 = vpop.permute.xlu0 %8449
  %8451 = vrot.lane.b32.xlu0 %v8380, 18
  %v8452 = vpop.permute.xlu0 %8451
  %8453 = vrot.lane.b32.xlu0 %v8381, 18
  %v8454 = vpop.permute.xlu0 %8453
  %8455 = vrot.lane.b32.xlu0 %v8382, 18
  %v8456 = vpop.permute.xlu0 %8455
  %8457 = vrot.lane.b32.xlu0 %v8383, 18
  %v8458 = vpop.permute.xlu0 %8457
  %8459 = vrot.lane.b32.xlu0 %v8384, 18
  %v8460 = vpop.permute.xlu0 %8459
  %8461 = vrot.lane.b32.xlu0 %v8385, 18
  %v8462 = vpop.permute.xlu0 %8461
  %8463 = vrot.lane.b32.xlu0 %v8386, 18
  %v8464 = vpop.permute.xlu0 %8463
  %8465 = vrot.lane.b32.xlu0 %v8387, 18
  %v8466 = vpop.permute.xlu0 %8465
  %8467 = vrot.lane.b32.xlu0 %v8388, 18
  %v8468 = vpop.permute.xlu0 %8467
  %8469 = vrot.lane.b32.xlu0 %v8389, 18
  %v8470 = vpop.permute.xlu0 %8469
  %8471 = vrot.lane.b32.xlu0 %v8390, 18
  %v8472 = vpop.permute.xlu0 %8471
  %8473 = vrot.lane.b32.xlu0 %v8391, 18
  %v8474 = vpop.permute.xlu0 %8473
  %8475 = vrot.lane.b32.xlu0 %v8392, 18
  %v8476 = vpop.permute.xlu0 %8475
  %v8477 = vsel %vm1244, %v8422, %v8424
  %v8478 = vsel %vm1244, %v8424, %v8426
  %v8479 = vsel %vm1244, %v8426, %v8428
  %v8480 = vsel %vm1244, %v8428, %v8430
  %v8481 = vsel %vm1244, %v8430, %v8432
  %v8482 = vsel %vm1244, %v8432, %v8434
  %v8483 = vsel %vm1244, %v8436, %v8438
  %v8484 = vsel %vm1244, %v8438, %v8440
  %v8485 = vsel %vm1244, %v8440, %v8442
  %v8486 = vsel %vm1244, %v8442, %v8444
  %v8487 = vsel %vm1244, %v8444, %v8446
  %v8488 = vsel %vm1244, %v8446, %v8448
  %v8489 = vsel %vm1244, %v8450, %v8452
  %v8490 = vsel %vm1244, %v8452, %v8454
  %v8491 = vsel %vm1244, %v8454, %v8456
  %v8492 = vsel %vm1244, %v8456, %v8458
  %v8493 = vsel %vm1244, %v8458, %v8460
  %v8494 = vsel %vm1244, %v8460, %v8462
  %v8495 = vsel %vm1244, %v8464, %v8466
  %v8496 = vsel %vm1244, %v8466, %v8468
  %v8497 = vsel %vm1244, %v8468, %v8470
  %v8498 = vsel %vm1244, %v8470, %v8472
  %v8499 = vsel %vm1244, %v8472, %v8474
  %v8500 = vsel %vm1244, %v8474, %v8476
  %8525 = vst [vmem:[#allocation4 + $0xc0] sm:$0xff] %v8477
  %8526 = vst [vmem:[#allocation4 + $0xc8] sm:$0xff] %v8478
  %8527 = vst [vmem:[#allocation4 + $0xd0] sm:$0xff] %v8479
  %8528 = vst [vmem:[#allocation4 + $0xd8] sm:$0xff] %v8480
  %8529 = vst [vmem:[#allocation4 + $0xe0] sm:$0xff] %v8481
  %8530 = vst [vmem:[#allocation4 + $0xe8] sm:$0xff] %v8482
  %8531 = vst [vmem:[#allocation4 + $0xf0] sm:$0xff] %v8483
  %8532 = vst [vmem:[#allocation4 + $0xf8] sm:$0xff] %v8484
  %8533 = vst [vmem:[#allocation4 + $0x100] sm:$0xff] %v8485
  %8534 = vst [vmem:[#allocation4 + $0x108] sm:$0xff] %v8486
  %8535 = vst [vmem:[#allocation4 + $0x110] sm:$0xff] %v8487
  %8536 = vst [vmem:[#allocation4 + $0x118] sm:$0xff] %v8488
  %8537 = vst [vmem:[#allocation4 + $0x120] sm:$0xff] %v8489
  %8538 = vst [vmem:[#allocation4 + $0x128] sm:$0xff] %v8490
  %8539 = vst [vmem:[#allocation4 + $0x130] sm:$0xff] %v8491
  %8540 = vst [vmem:[#allocation4 + $0x138] sm:$0xff] %v8492
  %8541 = vst [vmem:[#allocation4 + $0x140] sm:$0xff] %v8493
  %8542 = vst [vmem:[#allocation4 + $0x148] sm:$0xff] %v8494
  %8543 = vst [vmem:[#allocation4 + $0x150] sm:$0xff] %v8495
  %8544 = vst [vmem:[#allocation4 + $0x158] sm:$0xff] %v8496
  %8545 = vst [vmem:[#allocation4 + $0x160] sm:$0xff] %v8497
  %8546 = vst [vmem:[#allocation4 + $0x168] sm:$0xff] %v8498
  %8547 = vst [vmem:[#allocation4 + $0x170] sm:$0xff] %v8499
  %8548 = vst [vmem:[#allocation4 + $0x178] sm:$0xff] %v8500
  %v8549 = vld [vmem:[#allocation3] sm:$0xff]
  %v8550 = vld [vmem:[#allocation3 + $0x8] sm:$0xff]
  %v8551 = vld [vmem:[#allocation3 + $0x10] sm:$0xff]
  %v8552 = vld [vmem:[#allocation3 + $0x18] sm:$0xff]
  %v8553 = vld [vmem:[#allocation3 + $0x20] sm:$0xff]
  %v8554 = vld [vmem:[#allocation3 + $0x28] sm:$0xff]
  %v8555 = vld [vmem:[#allocation3 + $0x30] sm:$0xff]
  %v8556 = vld [vmem:[#allocation3 + $0x40] sm:$0xff]
  %v8557 = vld [vmem:[#allocation3 + $0x48] sm:$0xff]
  %v8558 = vld [vmem:[#allocation3 + $0x50] sm:$0xff]
  %v8559 = vld [vmem:[#allocation3 + $0x58] sm:$0xff]
  %v8560 = vld [vmem:[#allocation3 + $0x60] sm:$0xff]
  %v8561 = vld [vmem:[#allocation3 + $0x68] sm:$0xff]
  %v8562 = vld [vmem:[#allocation3 + $0x70] sm:$0xff]
  %v8563 = vld [vmem:[#allocation3 + $0x80] sm:$0xff]
  %v8564 = vld [vmem:[#allocation3 + $0x88] sm:$0xff]
  %v8565 = vld [vmem:[#allocation3 + $0x90] sm:$0xff]
  %v8566 = vld [vmem:[#allocation3 + $0x98] sm:$0xff]
  %v8567 = vld [vmem:[#allocation3 + $0xa0] sm:$0xff]
  %v8568 = vld [vmem:[#allocation3 + $0xa8] sm:$0xff]
  %v8569 = vld [vmem:[#allocation3 + $0xb0] sm:$0xff]
  %v8570 = vld [vmem:[#allocation3 + $0xc0] sm:$0xff]
  %v8571 = vld [vmem:[#allocation3 + $0xc8] sm:$0xff]
  %v8572 = vld [vmem:[#allocation3 + $0xd0] sm:$0xff]
  %v8573 = vld [vmem:[#allocation3 + $0xd8] sm:$0xff]
  %v8574 = vld [vmem:[#allocation3 + $0xe0] sm:$0xff]
  %v8575 = vld [vmem:[#allocation3 + $0xe8] sm:$0xff]
  %v8576 = vld [vmem:[#allocation3 + $0xf0] sm:$0xff]
  %8605 = vrot.lane.b32.xlu0 %v8549, 17
  %v8606 = vpop.permute.xlu0 %8605
  %8607 = vrot.lane.b32.xlu0 %v8550, 17
  %v8608 = vpop.permute.xlu0 %8607
  %8609 = vrot.lane.b32.xlu0 %v8551, 17
  %v8610 = vpop.permute.xlu0 %8609
  %8611 = vrot.lane.b32.xlu0 %v8552, 17
  %v8612 = vpop.permute.xlu0 %8611
  %8613 = vrot.lane.b32.xlu0 %v8553, 17
  %v8614 = vpop.permute.xlu0 %8613
  %8615 = vrot.lane.b32.xlu0 %v8554, 17
  %v8616 = vpop.permute.xlu0 %8615
  %8617 = vrot.lane.b32.xlu0 %v8555, 17
  %v8618 = vpop.permute.xlu0 %8617
  %8619 = vrot.lane.b32.xlu0 %v8556, 17
  %v8620 = vpop.permute.xlu0 %8619
  %8621 = vrot.lane.b32.xlu0 %v8557, 17
  %v8622 = vpop.permute.xlu0 %8621
  %8623 = vrot.lane.b32.xlu0 %v8558, 17
  %v8624 = vpop.permute.xlu0 %8623
  %8625 = vrot.lane.b32.xlu0 %v8559, 17
  %v8626 = vpop.permute.xlu0 %8625
  %8627 = vrot.lane.b32.xlu0 %v8560, 17
  %v8628 = vpop.permute.xlu0 %8627
  %8629 = vrot.lane.b32.xlu0 %v8561, 17
  %v8630 = vpop.permute.xlu0 %8629
  %8631 = vrot.lane.b32.xlu0 %v8562, 17
  %v8632 = vpop.permute.xlu0 %8631
  %8633 = vrot.lane.b32.xlu0 %v8563, 17
  %v8634 = vpop.permute.xlu0 %8633
  %8635 = vrot.lane.b32.xlu0 %v8564, 17
  %v8636 = vpop.permute.xlu0 %8635
  %8637 = vrot.lane.b32.xlu0 %v8565, 17
  %v8638 = vpop.permute.xlu0 %8637
  %8639 = vrot.lane.b32.xlu0 %v8566, 17
  %v8640 = vpop.permute.xlu0 %8639
  %8641 = vrot.lane.b32.xlu0 %v8567, 17
  %v8642 = vpop.permute.xlu0 %8641
  %8643 = vrot.lane.b32.xlu0 %v8568, 17
  %v8644 = vpop.permute.xlu0 %8643
  %8645 = vrot.lane.b32.xlu0 %v8569, 17
  %v8646 = vpop.permute.xlu0 %8645
  %8647 = vrot.lane.b32.xlu0 %v8570, 17
  %v8648 = vpop.permute.xlu0 %8647
  %8649 = vrot.lane.b32.xlu0 %v8571, 17
  %v8650 = vpop.permute.xlu0 %8649
  %8651 = vrot.lane.b32.xlu0 %v8572, 17
  %v8652 = vpop.permute.xlu0 %8651
  %8653 = vrot.lane.b32.xlu0 %v8573, 17
  %v8654 = vpop.permute.xlu0 %8653
  %8655 = vrot.lane.b32.xlu0 %v8574, 17
  %v8656 = vpop.permute.xlu0 %8655
  %8657 = vrot.lane.b32.xlu0 %v8575, 17
  %v8658 = vpop.permute.xlu0 %8657
  %8659 = vrot.lane.b32.xlu0 %v8576, 17
  %v8660 = vpop.permute.xlu0 %8659
  %v8661 = vsel %vm1429, %v8606, %v8608
  %v8662 = vsel %vm1429, %v8608, %v8610
  %v8663 = vsel %vm1429, %v8610, %v8612
  %v8664 = vsel %vm1429, %v8612, %v8614
  %v8665 = vsel %vm1429, %v8614, %v8616
  %v8666 = vsel %vm1429, %v8616, %v8618
  %v8667 = vsel %vm1429, %v8620, %v8622
  %v8668 = vsel %vm1429, %v8622, %v8624
  %v8669 = vsel %vm1429, %v8624, %v8626
  %v8670 = vsel %vm1429, %v8626, %v8628
  %v8671 = vsel %vm1429, %v8628, %v8630
  %v8672 = vsel %vm1429, %v8630, %v8632
  %v8673 = vsel %vm1429, %v8634, %v8636
  %v8674 = vsel %vm1429, %v8636, %v8638
  %v8675 = vsel %vm1429, %v8638, %v8640
  %v8676 = vsel %vm1429, %v8640, %v8642
  %v8677 = vsel %vm1429, %v8642, %v8644
  %v8678 = vsel %vm1429, %v8644, %v8646
  %v8679 = vsel %vm1429, %v8648, %v8650
  %v8680 = vsel %vm1429, %v8650, %v8652
  %v8681 = vsel %vm1429, %v8652, %v8654
  %v8682 = vsel %vm1429, %v8654, %v8656
  %v8683 = vsel %vm1429, %v8656, %v8658
  %v8684 = vsel %vm1429, %v8658, %v8660
  %8709 = vst [vmem:[#allocation4 + $0x180] sm:$0xff] %v8661
  %8710 = vst [vmem:[#allocation4 + $0x188] sm:$0xff] %v8662
  %8711 = vst [vmem:[#allocation4 + $0x190] sm:$0xff] %v8663
  %8712 = vst [vmem:[#allocation4 + $0x198] sm:$0xff] %v8664
  %8713 = vst [vmem:[#allocation4 + $0x1a0] sm:$0xff] %v8665
  %8714 = vst [vmem:[#allocation4 + $0x1a8] sm:$0xff] %v8666
  %8715 = vst [vmem:[#allocation4 + $0x1b0] sm:$0xff] %v8667
  %8716 = vst [vmem:[#allocation4 + $0x1b8] sm:$0xff] %v8668
  %8717 = vst [vmem:[#allocation4 + $0x1c0] sm:$0xff] %v8669
  %8718 = vst [vmem:[#allocation4 + $0x1c8] sm:$0xff] %v8670
  %8719 = vst [vmem:[#allocation4 + $0x1d0] sm:$0xff] %v8671
  %8720 = vst [vmem:[#allocation4 + $0x1d8] sm:$0xff] %v8672
  %8721 = vst [vmem:[#allocation4 + $0x1e0] sm:$0xff] %v8673
  %8722 = vst [vmem:[#allocation4 + $0x1e8] sm:$0xff] %v8674
  %8723 = vst [vmem:[#allocation4 + $0x1f0] sm:$0xff] %v8675
  %8724 = vst [vmem:[#allocation4 + $0x1f8] sm:$0xff] %v8676
  %8725 = vst [vmem:[#allocation4 + $0x200] sm:$0xff] %v8677
  %8726 = vst [vmem:[#allocation4 + $0x208] sm:$0xff] %v8678
  %8727 = vst [vmem:[#allocation4 + $0x210] sm:$0xff] %v8679
  %8728 = vst [vmem:[#allocation4 + $0x218] sm:$0xff] %v8680
  %8729 = vst [vmem:[#allocation4 + $0x220] sm:$0xff] %v8681
  %8730 = vst [vmem:[#allocation4 + $0x228] sm:$0xff] %v8682
  %8731 = vst [vmem:[#allocation4 + $0x230] sm:$0xff] %v8683
  %8732 = vst [vmem:[#allocation4 + $0x238] sm:$0xff] %v8684
  %v8733 = vld [vmem:[#allocation3] sm:$0xff]
  %v8734 = vld [vmem:[#allocation3 + $0x8] sm:$0xff]
  %v8735 = vld [vmem:[#allocation3 + $0x10] sm:$0xff]
  %v8736 = vld [vmem:[#allocation3 + $0x18] sm:$0xff]
  %v8737 = vld [vmem:[#allocation3 + $0x20] sm:$0xff]
  %v8738 = vld [vmem:[#allocation3 + $0x28] sm:$0xff]
  %v8739 = vld [vmem:[#allocation3 + $0x30] sm:$0xff]
  %v8740 = vld [vmem:[#allocation3 + $0x40] sm:$0xff]
  %v8741 = vld [vmem:[#allocation3 + $0x48] sm:$0xff]
  %v8742 = vld [vmem:[#allocation3 + $0x50] sm:$0xff]
  %v8743 = vld [vmem:[#allocation3 + $0x58] sm:$0xff]
  %v8744 = vld [vmem:[#allocation3 + $0x60] sm:$0xff]
  %v8745 = vld [vmem:[#allocation3 + $0x68] sm:$0xff]
  %v8746 = vld [vmem:[#allocation3 + $0x70] sm:$0xff]
  %v8747 = vld [vmem:[#allocation3 + $0x80] sm:$0xff]
  %v8748 = vld [vmem:[#allocation3 + $0x88] sm:$0xff]
  %v8749 = vld [vmem:[#allocation3 + $0x90] sm:$0xff]
  %v8750 = vld [vmem:[#allocation3 + $0x98] sm:$0xff]
  %v8751 = vld [vmem:[#allocation3 + $0xa0] sm:$0xff]
  %v8752 = vld [vmem:[#allocation3 + $0xa8] sm:$0xff]
  %v8753 = vld [vmem:[#allocation3 + $0xb0] sm:$0xff]
  %v8754 = vld [vmem:[#allocation3 + $0xc0] sm:$0xff]
  %v8755 = vld [vmem:[#allocation3 + $0xc8] sm:$0xff]
  %v8756 = vld [vmem:[#allocation3 + $0xd0] sm:$0xff]
  %v8757 = vld [vmem:[#allocation3 + $0xd8] sm:$0xff]
  %v8758 = vld [vmem:[#allocation3 + $0xe0] sm:$0xff]
  %v8759 = vld [vmem:[#allocation3 + $0xe8] sm:$0xff]
  %v8760 = vld [vmem:[#allocation3 + $0xf0] sm:$0xff]
  %8789 = vrot.lane.b32.xlu0 %v8733, 1
  %v8790 = vpop.permute.xlu0 %8789
  %8791 = vrot.lane.b32.xlu0 %v8734, 1
  %v8792 = vpop.permute.xlu0 %8791
  %8793 = vrot.lane.b32.xlu0 %v8735, 1
  %v8794 = vpop.permute.xlu0 %8793
  %8795 = vrot.lane.b32.xlu0 %v8736, 1
  %v8796 = vpop.permute.xlu0 %8795
  %8797 = vrot.lane.b32.xlu0 %v8737, 1
  %v8798 = vpop.permute.xlu0 %8797
  %8799 = vrot.lane.b32.xlu0 %v8738, 1
  %v8800 = vpop.permute.xlu0 %8799
  %8801 = vrot.lane.b32.xlu0 %v8739, 1
  %v8802 = vpop.permute.xlu0 %8801
  %8803 = vrot.lane.b32.xlu0 %v8740, 1
  %v8804 = vpop.permute.xlu0 %8803
  %8805 = vrot.lane.b32.xlu0 %v8741, 1
  %v8806 = vpop.permute.xlu0 %8805
  %8807 = vrot.lane.b32.xlu0 %v8742, 1
  %v8808 = vpop.permute.xlu0 %8807
  %8809 = vrot.lane.b32.xlu0 %v8743, 1
  %v8810 = vpop.permute.xlu0 %8809
  %8811 = vrot.lane.b32.xlu0 %v8744, 1
  %v8812 = vpop.permute.xlu0 %8811
  %8813 = vrot.lane.b32.xlu0 %v8745, 1
  %v8814 = vpop.permute.xlu0 %8813
  %8815 = vrot.lane.b32.xlu0 %v8746, 1
  %v8816 = vpop.permute.xlu0 %8815
  %8817 = vrot.lane.b32.xlu0 %v8747, 1
  %v8818 = vpop.permute.xlu0 %8817
  %8819 = vrot.lane.b32.xlu0 %v8748, 1
  %v8820 = vpop.permute.xlu0 %8819
  %8821 = vrot.lane.b32.xlu0 %v8749, 1
  %v8822 = vpop.permute.xlu0 %8821
  %8823 = vrot.lane.b32.xlu0 %v8750, 1
  %v8824 = vpop.permute.xlu0 %8823
  %8825 = vrot.lane.b32.xlu0 %v8751, 1
  %v8826 = vpop.permute.xlu0 %8825
  %8827 = vrot.lane.b32.xlu0 %v8752, 1
  %v8828 = vpop.permute.xlu0 %8827
  %8829 = vrot.lane.b32.xlu0 %v8753, 1
  %v8830 = vpop.permute.xlu0 %8829
  %8831 = vrot.lane.b32.xlu0 %v8754, 1
  %v8832 = vpop.permute.xlu0 %8831
  %8833 = vrot.lane.b32.xlu0 %v8755, 1
  %v8834 = vpop.permute.xlu0 %8833
  %8835 = vrot.lane.b32.xlu0 %v8756, 1
  %v8836 = vpop.permute.xlu0 %8835
  %8837 = vrot.lane.b32.xlu0 %v8757, 1
  %v8838 = vpop.permute.xlu0 %8837
  %8839 = vrot.lane.b32.xlu0 %v8758, 1
  %v8840 = vpop.permute.xlu0 %8839
  %8841 = vrot.lane.b32.xlu0 %v8759, 1
  %v8842 = vpop.permute.xlu0 %8841
  %8843 = vrot.lane.b32.xlu0 %v8760, 1
  %v8844 = vpop.permute.xlu0 %8843
  %v8845 = vsel %vm1614, %v8790, %v8792
  %v8846 = vsel %vm1614, %v8792, %v8794
  %v8847 = vsel %vm1614, %v8794, %v8796
  %v8848 = vsel %vm1614, %v8796, %v8798
  %v8849 = vsel %vm1614, %v8798, %v8800
  %v8850 = vsel %vm1614, %v8800, %v8802
  %v8851 = vsel %vm1614, %v8804, %v8806
  %v8852 = vsel %vm1614, %v8806, %v8808
  %v8853 = vsel %vm1614, %v8808, %v8810
  %v8854 = vsel %vm1614, %v8810, %v8812
  %v8855 = vsel %vm1614, %v8812, %v8814
  %v8856 = vsel %vm1614, %v8814, %v8816
  %v8857 = vsel %vm1614, %v8818, %v8820
  %v8858 = vsel %vm1614, %v8820, %v8822
  %v8859 = vsel %vm1614, %v8822, %v8824
  %v8860 = vsel %vm1614, %v8824, %v8826
  %v8861 = vsel %vm1614, %v8826, %v8828
  %v8862 = vsel %vm1614, %v8828, %v8830
  %v8863 = vsel %vm1614, %v8832, %v8834
  %v8864 = vsel %vm1614, %v8834, %v8836
  %v8865 = vsel %vm1614, %v8836, %v8838
  %v8866 = vsel %vm1614, %v8838, %v8840
  %v8867 = vsel %vm1614, %v8840, %v8842
  %v8868 = vsel %vm1614, %v8842, %v8844
  %8893 = vst [vmem:[#allocation4 + $0x240] sm:$0xff] %v8845
  %8894 = vst [vmem:[#allocation4 + $0x248] sm:$0xff] %v8846
  %8895 = vst [vmem:[#allocation4 + $0x250] sm:$0xff] %v8847
  %8896 = vst [vmem:[#allocation4 + $0x258] sm:$0xff] %v8848
  %8897 = vst [vmem:[#allocation4 + $0x260] sm:$0xff] %v8849
  %8898 = vst [vmem:[#allocation4 + $0x268] sm:$0xff] %v8850
  %8899 = vst [vmem:[#allocation4 + $0x270] sm:$0xff] %v8851
  %8900 = vst [vmem:[#allocation4 + $0x278] sm:$0xff] %v8852
  %8901 = vst [vmem:[#allocation4 + $0x280] sm:$0xff] %v8853
  %8902 = vst [vmem:[#allocation4 + $0x288] sm:$0xff] %v8854
  %8903 = vst [vmem:[#allocation4 + $0x290] sm:$0xff] %v8855
  %8904 = vst [vmem:[#allocation4 + $0x298] sm:$0xff] %v8856
  %8905 = vst [vmem:[#allocation4 + $0x2a0] sm:$0xff] %v8857
  %8906 = vst [vmem:[#allocation4 + $0x2a8] sm:$0xff] %v8858
  %8907 = vst [vmem:[#allocation4 + $0x2b0] sm:$0xff] %v8859
  %8908 = vst [vmem:[#allocation4 + $0x2b8] sm:$0xff] %v8860
  %8909 = vst [vmem:[#allocation4 + $0x2c0] sm:$0xff] %v8861
  %8910 = vst [vmem:[#allocation4 + $0x2c8] sm:$0xff] %v8862
  %8911 = vst [vmem:[#allocation4 + $0x2d0] sm:$0xff] %v8863
  %8912 = vst [vmem:[#allocation4 + $0x2d8] sm:$0xff] %v8864
  %8913 = vst [vmem:[#allocation4 + $0x2e0] sm:$0xff] %v8865
  %8914 = vst [vmem:[#allocation4 + $0x2e8] sm:$0xff] %v8866
  %8915 = vst [vmem:[#allocation4 + $0x2f0] sm:$0xff] %v8867
  %8916 = vst [vmem:[#allocation4 + $0x2f8] sm:$0xff] %v8868
  %v8917 = vld [vmem:[#allocation3 + $0x8] sm:$0xff]
  %v8918 = vld [vmem:[#allocation3 + $0x10] sm:$0xff]
  %v8919 = vld [vmem:[#allocation3 + $0x18] sm:$0xff]
  %v8920 = vld [vmem:[#allocation3 + $0x20] sm:$0xff]
  %v8921 = vld [vmem:[#allocation3 + $0x28] sm:$0xff]
  %v8922 = vld [vmem:[#allocation3 + $0x30] sm:$0xff]
  %v8923 = vld [vmem:[#allocation3 + $0x48] sm:$0xff]
  %v8924 = vld [vmem:[#allocation3 + $0x50] sm:$0xff]
  %v8925 = vld [vmem:[#allocation3 + $0x58] sm:$0xff]
  %v8926 = vld [vmem:[#allocation3 + $0x60] sm:$0xff]
  %v8927 = vld [vmem:[#allocation3 + $0x68] sm:$0xff]
  %v8928 = vld [vmem:[#allocation3 + $0x70] sm:$0xff]
  %v8929 = vld [vmem:[#allocation3 + $0x88] sm:$0xff]
  %v8930 = vld [vmem:[#allocation3 + $0x90] sm:$0xff]
  %v8931 = vld [vmem:[#allocation3 + $0x98] sm:$0xff]
  %v8932 = vld [vmem:[#allocation3 + $0xa0] sm:$0xff]
  %v8933 = vld [vmem:[#allocation3 + $0xa8] sm:$0xff]
  %v8934 = vld [vmem:[#allocation3 + $0xb0] sm:$0xff]
  %v8935 = vld [vmem:[#allocation3 + $0xc8] sm:$0xff]
  %v8936 = vld [vmem:[#allocation3 + $0xd0] sm:$0xff]
  %v8937 = vld [vmem:[#allocation3 + $0xd8] sm:$0xff]
  %v8938 = vld [vmem:[#allocation3 + $0xe0] sm:$0xff]
  %v8939 = vld [vmem:[#allocation3 + $0xe8] sm:$0xff]
  %v8940 = vld [vmem:[#allocation3 + $0xf0] sm:$0xff]
  %8941 = vst [vmem:[#allocation4 + $0x300] sm:$0xff] %v8917
  %8942 = vst [vmem:[#allocation4 + $0x308] sm:$0xff] %v8918
  %8943 = vst [vmem:[#allocation4 + $0x310] sm:$0xff] %v8919
  %8944 = vst [vmem:[#allocation4 + $0x318] sm:$0xff] %v8920
  %8945 = vst [vmem:[#allocation4 + $0x320] sm:$0xff] %v8921
  %8946 = vst [vmem:[#allocation4 + $0x328] sm:$0xff] %v8922
  %8947 = vst [vmem:[#allocation4 + $0x330] sm:$0xff] %v8923
  %8948 = vst [vmem:[#allocation4 + $0x338] sm:$0xff] %v8924
  %8949 = vst [vmem:[#allocation4 + $0x340] sm:$0xff] %v8925
  %8950 = vst [vmem:[#allocation4 + $0x348] sm:$0xff] %v8926
  %8951 = vst [vmem:[#allocation4 + $0x350] sm:$0xff] %v8927
  %8952 = vst [vmem:[#allocation4 + $0x358] sm:$0xff] %v8928
  %8953 = vst [vmem:[#allocation4 + $0x360] sm:$0xff] %v8929
  %8954 = vst [vmem:[#allocation4 + $0x368] sm:$0xff] %v8930
  %8955 = vst [vmem:[#allocation4 + $0x370] sm:$0xff] %v8931
  %8956 = vst [vmem:[#allocation4 + $0x378] sm:$0xff] %v8932
  %8957 = vst [vmem:[#allocation4 + $0x380] sm:$0xff] %v8933
  %8958 = vst [vmem:[#allocation4 + $0x388] sm:$0xff] %v8934
  %8959 = vst [vmem:[#allocation4 + $0x390] sm:$0xff] %v8935
  %8960 = vst [vmem:[#allocation4 + $0x398] sm:$0xff] %v8936
  %8961 = vst [vmem:[#allocation4 + $0x3a0] sm:$0xff] %v8937
  %8962 = vst [vmem:[#allocation4 + $0x3a8] sm:$0xff] %v8938
  %8963 = vst [vmem:[#allocation4 + $0x3b0] sm:$0xff] %v8939
  %8964 = vst [vmem:[#allocation4 + $0x3b8] sm:$0xff] %v8940
  %v8965 = vld [vmem:[#allocation3 + $0x8] sm:$0xff]
  %v8966 = vld [vmem:[#allocation3 + $0x10] sm:$0xff]
  %v8967 = vld [vmem:[#allocation3 + $0x18] sm:$0xff]
  %v8968 = vld [vmem:[#allocation3 + $0x20] sm:$0xff]
  %v8969 = vld [vmem:[#allocation3 + $0x28] sm:$0xff]
  %v8970 = vld [vmem:[#allocation3 + $0x30] sm:$0xff]
  %v8971 = vld [vmem:[#allocation3 + $0x38] sm:$0xff]
  %v8972 = vld [vmem:[#allocation3 + $0x48] sm:$0xff]
  %v8973 = vld [vmem:[#allocation3 + $0x50] sm:$0xff]
  %v8974 = vld [vmem:[#allocation3 + $0x58] sm:$0xff]
  %v8975 = vld [vmem:[#allocation3 + $0x60] sm:$0xff]
  %v8976 = vld [vmem:[#allocation3 + $0x68] sm:$0xff]
  %v8977 = vld [vmem:[#allocation3 + $0x70] sm:$0xff]
  %v8978 = vld [vmem:[#allocation3 + $0x78] sm:$0xff]
  %v8979 = vld [vmem:[#allocation3 + $0x88] sm:$0xff]
  %v8980 = vld [vmem:[#allocation3 + $0x90] sm:$0xff]
  %v8981 = vld [vmem:[#allocation3 + $0x98] sm:$0xff]
  %v8982 = vld [vmem:[#allocation3 + $0xa0] sm:$0xff]
  %v8983 = vld [vmem:[#allocation3 + $0xa8] sm:$0xff]
  %v8984 = vld [vmem:[#allocation3 + $0xb0] sm:$0xff]
  %v8985 = vld [vmem:[#allocation3 + $0xb8] sm:$0xff]
  %v8986 = vld [vmem:[#allocation3 + $0xc8] sm:$0xff]
  %v8987 = vld [vmem:[#allocation3 + $0xd0] sm:$0xff]
  %v8988 = vld [vmem:[#allocation3 + $0xd8] sm:$0xff]
  %v8989 = vld [vmem:[#allocation3 + $0xe0] sm:$0xff]
  %v8990 = vld [vmem:[#allocation3 + $0xe8] sm:$0xff]
  %v8991 = vld [vmem:[#allocation3 + $0xf0] sm:$0xff]
  %v8992 = vld [vmem:[#allocation3 + $0xf8] sm:$0xff]
  %9021 = vrot.lane.b32.xlu0 %v8965, 127
  %v9022 = vpop.permute.xlu0 %9021
  %9023 = vrot.lane.b32.xlu0 %v8966, 127
  %v9024 = vpop.permute.xlu0 %9023
  %9025 = vrot.lane.b32.xlu0 %v8967, 127
  %v9026 = vpop.permute.xlu0 %9025
  %9027 = vrot.lane.b32.xlu0 %v8968, 127
  %v9028 = vpop.permute.xlu0 %9027
  %9029 = vrot.lane.b32.xlu0 %v8969, 127
  %v9030 = vpop.permute.xlu0 %9029
  %9031 = vrot.lane.b32.xlu0 %v8970, 127
  %v9032 = vpop.permute.xlu0 %9031
  %9033 = vrot.lane.b32.xlu0 %v8971, 127
  %v9034 = vpop.permute.xlu0 %9033
  %9035 = vrot.lane.b32.xlu0 %v8972, 127
  %v9036 = vpop.permute.xlu0 %9035
  %9037 = vrot.lane.b32.xlu0 %v8973, 127
  %v9038 = vpop.permute.xlu0 %9037
  %9039 = vrot.lane.b32.xlu0 %v8974, 127
  %v9040 = vpop.permute.xlu0 %9039
  %9041 = vrot.lane.b32.xlu0 %v8975, 127
  %v9042 = vpop.permute.xlu0 %9041
  %9043 = vrot.lane.b32.xlu0 %v8976, 127
  %v9044 = vpop.permute.xlu0 %9043
  %9045 = vrot.lane.b32.xlu0 %v8977, 127
  %v9046 = vpop.permute.xlu0 %9045
  %9047 = vrot.lane.b32.xlu0 %v8978, 127
  %v9048 = vpop.permute.xlu0 %9047
  %9049 = vrot.lane.b32.xlu0 %v8979, 127
  %v9050 = vpop.permute.xlu0 %9049
  %9051 = vrot.lane.b32.xlu0 %v8980, 127
  %v9052 = vpop.permute.xlu0 %9051
  %9053 = vrot.lane.b32.xlu0 %v8981, 127
  %v9054 = vpop.permute.xlu0 %9053
  %9055 = vrot.lane.b32.xlu0 %v8982, 127
  %v9056 = vpop.permute.xlu0 %9055
  %9057 = vrot.lane.b32.xlu0 %v8983, 127
  %v9058 = vpop.permute.xlu0 %9057
  %9059 = vrot.lane.b32.xlu0 %v8984, 127
  %v9060 = vpop.permute.xlu0 %9059
  %9061 = vrot.lane.b32.xlu0 %v8985, 127
  %v9062 = vpop.permute.xlu0 %9061
  %9063 = vrot.lane.b32.xlu0 %v8986, 127
  %v9064 = vpop.permute.xlu0 %9063
  %9065 = vrot.lane.b32.xlu0 %v8987, 127
  %v9066 = vpop.permute.xlu0 %9065
  %9067 = vrot.lane.b32.xlu0 %v8988, 127
  %v9068 = vpop.permute.xlu0 %9067
  %9069 = vrot.lane.b32.xlu0 %v8989, 127
  %v9070 = vpop.permute.xlu0 %9069
  %9071 = vrot.lane.b32.xlu0 %v8990, 127
  %v9072 = vpop.permute.xlu0 %9071
  %9073 = vrot.lane.b32.xlu0 %v8991, 127
  %v9074 = vpop.permute.xlu0 %9073
  %9075 = vrot.lane.b32.xlu0 %v8992, 127
  %v9076 = vpop.permute.xlu0 %9075
  %v9077 = vsel %vm137, %v9022, %v9024
  %v9078 = vsel %vm137, %v9024, %v9026
  %v9079 = vsel %vm137, %v9026, %v9028
  %v9080 = vsel %vm137, %v9028, %v9030
  %v9081 = vsel %vm137, %v9030, %v9032
  %v9082 = vsel %vm137, %v9032, %v9034
  %v9083 = vsel %vm137, %v9036, %v9038
  %v9084 = vsel %vm137, %v9038, %v9040
  %v9085 = vsel %vm137, %v9040, %v9042
  %v9086 = vsel %vm137, %v9042, %v9044
  %v9087 = vsel %vm137, %v9044, %v9046
  %v9088 = vsel %vm137, %v9046, %v9048
  %v9089 = vsel %vm137, %v9050, %v9052
  %v9090 = vsel %vm137, %v9052, %v9054
  %v9091 = vsel %vm137, %v9054, %v9056
  %v9092 = vsel %vm137, %v9056, %v9058
  %v9093 = vsel %vm137, %v9058, %v9060
  %v9094 = vsel %vm137, %v9060, %v9062
  %v9095 = vsel %vm137, %v9064, %v9066
  %v9096 = vsel %vm137, %v9066, %v9068
  %v9097 = vsel %vm137, %v9068, %v9070
  %v9098 = vsel %vm137, %v9070, %v9072
  %v9099 = vsel %vm137, %v9072, %v9074
  %v9100 = vsel %vm137, %v9074, %v9076
  %9125 = vst [vmem:[#allocation4 + $0x3c0] sm:$0xff] %v9077
  %9126 = vst [vmem:[#allocation4 + $0x3c8] sm:$0xff] %v9078
  %9127 = vst [vmem:[#allocation4 + $0x3d0] sm:$0xff] %v9079
  %9128 = vst [vmem:[#allocation4 + $0x3d8] sm:$0xff] %v9080
  %9129 = vst [vmem:[#allocation4 + $0x3e0] sm:$0xff] %v9081
  %9130 = vst [vmem:[#allocation4 + $0x3e8] sm:$0xff] %v9082
  %9131 = vst [vmem:[#allocation4 + $0x3f0] sm:$0xff] %v9083
  %9132 = vst [vmem:[#allocation4 + $0x3f8] sm:$0xff] %v9084
  %9133 = vst [vmem:[#allocation4 + $0x400] sm:$0xff] %v9085
  %9134 = vst [vmem:[#allocation4 + $0x408] sm:$0xff] %v9086
  %9135 = vst [vmem:[#allocation4 + $0x410] sm:$0xff] %v9087
  %9136 = vst [vmem:[#allocation4 + $0x418] sm:$0xff] %v9088
  %9137 = vst [vmem:[#allocation4 + $0x420] sm:$0xff] %v9089
  %9138 = vst [vmem:[#allocation4 + $0x428] sm:$0xff] %v9090
  %9139 = vst [vmem:[#allocation4 + $0x430] sm:$0xff] %v9091
  %9140 = vst [vmem:[#allocation4 + $0x438] sm:$0xff] %v9092
  %9141 = vst [vmem:[#allocation4 + $0x440] sm:$0xff] %v9093
  %9142 = vst [vmem:[#allocation4 + $0x448] sm:$0xff] %v9094
  %9143 = vst [vmem:[#allocation4 + $0x450] sm:$0xff] %v9095
  %9144 = vst [vmem:[#allocation4 + $0x458] sm:$0xff] %v9096
  %9145 = vst [vmem:[#allocation4 + $0x460] sm:$0xff] %v9097
  %9146 = vst [vmem:[#allocation4 + $0x468] sm:$0xff] %v9098
  %9147 = vst [vmem:[#allocation4 + $0x470] sm:$0xff] %v9099
  %9148 = vst [vmem:[#allocation4 + $0x478] sm:$0xff] %v9100
  %v9149 = vld [vmem:[#allocation3 + $0x8] sm:$0xff]
  %v9150 = vld [vmem:[#allocation3 + $0x10] sm:$0xff]
  %v9151 = vld [vmem:[#allocation3 + $0x18] sm:$0xff]
  %v9152 = vld [vmem:[#allocation3 + $0x20] sm:$0xff]
  %v9153 = vld [vmem:[#allocation3 + $0x28] sm:$0xff]
  %v9154 = vld [vmem:[#allocation3 + $0x30] sm:$0xff]
  %v9155 = vld [vmem:[#allocation3 + $0x38] sm:$0xff]
  %v9156 = vld [vmem:[#allocation3 + $0x48] sm:$0xff]
  %v9157 = vld [vmem:[#allocation3 + $0x50] sm:$0xff]
  %v9158 = vld [vmem:[#allocation3 + $0x58] sm:$0xff]
  %v9159 = vld [vmem:[#allocation3 + $0x60] sm:$0xff]
  %v9160 = vld [vmem:[#allocation3 + $0x68] sm:$0xff]
  %v9161 = vld [vmem:[#allocation3 + $0x70] sm:$0xff]
  %v9162 = vld [vmem:[#allocation3 + $0x78] sm:$0xff]
  %v9163 = vld [vmem:[#allocation3 + $0x88] sm:$0xff]
  %v9164 = vld [vmem:[#allocation3 + $0x90] sm:$0xff]
  %v9165 = vld [vmem:[#allocation3 + $0x98] sm:$0xff]
  %v9166 = vld [vmem:[#allocation3 + $0xa0] sm:$0xff]
  %v9167 = vld [vmem:[#allocation3 + $0xa8] sm:$0xff]
  %v9168 = vld [vmem:[#allocation3 + $0xb0] sm:$0xff]
  %v9169 = vld [vmem:[#allocation3 + $0xb8] sm:$0xff]
  %v9170 = vld [vmem:[#allocation3 + $0xc8] sm:$0xff]
  %v9171 = vld [vmem:[#allocation3 + $0xd0] sm:$0xff]
  %v9172 = vld [vmem:[#allocation3 + $0xd8] sm:$0xff]
  %v9173 = vld [vmem:[#allocation3 + $0xe0] sm:$0xff]
  %v9174 = vld [vmem:[#allocation3 + $0xe8] sm:$0xff]
  %v9175 = vld [vmem:[#allocation3 + $0xf0] sm:$0xff]
  %v9176 = vld [vmem:[#allocation3 + $0xf8] sm:$0xff]
  %9205 = vrot.lane.b32.xlu0 %v9149, 111
  %v9206 = vpop.permute.xlu0 %9205
  %9207 = vrot.lane.b32.xlu0 %v9150, 111
  %v9208 = vpop.permute.xlu0 %9207
  %9209 = vrot.lane.b32.xlu0 %v9151, 111
  %v9210 = vpop.permute.xlu0 %9209
  %9211 = vrot.lane.b32.xlu0 %v9152, 111
  %v9212 = vpop.permute.xlu0 %9211
  %9213 = vrot.lane.b32.xlu0 %v9153, 111
  %v9214 = vpop.permute.xlu0 %9213
  %9215 = vrot.lane.b32.xlu0 %v9154, 111
  %v9216 = vpop.permute.xlu0 %9215
  %9217 = vrot.lane.b32.xlu0 %v9155, 111
  %v9218 = vpop.permute.xlu0 %9217
  %9219 = vrot.lane.b32.xlu0 %v9156, 111
  %v9220 = vpop.permute.xlu0 %9219
  %9221 = vrot.lane.b32.xlu0 %v9157, 111
  %v9222 = vpop.permute.xlu0 %9221
  %9223 = vrot.lane.b32.xlu0 %v9158, 111
  %v9224 = vpop.permute.xlu0 %9223
  %9225 = vrot.lane.b32.xlu0 %v9159, 111
  %v9226 = vpop.permute.xlu0 %9225
  %9227 = vrot.lane.b32.xlu0 %v9160, 111
  %v9228 = vpop.permute.xlu0 %9227
  %9229 = vrot.lane.b32.xlu0 %v9161, 111
  %v9230 = vpop.permute.xlu0 %9229
  %9231 = vrot.lane.b32.xlu0 %v9162, 111
  %v9232 = vpop.permute.xlu0 %9231
  %9233 = vrot.lane.b32.xlu0 %v9163, 111
  %v9234 = vpop.permute.xlu0 %9233
  %9235 = vrot.lane.b32.xlu0 %v9164, 111
  %v9236 = vpop.permute.xlu0 %9235
  %9237 = vrot.lane.b32.xlu0 %v9165, 111
  %v9238 = vpop.permute.xlu0 %9237
  %9239 = vrot.lane.b32.xlu0 %v9166, 111
  %v9240 = vpop.permute.xlu0 %9239
  %9241 = vrot.lane.b32.xlu0 %v9167, 111
  %v9242 = vpop.permute.xlu0 %9241
  %9243 = vrot.lane.b32.xlu0 %v9168, 111
  %v9244 = vpop.permute.xlu0 %9243
  %9245 = vrot.lane.b32.xlu0 %v9169, 111
  %v9246 = vpop.permute.xlu0 %9245
  %9247 = vrot.lane.b32.xlu0 %v9170, 111
  %v9248 = vpop.permute.xlu0 %9247
  %9249 = vrot.lane.b32.xlu0 %v9171, 111
  %v9250 = vpop.permute.xlu0 %9249
  %9251 = vrot.lane.b32.xlu0 %v9172, 111
  %v9252 = vpop.permute.xlu0 %9251
  %9253 = vrot.lane.b32.xlu0 %v9173, 111
  %v9254 = vpop.permute.xlu0 %9253
  %9255 = vrot.lane.b32.xlu0 %v9174, 111
  %v9256 = vpop.permute.xlu0 %9255
  %9257 = vrot.lane.b32.xlu0 %v9175, 111
  %v9258 = vpop.permute.xlu0 %9257
  %9259 = vrot.lane.b32.xlu0 %v9176, 111
  %v9260 = vpop.permute.xlu0 %9259
  %v9261 = vsel %vm2031, %v9206, %v9208
  %v9262 = vsel %vm2031, %v9208, %v9210
  %v9263 = vsel %vm2031, %v9210, %v9212
  %v9264 = vsel %vm2031, %v9212, %v9214
  %v9265 = vsel %vm2031, %v9214, %v9216
  %v9266 = vsel %vm2031, %v9216, %v9218
  %v9267 = vsel %vm2031, %v9220, %v9222
  %v9268 = vsel %vm2031, %v9222, %v9224
  %v9269 = vsel %vm2031, %v9224, %v9226
  %v9270 = vsel %vm2031, %v9226, %v9228
  %v9271 = vsel %vm2031, %v9228, %v9230
  %v9272 = vsel %vm2031, %v9230, %v9232
  %v9273 = vsel %vm2031, %v9234, %v9236
  %v9274 = vsel %vm2031, %v9236, %v9238
  %v9275 = vsel %vm2031, %v9238, %v9240
  %v9276 = vsel %vm2031, %v9240, %v9242
  %v9277 = vsel %vm2031, %v9242, %v9244
  %v9278 = vsel %vm2031, %v9244, %v9246
  %v9279 = vsel %vm2031, %v9248, %v9250
  %v9280 = vsel %vm2031, %v9250, %v9252
  %v9281 = vsel %vm2031, %v9252, %v9254
  %v9282 = vsel %vm2031, %v9254, %v9256
  %v9283 = vsel %vm2031, %v9256, %v9258
  %v9284 = vsel %vm2031, %v9258, %v9260
  %9309 = vst [vmem:[#allocation4 + $0x480] sm:$0xff] %v9261
  %9310 = vst [vmem:[#allocation4 + $0x488] sm:$0xff] %v9262
  %9311 = vst [vmem:[#allocation4 + $0x490] sm:$0xff] %v9263
  %9312 = vst [vmem:[#allocation4 + $0x498] sm:$0xff] %v9264
  %9313 = vst [vmem:[#allocation4 + $0x4a0] sm:$0xff] %v9265
  %9314 = vst [vmem:[#allocation4 + $0x4a8] sm:$0xff] %v9266
  %9315 = vst [vmem:[#allocation4 + $0x4b0] sm:$0xff] %v9267
  %9316 = vst [vmem:[#allocation4 + $0x4b8] sm:$0xff] %v9268
  %9317 = vst [vmem:[#allocation4 + $0x4c0] sm:$0xff] %v9269
  %9318 = vst [vmem:[#allocation4 + $0x4c8] sm:$0xff] %v9270
  %9319 = vst [vmem:[#allocation4 + $0x4d0] sm:$0xff] %v9271
  %9320 = vst [vmem:[#allocation4 + $0x4d8] sm:$0xff] %v9272
  %9321 = vst [vmem:[#allocation4 + $0x4e0] sm:$0xff] %v9273
  %9322 = vst [vmem:[#allocation4 + $0x4e8] sm:$0xff] %v9274
  %9323 = vst [vmem:[#allocation4 + $0x4f0] sm:$0xff] %v9275
  %9324 = vst [vmem:[#allocation4 + $0x4f8] sm:$0xff] %v9276
  %9325 = vst [vmem:[#allocation4 + $0x500] sm:$0xff] %v9277
  %9326 = vst [vmem:[#allocation4 + $0x508] sm:$0xff] %v9278
  %9327 = vst [vmem:[#allocation4 + $0x510] sm:$0xff] %v9279
  %9328 = vst [vmem:[#allocation4 + $0x518] sm:$0xff] %v9280
  %9329 = vst [vmem:[#allocation4 + $0x520] sm:$0xff] %v9281
  %9330 = vst [vmem:[#allocation4 + $0x528] sm:$0xff] %v9282
  %9331 = vst [vmem:[#allocation4 + $0x530] sm:$0xff] %v9283
  %9332 = vst [vmem:[#allocation4 + $0x538] sm:$0xff] %v9284
  %v9333 = vld [vmem:[#allocation3 + $0x8] sm:$0xff]
  %v9334 = vld [vmem:[#allocation3 + $0x10] sm:$0xff]
  %v9335 = vld [vmem:[#allocation3 + $0x18] sm:$0xff]
  %v9336 = vld [vmem:[#allocation3 + $0x20] sm:$0xff]
  %v9337 = vld [vmem:[#allocation3 + $0x28] sm:$0xff]
  %v9338 = vld [vmem:[#allocation3 + $0x30] sm:$0xff]
  %v9339 = vld [vmem:[#allocation3 + $0x38] sm:$0xff]
  %v9340 = vld [vmem:[#allocation3 + $0x48] sm:$0xff]
  %v9341 = vld [vmem:[#allocation3 + $0x50] sm:$0xff]
  %v9342 = vld [vmem:[#allocation3 + $0x58] sm:$0xff]
  %v9343 = vld [vmem:[#allocation3 + $0x60] sm:$0xff]
  %v9344 = vld [vmem:[#allocation3 + $0x68] sm:$0xff]
  %v9345 = vld [vmem:[#allocation3 + $0x70] sm:$0xff]
  %v9346 = vld [vmem:[#allocation3 + $0x78] sm:$0xff]
  %v9347 = vld [vmem:[#allocation3 + $0x88] sm:$0xff]
  %v9348 = vld [vmem:[#allocation3 + $0x90] sm:$0xff]
  %v9349 = vld [vmem:[#allocation3 + $0x98] sm:$0xff]
  %v9350 = vld [vmem:[#allocation3 + $0xa0] sm:$0xff]
  %v9351 = vld [vmem:[#allocation3 + $0xa8] sm:$0xff]
  %v9352 = vld [vmem:[#allocation3 + $0xb0] sm:$0xff]
  %v9353 = vld [vmem:[#allocation3 + $0xb8] sm:$0xff]
  %v9354 = vld [vmem:[#allocation3 + $0xc8] sm:$0xff]
  %v9355 = vld [vmem:[#allocation3 + $0xd0] sm:$0xff]
  %v9356 = vld [vmem:[#allocation3 + $0xd8] sm:$0xff]
  %v9357 = vld [vmem:[#allocation3 + $0xe0] sm:$0xff]
  %v9358 = vld [vmem:[#allocation3 + $0xe8] sm:$0xff]
  %v9359 = vld [vmem:[#allocation3 + $0xf0] sm:$0xff]
  %v9360 = vld [vmem:[#allocation3 + $0xf8] sm:$0xff]
  %9389 = vrot.lane.b32.xlu0 %v9333, 110
  %v9390 = vpop.permute.xlu0 %9389
  %9391 = vrot.lane.b32.xlu0 %v9334, 110
  %v9392 = vpop.permute.xlu0 %9391
  %9393 = vrot.lane.b32.xlu0 %v9335, 110
  %v9394 = vpop.permute.xlu0 %9393
  %9395 = vrot.lane.b32.xlu0 %v9336, 110
  %v9396 = vpop.permute.xlu0 %9395
  %9397 = vrot.lane.b32.xlu0 %v9337, 110
  %v9398 = vpop.permute.xlu0 %9397
  %9399 = vrot.lane.b32.xlu0 %v9338, 110
  %v9400 = vpop.permute.xlu0 %9399
  %9401 = vrot.lane.b32.xlu0 %v9339, 110
  %v9402 = vpop.permute.xlu0 %9401
  %9403 = vrot.lane.b32.xlu0 %v9340, 110
  %v9404 = vpop.permute.xlu0 %9403
  %9405 = vrot.lane.b32.xlu0 %v9341, 110
  %v9406 = vpop.permute.xlu0 %9405
  %9407 = vrot.lane.b32.xlu0 %v9342, 110
  %v9408 = vpop.permute.xlu0 %9407
  %9409 = vrot.lane.b32.xlu0 %v9343, 110
  %v9410 = vpop.permute.xlu0 %9409
  %9411 = vrot.lane.b32.xlu0 %v9344, 110
  %v9412 = vpop.permute.xlu0 %9411
  %9413 = vrot.lane.b32.xlu0 %v9345, 110
  %v9414 = vpop.permute.xlu0 %9413
  %9415 = vrot.lane.b32.xlu0 %v9346, 110
  %v9416 = vpop.permute.xlu0 %9415
  %9417 = vrot.lane.b32.xlu0 %v9347, 110
  %v9418 = vpop.permute.xlu0 %9417
  %9419 = vrot.lane.b32.xlu0 %v9348, 110
  %v9420 = vpop.permute.xlu0 %9419
  %9421 = vrot.lane.b32.xlu0 %v9349, 110
  %v9422 = vpop.permute.xlu0 %9421
  %9423 = vrot.lane.b32.xlu0 %v9350, 110
  %v9424 = vpop.permute.xlu0 %9423
  %9425 = vrot.lane.b32.xlu0 %v9351, 110
  %v9426 = vpop.permute.xlu0 %9425
  %9427 = vrot.lane.b32.xlu0 %v9352, 110
  %v9428 = vpop.permute.xlu0 %9427
  %9429 = vrot.lane.b32.xlu0 %v9353, 110
  %v9430 = vpop.permute.xlu0 %9429
  %9431 = vrot.lane.b32.xlu0 %v9354, 110
  %v9432 = vpop.permute.xlu0 %9431
  %9433 = vrot.lane.b32.xlu0 %v9355, 110
  %v9434 = vpop.permute.xlu0 %9433
  %9435 = vrot.lane.b32.xlu0 %v9356, 110
  %v9436 = vpop.permute.xlu0 %9435
  %9437 = vrot.lane.b32.xlu0 %v9357, 110
  %v9438 = vpop.permute.xlu0 %9437
  %9439 = vrot.lane.b32.xlu0 %v9358, 110
  %v9440 = vpop.permute.xlu0 %9439
  %9441 = vrot.lane.b32.xlu0 %v9359, 110
  %v9442 = vpop.permute.xlu0 %9441
  %9443 = vrot.lane.b32.xlu0 %v9360, 110
  %v9444 = vpop.permute.xlu0 %9443
  %v9445 = vsel %vm193, %v9390, %v9392
  %v9446 = vsel %vm193, %v9392, %v9394
  %v9447 = vsel %vm193, %v9394, %v9396
  %v9448 = vsel %vm193, %v9396, %v9398
  %v9449 = vsel %vm193, %v9398, %v9400
  %v9450 = vsel %vm193, %v9400, %v9402
  %v9451 = vsel %vm193, %v9404, %v9406
  %v9452 = vsel %vm193, %v9406, %v9408
  %v9453 = vsel %vm193, %v9408, %v9410
  %v9454 = vsel %vm193, %v9410, %v9412
  %v9455 = vsel %vm193, %v9412, %v9414
  %v9456 = vsel %vm193, %v9414, %v9416
  %v9457 = vsel %vm193, %v9418, %v9420
  %v9458 = vsel %vm193, %v9420, %v9422
  %v9459 = vsel %vm193, %v9422, %v9424
  %v9460 = vsel %vm193, %v9424, %v9426
  %v9461 = vsel %vm193, %v9426, %v9428
  %v9462 = vsel %vm193, %v9428, %v9430
  %v9463 = vsel %vm193, %v9432, %v9434
  %v9464 = vsel %vm193, %v9434, %v9436
  %v9465 = vsel %vm193, %v9436, %v9438
  %v9466 = vsel %vm193, %v9438, %v9440
  %v9467 = vsel %vm193, %v9440, %v9442
  %v9468 = vsel %vm193, %v9442, %v9444
  %9493 = vst [vmem:[#allocation4 + $0x540] sm:$0xff] %v9445
  %9494 = vst [vmem:[#allocation4 + $0x548] sm:$0xff] %v9446
  %9495 = vst [vmem:[#allocation4 + $0x550] sm:$0xff] %v9447
  %9496 = vst [vmem:[#allocation4 + $0x558] sm:$0xff] %v9448
  %9497 = vst [vmem:[#allocation4 + $0x560] sm:$0xff] %v9449
  %9498 = vst [vmem:[#allocation4 + $0x568] sm:$0xff] %v9450
  %9499 = vst [vmem:[#allocation4 + $0x570] sm:$0xff] %v9451
  %9500 = vst [vmem:[#allocation4 + $0x578] sm:$0xff] %v9452
  %9501 = vst [vmem:[#allocation4 + $0x580] sm:$0xff] %v9453
  %9502 = vst [vmem:[#allocation4 + $0x588] sm:$0xff] %v9454
  %9503 = vst [vmem:[#allocation4 + $0x590] sm:$0xff] %v9455
  %9504 = vst [vmem:[#allocation4 + $0x598] sm:$0xff] %v9456
  %9505 = vst [vmem:[#allocation4 + $0x5a0] sm:$0xff] %v9457
  %9506 = vst [vmem:[#allocation4 + $0x5a8] sm:$0xff] %v9458
  %9507 = vst [vmem:[#allocation4 + $0x5b0] sm:$0xff] %v9459
  %9508 = vst [vmem:[#allocation4 + $0x5b8] sm:$0xff] %v9460
  %9509 = vst [vmem:[#allocation4 + $0x5c0] sm:$0xff] %v9461
  %9510 = vst [vmem:[#allocation4 + $0x5c8] sm:$0xff] %v9462
  %9511 = vst [vmem:[#allocation4 + $0x5d0] sm:$0xff] %v9463
  %9512 = vst [vmem:[#allocation4 + $0x5d8] sm:$0xff] %v9464
  %9513 = vst [vmem:[#allocation4 + $0x5e0] sm:$0xff] %v9465
  %9514 = vst [vmem:[#allocation4 + $0x5e8] sm:$0xff] %v9466
  %9515 = vst [vmem:[#allocation4 + $0x5f0] sm:$0xff] %v9467
  %9516 = vst [vmem:[#allocation4 + $0x5f8] sm:$0xff] %v9468
  %v9517 = vld [vmem:[#allocation3 + $0x8] sm:$0xff]
  %v9518 = vld [vmem:[#allocation3 + $0x10] sm:$0xff]
  %v9519 = vld [vmem:[#allocation3 + $0x18] sm:$0xff]
  %v9520 = vld [vmem:[#allocation3 + $0x20] sm:$0xff]
  %v9521 = vld [vmem:[#allocation3 + $0x28] sm:$0xff]
  %v9522 = vld [vmem:[#allocation3 + $0x30] sm:$0xff]
  %v9523 = vld [vmem:[#allocation3 + $0x38] sm:$0xff]
  %v9524 = vld [vmem:[#allocation3 + $0x48] sm:$0xff]
  %v9525 = vld [vmem:[#allocation3 + $0x50] sm:$0xff]
  %v9526 = vld [vmem:[#allocation3 + $0x58] sm:$0xff]
  %v9527 = vld [vmem:[#allocation3 + $0x60] sm:$0xff]
  %v9528 = vld [vmem:[#allocation3 + $0x68] sm:$0xff]
  %v9529 = vld [vmem:[#allocation3 + $0x70] sm:$0xff]
  %v9530 = vld [vmem:[#allocation3 + $0x78] sm:$0xff]
  %v9531 = vld [vmem:[#allocation3 + $0x88] sm:$0xff]
  %v9532 = vld [vmem:[#allocation3 + $0x90] sm:$0xff]
  %v9533 = vld [vmem:[#allocation3 + $0x98] sm:$0xff]
  %v9534 = vld [vmem:[#allocation3 + $0xa0] sm:$0xff]
  %v9535 = vld [vmem:[#allocation3 + $0xa8] sm:$0xff]
  %v9536 = vld [vmem:[#allocation3 + $0xb0] sm:$0xff]
  %v9537 = vld [vmem:[#allocation3 + $0xb8] sm:$0xff]
  %v9538 = vld [vmem:[#allocation3 + $0xc8] sm:$0xff]
  %v9539 = vld [vmem:[#allocation3 + $0xd0] sm:$0xff]
  %v9540 = vld [vmem:[#allocation3 + $0xd8] sm:$0xff]
  %v9541 = vld [vmem:[#allocation3 + $0xe0] sm:$0xff]
  %v9542 = vld [vmem:[#allocation3 + $0xe8] sm:$0xff]
  %v9543 = vld [vmem:[#allocation3 + $0xf0] sm:$0xff]
  %v9544 = vld [vmem:[#allocation3 + $0xf8] sm:$0xff]
  %9573 = vrot.lane.b32.xlu0 %v9517, 109
  %v9574 = vpop.permute.xlu0 %9573
  %9575 = vrot.lane.b32.xlu0 %v9518, 109
  %v9576 = vpop.permute.xlu0 %9575
  %9577 = vrot.lane.b32.xlu0 %v9519, 109
  %v9578 = vpop.permute.xlu0 %9577
  %9579 = vrot.lane.b32.xlu0 %v9520, 109
  %v9580 = vpop.permute.xlu0 %9579
  %9581 = vrot.lane.b32.xlu0 %v9521, 109
  %v9582 = vpop.permute.xlu0 %9581
  %9583 = vrot.lane.b32.xlu0 %v9522, 109
  %v9584 = vpop.permute.xlu0 %9583
  %9585 = vrot.lane.b32.xlu0 %v9523, 109
  %v9586 = vpop.permute.xlu0 %9585
  %9587 = vrot.lane.b32.xlu0 %v9524, 109
  %v9588 = vpop.permute.xlu0 %9587
  %9589 = vrot.lane.b32.xlu0 %v9525, 109
  %v9590 = vpop.permute.xlu0 %9589
  %9591 = vrot.lane.b32.xlu0 %v9526, 109
  %v9592 = vpop.permute.xlu0 %9591
  %9593 = vrot.lane.b32.xlu0 %v9527, 109
  %v9594 = vpop.permute.xlu0 %9593
  %9595 = vrot.lane.b32.xlu0 %v9528, 109
  %v9596 = vpop.permute.xlu0 %9595
  %9597 = vrot.lane.b32.xlu0 %v9529, 109
  %v9598 = vpop.permute.xlu0 %9597
  %9599 = vrot.lane.b32.xlu0 %v9530, 109
  %v9600 = vpop.permute.xlu0 %9599
  %9601 = vrot.lane.b32.xlu0 %v9531, 109
  %v9602 = vpop.permute.xlu0 %9601
  %9603 = vrot.lane.b32.xlu0 %v9532, 109
  %v9604 = vpop.permute.xlu0 %9603
  %9605 = vrot.lane.b32.xlu0 %v9533, 109
  %v9606 = vpop.permute.xlu0 %9605
  %9607 = vrot.lane.b32.xlu0 %v9534, 109
  %v9608 = vpop.permute.xlu0 %9607
  %9609 = vrot.lane.b32.xlu0 %v9535, 109
  %v9610 = vpop.permute.xlu0 %9609
  %9611 = vrot.lane.b32.xlu0 %v9536, 109
  %v9612 = vpop.permute.xlu0 %9611
  %9613 = vrot.lane.b32.xlu0 %v9537, 109
  %v9614 = vpop.permute.xlu0 %9613
  %9615 = vrot.lane.b32.xlu0 %v9538, 109
  %v9616 = vpop.permute.xlu0 %9615
  %9617 = vrot.lane.b32.xlu0 %v9539, 109
  %v9618 = vpop.permute.xlu0 %9617
  %9619 = vrot.lane.b32.xlu0 %v9540, 109
  %v9620 = vpop.permute.xlu0 %9619
  %9621 = vrot.lane.b32.xlu0 %v9541, 109
  %v9622 = vpop.permute.xlu0 %9621
  %9623 = vrot.lane.b32.xlu0 %v9542, 109
  %v9624 = vpop.permute.xlu0 %9623
  %9625 = vrot.lane.b32.xlu0 %v9543, 109
  %v9626 = vpop.permute.xlu0 %9625
  %9627 = vrot.lane.b32.xlu0 %v9544, 109
  %v9628 = vpop.permute.xlu0 %9627
  %v9629 = vsel %vm244, %v9574, %v9576
  %v9630 = vsel %vm244, %v9576, %v9578
  %v9631 = vsel %vm244, %v9578, %v9580
  %v9632 = vsel %vm244, %v9580, %v9582
  %v9633 = vsel %vm244, %v9582, %v9584
  %v9634 = vsel %vm244, %v9584, %v9586
  %v9635 = vsel %vm244, %v9588, %v9590
  %v9636 = vsel %vm244, %v9590, %v9592
  %v9637 = vsel %vm244, %v9592, %v9594
  %v9638 = vsel %vm244, %v9594, %v9596
  %v9639 = vsel %vm244, %v9596, %v9598
  %v9640 = vsel %vm244, %v9598, %v9600
  %v9641 = vsel %vm244, %v9602, %v9604
  %v9642 = vsel %vm244, %v9604, %v9606
  %v9643 = vsel %vm244, %v9606, %v9608
  %v9644 = vsel %vm244, %v9608, %v9610
  %v9645 = vsel %vm244, %v9610, %v9612
  %v9646 = vsel %vm244, %v9612, %v9614
  %v9647 = vsel %vm244, %v9616, %v9618
  %v9648 = vsel %vm244, %v9618, %v9620
  %v9649 = vsel %vm244, %v9620, %v9622
  %v9650 = vsel %vm244, %v9622, %v9624
  %v9651 = vsel %vm244, %v9624, %v9626
  %v9652 = vsel %vm244, %v9626, %v9628
  %9677 = vst [vmem:[#allocation4 + $0x600] sm:$0xff] %v9629
  %9678 = vst [vmem:[#allocation4 + $0x608] sm:$0xff] %v9630
  %9679 = vst [vmem:[#allocation4 + $0x610] sm:$0xff] %v9631
  %9680 = vst [vmem:[#allocation4 + $0x618] sm:$0xff] %v9632
  %9681 = vst [vmem:[#allocation4 + $0x620] sm:$0xff] %v9633
  %9682 = vst [vmem:[#allocation4 + $0x628] sm:$0xff] %v9634
  %9683 = vst [vmem:[#allocation4 + $0x630] sm:$0xff] %v9635
  %9684 = vst [vmem:[#allocation4 + $0x638] sm:$0xff] %v9636
  %9685 = vst [vmem:[#allocation4 + $0x640] sm:$0xff] %v9637
  %9686 = vst [vmem:[#allocation4 + $0x648] sm:$0xff] %v9638
  %9687 = vst [vmem:[#allocation4 + $0x650] sm:$0xff] %v9639
  %9688 = vst [vmem:[#allocation4 + $0x658] sm:$0xff] %v9640
  %9689 = vst [vmem:[#allocation4 + $0x660] sm:$0xff] %v9641
  %9690 = vst [vmem:[#allocation4 + $0x668] sm:$0xff] %v9642
  %9691 = vst [vmem:[#allocation4 + $0x670] sm:$0xff] %v9643
  %9692 = vst [vmem:[#allocation4 + $0x678] sm:$0xff] %v9644
  %9693 = vst [vmem:[#allocation4 + $0x680] sm:$0xff] %v9645
  %9694 = vst [vmem:[#allocation4 + $0x688] sm:$0xff] %v9646
  %9695 = vst [vmem:[#allocation4 + $0x690] sm:$0xff] %v9647
  %9696 = vst [vmem:[#allocation4 + $0x698] sm:$0xff] %v9648
  %9697 = vst [vmem:[#allocation4 + $0x6a0] sm:$0xff] %v9649
  %9698 = vst [vmem:[#allocation4 + $0x6a8] sm:$0xff] %v9650
  %9699 = vst [vmem:[#allocation4 + $0x6b0] sm:$0xff] %v9651
  %9700 = vst [vmem:[#allocation4 + $0x6b8] sm:$0xff] %v9652
  %v9701 = vld [vmem:[#allocation4] sm:$0xff]
  %v9702 = vld [vmem:[#allocation4 + $0x8] sm:$0xff]
  %v9703 = vld [vmem:[#allocation4 + $0x10] sm:$0xff]
  %v9704 = vld [vmem:[#allocation4 + $0x18] sm:$0xff]
  %v9705 = vld [vmem:[#allocation4 + $0x20] sm:$0xff]
  %v9706 = vld [vmem:[#allocation4 + $0x28] sm:$0xff]
  %v9707 = vld [vmem:[#allocation4 + $0x30] sm:$0xff]
  %v9708 = vld [vmem:[#allocation4 + $0x38] sm:$0xff]
  %v9709 = vld [vmem:[#allocation4 + $0x40] sm:$0xff]
  %v9710 = vld [vmem:[#allocation4 + $0x48] sm:$0xff]
  %v9711 = vld [vmem:[#allocation4 + $0x50] sm:$0xff]
  %v9712 = vld [vmem:[#allocation4 + $0x58] sm:$0xff]
  %v9713 = vld [vmem:[#allocation4 + $0x60] sm:$0xff]
  %v9714 = vld [vmem:[#allocation4 + $0x68] sm:$0xff]
  %v9715 = vld [vmem:[#allocation4 + $0x70] sm:$0xff]
  %v9716 = vld [vmem:[#allocation4 + $0x78] sm:$0xff]
  %v9717 = vld [vmem:[#allocation4 + $0x80] sm:$0xff]
  %v9718 = vld [vmem:[#allocation4 + $0x88] sm:$0xff]
  %v9719 = vld [vmem:[#allocation4 + $0x90] sm:$0xff]
  %v9720 = vld [vmem:[#allocation4 + $0x98] sm:$0xff]
  %v9721 = vld [vmem:[#allocation4 + $0xa0] sm:$0xff]
  %v9722 = vld [vmem:[#allocation4 + $0xa8] sm:$0xff]
  %v9723 = vld [vmem:[#allocation4 + $0xb0] sm:$0xff]
  %v9724 = vld [vmem:[#allocation4 + $0xb8] sm:$0xff]
  %v9725 = vld [vmem:[#allocation4 + $0xc0] sm:$0xff]
  %v9726 = vld [vmem:[#allocation4 + $0xc8] sm:$0xff]
  %v9727 = vld [vmem:[#allocation4 + $0xd0] sm:$0xff]
  %v9728 = vld [vmem:[#allocation4 + $0xd8] sm:$0xff]
  %v9729 = vld [vmem:[#allocation4 + $0xe0] sm:$0xff]
  %v9730 = vld [vmem:[#allocation4 + $0xe8] sm:$0xff]
  %v9731 = vld [vmem:[#allocation4 + $0xf0] sm:$0xff]
  %v9732 = vld [vmem:[#allocation4 + $0xf8] sm:$0xff]
  %v9733 = vld [vmem:[#allocation4 + $0x100] sm:$0xff]
  %v9734 = vld [vmem:[#allocation4 + $0x108] sm:$0xff]
  %v9735 = vld [vmem:[#allocation4 + $0x110] sm:$0xff]
  %v9736 = vld [vmem:[#allocation4 + $0x118] sm:$0xff]
  %v9737 = vld [vmem:[#allocation4 + $0x120] sm:$0xff]
  %v9738 = vld [vmem:[#allocation4 + $0x128] sm:$0xff]
  %v9739 = vld [vmem:[#allocation4 + $0x130] sm:$0xff]
  %v9740 = vld [vmem:[#allocation4 + $0x138] sm:$0xff]
  %v9741 = vld [vmem:[#allocation4 + $0x140] sm:$0xff]
  %v9742 = vld [vmem:[#allocation4 + $0x148] sm:$0xff]
  %v9743 = vld [vmem:[#allocation4 + $0x150] sm:$0xff]
  %v9744 = vld [vmem:[#allocation4 + $0x158] sm:$0xff]
  %v9745 = vld [vmem:[#allocation4 + $0x160] sm:$0xff]
  %v9746 = vld [vmem:[#allocation4 + $0x168] sm:$0xff]
  %v9747 = vld [vmem:[#allocation4 + $0x170] sm:$0xff]
  %v9748 = vld [vmem:[#allocation4 + $0x178] sm:$0xff]
  %v9749 = vld [vmem:[#allocation4 + $0x180] sm:$0xff]
  %v9750 = vld [vmem:[#allocation4 + $0x188] sm:$0xff]
  %v9751 = vld [vmem:[#allocation4 + $0x190] sm:$0xff]
  %v9752 = vld [vmem:[#allocation4 + $0x198] sm:$0xff]
  %v9753 = vld [vmem:[#allocation4 + $0x1a0] sm:$0xff]
  %v9754 = vld [vmem:[#allocation4 + $0x1a8] sm:$0xff]
  %v9755 = vld [vmem:[#allocation4 + $0x1b0] sm:$0xff]
  %v9756 = vld [vmem:[#allocation4 + $0x1b8] sm:$0xff]
  %v9757 = vld [vmem:[#allocation4 + $0x1c0] sm:$0xff]
  %v9758 = vld [vmem:[#allocation4 + $0x1c8] sm:$0xff]
  %v9759 = vld [vmem:[#allocation4 + $0x1d0] sm:$0xff]
  %v9760 = vld [vmem:[#allocation4 + $0x1d8] sm:$0xff]
  %v9761 = vld [vmem:[#allocation4 + $0x1e0] sm:$0xff]
  %v9762 = vld [vmem:[#allocation4 + $0x1e8] sm:$0xff]
  %v9763 = vld [vmem:[#allocation4 + $0x1f0] sm:$0xff]
  %v9764 = vld [vmem:[#allocation4 + $0x1f8] sm:$0xff]
  %v9765 = vld [vmem:[#allocation4 + $0x200] sm:$0xff]
  %v9766 = vld [vmem:[#allocation4 + $0x208] sm:$0xff]
  %v9767 = vld [vmem:[#allocation4 + $0x210] sm:$0xff]
  %v9768 = vld [vmem:[#allocation4 + $0x218] sm:$0xff]
  %v9769 = vld [vmem:[#allocation4 + $0x220] sm:$0xff]
  %v9770 = vld [vmem:[#allocation4 + $0x228] sm:$0xff]
  %v9771 = vld [vmem:[#allocation4 + $0x230] sm:$0xff]
  %v9772 = vld [vmem:[#allocation4 + $0x238] sm:$0xff]
  %v9773 = vld [vmem:[#allocation4 + $0x240] sm:$0xff]
  %v9774 = vld [vmem:[#allocation4 + $0x248] sm:$0xff]
  %v9775 = vld [vmem:[#allocation4 + $0x250] sm:$0xff]
  %v9776 = vld [vmem:[#allocation4 + $0x258] sm:$0xff]
  %v9777 = vld [vmem:[#allocation4 + $0x260] sm:$0xff]
  %v9778 = vld [vmem:[#allocation4 + $0x268] sm:$0xff]
  %v9779 = vld [vmem:[#allocation4 + $0x270] sm:$0xff]
  %v9780 = vld [vmem:[#allocation4 + $0x278] sm:$0xff]
  %v9781 = vld [vmem:[#allocation4 + $0x280] sm:$0xff]
  %v9782 = vld [vmem:[#allocation4 + $0x288] sm:$0xff]
  %v9783 = vld [vmem:[#allocation4 + $0x290] sm:$0xff]
  %v9784 = vld [vmem:[#allocation4 + $0x298] sm:$0xff]
  %v9785 = vld [vmem:[#allocation4 + $0x2a0] sm:$0xff]
  %v9786 = vld [vmem:[#allocation4 + $0x2a8] sm:$0xff]
  %v9787 = vld [vmem:[#allocation4 + $0x2b0] sm:$0xff]
  %v9788 = vld [vmem:[#allocation4 + $0x2b8] sm:$0xff]
  %v9789 = vld [vmem:[#allocation4 + $0x2c0] sm:$0xff]
  %v9790 = vld [vmem:[#allocation4 + $0x2c8] sm:$0xff]
  %v9791 = vld [vmem:[#allocation4 + $0x2d0] sm:$0xff]
  %v9792 = vld [vmem:[#allocation4 + $0x2d8] sm:$0xff]
  %v9793 = vld [vmem:[#allocation4 + $0x2e0] sm:$0xff]
  %v9794 = vld [vmem:[#allocation4 + $0x2e8] sm:$0xff]
  %v9795 = vld [vmem:[#allocation4 + $0x2f0] sm:$0xff]
  %v9796 = vld [vmem:[#allocation4 + $0x2f8] sm:$0xff]
  %v9797 = vld [vmem:[#allocation4 + $0x300] sm:$0xff]
  %v9798 = vld [vmem:[#allocation4 + $0x308] sm:$0xff]
  %v9799 = vld [vmem:[#allocation4 + $0x310] sm:$0xff]
  %v9800 = vld [vmem:[#allocation4 + $0x318] sm:$0xff]
  %v9801 = vld [vmem:[#allocation4 + $0x320] sm:$0xff]
  %v9802 = vld [vmem:[#allocation4 + $0x328] sm:$0xff]
  %v9803 = vld [vmem:[#allocation4 + $0x330] sm:$0xff]
  %v9804 = vld [vmem:[#allocation4 + $0x338] sm:$0xff]
  %v9805 = vld [vmem:[#allocation4 + $0x340] sm:$0xff]
  %v9806 = vld [vmem:[#allocation4 + $0x348] sm:$0xff]
  %v9807 = vld [vmem:[#allocation4 + $0x350] sm:$0xff]
  %v9808 = vld [vmem:[#allocation4 + $0x358] sm:$0xff]
  %v9809 = vld [vmem:[#allocation4 + $0x360] sm:$0xff]
  %v9810 = vld [vmem:[#allocation4 + $0x368] sm:$0xff]
  %v9811 = vld [vmem:[#allocation4 + $0x370] sm:$0xff]
  %v9812 = vld [vmem:[#allocation4 + $0x378] sm:$0xff]
  %v9813 = vld [vmem:[#allocation4 + $0x380] sm:$0xff]
  %v9814 = vld [vmem:[#allocation4 + $0x388] sm:$0xff]
  %v9815 = vld [vmem:[#allocation4 + $0x390] sm:$0xff]
  %v9816 = vld [vmem:[#allocation4 + $0x398] sm:$0xff]
  %v9817 = vld [vmem:[#allocation4 + $0x3a0] sm:$0xff]
  %v9818 = vld [vmem:[#allocation4 + $0x3a8] sm:$0xff]
  %v9819 = vld [vmem:[#allocation4 + $0x3b0] sm:$0xff]
  %v9820 = vld [vmem:[#allocation4 + $0x3b8] sm:$0xff]
  %v9821 = vld [vmem:[#allocation4 + $0x3c0] sm:$0xff]
  %v9822 = vld [vmem:[#allocation4 + $0x3c8] sm:$0xff]
  %v9823 = vld [vmem:[#allocation4 + $0x3d0] sm:$0xff]
  %v9824 = vld [vmem:[#allocation4 + $0x3d8] sm:$0xff]
  %v9825 = vld [vmem:[#allocation4 + $0x3e0] sm:$0xff]
  %v9826 = vld [vmem:[#allocation4 + $0x3e8] sm:$0xff]
  %v9827 = vld [vmem:[#allocation4 + $0x3f0] sm:$0xff]
  %v9828 = vld [vmem:[#allocation4 + $0x3f8] sm:$0xff]
  %v9829 = vld [vmem:[#allocation4 + $0x400] sm:$0xff]
  %v9830 = vld [vmem:[#allocation4 + $0x408] sm:$0xff]
  %v9831 = vld [vmem:[#allocation4 + $0x410] sm:$0xff]
  %v9832 = vld [vmem:[#allocation4 + $0x418] sm:$0xff]
  %v9833 = vld [vmem:[#allocation4 + $0x420] sm:$0xff]
  %v9834 = vld [vmem:[#allocation4 + $0x428] sm:$0xff]
  %v9835 = vld [vmem:[#allocation4 + $0x430] sm:$0xff]
  %v9836 = vld [vmem:[#allocation4 + $0x438] sm:$0xff]
  %v9837 = vld [vmem:[#allocation4 + $0x440] sm:$0xff]
  %v9838 = vld [vmem:[#allocation4 + $0x448] sm:$0xff]
  %v9839 = vld [vmem:[#allocation4 + $0x450] sm:$0xff]
  %v9840 = vld [vmem:[#allocation4 + $0x458] sm:$0xff]
  %v9841 = vld [vmem:[#allocation4 + $0x460] sm:$0xff]
  %v9842 = vld [vmem:[#allocation4 + $0x468] sm:$0xff]
  %v9843 = vld [vmem:[#allocation4 + $0x470] sm:$0xff]
  %v9844 = vld [vmem:[#allocation4 + $0x478] sm:$0xff]
  %v9845 = vld [vmem:[#allocation4 + $0x480] sm:$0xff]
  %v9846 = vld [vmem:[#allocation4 + $0x488] sm:$0xff]
  %v9847 = vld [vmem:[#allocation4 + $0x490] sm:$0xff]
  %v9848 = vld [vmem:[#allocation4 + $0x498] sm:$0xff]
  %v9849 = vld [vmem:[#allocation4 + $0x4a0] sm:$0xff]
  %v9850 = vld [vmem:[#allocation4 + $0x4a8] sm:$0xff]
  %v9851 = vld [vmem:[#allocation4 + $0x4b0] sm:$0xff]
  %v9852 = vld [vmem:[#allocation4 + $0x4b8] sm:$0xff]
  %v9853 = vld [vmem:[#allocation4 + $0x4c0] sm:$0xff]
  %v9854 = vld [vmem:[#allocation4 + $0x4c8] sm:$0xff]
  %v9855 = vld [vmem:[#allocation4 + $0x4d0] sm:$0xff]
  %v9856 = vld [vmem:[#allocation4 + $0x4d8] sm:$0xff]
  %v9857 = vld [vmem:[#allocation4 + $0x4e0] sm:$0xff]
  %v9858 = vld [vmem:[#allocation4 + $0x4e8] sm:$0xff]
  %v9859 = vld [vmem:[#allocation4 + $0x4f0] sm:$0xff]
  %v9860 = vld [vmem:[#allocation4 + $0x4f8] sm:$0xff]
  %v9861 = vld [vmem:[#allocation4 + $0x500] sm:$0xff]
  %v9862 = vld [vmem:[#allocation4 + $0x508] sm:$0xff]
  %v9863 = vld [vmem:[#allocation4 + $0x510] sm:$0xff]
  %v9864 = vld [vmem:[#allocation4 + $0x518] sm:$0xff]
  %v9865 = vld [vmem:[#allocation4 + $0x520] sm:$0xff]
  %v9866 = vld [vmem:[#allocation4 + $0x528] sm:$0xff]
  %v9867 = vld [vmem:[#allocation4 + $0x530] sm:$0xff]
  %v9868 = vld [vmem:[#allocation4 + $0x538] sm:$0xff]
  %v9869 = vld [vmem:[#allocation4 + $0x540] sm:$0xff]
  %v9870 = vld [vmem:[#allocation4 + $0x548] sm:$0xff]
  %v9871 = vld [vmem:[#allocation4 + $0x550] sm:$0xff]
  %v9872 = vld [vmem:[#allocation4 + $0x558] sm:$0xff]
  %v9873 = vld [vmem:[#allocation4 + $0x560] sm:$0xff]
  %v9874 = vld [vmem:[#allocation4 + $0x568] sm:$0xff]
  %v9875 = vld [vmem:[#allocation4 + $0x570] sm:$0xff]
  %v9876 = vld [vmem:[#allocation4 + $0x578] sm:$0xff]
  %v9877 = vld [vmem:[#allocation4 + $0x580] sm:$0xff]
  %v9878 = vld [vmem:[#allocation4 + $0x588] sm:$0xff]
  %v9879 = vld [vmem:[#allocation4 + $0x590] sm:$0xff]
  %v9880 = vld [vmem:[#allocation4 + $0x598] sm:$0xff]
  %v9881 = vld [vmem:[#allocation4 + $0x5a0] sm:$0xff]
  %v9882 = vld [vmem:[#allocation4 + $0x5a8] sm:$0xff]
  %v9883 = vld [vmem:[#allocation4 + $0x5b0] sm:$0xff]
  %v9884 = vld [vmem:[#allocation4 + $0x5b8] sm:$0xff]
  %v9885 = vld [vmem:[#allocation4 + $0x5c0] sm:$0xff]
  %v9886 = vld [vmem:[#allocation4 + $0x5c8] sm:$0xff]
  %v9887 = vld [vmem:[#allocation4 + $0x5d0] sm:$0xff]
  %v9888 = vld [vmem:[#allocation4 + $0x5d8] sm:$0xff]
  %v9889 = vld [vmem:[#allocation4 + $0x5e0] sm:$0xff]
  %v9890 = vld [vmem:[#allocation4 + $0x5e8] sm:$0xff]
  %v9891 = vld [vmem:[#allocation4 + $0x5f0] sm:$0xff]
  %v9892 = vld [vmem:[#allocation4 + $0x5f8] sm:$0xff]
  %v9893 = vld [vmem:[#allocation4 + $0x600] sm:$0xff]
  %v9894 = vld [vmem:[#allocation4 + $0x608] sm:$0xff]
  %v9895 = vld [vmem:[#allocation4 + $0x610] sm:$0xff]
  %v9896 = vld [vmem:[#allocation4 + $0x618] sm:$0xff]
  %v9897 = vld [vmem:[#allocation4 + $0x620] sm:$0xff]
  %v9898 = vld [vmem:[#allocation4 + $0x628] sm:$0xff]
  %v9899 = vld [vmem:[#allocation4 + $0x630] sm:$0xff]
  %v9900 = vld [vmem:[#allocation4 + $0x638] sm:$0xff]
  %v9901 = vld [vmem:[#allocation4 + $0x640] sm:$0xff]
  %v9902 = vld [vmem:[#allocation4 + $0x648] sm:$0xff]
  %v9903 = vld [vmem:[#allocation4 + $0x650] sm:$0xff]
  %v9904 = vld [vmem:[#allocation4 + $0x658] sm:$0xff]
  %v9905 = vld [vmem:[#allocation4 + $0x660] sm:$0xff]
  %v9906 = vld [vmem:[#allocation4 + $0x668] sm:$0xff]
  %v9907 = vld [vmem:[#allocation4 + $0x670] sm:$0xff]
  %v9908 = vld [vmem:[#allocation4 + $0x678] sm:$0xff]
  %v9909 = vld [vmem:[#allocation4 + $0x680] sm:$0xff]
  %v9910 = vld [vmem:[#allocation4 + $0x688] sm:$0xff]
  %v9911 = vld [vmem:[#allocation4 + $0x690] sm:$0xff]
  %v9912 = vld [vmem:[#allocation4 + $0x698] sm:$0xff]
  %v9913 = vld [vmem:[#allocation4 + $0x6a0] sm:$0xff]
  %v9914 = vld [vmem:[#allocation4 + $0x6a8] sm:$0xff]
  %v9915 = vld [vmem:[#allocation4 + $0x6b0] sm:$0xff]
  %v9916 = vld [vmem:[#allocation4 + $0x6b8] sm:$0xff]
  %v9917 = vld [vmem:[%s10] sm:$0x7]
  %v9919 = vlaneseq
  %v9920 = vshrl.u32 %v9919, 7
  %v9921 = vsub.s32 0, %v9920
  %v9922 = vrot.slane %v9917, %v9921
  %v9923 = vlaneseq
  %v9924 = vshrl.u32 %v9923, 7
  %v9925 = vsub.s32 1, %v9924
  %v9926 = vrot.slane %v9917, %v9925
  %v9927 = vlaneseq
  %v9928 = vshrl.u32 %v9927, 7
  %v9929 = vsub.s32 2, %v9928
  %v9930 = vrot.slane %v9917, %v9929
  %v9933 = vsel %vm2700, %v9930, 0
  %9935 = vmatprep.subr.mxu0 %v9702
  %9936 = vmatpush1.msra.mxu0 %v9701
  %9937 = vmatprep.subr.mxu0 %v9708
  %9938 = vmatpush1.msra.mxu0 %v9707
  %9939 = vmatprep.subr.mxu0 %v9714
  %9940 = vmatpush1.msra.mxu0 %v9713
  %9941 = vmatprep.subr.mxu0 %v9720
  %9942 = vmatpush1.msra.mxu0 %v9719
  %9943 = vmatprep.subr.mxu0 %v9726
  %9944 = vmatpush1.msra.mxu0 %v9725
  %9945 = vmatprep.subr.mxu0 %v9732
  %9946 = vmatpush1.msra.mxu0 %v9731
  %9947 = vmatprep.subr.mxu0 %v9738
  %9948 = vmatpush1.msra.mxu0 %v9737
  %9949 = vmatprep.subr.mxu0 %v9744
  %9950 = vmatpush1.msra.mxu0 %v9743
  %9951 = vmatprep.subr.mxu0 %v9750
  %9952 = vmatpush1.msra.mxu0 %v9749
  %9953 = vmatprep.subr.mxu0 %v9756
  %9954 = vmatpush1.msra.mxu0 %v9755
  %9955 = vmatprep.subr.mxu0 %v9762
  %9956 = vmatpush1.msra.mxu0 %v9761
  %9957 = vmatprep.subr.mxu0 %v9768
  %9958 = vmatpush1.msra.mxu0 %v9767
  %9959 = vmatprep.subr.mxu0 %v9774
  %9960 = vmatpush1.msra.mxu0 %v9773
  %9961 = vmatprep.subr.mxu0 %v9780
  %9962 = vmatpush1.msra.mxu0 %v9779
  %9963 = vmatprep.subr.mxu0 %v9786
  %9964 = vmatpush1.msra.mxu0 %v9785
  %9965 = vmatprep.subr.mxu0 %v9792
  %9966 = vmatpush1.msra.mxu0 %v9791
  %9967 = vmatprep.subr.mxu0 %v9798
  %9968 = vmatpush1.msra.mxu0 %v9797
  %9969 = vmatprep.subr.mxu0 %v9804
  %9970 = vmatpush1.msra.mxu0 %v9803
  %9971 = vmatprep.subr.mxu0 %v9810
  %9972 = vmatpush1.msra.mxu0 %v9809
  %9973 = vmatprep.subr.mxu0 %v9816
  %9974 = vmatpush1.msra.mxu0 %v9815
  %9975 = vmatprep.subr.mxu0 %v9822
  %9976 = vmatpush1.msra.mxu0 %v9821
  %9977 = vmatprep.subr.mxu0 %v9828
  %9978 = vmatpush1.msra.mxu0 %v9827
  %9979 = vmatprep.subr.mxu0 %v9834
  %9980 = vmatpush1.msra.mxu0 %v9833
  %9981 = vmatprep.subr.mxu0 %v9840
  %9982 = vmatpush1.msra.mxu0 %v9839
  %9983 = vmatprep.subr.mxu0 %v9846
  %9984 = vmatpush1.msra.mxu0 %v9845
  %9985 = vmatprep.subr.mxu0 %v9852
  %9986 = vmatpush1.msra.mxu0 %v9851
  %9987 = vmatprep.subr.mxu0 %v9858
  %9988 = vmatpush1.msra.mxu0 %v9857
  %9989 = vmatprep.subr.mxu0 %v9864
  %9990 = vmatpush1.msra.mxu0 %v9863
  %9991 = vmatprep.subr.mxu0 %v9870
  %9992 = vmatpush1.msra.mxu0 %v9869
  %9993 = vmatprep.subr.mxu0 %v9876
  %9994 = vmatpush1.msra.mxu0 %v9875
  %9995 = vmatprep.subr.mxu0 %v9882
  %9996 = vmatpush1.msra.mxu0 %v9881
  %9997 = vmatprep.subr.mxu0 %v9888
  %9998 = vmatpush1.msra.mxu0 %v9887
  %9999 = vmatprep.mubr.f32.mxu0 %v9926
  %10000 = vmatmul.mubr.f32.gmra.mrb[0].mxu0 %v9922
  %v10001 = vpop.f32.mrb[0].mxu0
  %v10002 = vadd.f32 0.0, %v10001
  %v10003 = vpop.f32.mrb[0].mxu0
  %v10004 = vadd.f32 0.0, %v10003
  %10005 = vdwg.mxu0
  %10006 = vmatprep.subr.mxu0 %v9894
  %10007 = vmatpush1.msra.mxu0 %v9893
  %10008 = vmatprep.subr.mxu0 %v9900
  %10009 = vmatpush1.msra.mxu0 %v9899
  %10010 = vmatprep.subr.mxu0 %v9906
  %10011 = vmatpush1.msra.mxu0 %v9905
  %10012 = vmatprep.subr.mxu0 %v9912
  %10013 = vmatpush1.msra.mxu0 %v9911
  %10014 = vmatprep.subr.mxu0 0.0
  %10015 = vmatpush1.msra.mxu0 0.0
  %10016 = vmatprep.subr.mxu0 0.0
  %10017 = vmatpush1.msra.mxu0 0.0
  %10018 = vmatprep.subr.mxu0 0.0
  %10019 = vmatpush1.msra.mxu0 0.0
  %10020 = vmatprep.subr.mxu0 0.0
  %10021 = vmatpush1.msra.mxu0 0.0
  %10022 = vmatprep.subr.mxu0 0.0
  %10023 = vmatpush1.msra.mxu0 0.0
  %10024 = vmatprep.subr.mxu0 0.0
  %10025 = vmatpush1.msra.mxu0 0.0
  %10026 = vmatprep.subr.mxu0 0.0
  %10027 = vmatpush1.msra.mxu0 0.0
  %10028 = vmatprep.subr.mxu0 0.0
  %10029 = vmatpush1.msra.mxu0 0.0
  %10030 = vmatprep.subr.mxu0 0.0
  %10031 = vmatpush1.msra.mxu0 0.0
  %10032 = vmatprep.subr.mxu0 0.0
  %10033 = vmatpush1.msra.mxu0 0.0
  %10034 = vmatprep.subr.mxu0 0.0
  %10035 = vmatpush1.msra.mxu0 0.0
  %10036 = vmatprep.subr.mxu0 0.0
  %10037 = vmatpush1.msra.mxu0 0.0
  %10038 = vmatprep.subr.mxu0 0.0
  %10039 = vmatpush1.msra.mxu0 0.0
  %10040 = vmatprep.subr.mxu0 0.0
  %10041 = vmatpush1.msra.mxu0 0.0
  %10042 = vmatprep.subr.mxu0 0.0
  %10043 = vmatpush1.msra.mxu0 0.0
  %10044 = vmatprep.subr.mxu0 0.0
  %10045 = vmatpush1.msra.mxu0 0.0
  %10046 = vmatprep.subr.mxu0 0.0
  %10047 = vmatpush1.msra.mxu0 0.0
  %10048 = vmatprep.subr.mxu0 0.0
  %10049 = vmatpush1.msra.mxu0 0.0
  %10050 = vmatprep.subr.mxu0 0.0
  %10051 = vmatpush1.msra.mxu0 0.0
  %10052 = vmatprep.subr.mxu0 0.0
  %10053 = vmatpush1.msra.mxu0 0.0
  %10054 = vmatprep.subr.mxu0 0.0
  %10055 = vmatpush1.msra.mxu0 0.0
  %10056 = vmatprep.subr.mxu0 0.0
  %10057 = vmatpush1.msra.mxu0 0.0
  %10058 = vmatprep.subr.mxu0 0.0
  %10059 = vmatpush1.msra.mxu0 0.0
  %10060 = vmatprep.subr.mxu0 0.0
  %10061 = vmatpush1.msra.mxu0 0.0
  %10062 = vmatprep.subr.mxu0 0.0
  %10063 = vmatpush1.msra.mxu0 0.0
  %10064 = vmatprep.subr.mxu0 0.0
  %10065 = vmatpush1.msra.mxu0 0.0
  %10066 = vmatprep.subr.mxu0 0.0
  %10067 = vmatpush1.msra.mxu0 0.0
  %10068 = vmatprep.subr.mxu0 0.0
  %10069 = vmatpush1.msra.mxu0 0.0
  %10070 = vmatprep.mubr.f32.mxu0 0.0
  %10071 = vmatmul.mubr.f32.gmra.mrb[0].mxu0 %v9933
  %v10072 = vpop.f32.mrb[0].mxu0
  %v10073 = vadd.f32 %v10002, %v10072
  %v10074 = vpop.f32.mrb[0].mxu0
  %v10075 = vadd.f32 %v10004, %v10074
  %10076 = vdwg.mxu0
  %10077 = vmatprep.subr.mxu0 %v9704
  %10078 = vmatpush1.msra.mxu0 %v9703
  %10079 = vmatprep.subr.mxu0 %v9710
  %10080 = vmatpush1.msra.mxu0 %v9709
  %10081 = vmatprep.subr.mxu0 %v9716
  %10082 = vmatpush1.msra.mxu0 %v9715
  %10083 = vmatprep.subr.mxu0 %v9722
  %10084 = vmatpush1.msra.mxu0 %v9721
  %10085 = vmatprep.subr.mxu0 %v9728
  %10086 = vmatpush1.msra.mxu0 %v9727
  %10087 = vmatprep.subr.mxu0 %v9734
  %10088 = vmatpush1.msra.mxu0 %v9733
  %10089 = vmatprep.subr.mxu0 %v9740
  %10090 = vmatpush1.msra.mxu0 %v9739
  %10091 = vmatprep.subr.mxu0 %v9746
  %10092 = vmatpush1.msra.mxu0 %v9745
  %10093 = vmatprep.subr.mxu0 %v9752
  %10094 = vmatpush1.msra.mxu0 %v9751
  %10095 = vmatprep.subr.mxu0 %v9758
  %10096 = vmatpush1.msra.mxu0 %v9757
  %10097 = vmatprep.subr.mxu0 %v9764
  %10098 = vmatpush1.msra.mxu0 %v9763
  %10099 = vmatprep.subr.mxu0 %v9770
  %10100 = vmatpush1.msra.mxu0 %v9769
  %10101 = vmatprep.subr.mxu0 %v9776
  %10102 = vmatpush1.msra.mxu0 %v9775
  %10103 = vmatprep.subr.mxu0 %v9782
  %10104 = vmatpush1.msra.mxu0 %v9781
  %10105 = vmatprep.subr.mxu0 %v9788
  %10106 = vmatpush1.msra.mxu0 %v9787
  %10107 = vmatprep.subr.mxu0 %v9794
  %10108 = vmatpush1.msra.mxu0 %v9793
  %10109 = vmatprep.subr.mxu0 %v9800
  %10110 = vmatpush1.msra.mxu0 %v9799
  %10111 = vmatprep.subr.mxu0 %v9806
  %10112 = vmatpush1.msra.mxu0 %v9805
  %10113 = vmatprep.subr.mxu0 %v9812
  %10114 = vmatpush1.msra.mxu0 %v9811
  %10115 = vmatprep.subr.mxu0 %v9818
  %10116 = vmatpush1.msra.mxu0 %v9817
  %10117 = vmatprep.subr.mxu0 %v9824
  %10118 = vmatpush1.msra.mxu0 %v9823
  %10119 = vmatprep.subr.mxu0 %v9830
  %10120 = vmatpush1.msra.mxu0 %v9829
  %10121 = vmatprep.subr.mxu0 %v9836
  %10122 = vmatpush1.msra.mxu0 %v9835
  %10123 = vmatprep.subr.mxu0 %v9842
  %10124 = vmatpush1.msra.mxu0 %v9841
  %10125 = vmatprep.subr.mxu0 %v9848
  %10126 = vmatpush1.msra.mxu0 %v9847
  %10127 = vmatprep.subr.mxu0 %v9854
  %10128 = vmatpush1.msra.mxu0 %v9853
  %10129 = vmatprep.subr.mxu0 %v9860
  %10130 = vmatpush1.msra.mxu0 %v9859
  %10131 = vmatprep.subr.mxu0 %v9866
  %10132 = vmatpush1.msra.mxu0 %v9865
  %10133 = vmatprep.subr.mxu0 %v9872
  %10134 = vmatpush1.msra.mxu0 %v9871
  %10135 = vmatprep.subr.mxu0 %v9878
  %10136 = vmatpush1.msra.mxu0 %v9877
  %10137 = vmatprep.subr.mxu0 %v9884
  %10138 = vmatpush1.msra.mxu0 %v9883
  %10139 = vmatprep.subr.mxu0 %v9890
  %10140 = vmatpush1.msra.mxu0 %v9889
  %10141 = vmatprep.mubr.f32.mxu0 %v9926
  %10142 = vmatmul.mubr.f32.gmra.mrb[0].mxu0 %v9922
  %v10143 = vpop.f32.mrb[0].mxu0
  %v10144 = vadd.f32 0.0, %v10143
  %v10145 = vpop.f32.mrb[0].mxu0
  %v10146 = vadd.f32 0.0, %v10145
  %10147 = vdwg.mxu0
  %10148 = vmatprep.subr.mxu0 %v9896
  %10149 = vmatpush1.msra.mxu0 %v9895
  %10150 = vmatprep.subr.mxu0 %v9902
  %10151 = vmatpush1.msra.mxu0 %v9901
  %10152 = vmatprep.subr.mxu0 %v9908
  %10153 = vmatpush1.msra.mxu0 %v9907
  %10154 = vmatprep.subr.mxu0 %v9914
  %10155 = vmatpush1.msra.mxu0 %v9913
  %10156 = vmatprep.subr.mxu0 0.0
  %10157 = vmatpush1.msra.mxu0 0.0
  %10158 = vmatprep.subr.mxu0 0.0
  %10159 = vmatpush1.msra.mxu0 0.0
  %10160 = vmatprep.subr.mxu0 0.0
  %10161 = vmatpush1.msra.mxu0 0.0
  %10162 = vmatprep.subr.mxu0 0.0
  %10163 = vmatpush1.msra.mxu0 0.0
  %10164 = vmatprep.subr.mxu0 0.0
  %10165 = vmatpush1.msra.mxu0 0.0
  %10166 = vmatprep.subr.mxu0 0.0
  %10167 = vmatpush1.msra.mxu0 0.0
  %10168 = vmatprep.subr.mxu0 0.0
  %10169 = vmatpush1.msra.mxu0 0.0
  %10170 = vmatprep.subr.mxu0 0.0
  %10171 = vmatpush1.msra.mxu0 0.0
  %10172 = vmatprep.subr.mxu0 0.0
  %10173 = vmatpush1.msra.mxu0 0.0
  %10174 = vmatprep.subr.mxu0 0.0
  %10175 = vmatpush1.msra.mxu0 0.0
  %10176 = vmatprep.subr.mxu0 0.0
  %10177 = vmatpush1.msra.mxu0 0.0
  %10178 = vmatprep.subr.mxu0 0.0
  %10179 = vmatpush1.msra.mxu0 0.0
  %10180 = vmatprep.subr.mxu0 0.0
  %10181 = vmatpush1.msra.mxu0 0.0
  %10182 = vmatprep.subr.mxu0 0.0
  %10183 = vmatpush1.msra.mxu0 0.0
  %10184 = vmatprep.subr.mxu0 0.0
  %10185 = vmatpush1.msra.mxu0 0.0
  %10186 = vmatprep.subr.mxu0 0.0
  %10187 = vmatpush1.msra.mxu0 0.0
  %10188 = vmatprep.subr.mxu0 0.0
  %10189 = vmatpush1.msra.mxu0 0.0
  %10190 = vmatprep.subr.mxu0 0.0
  %10191 = vmatpush1.msra.mxu0 0.0
  %10192 = vmatprep.subr.mxu0 0.0
  %10193 = vmatpush1.msra.mxu0 0.0
  %10194 = vmatprep.subr.mxu0 0.0
  %10195 = vmatpush1.msra.mxu0 0.0
  %10196 = vmatprep.subr.mxu0 0.0
  %10197 = vmatpush1.msra.mxu0 0.0
  %10198 = vmatprep.subr.mxu0 0.0
  %10199 = vmatpush1.msra.mxu0 0.0
  %10200 = vmatprep.subr.mxu0 0.0
  %10201 = vmatpush1.msra.mxu0 0.0
  %10202 = vmatprep.subr.mxu0 0.0
  %10203 = vmatpush1.msra.mxu0 0.0
  %10204 = vmatprep.subr.mxu0 0.0
  %10205 = vmatpush1.msra.mxu0 0.0
  %10206 = vmatprep.subr.mxu0 0.0
  %10207 = vmatpush1.msra.mxu0 0.0
  %10208 = vmatprep.subr.mxu0 0.0
  %10209 = vmatpush1.msra.mxu0 0.0
  %10210 = vmatprep.subr.mxu0 0.0
  %10211 = vmatpush1.msra.mxu0 0.0
  %10212 = vmatprep.mubr.f32.mxu0 0.0
  %10213 = vmatmul.mubr.f32.gmra.mrb[0].mxu0 %v9933
  %v10214 = vpop.f32.mrb[0].mxu0
  %v10215 = vadd.f32 %v10144, %v10214
  %v10216 = vpop.f32.mrb[0].mxu0
  %v10217 = vadd.f32 %v10146, %v10216
  %10218 = vdwg.mxu0
  %10219 = vmatprep.subr.mxu0 %v9706
  %10220 = vmatpush1.msra.mxu0 %v9705
  %10221 = vmatprep.subr.mxu0 %v9712
  %10222 = vmatpush1.msra.mxu0 %v9711
  %10223 = vmatprep.subr.mxu0 %v9718
  %10224 = vmatpush1.msra.mxu0 %v9717
  %10225 = vmatprep.subr.mxu0 %v9724
  %10226 = vmatpush1.msra.mxu0 %v9723
  %10227 = vmatprep.subr.mxu0 %v9730
  %10228 = vmatpush1.msra.mxu0 %v9729
  %10229 = vmatprep.subr.mxu0 %v9736
  %10230 = vmatpush1.msra.mxu0 %v9735
  %10231 = vmatprep.subr.mxu0 %v9742
  %10232 = vmatpush1.msra.mxu0 %v9741
  %10233 = vmatprep.subr.mxu0 %v9748
  %10234 = vmatpush1.msra.mxu0 %v9747
  %10235 = vmatprep.subr.mxu0 %v9754
  %10236 = vmatpush1.msra.mxu0 %v9753
  %10237 = vmatprep.subr.mxu0 %v9760
  %10238 = vmatpush1.msra.mxu0 %v9759
  %10239 = vmatprep.subr.mxu0 %v9766
  %10240 = vmatpush1.msra.mxu0 %v9765
  %10241 = vmatprep.subr.mxu0 %v9772
  %10242 = vmatpush1.msra.mxu0 %v9771
  %10243 = vmatprep.subr.mxu0 %v9778
  %10244 = vmatpush1.msra.mxu0 %v9777
  %10245 = vmatprep.subr.mxu0 %v9784
  %10246 = vmatpush1.msra.mxu0 %v9783
  %10247 = vmatprep.subr.mxu0 %v9790
  %10248 = vmatpush1.msra.mxu0 %v9789
  %10249 = vmatprep.subr.mxu0 %v9796
  %10250 = vmatpush1.msra.mxu0 %v9795
  %10251 = vmatprep.subr.mxu0 %v9802
  %10252 = vmatpush1.msra.mxu0 %v9801
  %10253 = vmatprep.subr.mxu0 %v9808
  %10254 = vmatpush1.msra.mxu0 %v9807
  %10255 = vmatprep.subr.mxu0 %v9814
  %10256 = vmatpush1.msra.mxu0 %v9813
  %10257 = vmatprep.subr.mxu0 %v9820
  %10258 = vmatpush1.msra.mxu0 %v9819
  %10259 = vmatprep.subr.mxu0 %v9826
  %10260 = vmatpush1.msra.mxu0 %v9825
  %10261 = vmatprep.subr.mxu0 %v9832
  %10262 = vmatpush1.msra.mxu0 %v9831
  %10263 = vmatprep.subr.mxu0 %v9838
  %10264 = vmatpush1.msra.mxu0 %v9837
  %10265 = vmatprep.subr.mxu0 %v9844
  %10266 = vmatpush1.msra.mxu0 %v9843
  %10267 = vmatprep.subr.mxu0 %v9850
  %10268 = vmatpush1.msra.mxu0 %v9849
  %10269 = vmatprep.subr.mxu0 %v9856
  %10270 = vmatpush1.msra.mxu0 %v9855
  %10271 = vmatprep.subr.mxu0 %v9862
  %10272 = vmatpush1.msra.mxu0 %v9861
  %10273 = vmatprep.subr.mxu0 %v9868
  %10274 = vmatpush1.msra.mxu0 %v9867
  %10275 = vmatprep.subr.mxu0 %v9874
  %10276 = vmatpush1.msra.mxu0 %v9873
  %10277 = vmatprep.subr.mxu0 %v9880
  %10278 = vmatpush1.msra.mxu0 %v9879
  %10279 = vmatprep.subr.mxu0 %v9886
  %10280 = vmatpush1.msra.mxu0 %v9885
  %10281 = vmatprep.subr.mxu0 %v9892
  %10282 = vmatpush1.msra.mxu0 %v9891
  %10283 = vmatprep.mubr.f32.mxu0 %v9926
  %10284 = vmatmul.mubr.f32.gmra.mrb[0].mxu0 %v9922
  %v10285 = vpop.f32.mrb[0].mxu0
  %v10286 = vadd.f32 0.0, %v10285
  %v10287 = vpop.f32.mrb[0].mxu0
  %v10288 = vadd.f32 0.0, %v10287
  %10289 = vdwg.mxu0
  %10290 = vmatprep.subr.mxu0 %v9898
  %10291 = vmatpush1.msra.mxu0 %v9897
  %10292 = vmatprep.subr.mxu0 %v9904
  %10293 = vmatpush1.msra.mxu0 %v9903
  %10294 = vmatprep.subr.mxu0 %v9910
  %10295 = vmatpush1.msra.mxu0 %v9909
  %10296 = vmatprep.subr.mxu0 %v9916
  %10297 = vmatpush1.msra.mxu0 %v9915
  %10298 = vmatprep.subr.mxu0 0.0
  %10299 = vmatpush1.msra.mxu0 0.0
  %10300 = vmatprep.subr.mxu0 0.0
  %10301 = vmatpush1.msra.mxu0 0.0
  %10302 = vmatprep.subr.mxu0 0.0
  %10303 = vmatpush1.msra.mxu0 0.0
  %10304 = vmatprep.subr.mxu0 0.0
  %10305 = vmatpush1.msra.mxu0 0.0
  %10306 = vmatprep.subr.mxu0 0.0
  %10307 = vmatpush1.msra.mxu0 0.0
  %10308 = vmatprep.subr.mxu0 0.0
  %10309 = vmatpush1.msra.mxu0 0.0
  %10310 = vmatprep.subr.mxu0 0.0
  %10311 = vmatpush1.msra.mxu0 0.0
  %10312 = vmatprep.subr.mxu0 0.0
  %10313 = vmatpush1.msra.mxu0 0.0
  %10314 = vmatprep.subr.mxu0 0.0
  %10315 = vmatpush1.msra.mxu0 0.0
  %10316 = vmatprep.subr.mxu0 0.0
  %10317 = vmatpush1.msra.mxu0 0.0
  %10318 = vmatprep.subr.mxu0 0.0
  %10319 = vmatpush1.msra.mxu0 0.0
  %10320 = vmatprep.subr.mxu0 0.0
  %10321 = vmatpush1.msra.mxu0 0.0
  %10322 = vmatprep.subr.mxu0 0.0
  %10323 = vmatpush1.msra.mxu0 0.0
  %10324 = vmatprep.subr.mxu0 0.0
  %10325 = vmatpush1.msra.mxu0 0.0
  %10326 = vmatprep.subr.mxu0 0.0
  %10327 = vmatpush1.msra.mxu0 0.0
  %10328 = vmatprep.subr.mxu0 0.0
  %10329 = vmatpush1.msra.mxu0 0.0
  %10330 = vmatprep.subr.mxu0 0.0
  %10331 = vmatpush1.msra.mxu0 0.0
  %10332 = vmatprep.subr.mxu0 0.0
  %10333 = vmatpush1.msra.mxu0 0.0
  %10334 = vmatprep.subr.mxu0 0.0
  %10335 = vmatpush1.msra.mxu0 0.0
  %10336 = vmatprep.subr.mxu0 0.0
  %10337 = vmatpush1.msra.mxu0 0.0
  %10338 = vmatprep.subr.mxu0 0.0
  %10339 = vmatpush1.msra.mxu0 0.0
  %10340 = vmatprep.subr.mxu0 0.0
  %10341 = vmatpush1.msra.mxu0 0.0
  %10342 = vmatprep.subr.mxu0 0.0
  %10343 = vmatpush1.msra.mxu0 0.0
  %10344 = vmatprep.subr.mxu0 0.0
  %10345 = vmatpush1.msra.mxu0 0.0
  %10346 = vmatprep.subr.mxu0 0.0
  %10347 = vmatpush1.msra.mxu0 0.0
  %10348 = vmatprep.subr.mxu0 0.0
  %10349 = vmatpush1.msra.mxu0 0.0
  %10350 = vmatprep.subr.mxu0 0.0
  %10351 = vmatpush1.msra.mxu0 0.0
  %10352 = vmatprep.subr.mxu0 0.0
  %10353 = vmatpush1.msra.mxu0 0.0
  %10354 = vmatprep.mubr.f32.mxu0 0.0
  %10355 = vmatmul.mubr.f32.gmra.mrb[0].mxu0 %v9933
  %v10356 = vpop.f32.mrb[0].mxu0
  %v10357 = vadd.f32 %v10286, %v10356
  %v10358 = vpop.f32.mrb[0].mxu0
  %v10359 = vadd.f32 %v10288, %v10358
  %10360 = vdwg.mxu0
  %v10361 = vadd.f32 %v8180, %v10073
  %v10362 = vadd.f32 %v8180, %v10075
  %v10363 = vadd.f32 %v8180, %v10215
  %v10364 = vadd.f32 %v8180, %v10217
  %v10365 = vadd.f32 %v8180, %v10357
  %v10366 = vadd.f32 %v8180, %v10359
  %v10367 = vld [vmem:[%s0 + $0x1] sm:$0x3f]
  %v10374 = vcombine.low %v10361, %v10362
  %v10375 = vcombine.low %v10363, %v10364
  %v10376 = vcombine.low %v10365, %v10366
  %v10378 = vunpack.c.l.s4 1966171168
  %v10379 = vunpack.c.0.s8 %v10378
  %v10380 = vlaneseq
  %v10381 = vshrl.u32 %v10380, 7
  %v10382 = vsub.s32 %v10379, %v10381
  %v10383 = vrot.slane %v10374, %v10382
  %v10385 = vunpack.c.l.s4 1966171168
  %v10386 = vunpack.c.0.s8 %v10385
  %v10387 = vlaneseq
  %v10388 = vshrl.u32 %v10387, 7
  %v10389 = vsub.s32 %v10386, %v10388
  %v10390 = vrot.slane %v10375, %v10389
  %v10392 = vunpack.c.l.s4 1966171168
  %v10393 = vunpack.c.0.s8 %v10392
  %v10394 = vlaneseq
  %v10395 = vshrl.u32 %v10394, 7
  %v10396 = vsub.s32 %v10393, %v10395
  %v10397 = vrot.slane %v10376, %v10396
  %v10398 = vcombine.low %v10383, %v10390
  %v10400 = vunpack.c.l.s4 1966171168
  %v10401 = vunpack.c.0.s8 %v10400
  %v10402 = vlaneseq
  %v10403 = vshrl.u32 %v10402, 7
  %v10404 = vsub.s32 %v10401, %v10403
  %v10405 = vrot.slane %v10398, %v10404
  %v10407 = vunpack.c.l.s4 1966171168
  %v10408 = vunpack.c.0.s8 %v10407
  %v10409 = vlaneseq
  %v10410 = vshrl.u32 %v10409, 7
  %v10411 = vsub.s32 %v10408, %v10410
  %v10412 = vrot.slane %v10397, %v10411
  %v10413 = vcombine.low %v10405, %v10412
  %v10415 = vsub.f32 %v10367, %v10413
  %v10416 = vlaneseq
  %vm10417 = vcmp.ge.s32.totalorder %v10416, 0
  %vm10418 = vcmp.lt.s32.totalorder %v10416, 768
  %vm10419 = vmand %vm10417, %vm10418
  %10420 = vst.msk [vmem:[%s12] sm:$0x3f] %vm10419, %v10415
  // Predicated region
  $region50: #{dncnn_forward.1} parent=0 // pred_check
    _
  $region51: #{dncnn_forward.1} parent=0 // pred_check_branch
    %10422 = sbr.rel (0) target = $region53
  $region52: #{dncnn_forward.1} parent=0 // pred_region
    _
  $region53: #{dncnn_forward.1} parent=0 // pred_fallthru
    _
  // Predicated region
  $region54: #{dncnn_forward.1} parent=0 // pred_check
    _
  $region55: #{dncnn_forward.1} parent=0 // pred_check_branch
    %10424 = sbr.rel (0) target = $region57
  $region56: #{dncnn_forward.1} parent=0 // pred_region
    _
  $region57: #{dncnn_forward.1} parent=0 // pred_fallthru
    _

</llo_original>
